<compile_context>
chip_gen: v6e
topology: v6e:2x2x1
jax: 0.10.0
libtpu: 0.0.40
codegen_flags: <defaults>
</compile_context>

<pallas_src>
import jax
import jax.numpy as jnp
from jax import lax
from jax.experimental import pallas as pl
from jax.experimental.pallas import tpu as pltpu


# ----------------------------------------------------------------------------
# Pallas kernels
# ----------------------------------------------------------------------------

def matmul_bias_kernel(x_ref, w_ref, b_ref, o_ref):
    """o = x @ w + b  (bf16 MXU operands, f32 accumulate)."""
    o_ref[...] = (jnp.dot(x_ref[...].astype(jnp.bfloat16), w_ref[...],
                          preferred_element_type=jnp.float32)
                  + b_ref[...])


def dual_matmul_bias_kernel(a_ref, b_ref, wa_ref, wb_ref, bias_ref, o_ref):
    """o = a @ wa + b @ wb + bias  (concat-free projection of [a | b])."""
    acc = jnp.dot(a_ref[...].astype(jnp.bfloat16), wa_ref[...],
                  preferred_element_type=jnp.float32)
    acc = acc + jnp.dot(b_ref[...].astype(jnp.bfloat16), wb_ref[...],
                        preferred_element_type=jnp.float32)
    o_ref[...] = acc + bias_ref[...]


def bidir_lstm_chunk_kernel(gxf_ref, gxr_ref, whh_ref,
                            yf_ref, yr_ref, hn_ref, cn_ref,
                            h_sc, c_sc):
    """Fused fwd+rev LSTM recurrence over one time chunk.

    gxf_ref: (TB, B, 4H) f32  precomputed x-gates, forward chunk order.
    gxr_ref: (TB, B, 4H) f32  precomputed x-gates, reverse chunk order.
    whh_ref: (2, H, 4H) bf16  recurrent weights [fwd, rev].
    yf_ref/yr_ref: (TB, B, H) per-direction hidden outputs.
    hn_ref/cn_ref: (2, B, H)  final states.
    h_sc/c_sc:     (2, B, H)  f32 carried state (index 0 = fwd, 1 = rev).
    """
    c = pl.program_id(0)

    @pl.when(c == 0)
    def _():
        h_sc[...] = jnp.zeros_like(h_sc)
        c_sc[...] = jnp.zeros_like(c_sc)

    TB = gxf_ref.shape[0]
    H = h_sc.shape[-1]

    def step(i, carry):
        j = TB - 1 - i                       # reverse direction walks backwards
        # Only the recurrent projection sits on the sequential path.
        gh = jnp.einsum("dbh,dhg->dbg",
                        h_sc[...].astype(jnp.bfloat16), whh_ref[...],
                        preferred_element_type=jnp.float32)       # (2, B, 4H)
        gx = jnp.stack([gxf_ref[i], gxr_ref[j]], axis=0)          # (2, B, 4H) f32
        gates = gx + gh
        i_g = jax.nn.sigmoid(gates[..., 0 * H:1 * H])
        f_g = jax.nn.sigmoid(gates[..., 1 * H:2 * H])
        g_g = jnp.tanh(gates[..., 2 * H:3 * H])
        o_g = jax.nn.sigmoid(gates[..., 3 * H:4 * H])
        c_new = f_g * c_sc[...] + i_g * g_g
        h_new = o_g * jnp.tanh(c_new)
        c_sc[...] = c_new
        h_sc[...] = h_new
        yf_ref[i] = h_new[0].astype(yf_ref.dtype)
        yr_ref[j] = h_new[1].astype(yr_ref.dtype)
        return carry

    lax.fori_loop(0, TB, step, 0, unroll=True)

    # Constant block index across the grid -> resident; last write wins.
    hn_ref[...] = h_sc[...]
    cn_ref[...] = c_sc[...]


# ----------------------------------------------------------------------------
# Wrappers
# ----------------------------------------------------------------------------

def matmul_bias(x, w, b, *, block_n=None):
    """(N, K) f32 @ (K, P) bf16 + (1, P) f32 -> (N, P) f32."""
    N, K = x.shape
    P = w.shape[1]
    bn = N if block_n is None else block_n
    assert N % bn == 0
    return pl.pallas_call(
        matmul_bias_kernel,
        out_shape=jax.ShapeDtypeStruct((N, P), jnp.float32),
        grid_spec=pltpu.PrefetchScalarGridSpec(
            num_scalar_prefetch=0,
            grid=(N // bn,),
            in_specs=[pl.BlockSpec((bn, K), lambda i: (i, 0)),
                      pl.BlockSpec((K, P), lambda i: (0, 0)),
                      pl.BlockSpec((1, P), lambda i: (0, 0))],
            out_specs=pl.BlockSpec((bn, P), lambda i: (i, 0))),
        compiler_params=pltpu.CompilerParams(
            dimension_semantics=("parallel",)),
    )(x, w, b)


def dual_matmul_bias(a, b, wa, wb, bias, *, block_n=None):
    """(N,K)@(K,P) + (N,K)@(K,P) + (1,P) -> (N,P) f32 — fused [a|b] projection."""
    N, K = a.shape
    P = wa.shape[1]
    bn = N if block_n is None else block_n
    assert N % bn == 0
    return pl.pallas_call(
        dual_matmul_bias_kernel,
        out_shape=jax.ShapeDtypeStruct((N, P), jnp.float32),
        grid_spec=pltpu.PrefetchScalarGridSpec(
            num_scalar_prefetch=0,
            grid=(N // bn,),
            in_specs=[pl.BlockSpec((bn, K), lambda i: (i, 0)),
                      pl.BlockSpec((bn, K), lambda i: (i, 0)),
                      pl.BlockSpec((K, P), lambda i: (0, 0)),
                      pl.BlockSpec((K, P), lambda i: (0, 0)),
                      pl.BlockSpec((1, P), lambda i: (0, 0))],
            out_specs=pl.BlockSpec((bn, P), lambda i: (i, 0))),
        compiler_params=pltpu.CompilerParams(
            dimension_semantics=("parallel",)),
    )(a, b, wa, wb, bias)


def bidir_lstm_layer(gx_f, gx_r, w_hh_fr, *, time_block=None):
    """Fused bidirectional LSTM layer.

    gx_f, gx_r: (T, B, 4H) f32 precomputed x-gates per direction.
    w_hh_fr:    (2, H, 4H) bf16 recurrent weights [fwd, rev].
    Returns y_f, y_r: (T, B, H) and h_n, c_n: (2, B, H).
    """
    T, B, G = gx_f.shape
    H = G // 4
    tb = T if time_block is None else time_block
    assert T % tb == 0
    nc = T // tb

    fwd_idx = lambda c: (c, 0, 0)
    rev_idx = lambda c: (nc - 1 - c, 0, 0)

    return pl.pallas_call(
        bidir_lstm_chunk_kernel,
        out_shape=(jax.ShapeDtypeStruct((T, B, H), jnp.float32),
                   jax.ShapeDtypeStruct((T, B, H), jnp.float32),
                   jax.ShapeDtypeStruct((2, B, H), jnp.float32),
                   jax.ShapeDtypeStruct((2, B, H), jnp.float32)),
        grid_spec=pltpu.PrefetchScalarGridSpec(
            num_scalar_prefetch=0,
            grid=(nc,),
            in_specs=[pl.BlockSpec((tb, B, G), fwd_idx),
                      pl.BlockSpec((tb, B, G), rev_idx),
                      pl.BlockSpec((2, H, G), lambda c: (0, 0, 0))],
            out_specs=[pl.BlockSpec((tb, B, H), fwd_idx),
                       pl.BlockSpec((tb, B, H), rev_idx),
                       pl.BlockSpec((2, B, H), lambda c: (0, 0, 0)),
                       pl.BlockSpec((2, B, H), lambda c: (0, 0, 0))],
            scratch_shapes=[pltpu.VMEM((2, B, H), jnp.float32),
                            pltpu.VMEM((2, B, H), jnp.float32)]),
        compiler_params=pltpu.CompilerParams(
            dimension_semantics=("arbitrary",)),   # sequential recurrence
    )(gx_f, gx_r, w_hh_fr)


def init_params(key, vocab_size, embed_size, hidden_size):
    """Deterministic parameter init mimicking PyTorch shapes (not values)."""
    params = {}
    keys = iter(jax.random.split(key, 32))
    params["embed"] = jax.random.normal(next(keys), (vocab_size, embed_size),
                                        jnp.float32)

    k_lstm = 1.0 / jnp.sqrt(hidden_size)

    def unif(k, shape, scale):
        return jax.random.uniform(k, shape, jnp.float32, -scale, scale)

    # layer 0 input size = embed_size, layer 1 input size = 2*hidden (bidir).
    in_sizes = [embed_size, 2 * hidden_size]
    lstm = []
    for layer in range(2):
        per_dir = []
        for _ in range(2):   # forward, reverse
            In = in_sizes[layer]
            w_ih = unif(next(keys), (In, 4 * hidden_size), k_lstm)
            w_hh = unif(next(keys), (hidden_size, 4 * hidden_size), k_lstm)
            b_ih = unif(next(keys), (1, 4 * hidden_size), k_lstm)
            b_hh = unif(next(keys), (1, 4 * hidden_size), k_lstm)
            per_dir.append((w_ih, w_hh, b_ih + b_hh))
        lstm.append(per_dir)
    params["lstm"] = lstm

    k_fc = 1.0 / jnp.sqrt(2 * hidden_size)
    params["fc_w"] = unif(next(keys), (2 * hidden_size, vocab_size), k_fc)
    params["fc_b"] = unif(next(keys), (1, vocab_size), k_fc)
    return params


@jax.jit
def lstm_rnn_forward(params, x_ids):
    """x_ids: (B, T) int32 -> (logits (B,T,V), (h_n (4,B,H), c_n (4,B,H)))."""
    B, T = x_ids.shape
    embed = params["embed"]                               # (V, E) f32
    V = embed.shape[0]
    (wih0_f, whh0_f, b0_f), (wih0_r, whh0_r, b0_r) = params["lstm"][0]
    (wih1_f, whh1_f, b1_f), (wih1_r, whh1_r, b1_r) = params["lstm"][1]
    H = whh0_f.shape[0]
    bf16 = jnp.bfloat16

    ids_tb = x_ids.T                                      # (T, B), time-major

    # ---- layer 0 input projection folded into a per-token table ------------
    # gates_x0[t, b] = embed[id] @ W_ih0 + b0 == table0[id]
    table0_f = matmul_bias(embed, wih0_f.astype(bf16), b0_f)     # (V, 4H)
    table0_r = matmul_bias(embed, wih0_r.astype(bf16), b0_r)     # (V, 4H)
    gx0_f = jnp.take(table0_f, ids_tb, axis=0)            # (T, B, 4H) gather glue
    gx0_r = jnp.take(table0_r, ids_tb, axis=0)

    # ---- layer 0 fused bidirectional recurrence -----------------------------
    whh0 = jnp.stack([whh0_f, whh0_r], axis=0).astype(bf16)      # (2, H, 4H)
    y0_f, y0_r, h0, c0 = bidir_lstm_layer(gx0_f, gx0_r, whh0)
    # TODO(synk): training-mode inter-layer dropout (p=0.2); identity in eval.

    # ---- layer 1 input projection (consumes fwd/rev halves, no concat) ------
    y0_f2 = y0_f.reshape(T * B, H)
    y0_r2 = y0_r.reshape(T * B, H)
    gx1_f = dual_matmul_bias(y0_f2, y0_r2,
                             wih1_f[:H].astype(bf16), wih1_f[H:].astype(bf16),
                             b1_f).reshape(T, B, 4 * H)
    gx1_r = dual_matmul_bias(y0_f2, y0_r2,
                             wih1_r[:H].astype(bf16), wih1_r[H:].astype(bf16),
                             b1_r).reshape(T, B, 4 * H)

    # ---- layer 1 fused bidirectional recurrence -----------------------------
    whh1 = jnp.stack([whh1_f, whh1_r], axis=0).astype(bf16)
    y1_f, y1_r, h1, c1 = bidir_lstm_layer(gx1_f, gx1_r, whh1)

    # ---- final Linear: fwd/rev halves, lane-dense (vocab padded to 128) -----
    V_pad = ((V + 127) // 128) * 128
    fc_w, fc_b = params["fc_w"], params["fc_b"]           # (2H, V), (1, V)
    fc_wa = jnp.zeros((H, V_pad), bf16).at[:, :V].set(fc_w[:H].astype(bf16))
    fc_wb = jnp.zeros((H, V_pad), bf16).at[:, :V].set(fc_w[H:].astype(bf16))
    fc_bp = jnp.zeros((1, V_pad), jnp.float32).at[:, :V].set(fc_b)
    logits_tb = dual_matmul_bias(y1_f.reshape(T * B, H), y1_r.reshape(T * B, H),
                                 fc_wa, fc_wb, fc_bp)     # (T*B, V_pad)
    logits = logits_tb.reshape(T, B, V_pad)[:, :, :V]
    logits = jnp.transpose(logits, (1, 0, 2))             # (B, T, V) batch_first

    h_n = jnp.concatenate([h0, h1], axis=0)               # (4, B, H)
    c_n = jnp.concatenate([c0, c1], axis=0)               # (4, B, H)
    return logits, (h_n, c_n)


if __name__ == "__main__":
    VOCAB = 64
    EMBED = 64
    HIDDEN = 128
    B, T = 2, 8

    key = jax.random.PRNGKey(0)
    k_param, k_data = jax.random.split(key)
    params = init_params(k_param, VOCAB, EMBED, HIDDEN)
    x_ids = jax.random.randint(k_data, (B, T), 0, VOCAB, dtype=jnp.int32)

    logits, (h_n, c_n) = lstm_rnn_forward(params, x_ids)
    jax.block_until_ready((logits, h_n, c_n))

    assert logits.shape == (B, T, VOCAB)
    assert h_n.shape == (4, B, HIDDEN)
    assert c_n.shape == (4, B, HIDDEN)
    print("KERNEL_OK")
</pallas_src>

<mosaic_0001>
module attributes {stable_mosaic.version = 11 : i64} {
  func.func @matmul_bias_kernel(%arg0: i32, %arg1: memref<64x64xf32, #tpu.memory_space<vmem>>, %arg2: memref<64x512xbf16, #tpu.memory_space<vmem>>, %arg3: memref<1x512xf32, #tpu.memory_space<vmem>>, %arg4: memref<64x512xf32, #tpu.memory_space<vmem>>) attributes {dimension_semantics = [#tpu.dimension_semantics<parallel>], iteration_bounds = array<i64: 1>, scalar_prefetch = 0 : i64, scratch_operands = 0 : i64, tpu.core_type = #tpu.core_type<tc>, window_params = [{transform_indices = @transform_0, window_bounds = array<i64: 64, 64>}, {pipeline_mode = #tpu.pipeline_mode<synchronous>, transform_indices = @transform_1, window_bounds = array<i64: 64, 512>}, {pipeline_mode = #tpu.pipeline_mode<synchronous>, transform_indices = @transform_2, window_bounds = array<i64: 1, 512>}, {transform_indices = @transform_3, window_bounds = array<i64: 64, 512>}]} {
    %c0 = arith.constant 0 : index
    %c0_0 = arith.constant 0 : index
    %0 = vector.load %arg1[%c0, %c0_0] : memref<64x64xf32, #tpu.memory_space<vmem>>, vector<64x64xf32>
    %1 = arith.truncf %0 : vector<64x64xf32> to vector<64x64xbf16>
    %c0_1 = arith.constant 0 : index
    %c0_2 = arith.constant 0 : index
    %2 = vector.load %arg2[%c0_1, %c0_2] : memref<64x512xbf16, #tpu.memory_space<vmem>>, vector<64x512xbf16>
    %cst = arith.constant dense<0.000000e+00> : vector<64x512xf32>
    %3 = tpu.matmul %1, %2, %cst {dimension_numbers = #tpu.dot_dimension_numbers<[1], [0], [0], [1], [0, 0, 1, 1], [], []>} : vector<64x64xbf16>, vector<64x512xbf16>, vector<64x512xf32> -> vector<64x512xf32>
    %c0_3 = arith.constant 0 : index
    %c0_4 = arith.constant 0 : index
    %4 = vector.load %arg3[%c0_3, %c0_4] : memref<1x512xf32, #tpu.memory_space<vmem>>, vector<1x512xf32>
    %5 = vector.broadcast %4 : vector<1x512xf32> to vector<64x512xf32>
    %6 = arith.addf %3, %5 : vector<64x512xf32>
    %c0_5 = arith.constant 0 : index
    %c0_6 = arith.constant 0 : index
    %7 = vector.load %arg4[%c0_5, %c0_6] : memref<64x512xf32, #tpu.memory_space<vmem>>, vector<64x512xf32>
    tpu.vector_store %arg4[%c0_5, %c0_6], %6 {strides = array<i32>} : memref<64x512xf32, #tpu.memory_space<vmem>>, vector<64x512xf32>,
    return
  }
  func.func @transform_0(%arg0: i32) -> (i32, i32) {
    %c0_i32 = arith.constant 0 : i32
    %c0_i32_0 = arith.constant 0 : i32
    return %arg0, %c0_i32 : i32, i32
  }
  func.func @transform_1(%arg0: i32) -> (i32, i32) {
    %c0_i32 = arith.constant 0 : i32
    %c0_i32_0 = arith.constant 0 : i32
    %c0_i32_1 = arith.constant 0 : i32
    return %c0_i32, %c0_i32_0 : i32, i32
  }
  func.func @transform_2(%arg0: i32) -> (i32, i32) {
    %c0_i32 = arith.constant 0 : i32
    %c0_i32_0 = arith.constant 0 : i32
    %c0_i32_1 = arith.constant 0 : i32
    return %c0_i32, %c0_i32_0 : i32, i32
  }
  func.func @transform_3(%arg0: i32) -> (i32, i32) {
    %c0_i32 = arith.constant 0 : i32
    %c0_i32_0 = arith.constant 0 : i32
    return %arg0, %c0_i32 : i32, i32
  }
}

module attributes {stable_mosaic.version = 11 : i64} {
  func.func @bidir_lstm_chunk_kernel(%arg0: i32, %arg1: memref<8x2x512xf32, #tpu.memory_space<vmem>>, %arg2: memref<8x2x512xf32, #tpu.memory_space<vmem>>, %arg3: memref<2x128x512xbf16, #tpu.memory_space<vmem>>, %arg4: memref<8x2x128xf32, #tpu.memory_space<vmem>>, %arg5: memref<8x2x128xf32, #tpu.memory_space<vmem>>, %arg6: memref<2x2x128xf32, #tpu.memory_space<vmem>>, %arg7: memref<2x2x128xf32, #tpu.memory_space<vmem>>, %arg8: memref<2x2x128xf32, #tpu.memory_space<vmem>>, %arg9: memref<2x2x128xf32, #tpu.memory_space<vmem>>) attributes {dimension_semantics = [#tpu.dimension_semantics<arbitrary>], iteration_bounds = array<i64: 1>, scalar_prefetch = 0 : i64, scratch_operands = 2 : i64, tpu.core_type = #tpu.core_type<tc>, window_params = [{transform_indices = @transform_0, window_bounds = array<i64: 8, 2, 512>}, {transform_indices = @transform_1, window_bounds = array<i64: 8, 2, 512>}, {pipeline_mode = #tpu.pipeline_mode<synchronous>, transform_indices = @transform_2, window_bounds = array<i64: 2, 128, 512>}, {transform_indices = @transform_3, window_bounds = array<i64: 8, 2, 128>}, {transform_indices = @transform_4, window_bounds = array<i64: 8, 2, 128>}, {pipeline_mode = #tpu.pipeline_mode<synchronous>, transform_indices = @transform_5, window_bounds = array<i64: 2, 2, 128>}, {pipeline_mode = #tpu.pipeline_mode<synchronous>, transform_indices = @transform_6, window_bounds = array<i64: 2, 2, 128>}]} {
    %c0_i32 = arith.constant 0 : i32
    %0 = arith.cmpi eq, %arg0, %c0_i32 : i32
    %1 = arith.extui %0 : i1 to i32
    %c0_i32_0 = arith.constant 0 : i32
    %2 = arith.cmpi ne, %1, %c0_i32_0 : i32
    scf.if %2 {
      %cst_236 = arith.constant 0.000000e+00 : f32
      %447 = vector.broadcast %cst_236 : f32 to vector<2x2x128xf32>
      %c0_237 = arith.constant 0 : index
      %c0_238 = arith.constant 0 : index
      %c0_239 = arith.constant 0 : index
      %448 = vector.load %arg8[%c0_237, %c0_238, %c0_239] : memref<2x2x128xf32, #tpu.memory_space<vmem>>, vector<2x2x128xf32>
      tpu.vector_store %arg8[%c0_237, %c0_238, %c0_239], %447 {strides = array<i32>} : memref<2x2x128xf32, #tpu.memory_space<vmem>>, vector<2x2x128xf32>,
      %cst_240 = arith.constant 0.000000e+00 : f32
      %449 = vector.broadcast %cst_240 : f32 to vector<2x2x128xf32>
      %c0_241 = arith.constant 0 : index
      %c0_242 = arith.constant 0 : index
      %c0_243 = arith.constant 0 : index
      %450 = vector.load %arg9[%c0_241, %c0_242, %c0_243] : memref<2x2x128xf32, #tpu.memory_space<vmem>>, vector<2x2x128xf32>
      tpu.vector_store %arg9[%c0_241, %c0_242, %c0_243], %449 {strides = array<i32>} : memref<2x2x128xf32, #tpu.memory_space<vmem>>, vector<2x2x128xf32>,
    } else {
    }
    %c0_i32_1 = arith.constant 0 : i32
    %c7_i32 = arith.constant 7 : i32
    %3 = arith.subi %c7_i32, %c0_i32_1 : i32
    %c0 = arith.constant 0 : index
    %c0_2 = arith.constant 0 : index
    %c0_3 = arith.constant 0 : index
    %4 = vector.load %arg8[%c0, %c0_2, %c0_3] : memref<2x2x128xf32, #tpu.memory_space<vmem>>, vector<2x2x128xf32>
    %5 = arith.truncf %4 : vector<2x2x128xf32> to vector<2x2x128xbf16>
    %c0_4 = arith.constant 0 : index
    %c0_5 = arith.constant 0 : index
    %c0_6 = arith.constant 0 : index
    %6 = vector.load %arg3[%c0_4, %c0_5, %c0_6] : memref<2x128x512xbf16, #tpu.memory_space<vmem>>, vector<2x128x512xbf16>
    "tpu.trace_start"() <{level = 10 : i32, message = "dbh,dhg->dbg"}> : () -> ()
    %cst = arith.constant dense<0.000000e+00> : vector<2x2x512xf32>
    %7 = tpu.matmul %5, %6, %cst {dimension_numbers = #tpu.dot_dimension_numbers<[2], [1], [1], [2], [0, 0, 0, 1, 1, 2], [0], [0]>} : vector<2x2x128xbf16>, vector<2x128x512xbf16>, vector<2x2x512xf32> -> vector<2x2x512xf32>
    "tpu.trace_stop"() : () -> ()
    %8 = arith.index_cast %c0_i32_1 : i32 to index
    %c0_7 = arith.constant 0 : index
    %c0_8 = arith.constant 0 : index
    %9 = vector.load %arg1[%8, %c0_7, %c0_8] : memref<8x2x512xf32, #tpu.memory_space<vmem>>, vector<1x2x512xf32>
    %10 = vector.shape_cast %9 : vector<1x2x512xf32> to vector<2x512xf32>
    %11 = arith.index_cast %3 : i32 to index
    %c0_9 = arith.constant 0 : index
    %c0_10 = arith.constant 0 : index
    %12 = vector.load %arg2[%11, %c0_9, %c0_10] : memref<8x2x512xf32, #tpu.memory_space<vmem>>, vector<1x2x512xf32>
    %13 = vector.shape_cast %12 : vector<1x2x512xf32> to vector<2x512xf32>
    %14 = vector.shape_cast %10 : vector<2x512xf32> to vector<1x2x512xf32>
    %15 = vector.shape_cast %13 : vector<2x512xf32> to vector<1x2x512xf32>
    %16 = tpu.concatenate %14, %15 in 0 : vector<1x2x512xf32>, vector<1x2x512xf32> -> vector<2x2x512xf32>
    %17 = arith.addf %16, %7 : vector<2x2x512xf32>
    %18 = vector.extract_strided_slice %17 {offsets = [0, 0, 0], sizes = [2, 2, 128], strides = [1, 1, 1]} : vector<2x2x512xf32> to vector<2x2x128xf32>
    %19 = arith.negf %18 : vector<2x2x128xf32>
    %20 = math.exp %19 : vector<2x2x128xf32>
    %cst_11 = arith.constant 1.000000e+00 : f32
    %21 = vector.broadcast %cst_11 : f32 to vector<2x2x128xf32>
    %22 = arith.addf %21, %20 : vector<2x2x128xf32>
    %23 = arith.divf %21, %22 : vector<2x2x128xf32>
    %24 = vector.extract_strided_slice %17 {offsets = [0, 0, 128], sizes = [2, 2, 128], strides = [1, 1, 1]} : vector<2x2x512xf32> to vector<2x2x128xf32>
    %25 = arith.negf %24 : vector<2x2x128xf32>
    %26 = math.exp %25 : vector<2x2x128xf32>
    %cst_12 = arith.constant 1.000000e+00 : f32
    %27 = vector.broadcast %cst_12 : f32 to vector<2x2x128xf32>
    %28 = arith.addf %27, %26 : vector<2x2x128xf32>
    %29 = arith.divf %27, %28 : vector<2x2x128xf32>
    %30 = vector.extract_strided_slice %17 {offsets = [0, 0, 256], sizes = [2, 2, 128], strides = [1, 1, 1]} : vector<2x2x512xf32> to vector<2x2x128xf32>
    %31 = math.tanh %30 : vector<2x2x128xf32>
    %32 = vector.extract_strided_slice %17 {offsets = [0, 0, 384], sizes = [2, 2, 128], strides = [1, 1, 1]} : vector<2x2x512xf32> to vector<2x2x128xf32>
    %33 = arith.negf %32 : vector<2x2x128xf32>
    %34 = math.exp %33 : vector<2x2x128xf32>
    %cst_13 = arith.constant 1.000000e+00 : f32
    %35 = vector.broadcast %cst_13 : f32 to vector<2x2x128xf32>
    %36 = arith.addf %35, %34 : vector<2x2x128xf32>
    %37 = arith.divf %35, %36 : vector<2x2x128xf32>
    %c0_14 = arith.constant 0 : index
    %c0_15 = arith.constant 0 : index
    %c0_16 = arith.constant 0 : index
    %38 = vector.load %arg9[%c0_14, %c0_15, %c0_16] : memref<2x2x128xf32, #tpu.memory_space<vmem>>, vector<2x2x128xf32>
    %39 = arith.mulf %29, %38 : vector<2x2x128xf32>
    %40 = arith.mulf %23, %31 : vector<2x2x128xf32>
    %41 = arith.addf %39, %40 : vector<2x2x128xf32>
    %42 = math.tanh %41 : vector<2x2x128xf32>
    %43 = arith.mulf %37, %42 : vector<2x2x128xf32>
    %c0_17 = arith.constant 0 : index
    %c0_18 = arith.constant 0 : index
    %c0_19 = arith.constant 0 : index
    %44 = vector.load %arg9[%c0_17, %c0_18, %c0_19] : memref<2x2x128xf32, #tpu.memory_space<vmem>>, vector<2x2x128xf32>
    tpu.vector_store %arg9[%c0_17, %c0_18, %c0_19], %41 {strides = array<i32>} : memref<2x2x128xf32, #tpu.memory_space<vmem>>, vector<2x2x128xf32>,
    %c0_20 = arith.constant 0 : index
    %c0_21 = arith.constant 0 : index
    %c0_22 = arith.constant 0 : index
    %45 = vector.load %arg8[%c0_20, %c0_21, %c0_22] : memref<2x2x128xf32, #tpu.memory_space<vmem>>, vector<2x2x128xf32>
    tpu.vector_store %arg8[%c0_20, %c0_21, %c0_22], %43 {strides = array<i32>} : memref<2x2x128xf32, #tpu.memory_space<vmem>>, vector<2x2x128xf32>,
    %46 = vector.extract_strided_slice %43 {offsets = [0, 0, 0], sizes = [1, 2, 128], strides = [1, 1, 1]} : vector<2x2x128xf32> to vector<1x2x128xf32>
    %47 = vector.shape_cast %46 : vector<1x2x128xf32> to vector<2x128xf32>
    %48 = arith.index_cast %c0_i32_1 : i32 to index
    %c0_23 = arith.constant 0 : index
    %c0_24 = arith.constant 0 : index
    %49 = vector.load %arg4[%48, %c0_23, %c0_24] : memref<8x2x128xf32, #tpu.memory_space<vmem>>, vector<1x2x128xf32>
    %50 = vector.shape_cast %49 : vector<1x2x128xf32> to vector<2x128xf32>
    %51 = vector.shape_cast %47 : vector<2x128xf32> to vector<1x2x128xf32>
    tpu.vector_store %arg4[%48, %c0_23, %c0_24], %51 {strides = array<i32>} : memref<8x2x128xf32, #tpu.memory_space<vmem>>, vector<1x2x128xf32>,
    %52 = vector.extract_strided_slice %43 {offsets = [1, 0, 0], sizes = [1, 2, 128], strides = [1, 1, 1]} : vector<2x2x128xf32> to vector<1x2x128xf32>
    %53 = vector.shape_cast %52 : vector<1x2x128xf32> to vector<2x128xf32>
    %54 = arith.index_cast %3 : i32 to index
    %c0_25 = arith.constant 0 : index
    %c0_26 = arith.constant 0 : index
    %55 = vector.load %arg5[%54, %c0_25, %c0_26] : memref<8x2x128xf32, #tpu.memory_space<vmem>>, vector<1x2x128xf32>
    %56 = vector.shape_cast %55 : vector<1x2x128xf32> to vector<2x128xf32>
    %57 = vector.shape_cast %53 : vector<2x128xf32> to vector<1x2x128xf32>
    tpu.vector_store %arg5[%54, %c0_25, %c0_26], %57 {strides = array<i32>} : memref<8x2x128xf32, #tpu.memory_space<vmem>>, vector<1x2x128xf32>,
    %c1_i32 = arith.constant 1 : i32
    %c7_i32_27 = arith.constant 7 : i32
    %58 = arith.subi %c7_i32_27, %c1_i32 : i32
    %c0_28 = arith.constant 0 : index
    %c0_29 = arith.constant 0 : index
    %c0_30 = arith.constant 0 : index
    %59 = vector.load %arg8[%c0_28, %c0_29, %c0_30] : memref<2x2x128xf32, #tpu.memory_space<vmem>>, vector<2x2x128xf32>
    %60 = arith.truncf %59 : vector<2x2x128xf32> to vector<2x2x128xbf16>
    %c0_31 = arith.constant 0 : index
    %c0_32 = arith.constant 0 : index
    %c0_33 = arith.constant 0 : index
    %61 = vector.load %arg3[%c0_31, %c0_32, %c0_33] : memref<2x128x512xbf16, #tpu.memory_space<vmem>>, vector<2x128x512xbf16>
    "tpu.trace_start"() <{level = 10 : i32, message = "dbh,dhg->dbg"}> : () -> ()
    %cst_34 = arith.constant dense<0.000000e+00> : vector<2x2x512xf32>
    %62 = tpu.matmul %60, %61, %cst_34 {dimension_numbers = #tpu.dot_dimension_numbers<[2], [1], [1], [2], [0, 0, 0, 1, 1, 2], [0], [0]>} : vector<2x2x128xbf16>, vector<2x128x512xbf16>, vector<2x2x512xf32> -> vector<2x2x512xf32>
    "tpu.trace_stop"() : () -> ()
    %63 = arith.index_cast %c1_i32 : i32 to index
    %c0_35 = arith.constant 0 : index
    %c0_36 = arith.constant 0 : index
    %64 = vector.load %arg1[%63, %c0_35, %c0_36] : memref<8x2x512xf32, #tpu.memory_space<vmem>>, vector<1x2x512xf32>
    %65 = vector.shape_cast %64 : vector<1x2x512xf32> to vector<2x512xf32>
    %66 = arith.index_cast %58 : i32 to index
    %c0_37 = arith.constant 0 : index
    %c0_38 = arith.constant 0 : index
    %67 = vector.load %arg2[%66, %c0_37, %c0_38] : memref<8x2x512xf32, #tpu.memory_space<vmem>>, vector<1x2x512xf32>
    %68 = vector.shape_cast %67 : vector<1x2x512xf32> to vector<2x512xf32>
    %69 = vector.shape_cast %65 : vector<2x512xf32> to vector<1x2x512xf32>
    %70 = vector.shape_cast %68 : vector<2x512xf32> to vector<1x2x512xf32>
    %71 = tpu.concatenate %69, %70 in 0 : vector<1x2x512xf32>, vector<1x2x512xf32> -> vector<2x2x512xf32>
    %72 = arith.addf %71, %62 : vector<2x2x512xf32>
    %73 = vector.extract_strided_slice %72 {offsets = [0, 0, 0], sizes = [2, 2, 128], strides = [1, 1, 1]} : vector<2x2x512xf32> to vector<2x2x128xf32>
    %74 = arith.negf %73 : vector<2x2x128xf32>
    %75 = math.exp %74 : vector<2x2x128xf32>
    %cst_39 = arith.constant 1.000000e+00 : f32
    %76 = vector.broadcast %cst_39 : f32 to vector<2x2x128xf32>
    %77 = arith.addf %76, %75 : vector<2x2x128xf32>
    %78 = arith.divf %76, %77 : vector<2x2x128xf32>
    %79 = vector.extract_strided_slice %72 {offsets = [0, 0, 128], sizes = [2, 2, 128], strides = [1, 1, 1]} : vector<2x2x512xf32> to vector<2x2x128xf32>
    %80 = arith.negf %79 : vector<2x2x128xf32>
    %81 = math.exp %80 : vector<2x2x128xf32>
    %cst_40 = arith.constant 1.000000e+00 : f32
    %82 = vector.broadcast %cst_40 : f32 to vector<2x2x128xf32>
    %83 = arith.addf %82, %81 : vector<2x2x128xf32>
    %84 = arith.divf %82, %83 : vector<2x2x128xf32>
    %85 = vector.extract_strided_slice %72 {offsets = [0, 0, 256], sizes = [2, 2, 128], strides = [1, 1, 1]} : vector<2x2x512xf32> to vector<2x2x128xf32>
    %86 = math.tanh %85 : vector<2x2x128xf32>
    %87 = vector.extract_strided_slice %72 {offsets = [0, 0, 384], sizes = [2, 2, 128], strides = [1, 1, 1]} : vector<2x2x512xf32> to vector<2x2x128xf32>
    %88 = arith.negf %87 : vector<2x2x128xf32>
    %89 = math.exp %88 : vector<2x2x128xf32>
    %cst_41 = arith.constant 1.000000e+00 : f32
    %90 = vector.broadcast %cst_41 : f32 to vector<2x2x128xf32>
    %91 = arith.addf %90, %89 : vector<2x2x128xf32>
    %92 = arith.divf %90, %91 : vector<2x2x128xf32>
    %c0_42 = arith.constant 0 : index
    %c0_43 = arith.constant 0 : index
    %c0_44 = arith.constant 0 : index
    %93 = vector.load %arg9[%c0_42, %c0_43, %c0_44] : memref<2x2x128xf32, #tpu.memory_space<vmem>>, vector<2x2x128xf32>
    %94 = arith.mulf %84, %93 : vector<2x2x128xf32>
    %95 = arith.mulf %78, %86 : vector<2x2x128xf32>
    %96 = arith.addf %94, %95 : vector<2x2x128xf32>
    %97 = math.tanh %96 : vector<2x2x128xf32>
    %98 = arith.mulf %92, %97 : vector<2x2x128xf32>
    %c0_45 = arith.constant 0 : index
    %c0_46 = arith.constant 0 : index
    %c0_47 = arith.constant 0 : index
    %99 = vector.load %arg9[%c0_45, %c0_46, %c0_47] : memref<2x2x128xf32, #tpu.memory_space<vmem>>, vector<2x2x128xf32>
    tpu.vector_store %arg9[%c0_45, %c0_46, %c0_47], %96 {strides = array<i32>} : memref<2x2x128xf32, #tpu.memory_space<vmem>>, vector<2x2x128xf32>,
    %c0_48 = arith.constant 0 : index
    %c0_49 = arith.constant 0 : index
    %c0_50 = arith.constant 0 : index
    %100 = vector.load %arg8[%c0_48, %c0_49, %c0_50] : memref<2x2x128xf32, #tpu.memory_space<vmem>>, vector<2x2x128xf32>
    tpu.vector_store %arg8[%c0_48, %c0_49, %c0_50], %98 {strides = array<i32>} : memref<2x2x128xf32, #tpu.memory_space<vmem>>, vector<2x2x128xf32>,
    %101 = vector.extract_strided_slice %98 {offsets = [0, 0, 0], sizes = [1, 2, 128], strides = [1, 1, 1]} : vector<2x2x128xf32> to vector<1x2x128xf32>
    %102 = vector.shape_cast %101 : vector<1x2x128xf32> to vector<2x128xf32>
    %103 = arith.index_cast %c1_i32 : i32 to index
    %c0_51 = arith.constant 0 : index
    %c0_52 = arith.constant 0 : index
    %104 = vector.load %arg4[%103, %c0_51, %c0_52] : memref<8x2x128xf32, #tpu.memory_space<vmem>>, vector<1x2x128xf32>
    %105 = vector.shape_cast %104 : vector<1x2x128xf32> to vector<2x128xf32>
    %106 = vector.shape_cast %102 : vector<2x128xf32> to vector<1x2x128xf32>
    tpu.vector_store %arg4[%103, %c0_51, %c0_52], %106 {strides = array<i32>} : memref<8x2x128xf32, #tpu.memory_space<vmem>>, vector<1x2x128xf32>,
    %107 = vector.extract_strided_slice %98 {offsets = [1, 0, 0], sizes = [1, 2, 128], strides = [1, 1, 1]} : vector<2x2x128xf32> to vector<1x2x128xf32>
    %108 = vector.shape_cast %107 : vector<1x2x128xf32> to vector<2x128xf32>
    %109 = arith.index_cast %58 : i32 to index
    %c0_53 = arith.constant 0 : index
    %c0_54 = arith.constant 0 : index
    %110 = vector.load %arg5[%109, %c0_53, %c0_54] : memref<8x2x128xf32, #tpu.memory_space<vmem>>, vector<1x2x128xf32>
    %111 = vector.shape_cast %110 : vector<1x2x128xf32> to vector<2x128xf32>
    %112 = vector.shape_cast %108 : vector<2x128xf32> to vector<1x2x128xf32>
    tpu.vector_store %arg5[%109, %c0_53, %c0_54], %112 {strides = array<i32>} : memref<8x2x128xf32, #tpu.memory_space<vmem>>, vector<1x2x128xf32>,
    %c2_i32 = arith.constant 2 : i32
    %c7_i32_55 = arith.constant 7 : i32
    %113 = arith.subi %c7_i32_55, %c2_i32 : i32
    %c0_56 = arith.constant 0 : index
    %c0_57 = arith.constant 0 : index
    %c0_58 = arith.constant 0 : index
    %114 = vector.load %arg8[%c0_56, %c0_57, %c0_58] : memref<2x2x128xf32, #tpu.memory_space<vmem>>, vector<2x2x128xf32>
    %115 = arith.truncf %114 : vector<2x2x128xf32> to vector<2x2x128xbf16>
    %c0_59 = arith.constant 0 : index
    %c0_60 = arith.constant 0 : index
    %c0_61 = arith.constant 0 : index
    %116 = vector.load %arg3[%c0_59, %c0_60, %c0_61] : memref<2x128x512xbf16, #tpu.memory_space<vmem>>, vector<2x128x512xbf16>
    "tpu.trace_start"() <{level = 10 : i32, message = "dbh,dhg->dbg"}> : () -> ()
    %cst_62 = arith.constant dense<0.000000e+00> : vector<2x2x512xf32>
    %117 = tpu.matmul %115, %116, %cst_62 {dimension_numbers = #tpu.dot_dimension_numbers<[2], [1], [1], [2], [0, 0, 0, 1, 1, 2], [0], [0]>} : vector<2x2x128xbf16>, vector<2x128x512xbf16>, vector<2x2x512xf32> -> vector<2x2x512xf32>
    "tpu.trace_stop"() : () -> ()
    %118 = arith.index_cast %c2_i32 : i32 to index
    %c0_63 = arith.constant 0 : index
    %c0_64 = arith.constant 0 : index
    %119 = vector.load %arg1[%118, %c0_63, %c0_64] : memref<8x2x512xf32, #tpu.memory_space<vmem>>, vector<1x2x512xf32>
    %120 = vector.shape_cast %119 : vector<1x2x512xf32> to vector<2x512xf32>
    %121 = arith.index_cast %113 : i32 to index
    %c0_65 = arith.constant 0 : index
    %c0_66 = arith.constant 0 : index
    %122 = vector.load %arg2[%121, %c0_65, %c0_66] : memref<8x2x512xf32, #tpu.memory_space<vmem>>, vector<1x2x512xf32>
    %123 = vector.shape_cast %122 : vector<1x2x512xf32> to vector<2x512xf32>
    %124 = vector.shape_cast %120 : vector<2x512xf32> to vector<1x2x512xf32>
    %125 = vector.shape_cast %123 : vector<2x512xf32> to vector<1x2x512xf32>
    %126 = tpu.concatenate %124, %125 in 0 : vector<1x2x512xf32>, vector<1x2x512xf32> -> vector<2x2x512xf32>
    %127 = arith.addf %126, %117 : vector<2x2x512xf32>
    %128 = vector.extract_strided_slice %127 {offsets = [0, 0, 0], sizes = [2, 2, 128], strides = [1, 1, 1]} : vector<2x2x512xf32> to vector<2x2x128xf32>
    %129 = arith.negf %128 : vector<2x2x128xf32>
    %130 = math.exp %129 : vector<2x2x128xf32>
    %cst_67 = arith.constant 1.000000e+00 : f32
    %131 = vector.broadcast %cst_67 : f32 to vector<2x2x128xf32>
    %132 = arith.addf %131, %130 : vector<2x2x128xf32>
    %133 = arith.divf %131, %132 : vector<2x2x128xf32>
    %134 = vector.extract_strided_slice %127 {offsets = [0, 0, 128], sizes = [2, 2, 128], strides = [1, 1, 1]} : vector<2x2x512xf32> to vector<2x2x128xf32>
    %135 = arith.negf %134 : vector<2x2x128xf32>
    %136 = math.exp %135 : vector<2x2x128xf32>
    %cst_68 = arith.constant 1.000000e+00 : f32
    %137 = vector.broadcast %cst_68 : f32 to vector<2x2x128xf32>
    %138 = arith.addf %137, %136 : vector<2x2x128xf32>
    %139 = arith.divf %137, %138 : vector<2x2x128xf32>
    %140 = vector.extract_strided_slice %127 {offsets = [0, 0, 256], sizes = [2, 2, 128], strides = [1, 1, 1]} : vector<2x2x512xf32> to vector<2x2x128xf32>
    %141 = math.tanh %140 : vector<2x2x128xf32>
    %142 = vector.extract_strided_slice %127 {offsets = [0, 0, 384], sizes = [2, 2, 128], strides = [1, 1, 1]} : vector<2x2x512xf32> to vector<2x2x128xf32>
    %143 = arith.negf %142 : vector<2x2x128xf32>
    %144 = math.exp %143 : vector<2x2x128xf32>
    %cst_69 = arith.constant 1.000000e+00 : f32
    %145 = vector.broadcast %cst_69 : f32 to vector<2x2x128xf32>
    %146 = arith.addf %145, %144 : vector<2x2x128xf32>
    %147 = arith.divf %145, %146 : vector<2x2x128xf32>
    %c0_70 = arith.constant 0 : index
    %c0_71 = arith.constant 0 : index
    %c0_72 = arith.constant 0 : index
    %148 = vector.load %arg9[%c0_70, %c0_71, %c0_72] : memref<2x2x128xf32, #tpu.memory_space<vmem>>, vector<2x2x128xf32>
    %149 = arith.mulf %139, %148 : vector<2x2x128xf32>
    %150 = arith.mulf %133, %141 : vector<2x2x128xf32>
    %151 = arith.addf %149, %150 : vector<2x2x128xf32>
    %152 = math.tanh %151 : vector<2x2x128xf32>
    %153 = arith.mulf %147, %152 : vector<2x2x128xf32>
    %c0_73 = arith.constant 0 : index
    %c0_74 = arith.constant 0 : index
    %c0_75 = arith.constant 0 : index
    %154 = vector.load %arg9[%c0_73, %c0_74, %c0_75] : memref<2x2x128xf32, #tpu.memory_space<vmem>>, vector<2x2x128xf32>
    tpu.vector_store %arg9[%c0_73, %c0_74, %c0_75], %151 {strides = array<i32>} : memref<2x2x128xf32, #tpu.memory_space<vmem>>, vector<2x2x128xf32>,
    %c0_76 = arith.constant 0 : index
    %c0_77 = arith.constant 0 : index
    %c0_78 = arith.constant 0 : index
    %155 = vector.load %arg8[%c0_76, %c0_77, %c0_78] : memref<2x2x128xf32, #tpu.memory_space<vmem>>, vector<2x2x128xf32>
    tpu.vector_store %arg8[%c0_76, %c0_77, %c0_78], %153 {strides = array<i32>} : memref<2x2x128xf32, #tpu.memory_space<vmem>>, vector<2x2x128xf32>,
    %156 = vector.extract_strided_slice %153 {offsets = [0, 0, 0], sizes = [1, 2, 128], strides = [1, 1, 1]} : vector<2x2x128xf32> to vector<1x2x128xf32>
    %157 = vector.shape_cast %156 : vector<1x2x128xf32> to vector<2x128xf32>
    %158 = arith.index_cast %c2_i32 : i32 to index
    %c0_79 = arith.constant 0 : index
    %c0_80 = arith.constant 0 : index
    %159 = vector.load %arg4[%158, %c0_79, %c0_80] : memref<8x2x128xf32, #tpu.memory_space<vmem>>, vector<1x2x128xf32>
    %160 = vector.shape_cast %159 : vector<1x2x128xf32> to vector<2x128xf32>
    %161 = vector.shape_cast %157 : vector<2x128xf32> to vector<1x2x128xf32>
    tpu.vector_store %arg4[%158, %c0_79, %c0_80], %161 {strides = array<i32>} : memref<8x2x128xf32, #tpu.memory_space<vmem>>, vector<1x2x128xf32>,
    %162 = vector.extract_strided_slice %153 {offsets = [1, 0, 0], sizes = [1, 2, 128], strides = [1, 1, 1]} : vector<2x2x128xf32> to vector<1x2x128xf32>
    %163 = vector.shape_cast %162 : vector<1x2x128xf32> to vector<2x128xf32>
    %164 = arith.index_cast %113 : i32 to index
    %c0_81 = arith.constant 0 : index
    %c0_82 = arith.constant 0 : index
    %165 = vector.load %arg5[%164, %c0_81, %c0_82] : memref<8x2x128xf32, #tpu.memory_space<vmem>>, vector<1x2x128xf32>
    %166 = vector.shape_cast %165 : vector<1x2x128xf32> to vector<2x128xf32>
    %167 = vector.shape_cast %163 : vector<2x128xf32> to vector<1x2x128xf32>
    tpu.vector_store %arg5[%164, %c0_81, %c0_82], %167 {strides = array<i32>} : memref<8x2x128xf32, #tpu.memory_space<vmem>>, vector<1x2x128xf32>,
    %c3_i32 = arith.constant 3 : i32
    %c7_i32_83 = arith.constant 7 : i32
    %168 = arith.subi %c7_i32_83, %c3_i32 : i32
    %c0_84 = arith.constant 0 : index
    %c0_85 = arith.constant 0 : index
    %c0_86 = arith.constant 0 : index
    %169 = vector.load %arg8[%c0_84, %c0_85, %c0_86] : memref<2x2x128xf32, #tpu.memory_space<vmem>>, vector<2x2x128xf32>
    %170 = arith.truncf %169 : vector<2x2x128xf32> to vector<2x2x128xbf16>
    %c0_87 = arith.constant 0 : index
    %c0_88 = arith.constant 0 : index
    %c0_89 = arith.constant 0 : index
    %171 = vector.load %arg3[%c0_87, %c0_88, %c0_89] : memref<2x128x512xbf16, #tpu.memory_space<vmem>>, vector<2x128x512xbf16>
    "tpu.trace_start"() <{level = 10 : i32, message = "dbh,dhg->dbg"}> : () -> ()
    %cst_90 = arith.constant dense<0.000000e+00> : vector<2x2x512xf32>
    %172 = tpu.matmul %170, %171, %cst_90 {dimension_numbers = #tpu.dot_dimension_numbers<[2], [1], [1], [2], [0, 0, 0, 1, 1, 2], [0], [0]>} : vector<2x2x128xbf16>, vector<2x128x512xbf16>, vector<2x2x512xf32> -> vector<2x2x512xf32>
    "tpu.trace_stop"() : () -> ()
    %173 = arith.index_cast %c3_i32 : i32 to index
    %c0_91 = arith.constant 0 : index
    %c0_92 = arith.constant 0 : index
    %174 = vector.load %arg1[%173, %c0_91, %c0_92] : memref<8x2x512xf32, #tpu.memory_space<vmem>>, vector<1x2x512xf32>
    %175 = vector.shape_cast %174 : vector<1x2x512xf32> to vector<2x512xf32>
    %176 = arith.index_cast %168 : i32 to index
    %c0_93 = arith.constant 0 : index
    %c0_94 = arith.constant 0 : index
    %177 = vector.load %arg2[%176, %c0_93, %c0_94] : memref<8x2x512xf32, #tpu.memory_space<vmem>>, vector<1x2x512xf32>
    %178 = vector.shape_cast %177 : vector<1x2x512xf32> to vector<2x512xf32>
    %179 = vector.shape_cast %175 : vector<2x512xf32> to vector<1x2x512xf32>
    %180 = vector.shape_cast %178 : vector<2x512xf32> to vector<1x2x512xf32>
    %181 = tpu.concatenate %179, %180 in 0 : vector<1x2x512xf32>, vector<1x2x512xf32> -> vector<2x2x512xf32>
    %182 = arith.addf %181, %172 : vector<2x2x512xf32>
    %183 = vector.extract_strided_slice %182 {offsets = [0, 0, 0], sizes = [2, 2, 128], strides = [1, 1, 1]} : vector<2x2x512xf32> to vector<2x2x128xf32>
    %184 = arith.negf %183 : vector<2x2x128xf32>
    %185 = math.exp %184 : vector<2x2x128xf32>
    %cst_95 = arith.constant 1.000000e+00 : f32
    %186 = vector.broadcast %cst_95 : f32 to vector<2x2x128xf32>
    %187 = arith.addf %186, %185 : vector<2x2x128xf32>
    %188 = arith.divf %186, %187 : vector<2x2x128xf32>
    %189 = vector.extract_strided_slice %182 {offsets = [0, 0, 128], sizes = [2, 2, 128], strides = [1, 1, 1]} : vector<2x2x512xf32> to vector<2x2x128xf32>
    %190 = arith.negf %189 : vector<2x2x128xf32>
    %191 = math.exp %190 : vector<2x2x128xf32>
    %cst_96 = arith.constant 1.000000e+00 : f32
    %192 = vector.broadcast %cst_96 : f32 to vector<2x2x128xf32>
    %193 = arith.addf %192, %191 : vector<2x2x128xf32>
    %194 = arith.divf %192, %193 : vector<2x2x128xf32>
    %195 = vector.extract_strided_slice %182 {offsets = [0, 0, 256], sizes = [2, 2, 128], strides = [1, 1, 1]} : vector<2x2x512xf32> to vector<2x2x128xf32>
    %196 = math.tanh %195 : vector<2x2x128xf32>
    %197 = vector.extract_strided_slice %182 {offsets = [0, 0, 384], sizes = [2, 2, 128], strides = [1, 1, 1]} : vector<2x2x512xf32> to vector<2x2x128xf32>
    %198 = arith.negf %197 : vector<2x2x128xf32>
    %199 = math.exp %198 : vector<2x2x128xf32>
    %cst_97 = arith.constant 1.000000e+00 : f32
    %200 = vector.broadcast %cst_97 : f32 to vector<2x2x128xf32>
    %201 = arith.addf %200, %199 : vector<2x2x128xf32>
    %202 = arith.divf %200, %201 : vector<2x2x128xf32>
    %c0_98 = arith.constant 0 : index
    %c0_99 = arith.constant 0 : index
    %c0_100 = arith.constant 0 : index
    %203 = vector.load %arg9[%c0_98, %c0_99, %c0_100] : memref<2x2x128xf32, #tpu.memory_space<vmem>>, vector<2x2x128xf32>
    %204 = arith.mulf %194, %203 : vector<2x2x128xf32>
    %205 = arith.mulf %188, %196 : vector<2x2x128xf32>
    %206 = arith.addf %204, %205 : vector<2x2x128xf32>
    %207 = math.tanh %206 : vector<2x2x128xf32>
    %208 = arith.mulf %202, %207 : vector<2x2x128xf32>
    %c0_101 = arith.constant 0 : index
    %c0_102 = arith.constant 0 : index
    %c0_103 = arith.constant 0 : index
    %209 = vector.load %arg9[%c0_101, %c0_102, %c0_103] : memref<2x2x128xf32, #tpu.memory_space<vmem>>, vector<2x2x128xf32>
    tpu.vector_store %arg9[%c0_101, %c0_102, %c0_103], %206 {strides = array<i32>} : memref<2x2x128xf32, #tpu.memory_space<vmem>>, vector<2x2x128xf32>,
    %c0_104 = arith.constant 0 : index
    %c0_105 = arith.constant 0 : index
    %c0_106 = arith.constant 0 : index
    %210 = vector.load %arg8[%c0_104, %c0_105, %c0_106] : memref<2x2x128xf32, #tpu.memory_space<vmem>>, vector<2x2x128xf32>
    tpu.vector_store %arg8[%c0_104, %c0_105, %c0_106], %208 {strides = array<i32>} : memref<2x2x128xf32, #tpu.memory_space<vmem>>, vector<2x2x128xf32>,
    %211 = vector.extract_strided_slice %208 {offsets = [0, 0, 0], sizes = [1, 2, 128], strides = [1, 1, 1]} : vector<2x2x128xf32> to vector<1x2x128xf32>
    %212 = vector.shape_cast %211 : vector<1x2x128xf32> to vector<2x128xf32>
    %213 = arith.index_cast %c3_i32 : i32 to index
    %c0_107 = arith.constant 0 : index
    %c0_108 = arith.constant 0 : index
    %214 = vector.load %arg4[%213, %c0_107, %c0_108] : memref<8x2x128xf32, #tpu.memory_space<vmem>>, vector<1x2x128xf32>
    %215 = vector.shape_cast %214 : vector<1x2x128xf32> to vector<2x128xf32>
    %216 = vector.shape_cast %212 : vector<2x128xf32> to vector<1x2x128xf32>
    tpu.vector_store %arg4[%213, %c0_107, %c0_108], %216 {strides = array<i32>} : memref<8x2x128xf32, #tpu.memory_space<vmem>>, vector<1x2x128xf32>,
    %217 = vector.extract_strided_slice %208 {offsets = [1, 0, 0], sizes = [1, 2, 128], strides = [1, 1, 1]} : vector<2x2x128xf32> to vector<1x2x128xf32>
    %218 = vector.shape_cast %217 : vector<1x2x128xf32> to vector<2x128xf32>
    %219 = arith.index_cast %168 : i32 to index
    %c0_109 = arith.constant 0 : index
    %c0_110 = arith.constant 0 : index
    %220 = vector.load %arg5[%219, %c0_109, %c0_110] : memref<8x2x128xf32, #tpu.memory_space<vmem>>, vector<1x2x128xf32>
    %221 = vector.shape_cast %220 : vector<1x2x128xf32> to vector<2x128xf32>
    %222 = vector.shape_cast %218 : vector<2x128xf32> to vector<1x2x128xf32>
    tpu.vector_store %arg5[%219, %c0_109, %c0_110], %222 {strides = array<i32>} : memref<8x2x128xf32, #tpu.memory_space<vmem>>, vector<1x2x128xf32>,
    %c4_i32 = arith.constant 4 : i32
    %c7_i32_111 = arith.constant 7 : i32
    %223 = arith.subi %c7_i32_111, %c4_i32 : i32
    %c0_112 = arith.constant 0 : index
    %c0_113 = arith.constant 0 : index
    %c0_114 = arith.constant 0 : index
    %224 = vector.load %arg8[%c0_112, %c0_113, %c0_114] : memref<2x2x128xf32, #tpu.memory_space<vmem>>, vector<2x2x128xf32>
    %225 = arith.truncf %224 : vector<2x2x128xf32> to vector<2x2x128xbf16>
    %c0_115 = arith.constant 0 : index
    %c0_116 = arith.constant 0 : index
    %c0_117 = arith.constant 0 : index
    %226 = vector.load %arg3[%c0_115, %c0_116, %c0_117] : memref<2x128x512xbf16, #tpu.memory_space<vmem>>, vector<2x128x512xbf16>
    "tpu.trace_start"() <{level = 10 : i32, message = "dbh,dhg->dbg"}> : () -> ()
    %cst_118 = arith.constant dense<0.000000e+00> : vector<2x2x512xf32>
    %227 = tpu.matmul %225, %226, %cst_118 {dimension_numbers = #tpu.dot_dimension_numbers<[2], [1], [1], [2], [0, 0, 0, 1, 1, 2], [0], [0]>} : vector<2x2x128xbf16>, vector<2x128x512xbf16>, vector<2x2x512xf32> -> vector<2x2x512xf32>
    "tpu.trace_stop"() : () -> ()
    %228 = arith.index_cast %c4_i32 : i32 to index
    %c0_119 = arith.constant 0 : index
    %c0_120 = arith.constant 0 : index
    %229 = vector.load %arg1[%228, %c0_119, %c0_120] : memref<8x2x512xf32, #tpu.memory_space<vmem>>, vector<1x2x512xf32>
    %230 = vector.shape_cast %229 : vector<1x2x512xf32> to vector<2x512xf32>
    %231 = arith.index_cast %223 : i32 to index
    %c0_121 = arith.constant 0 : index
    %c0_122 = arith.constant 0 : index
    %232 = vector.load %arg2[%231, %c0_121, %c0_122] : memref<8x2x512xf32, #tpu.memory_space<vmem>>, vector<1x2x512xf32>
    %233 = vector.shape_cast %232 : vector<1x2x512xf32> to vector<2x512xf32>
    %234 = vector.shape_cast %230 : vector<2x512xf32> to vector<1x2x512xf32>
    %235 = vector.shape_cast %233 : vector<2x512xf32> to vector<1x2x512xf32>
    %236 = tpu.concatenate %234, %235 in 0 : vector<1x2x512xf32>, vector<1x2x512xf32> -> vector<2x2x512xf32>
    %237 = arith.addf %236, %227 : vector<2x2x512xf32>
    %238 = vector.extract_strided_slice %237 {offsets = [0, 0, 0], sizes = [2, 2, 128], strides = [1, 1, 1]} : vector<2x2x512xf32> to vector<2x2x128xf32>
    %239 = arith.negf %238 : vector<2x2x128xf32>
    %240 = math.exp %239 : vector<2x2x128xf32>
    %cst_123 = arith.constant 1.000000e+00 : f32
    %241 = vector.broadcast %cst_123 : f32 to vector<2x2x128xf32>
    %242 = arith.addf %241, %240 : vector<2x2x128xf32>
    %243 = arith.divf %241, %242 : vector<2x2x128xf32>
    %244 = vector.extract_strided_slice %237 {offsets = [0, 0, 128], sizes = [2, 2, 128], strides = [1, 1, 1]} : vector<2x2x512xf32> to vector<2x2x128xf32>
    %245 = arith.negf %244 : vector<2x2x128xf32>
    %246 = math.exp %245 : vector<2x2x128xf32>
    %cst_124 = arith.constant 1.000000e+00 : f32
    %247 = vector.broadcast %cst_124 : f32 to vector<2x2x128xf32>
    %248 = arith.addf %247, %246 : vector<2x2x128xf32>
    %249 = arith.divf %247, %248 : vector<2x2x128xf32>
    %250 = vector.extract_strided_slice %237 {offsets = [0, 0, 256], sizes = [2, 2, 128], strides = [1, 1, 1]} : vector<2x2x512xf32> to vector<2x2x128xf32>
    %251 = math.tanh %250 : vector<2x2x128xf32>
    %252 = vector.extract_strided_slice %237 {offsets = [0, 0, 384], sizes = [2, 2, 128], strides = [1, 1, 1]} : vector<2x2x512xf32> to vector<2x2x128xf32>
    %253 = arith.negf %252 : vector<2x2x128xf32>
    %254 = math.exp %253 : vector<2x2x128xf32>
    %cst_125 = arith.constant 1.000000e+00 : f32
    %255 = vector.broadcast %cst_125 : f32 to vector<2x2x128xf32>
    %256 = arith.addf %255, %254 : vector<2x2x128xf32>
    %257 = arith.divf %255, %256 : vector<2x2x128xf32>
    %c0_126 = arith.constant 0 : index
    %c0_127 = arith.constant 0 : index
    %c0_128 = arith.constant 0 : index
    %258 = vector.load %arg9[%c0_126, %c0_127, %c0_128] : memref<2x2x128xf32, #tpu.memory_space<vmem>>, vector<2x2x128xf32>
    %259 = arith.mulf %249, %258 : vector<2x2x128xf32>
    %260 = arith.mulf %243, %251 : vector<2x2x128xf32>
    %261 = arith.addf %259, %260 : vector<2x2x128xf32>
    %262 = math.tanh %261 : vector<2x2x128xf32>
    %263 = arith.mulf %257, %262 : vector<2x2x128xf32>
    %c0_129 = arith.constant 0 : index
    %c0_130 = arith.constant 0 : index
    %c0_131 = arith.constant 0 : index
    %264 = vector.load %arg9[%c0_129, %c0_130, %c0_131] : memref<2x2x128xf32, #tpu.memory_space<vmem>>, vector<2x2x128xf32>
    tpu.vector_store %arg9[%c0_129, %c0_130, %c0_131], %261 {strides = array<i32>} : memref<2x2x128xf32, #tpu.memory_space<vmem>>, vector<2x2x128xf32>,
    %c0_132 = arith.constant 0 : index
    %c0_133 = arith.constant 0 : index
    %c0_134 = arith.constant 0 : index
    %265 = vector.load %arg8[%c0_132, %c0_133, %c0_134] : memref<2x2x128xf32, #tpu.memory_space<vmem>>, vector<2x2x128xf32>
    tpu.vector_store %arg8[%c0_132, %c0_133, %c0_134], %263 {strides = array<i32>} : memref<2x2x128xf32, #tpu.memory_space<vmem>>, vector<2x2x128xf32>,
    %266 = vector.extract_strided_slice %263 {offsets = [0, 0, 0], sizes = [1, 2, 128], strides = [1, 1, 1]} : vector<2x2x128xf32> to vector<1x2x128xf32>
    %267 = vector.shape_cast %266 : vector<1x2x128xf32> to vector<2x128xf32>
    %268 = arith.index_cast %c4_i32 : i32 to index
    %c0_135 = arith.constant 0 : index
    %c0_136 = arith.constant 0 : index
    %269 = vector.load %arg4[%268, %c0_135, %c0_136] : memref<8x2x128xf32, #tpu.memory_space<vmem>>, vector<1x2x128xf32>
    %270 = vector.shape_cast %269 : vector<1x2x128xf32> to vector<2x128xf32>
    %271 = vector.shape_cast %267 : vector<2x128xf32> to vector<1x2x128xf32>
    tpu.vector_store %arg4[%268, %c0_135, %c0_136], %271 {strides = array<i32>} : memref<8x2x128xf32, #tpu.memory_space<vmem>>, vector<1x2x128xf32>,
    %272 = vector.extract_strided_slice %263 {offsets = [1, 0, 0], sizes = [1, 2, 128], strides = [1, 1, 1]} : vector<2x2x128xf32> to vector<1x2x128xf32>
    %273 = vector.shape_cast %272 : vector<1x2x128xf32> to vector<2x128xf32>
    %274 = arith.index_cast %223 : i32 to index
    %c0_137 = arith.constant 0 : index
    %c0_138 = arith.constant 0 : index
    %275 = vector.load %arg5[%274, %c0_137, %c0_138] : memref<8x2x128xf32, #tpu.memory_space<vmem>>, vector<1x2x128xf32>
    %276 = vector.shape_cast %275 : vector<1x2x128xf32> to vector<2x128xf32>
    %277 = vector.shape_cast %273 : vector<2x128xf32> to vector<1x2x128xf32>
    tpu.vector_store %arg5[%274, %c0_137, %c0_138], %277 {strides = array<i32>} : memref<8x2x128xf32, #tpu.memory_space<vmem>>, vector<1x2x128xf32>,
    %c5_i32 = arith.constant 5 : i32
    %c7_i32_139 = arith.constant 7 : i32
    %278 = arith.subi %c7_i32_139, %c5_i32 : i32
    %c0_140 = arith.constant 0 : index
    %c0_141 = arith.constant 0 : index
    %c0_142 = arith.constant 0 : index
    %279 = vector.load %arg8[%c0_140, %c0_141, %c0_142] : memref<2x2x128xf32, #tpu.memory_space<vmem>>, vector<2x2x128xf32>
    %280 = arith.truncf %279 : vector<2x2x128xf32> to vector<2x2x128xbf16>
    %c0_143 = arith.constant 0 : index
    %c0_144 = arith.constant 0 : index
    %c0_145 = arith.constant 0 : index
    %281 = vector.load %arg3[%c0_143, %c0_144, %c0_145] : memref<2x128x512xbf16, #tpu.memory_space<vmem>>, vector<2x128x512xbf16>
    "tpu.trace_start"() <{level = 10 : i32, message = "dbh,dhg->dbg"}> : () -> ()
    %cst_146 = arith.constant dense<0.000000e+00> : vector<2x2x512xf32>
    %282 = tpu.matmul %280, %281, %cst_146 {dimension_numbers = #tpu.dot_dimension_numbers<[2], [1], [1], [2], [0, 0, 0, 1, 1, 2], [0], [0]>} : vector<2x2x128xbf16>, vector<2x128x512xbf16>, vector<2x2x512xf32> -> vector<2x2x512xf32>
    "tpu.trace_stop"() : () -> ()
    %283 = arith.index_cast %c5_i32 : i32 to index
    %c0_147 = arith.constant 0 : index
    %c0_148 = arith.constant 0 : index
    %284 = vector.load %arg1[%283, %c0_147, %c0_148] : memref<8x2x512xf32, #tpu.memory_space<vmem>>, vector<1x2x512xf32>
    %285 = vector.shape_cast %284 : vector<1x2x512xf32> to vector<2x512xf32>
    %286 = arith.index_cast %278 : i32 to index
    %c0_149 = arith.constant 0 : index
    %c0_150 = arith.constant 0 : index
    %287 = vector.load %arg2[%286, %c0_149, %c0_150] : memref<8x2x512xf32, #tpu.memory_space<vmem>>, vector<1x2x512xf32>
    %288 = vector.shape_cast %287 : vector<1x2x512xf32> to vector<2x512xf32>
    %289 = vector.shape_cast %285 : vector<2x512xf32> to vector<1x2x512xf32>
    %290 = vector.shape_cast %288 : vector<2x512xf32> to vector<1x2x512xf32>
    %291 = tpu.concatenate %289, %290 in 0 : vector<1x2x512xf32>, vector<1x2x512xf32> -> vector<2x2x512xf32>
    %292 = arith.addf %291, %282 : vector<2x2x512xf32>
    %293 = vector.extract_strided_slice %292 {offsets = [0, 0, 0], sizes = [2, 2, 128], strides = [1, 1, 1]} : vector<2x2x512xf32> to vector<2x2x128xf32>
    %294 = arith.negf %293 : vector<2x2x128xf32>
    %295 = math.exp %294 : vector<2x2x128xf32>
    %cst_151 = arith.constant 1.000000e+00 : f32
    %296 = vector.broadcast %cst_151 : f32 to vector<2x2x128xf32>
    %297 = arith.addf %296, %295 : vector<2x2x128xf32>
    %298 = arith.divf %296, %297 : vector<2x2x128xf32>
    %299 = vector.extract_strided_slice %292 {offsets = [0, 0, 128], sizes = [2, 2, 128], strides = [1, 1, 1]} : vector<2x2x512xf32> to vector<2x2x128xf32>
    %300 = arith.negf %299 : vector<2x2x128xf32>
    %301 = math.exp %300 : vector<2x2x128xf32>
    %cst_152 = arith.constant 1.000000e+00 : f32
    %302 = vector.broadcast %cst_152 : f32 to vector<2x2x128xf32>
    %303 = arith.addf %302, %301 : vector<2x2x128xf32>
    %304 = arith.divf %302, %303 : vector<2x2x128xf32>
    %305 = vector.extract_strided_slice %292 {offsets = [0, 0, 256], sizes = [2, 2, 128], strides = [1, 1, 1]} : vector<2x2x512xf32> to vector<2x2x128xf32>
    %306 = math.tanh %305 : vector<2x2x128xf32>
    %307 = vector.extract_strided_slice %292 {offsets = [0, 0, 384], sizes = [2, 2, 128], strides = [1, 1, 1]} : vector<2x2x512xf32> to vector<2x2x128xf32>
    %308 = arith.negf %307 : vector<2x2x128xf32>
    %309 = math.exp %308 : vector<2x2x128xf32>
    %cst_153 = arith.constant 1.000000e+00 : f32
    %310 = vector.broadcast %cst_153 : f32 to vector<2x2x128xf32>
    %311 = arith.addf %310, %309 : vector<2x2x128xf32>
    %312 = arith.divf %310, %311 : vector<2x2x128xf32>
    %c0_154 = arith.constant 0 : index
    %c0_155 = arith.constant 0 : index
    %c0_156 = arith.constant 0 : index
    %313 = vector.load %arg9[%c0_154, %c0_155, %c0_156] : memref<2x2x128xf32, #tpu.memory_space<vmem>>, vector<2x2x128xf32>
    %314 = arith.mulf %304, %313 : vector<2x2x128xf32>
    %315 = arith.mulf %298, %306 : vector<2x2x128xf32>
    %316 = arith.addf %314, %315 : vector<2x2x128xf32>
    %317 = math.tanh %316 : vector<2x2x128xf32>
    %318 = arith.mulf %312, %317 : vector<2x2x128xf32>
    %c0_157 = arith.constant 0 : index
    %c0_158 = arith.constant 0 : index
    %c0_159 = arith.constant 0 : index
    %319 = vector.load %arg9[%c0_157, %c0_158, %c0_159] : memref<2x2x128xf32, #tpu.memory_space<vmem>>, vector<2x2x128xf32>
    tpu.vector_store %arg9[%c0_157, %c0_158, %c0_159], %316 {strides = array<i32>} : memref<2x2x128xf32, #tpu.memory_space<vmem>>, vector<2x2x128xf32>,
    %c0_160 = arith.constant 0 : index
    %c0_161 = arith.constant 0 : index
    %c0_162 = arith.constant 0 : index
    %320 = vector.load %arg8[%c0_160, %c0_161, %c0_162] : memref<2x2x128xf32, #tpu.memory_space<vmem>>, vector<2x2x128xf32>
    tpu.vector_store %arg8[%c0_160, %c0_161, %c0_162], %318 {strides = array<i32>} : memref<2x2x128xf32, #tpu.memory_space<vmem>>, vector<2x2x128xf32>,
    %321 = vector.extract_strided_slice %318 {offsets = [0, 0, 0], sizes = [1, 2, 128], strides = [1, 1, 1]} : vector<2x2x128xf32> to vector<1x2x128xf32>
    %322 = vector.shape_cast %321 : vector<1x2x128xf32> to vector<2x128xf32>
    %323 = arith.index_cast %c5_i32 : i32 to index
    %c0_163 = arith.constant 0 : index
    %c0_164 = arith.constant 0 : index
    %324 = vector.load %arg4[%323, %c0_163, %c0_164] : memref<8x2x128xf32, #tpu.memory_space<vmem>>, vector<1x2x128xf32>
    %325 = vector.shape_cast %324 : vector<1x2x128xf32> to vector<2x128xf32>
    %326 = vector.shape_cast %322 : vector<2x128xf32> to vector<1x2x128xf32>
    tpu.vector_store %arg4[%323, %c0_163, %c0_164], %326 {strides = array<i32>} : memref<8x2x128xf32, #tpu.memory_space<vmem>>, vector<1x2x128xf32>,
    %327 = vector.extract_strided_slice %318 {offsets = [1, 0, 0], sizes = [1, 2, 128], strides = [1, 1, 1]} : vector<2x2x128xf32> to vector<1x2x128xf32>
    %328 = vector.shape_cast %327 : vector<1x2x128xf32> to vector<2x128xf32>
    %329 = arith.index_cast %278 : i32 to index
    %c0_165 = arith.constant 0 : index
    %c0_166 = arith.constant 0 : index
    %330 = vector.load %arg5[%329, %c0_165, %c0_166] : memref<8x2x128xf32, #tpu.memory_space<vmem>>, vector<1x2x128xf32>
    %331 = vector.shape_cast %330 : vector<1x2x128xf32> to vector<2x128xf32>
    %332 = vector.shape_cast %328 : vector<2x128xf32> to vector<1x2x128xf32>
    tpu.vector_store %arg5[%329, %c0_165, %c0_166], %332 {strides = array<i32>} : memref<8x2x128xf32, #tpu.memory_space<vmem>>, vector<1x2x128xf32>,
    %c6_i32 = arith.constant 6 : i32
    %c7_i32_167 = arith.constant 7 : i32
    %333 = arith.subi %c7_i32_167, %c6_i32 : i32
    %c0_168 = arith.constant 0 : index
    %c0_169 = arith.constant 0 : index
    %c0_170 = arith.constant 0 : index
    %334 = vector.load %arg8[%c0_168, %c0_169, %c0_170] : memref<2x2x128xf32, #tpu.memory_space<vmem>>, vector<2x2x128xf32>
    %335 = arith.truncf %334 : vector<2x2x128xf32> to vector<2x2x128xbf16>
    %c0_171 = arith.constant 0 : index
    %c0_172 = arith.constant 0 : index
    %c0_173 = arith.constant 0 : index
    %336 = vector.load %arg3[%c0_171, %c0_172, %c0_173] : memref<2x128x512xbf16, #tpu.memory_space<vmem>>, vector<2x128x512xbf16>
    "tpu.trace_start"() <{level = 10 : i32, message = "dbh,dhg->dbg"}> : () -> ()
    %cst_174 = arith.constant dense<0.000000e+00> : vector<2x2x512xf32>
    %337 = tpu.matmul %335, %336, %cst_174 {dimension_numbers = #tpu.dot_dimension_numbers<[2], [1], [1], [2], [0, 0, 0, 1, 1, 2], [0], [0]>} : vector<2x2x128xbf16>, vector<2x128x512xbf16>, vector<2x2x512xf32> -> vector<2x2x512xf32>
    "tpu.trace_stop"() : () -> ()
    %338 = arith.index_cast %c6_i32 : i32 to index
    %c0_175 = arith.constant 0 : index
    %c0_176 = arith.constant 0 : index
    %339 = vector.load %arg1[%338, %c0_175, %c0_176] : memref<8x2x512xf32, #tpu.memory_space<vmem>>, vector<1x2x512xf32>
    %340 = vector.shape_cast %339 : vector<1x2x512xf32> to vector<2x512xf32>
    %341 = arith.index_cast %333 : i32 to index
    %c0_177 = arith.constant 0 : index
    %c0_178 = arith.constant 0 : index
    %342 = vector.load %arg2[%341, %c0_177, %c0_178] : memref<8x2x512xf32, #tpu.memory_space<vmem>>, vector<1x2x512xf32>
    %343 = vector.shape_cast %342 : vector<1x2x512xf32> to vector<2x512xf32>
    %344 = vector.shape_cast %340 : vector<2x512xf32> to vector<1x2x512xf32>
    %345 = vector.shape_cast %343 : vector<2x512xf32> to vector<1x2x512xf32>
    %346 = tpu.concatenate %344, %345 in 0 : vector<1x2x512xf32>, vector<1x2x512xf32> -> vector<2x2x512xf32>
    %347 = arith.addf %346, %337 : vector<2x2x512xf32>
    %348 = vector.extract_strided_slice %347 {offsets = [0, 0, 0], sizes = [2, 2, 128], strides = [1, 1, 1]} : vector<2x2x512xf32> to vector<2x2x128xf32>
    %349 = arith.negf %348 : vector<2x2x128xf32>
    %350 = math.exp %349 : vector<2x2x128xf32>
    %cst_179 = arith.constant 1.000000e+00 : f32
    %351 = vector.broadcast %cst_179 : f32 to vector<2x2x128xf32>
    %352 = arith.addf %351, %350 : vector<2x2x128xf32>
    %353 = arith.divf %351, %352 : vector<2x2x128xf32>
    %354 = vector.extract_strided_slice %347 {offsets = [0, 0, 128], sizes = [2, 2, 128], strides = [1, 1, 1]} : vector<2x2x512xf32> to vector<2x2x128xf32>
    %355 = arith.negf %354 : vector<2x2x128xf32>
    %356 = math.exp %355 : vector<2x2x128xf32>
    %cst_180 = arith.constant 1.000000e+00 : f32
    %357 = vector.broadcast %cst_180 : f32 to vector<2x2x128xf32>
    %358 = arith.addf %357, %356 : vector<2x2x128xf32>
    %359 = arith.divf %357, %358 : vector<2x2x128xf32>
    %360 = vector.extract_strided_slice %347 {offsets = [0, 0, 256], sizes = [2, 2, 128], strides = [1, 1, 1]} : vector<2x2x512xf32> to vector<2x2x128xf32>
    %361 = math.tanh %360 : vector<2x2x128xf32>
    %362 = vector.extract_strided_slice %347 {offsets = [0, 0, 384], sizes = [2, 2, 128], strides = [1, 1, 1]} : vector<2x2x512xf32> to vector<2x2x128xf32>
    %363 = arith.negf %362 : vector<2x2x128xf32>
    %364 = math.exp %363 : vector<2x2x128xf32>
    %cst_181 = arith.constant 1.000000e+00 : f32
    %365 = vector.broadcast %cst_181 : f32 to vector<2x2x128xf32>
    %366 = arith.addf %365, %364 : vector<2x2x128xf32>
    %367 = arith.divf %365, %366 : vector<2x2x128xf32>
    %c0_182 = arith.constant 0 : index
    %c0_183 = arith.constant 0 : index
    %c0_184 = arith.constant 0 : index
    %368 = vector.load %arg9[%c0_182, %c0_183, %c0_184] : memref<2x2x128xf32, #tpu.memory_space<vmem>>, vector<2x2x128xf32>
    %369 = arith.mulf %359, %368 : vector<2x2x128xf32>
    %370 = arith.mulf %353, %361 : vector<2x2x128xf32>
    %371 = arith.addf %369, %370 : vector<2x2x128xf32>
    %372 = math.tanh %371 : vector<2x2x128xf32>
    %373 = arith.mulf %367, %372 : vector<2x2x128xf32>
    %c0_185 = arith.constant 0 : index
    %c0_186 = arith.constant 0 : index
    %c0_187 = arith.constant 0 : index
    %374 = vector.load %arg9[%c0_185, %c0_186, %c0_187] : memref<2x2x128xf32, #tpu.memory_space<vmem>>, vector<2x2x128xf32>
    tpu.vector_store %arg9[%c0_185, %c0_186, %c0_187], %371 {strides = array<i32>} : memref<2x2x128xf32, #tpu.memory_space<vmem>>, vector<2x2x128xf32>,
    %c0_188 = arith.constant 0 : index
    %c0_189 = arith.constant 0 : index
    %c0_190 = arith.constant 0 : index
    %375 = vector.load %arg8[%c0_188, %c0_189, %c0_190] : memref<2x2x128xf32, #tpu.memory_space<vmem>>, vector<2x2x128xf32>
    tpu.vector_store %arg8[%c0_188, %c0_189, %c0_190], %373 {strides = array<i32>} : memref<2x2x128xf32, #tpu.memory_space<vmem>>, vector<2x2x128xf32>,
    %376 = vector.extract_strided_slice %373 {offsets = [0, 0, 0], sizes = [1, 2, 128], strides = [1, 1, 1]} : vector<2x2x128xf32> to vector<1x2x128xf32>
    %377 = vector.shape_cast %376 : vector<1x2x128xf32> to vector<2x128xf32>
    %378 = arith.index_cast %c6_i32 : i32 to index
    %c0_191 = arith.constant 0 : index
    %c0_192 = arith.constant 0 : index
    %379 = vector.load %arg4[%378, %c0_191, %c0_192] : memref<8x2x128xf32, #tpu.memory_space<vmem>>, vector<1x2x128xf32>
    %380 = vector.shape_cast %379 : vector<1x2x128xf32> to vector<2x128xf32>
    %381 = vector.shape_cast %377 : vector<2x128xf32> to vector<1x2x128xf32>
    tpu.vector_store %arg4[%378, %c0_191, %c0_192], %381 {strides = array<i32>} : memref<8x2x128xf32, #tpu.memory_space<vmem>>, vector<1x2x128xf32>,
    %382 = vector.extract_strided_slice %373 {offsets = [1, 0, 0], sizes = [1, 2, 128], strides = [1, 1, 1]} : vector<2x2x128xf32> to vector<1x2x128xf32>
    %383 = vector.shape_cast %382 : vector<1x2x128xf32> to vector<2x128xf32>
    %384 = arith.index_cast %333 : i32 to index
    %c0_193 = arith.constant 0 : index
    %c0_194 = arith.constant 0 : index
    %385 = vector.load %arg5[%384, %c0_193, %c0_194] : memref<8x2x128xf32, #tpu.memory_space<vmem>>, vector<1x2x128xf32>
    %386 = vector.shape_cast %385 : vector<1x2x128xf32> to vector<2x128xf32>
    %387 = vector.shape_cast %383 : vector<2x128xf32> to vector<1x2x128xf32>
    tpu.vector_store %arg5[%384, %c0_193, %c0_194], %387 {strides = array<i32>} : memref<8x2x128xf32, #tpu.memory_space<vmem>>, vector<1x2x128xf32>,
    %c7_i32_195 = arith.constant 7 : i32
    %c7_i32_196 = arith.constant 7 : i32
    %388 = arith.subi %c7_i32_196, %c7_i32_195 : i32
    %c0_197 = arith.constant 0 : index
    %c0_198 = arith.constant 0 : index
    %c0_199 = arith.constant 0 : index
    %389 = vector.load %arg8[%c0_197, %c0_198, %c0_199] : memref<2x2x128xf32, #tpu.memory_space<vmem>>, vector<2x2x128xf32>
    %390 = arith.truncf %389 : vector<2x2x128xf32> to vector<2x2x128xbf16>
    %c0_200 = arith.constant 0 : index
    %c0_201 = arith.constant 0 : index
    %c0_202 = arith.constant 0 : index
    %391 = vector.load %arg3[%c0_200, %c0_201, %c0_202] : memref<2x128x512xbf16, #tpu.memory_space<vmem>>, vector<2x128x512xbf16>
    "tpu.trace_start"() <{level = 10 : i32, message = "dbh,dhg->dbg"}> : () -> ()
    %cst_203 = arith.constant dense<0.000000e+00> : vector<2x2x512xf32>
    %392 = tpu.matmul %390, %391, %cst_203 {dimension_numbers = #tpu.dot_dimension_numbers<[2], [1], [1], [2], [0, 0, 0, 1, 1, 2], [0], [0]>} : vector<2x2x128xbf16>, vector<2x128x512xbf16>, vector<2x2x512xf32> -> vector<2x2x512xf32>
    "tpu.trace_stop"() : () -> ()
    %393 = arith.index_cast %c7_i32_195 : i32 to index
    %c0_204 = arith.constant 0 : index
    %c0_205 = arith.constant 0 : index
    %394 = vector.load %arg1[%393, %c0_204, %c0_205] : memref<8x2x512xf32, #tpu.memory_space<vmem>>, vector<1x2x512xf32>
    %395 = vector.shape_cast %394 : vector<1x2x512xf32> to vector<2x512xf32>
    %396 = arith.index_cast %388 : i32 to index
    %c0_206 = arith.constant 0 : index
    %c0_207 = arith.constant 0 : index
    %397 = vector.load %arg2[%396, %c0_206, %c0_207] : memref<8x2x512xf32, #tpu.memory_space<vmem>>, vector<1x2x512xf32>
    %398 = vector.shape_cast %397 : vector<1x2x512xf32> to vector<2x512xf32>
    %399 = vector.shape_cast %395 : vector<2x512xf32> to vector<1x2x512xf32>
    %400 = vector.shape_cast %398 : vector<2x512xf32> to vector<1x2x512xf32>
    %401 = tpu.concatenate %399, %400 in 0 : vector<1x2x512xf32>, vector<1x2x512xf32> -> vector<2x2x512xf32>
    %402 = arith.addf %401, %392 : vector<2x2x512xf32>
    %403 = vector.extract_strided_slice %402 {offsets = [0, 0, 0], sizes = [2, 2, 128], strides = [1, 1, 1]} : vector<2x2x512xf32> to vector<2x2x128xf32>
    %404 = arith.negf %403 : vector<2x2x128xf32>
    %405 = math.exp %404 : vector<2x2x128xf32>
    %cst_208 = arith.constant 1.000000e+00 : f32
    %406 = vector.broadcast %cst_208 : f32 to vector<2x2x128xf32>
    %407 = arith.addf %406, %405 : vector<2x2x128xf32>
    %408 = arith.divf %406, %407 : vector<2x2x128xf32>
    %409 = vector.extract_strided_slice %402 {offsets = [0, 0, 128], sizes = [2, 2, 128], strides = [1, 1, 1]} : vector<2x2x512xf32> to vector<2x2x128xf32>
    %410 = arith.negf %409 : vector<2x2x128xf32>
    %411 = math.exp %410 : vector<2x2x128xf32>
    %cst_209 = arith.constant 1.000000e+00 : f32
    %412 = vector.broadcast %cst_209 : f32 to vector<2x2x128xf32>
    %413 = arith.addf %412, %411 : vector<2x2x128xf32>
    %414 = arith.divf %412, %413 : vector<2x2x128xf32>
    %415 = vector.extract_strided_slice %402 {offsets = [0, 0, 256], sizes = [2, 2, 128], strides = [1, 1, 1]} : vector<2x2x512xf32> to vector<2x2x128xf32>
    %416 = math.tanh %415 : vector<2x2x128xf32>
    %417 = vector.extract_strided_slice %402 {offsets = [0, 0, 384], sizes = [2, 2, 128], strides = [1, 1, 1]} : vector<2x2x512xf32> to vector<2x2x128xf32>
    %418 = arith.negf %417 : vector<2x2x128xf32>
    %419 = math.exp %418 : vector<2x2x128xf32>
    %cst_210 = arith.constant 1.000000e+00 : f32
    %420 = vector.broadcast %cst_210 : f32 to vector<2x2x128xf32>
    %421 = arith.addf %420, %419 : vector<2x2x128xf32>
    %422 = arith.divf %420, %421 : vector<2x2x128xf32>
    %c0_211 = arith.constant 0 : index
    %c0_212 = arith.constant 0 : index
    %c0_213 = arith.constant 0 : index
    %423 = vector.load %arg9[%c0_211, %c0_212, %c0_213] : memref<2x2x128xf32, #tpu.memory_space<vmem>>, vector<2x2x128xf32>
    %424 = arith.mulf %414, %423 : vector<2x2x128xf32>
    %425 = arith.mulf %408, %416 : vector<2x2x128xf32>
    %426 = arith.addf %424, %425 : vector<2x2x128xf32>
    %427 = math.tanh %426 : vector<2x2x128xf32>
    %428 = arith.mulf %422, %427 : vector<2x2x128xf32>
    %c0_214 = arith.constant 0 : index
    %c0_215 = arith.constant 0 : index
    %c0_216 = arith.constant 0 : index
    %429 = vector.load %arg9[%c0_214, %c0_215, %c0_216] : memref<2x2x128xf32, #tpu.memory_space<vmem>>, vector<2x2x128xf32>
    tpu.vector_store %arg9[%c0_214, %c0_215, %c0_216], %426 {strides = array<i32>} : memref<2x2x128xf32, #tpu.memory_space<vmem>>, vector<2x2x128xf32>,
    %c0_217 = arith.constant 0 : index
    %c0_218 = arith.constant 0 : index
    %c0_219 = arith.constant 0 : index
    %430 = vector.load %arg8[%c0_217, %c0_218, %c0_219] : memref<2x2x128xf32, #tpu.memory_space<vmem>>, vector<2x2x128xf32>
    tpu.vector_store %arg8[%c0_217, %c0_218, %c0_219], %428 {strides = array<i32>} : memref<2x2x128xf32, #tpu.memory_space<vmem>>, vector<2x2x128xf32>,
    %431 = vector.extract_strided_slice %428 {offsets = [0, 0, 0], sizes = [1, 2, 128], strides = [1, 1, 1]} : vector<2x2x128xf32> to vector<1x2x128xf32>
    %432 = vector.shape_cast %431 : vector<1x2x128xf32> to vector<2x128xf32>
    %433 = arith.index_cast %c7_i32_195 : i32 to index
    %c0_220 = arith.constant 0 : index
    %c0_221 = arith.constant 0 : index
    %434 = vector.load %arg4[%433, %c0_220, %c0_221] : memref<8x2x128xf32, #tpu.memory_space<vmem>>, vector<1x2x128xf32>
    %435 = vector.shape_cast %434 : vector<1x2x128xf32> to vector<2x128xf32>
    %436 = vector.shape_cast %432 : vector<2x128xf32> to vector<1x2x128xf32>
    tpu.vector_store %arg4[%433, %c0_220, %c0_221], %436 {strides = array<i32>} : memref<8x2x128xf32, #tpu.memory_space<vmem>>, vector<1x2x128xf32>,
    %437 = vector.extract_strided_slice %428 {offsets = [1, 0, 0], sizes = [1, 2, 128], strides = [1, 1, 1]} : vector<2x2x128xf32> to vector<1x2x128xf32>
    %438 = vector.shape_cast %437 : vector<1x2x128xf32> to vector<2x128xf32>
    %439 = arith.index_cast %388 : i32 to index
    %c0_222 = arith.constant 0 : index
    %c0_223 = arith.constant 0 : index
    %440 = vector.load %arg5[%439, %c0_222, %c0_223] : memref<8x2x128xf32, #tpu.memory_space<vmem>>, vector<1x2x128xf32>
    %441 = vector.shape_cast %440 : vector<1x2x128xf32> to vector<2x128xf32>
    %442 = vector.shape_cast %438 : vector<2x128xf32> to vector<1x2x128xf32>
    tpu.vector_store %arg5[%439, %c0_222, %c0_223], %442 {strides = array<i32>} : memref<8x2x128xf32, #tpu.memory_space<vmem>>, vector<1x2x128xf32>,
    %c8_i32 = arith.constant 8 : i32
    %c0_224 = arith.constant 0 : index
    %c0_225 = arith.constant 0 : index
    %c0_226 = arith.constant 0 : index
    %443 = vector.load %arg8[%c0_224, %c0_225, %c0_226] : memref<2x2x128xf32, #tpu.memory_space<vmem>>, vector<2x2x128xf32>
    %c0_227 = arith.constant 0 : index
    %c0_228 = arith.constant 0 : index
    %c0_229 = arith.constant 0 : index
    %444 = vector.load %arg6[%c0_227, %c0_228, %c0_229] : memref<2x2x128xf32, #tpu.memory_space<vmem>>, vector<2x2x128xf32>
    tpu.vector_store %arg6[%c0_227, %c0_228, %c0_229], %443 {strides = array<i32>} : memref<2x2x128xf32, #tpu.memory_space<vmem>>, vector<2x2x128xf32>,
    %c0_230 = arith.constant 0 : index
    %c0_231 = arith.constant 0 : index
    %c0_232 = arith.constant 0 : index
    %445 = vector.load %arg9[%c0_230, %c0_231, %c0_232] : memref<2x2x128xf32, #tpu.memory_space<vmem>>, vector<2x2x128xf32>
    %c0_233 = arith.constant 0 : index
    %c0_234 = arith.constant 0 : index
    %c0_235 = arith.constant 0 : index
    %446 = vector.load %arg7[%c0_233, %c0_234, %c0_235] : memref<2x2x128xf32, #tpu.memory_space<vmem>>, vector<2x2x128xf32>
    tpu.vector_store %arg7[%c0_233, %c0_234, %c0_235], %445 {strides = array<i32>} : memref<2x2x128xf32, #tpu.memory_space<vmem>>, vector<2x2x128xf32>,
    return
  }
  func.func @transform_0(%arg0: i32) -> (i32, i32, i32) {
    %c0_i32 = arith.constant 0 : i32
    %c0_i32_0 = arith.constant 0 : i32
    %c0_i32_1 = arith.constant 0 : i32
    return %arg0, %c0_i32, %c0_i32_0 : i32, i32, i32
  }
  func.func @transform_1(%arg0: i32) -> (i32, i32, i32) {
    %c0_i32 = arith.constant 0 : i32
    %0 = arith.subi %c0_i32, %arg0 : i32
    %c0_i32_0 = arith.constant 0 : i32
    %c0_i32_1 = arith.constant 0 : i32
    %c0_i32_2 = arith.constant 0 : i32
    return %0, %c0_i32_0, %c0_i32_1 : i32, i32, i32
  }
  func.func @transform_2(%arg0: i32) -> (i32, i32, i32) {
    %c0_i32 = arith.constant 0 : i32
    %c0_i32_0 = arith.constant 0 : i32
    %c0_i32_1 = arith.constant 0 : i32
    %c0_i32_2 = arith.constant 0 : i32
    return %c0_i32, %c0_i32_0, %c0_i32_1 : i32, i32, i32
  }
  func.func @transform_3(%arg0: i32) -> (i32, i32, i32) {
    %c0_i32 = arith.constant 0 : i32
    %c0_i32_0 = arith.constant 0 : i32
    %c0_i32_1 = arith.constant 0 : i32
    return %arg0, %c0_i32, %c0_i32_0 : i32, i32, i32
  }
  func.func @transform_4(%arg0: i32) -> (i32, i32, i32) {
    %c0_i32 = arith.constant 0 : i32
    %0 = arith.subi %c0_i32, %arg0 : i32
    %c0_i32_0 = arith.constant 0 : i32
    %c0_i32_1 = arith.constant 0 : i32
    %c0_i32_2 = arith.constant 0 : i32
    return %0, %c0_i32_0, %c0_i32_1 : i32, i32, i32
  }
  func.func @transform_5(%arg0: i32) -> (i32, i32, i32) {
    %c0_i32 = arith.constant 0 : i32
    %c0_i32_0 = arith.constant 0 : i32
    %c0_i32_1 = arith.constant 0 : i32
    %c0_i32_2 = arith.constant 0 : i32
    return %c0_i32, %c0_i32_0, %c0_i32_1 : i32, i32, i32
  }
  func.func @transform_6(%arg0: i32) -> (i32, i32, i32) {
    %c0_i32 = arith.constant 0 : i32
    %c0_i32_0 = arith.constant 0 : i32
    %c0_i32_1 = arith.constant 0 : i32
    %c0_i32_2 = arith.constant 0 : i32
    return %c0_i32, %c0_i32_0, %c0_i32_1 : i32, i32, i32
  }
}

module attributes {stable_mosaic.version = 11 : i64} {
  func.func @dual_matmul_bias_kernel(%arg0: i32, %arg1: memref<16x128xf32, #tpu.memory_space<vmem>>, %arg2: memref<16x128xf32, #tpu.memory_space<vmem>>, %arg3: memref<128x512xbf16, #tpu.memory_space<vmem>>, %arg4: memref<128x512xbf16, #tpu.memory_space<vmem>>, %arg5: memref<1x512xf32, #tpu.memory_space<vmem>>, %arg6: memref<16x512xf32, #tpu.memory_space<vmem>>) attributes {dimension_semantics = [#tpu.dimension_semantics<parallel>], iteration_bounds = array<i64: 1>, scalar_prefetch = 0 : i64, scratch_operands = 0 : i64, tpu.core_type = #tpu.core_type<tc>, window_params = [{transform_indices = @transform_0, window_bounds = array<i64: 16, 128>}, {transform_indices = @transform_1, window_bounds = array<i64: 16, 128>}, {pipeline_mode = #tpu.pipeline_mode<synchronous>, transform_indices = @transform_2, window_bounds = array<i64: 128, 512>}, {pipeline_mode = #tpu.pipeline_mode<synchronous>, transform_indices = @transform_3, window_bounds = array<i64: 128, 512>}, {pipeline_mode = #tpu.pipeline_mode<synchronous>, transform_indices = @transform_4, window_bounds = array<i64: 1, 512>}, {transform_indices = @transform_5, window_bounds = array<i64: 16, 512>}]} {
    %c0 = arith.constant 0 : index
    %c0_0 = arith.constant 0 : index
    %0 = vector.load %arg1[%c0, %c0_0] : memref<16x128xf32, #tpu.memory_space<vmem>>, vector<16x128xf32>
    %1 = arith.truncf %0 : vector<16x128xf32> to vector<16x128xbf16>
    %c0_1 = arith.constant 0 : index
    %c0_2 = arith.constant 0 : index
    %2 = vector.load %arg3[%c0_1, %c0_2] : memref<128x512xbf16, #tpu.memory_space<vmem>>, vector<128x512xbf16>
    %cst = arith.constant dense<0.000000e+00> : vector<16x512xf32>
    %3 = tpu.matmul %1, %2, %cst {dimension_numbers = #tpu.dot_dimension_numbers<[1], [0], [0], [1], [0, 0, 1, 1], [], []>} : vector<16x128xbf16>, vector<128x512xbf16>, vector<16x512xf32> -> vector<16x512xf32>
    %c0_3 = arith.constant 0 : index
    %c0_4 = arith.constant 0 : index
    %4 = vector.load %arg2[%c0_3, %c0_4] : memref<16x128xf32, #tpu.memory_space<vmem>>, vector<16x128xf32>
    %5 = arith.truncf %4 : vector<16x128xf32> to vector<16x128xbf16>
    %c0_5 = arith.constant 0 : index
    %c0_6 = arith.constant 0 : index
    %6 = vector.load %arg4[%c0_5, %c0_6] : memref<128x512xbf16, #tpu.memory_space<vmem>>, vector<128x512xbf16>
    %cst_7 = arith.constant dense<0.000000e+00> : vector<16x512xf32>
    %7 = tpu.matmul %5, %6, %cst_7 {dimension_numbers = #tpu.dot_dimension_numbers<[1], [0], [0], [1], [0, 0, 1, 1], [], []>} : vector<16x128xbf16>, vector<128x512xbf16>, vector<16x512xf32> -> vector<16x512xf32>
    %8 = arith.addf %3, %7 : vector<16x512xf32>
    %c0_8 = arith.constant 0 : index
    %c0_9 = arith.constant 0 : index
    %9 = vector.load %arg5[%c0_8, %c0_9] : memref<1x512xf32, #tpu.memory_space<vmem>>, vector<1x512xf32>
    %10 = vector.broadcast %9 : vector<1x512xf32> to vector<16x512xf32>
    %11 = arith.addf %8, %10 : vector<16x512xf32>
    %c0_10 = arith.constant 0 : index
    %c0_11 = arith.constant 0 : index
    %12 = vector.load %arg6[%c0_10, %c0_11] : memref<16x512xf32, #tpu.memory_space<vmem>>, vector<16x512xf32>
    tpu.vector_store %arg6[%c0_10, %c0_11], %11 {strides = array<i32>} : memref<16x512xf32, #tpu.memory_space<vmem>>, vector<16x512xf32>,
    return
  }
  func.func @transform_0(%arg0: i32) -> (i32, i32) {
    %c0_i32 = arith.constant 0 : i32
    %c0_i32_0 = arith.constant 0 : i32
    return %arg0, %c0_i32 : i32, i32
  }
  func.func @transform_1(%arg0: i32) -> (i32, i32) {
    %c0_i32 = arith.constant 0 : i32
    %c0_i32_0 = arith.constant 0 : i32
    return %arg0, %c0_i32 : i32, i32
  }
  func.func @transform_2(%arg0: i32) -> (i32, i32) {
    %c0_i32 = arith.constant 0 : i32
    %c0_i32_0 = arith.constant 0 : i32
    %c0_i32_1 = arith.constant 0 : i32
    return %c0_i32, %c0_i32_0 : i32, i32
  }
  func.func @transform_3(%arg0: i32) -> (i32, i32) {
    %c0_i32 = arith.constant 0 : i32
    %c0_i32_0 = arith.constant 0 : i32
    %c0_i32_1 = arith.constant 0 : i32
    return %c0_i32, %c0_i32_0 : i32, i32
  }
  func.func @transform_4(%arg0: i32) -> (i32, i32) {
    %c0_i32 = arith.constant 0 : i32
    %c0_i32_0 = arith.constant 0 : i32
    %c0_i32_1 = arith.constant 0 : i32
    return %c0_i32, %c0_i32_0 : i32, i32
  }
  func.func @transform_5(%arg0: i32) -> (i32, i32) {
    %c0_i32 = arith.constant 0 : i32
    %c0_i32_0 = arith.constant 0 : i32
    return %arg0, %c0_i32 : i32, i32
  }
}

module attributes {stable_mosaic.version = 11 : i64} {
  func.func @dual_matmul_bias_kernel(%arg0: i32, %arg1: memref<16x128xf32, #tpu.memory_space<vmem>>, %arg2: memref<16x128xf32, #tpu.memory_space<vmem>>, %arg3: memref<128x128xbf16, #tpu.memory_space<vmem>>, %arg4: memref<128x128xbf16, #tpu.memory_space<vmem>>, %arg5: memref<1x128xf32, #tpu.memory_space<vmem>>, %arg6: memref<16x128xf32, #tpu.memory_space<vmem>>) attributes {dimension_semantics = [#tpu.dimension_semantics<parallel>], iteration_bounds = array<i64: 1>, scalar_prefetch = 0 : i64, scratch_operands = 0 : i64, tpu.core_type = #tpu.core_type<tc>, window_params = [{transform_indices = @transform_0, window_bounds = array<i64: 16, 128>}, {transform_indices = @transform_1, window_bounds = array<i64: 16, 128>}, {pipeline_mode = #tpu.pipeline_mode<synchronous>, transform_indices = @transform_2, window_bounds = array<i64: 128, 128>}, {pipeline_mode = #tpu.pipeline_mode<synchronous>, transform_indices = @transform_3, window_bounds = array<i64: 128, 128>}, {pipeline_mode = #tpu.pipeline_mode<synchronous>, transform_indices = @transform_4, window_bounds = array<i64: 1, 128>}, {transform_indices = @transform_5, window_bounds = array<i64: 16, 128>}]} {
    %c0 = arith.constant 0 : index
    %c0_0 = arith.constant 0 : index
    %0 = vector.load %arg1[%c0, %c0_0] : memref<16x128xf32, #tpu.memory_space<vmem>>, vector<16x128xf32>
    %1 = arith.truncf %0 : vector<16x128xf32> to vector<16x128xbf16>
    %c0_1 = arith.constant 0 : index
    %c0_2 = arith.constant 0 : index
    %2 = vector.load %arg3[%c0_1, %c0_2] : memref<128x128xbf16, #tpu.memory_space<vmem>>, vector<128x128xbf16>
    %cst = arith.constant dense<0.000000e+00> : vector<16x128xf32>
    %3 = tpu.matmul %1, %2, %cst {dimension_numbers = #tpu.dot_dimension_numbers<[1], [0], [0], [1], [0, 0, 1, 1], [], []>} : vector<16x128xbf16>, vector<128x128xbf16>, vector<16x128xf32> -> vector<16x128xf32>
    %c0_3 = arith.constant 0 : index
    %c0_4 = arith.constant 0 : index
    %4 = vector.load %arg2[%c0_3, %c0_4] : memref<16x128xf32, #tpu.memory_space<vmem>>, vector<16x128xf32>
    %5 = arith.truncf %4 : vector<16x128xf32> to vector<16x128xbf16>
    %c0_5 = arith.constant 0 : index
    %c0_6 = arith.constant 0 : index
    %6 = vector.load %arg4[%c0_5, %c0_6] : memref<128x128xbf16, #tpu.memory_space<vmem>>, vector<128x128xbf16>
    %cst_7 = arith.constant dense<0.000000e+00> : vector<16x128xf32>
    %7 = tpu.matmul %5, %6, %cst_7 {dimension_numbers = #tpu.dot_dimension_numbers<[1], [0], [0], [1], [0, 0, 1, 1], [], []>} : vector<16x128xbf16>, vector<128x128xbf16>, vector<16x128xf32> -> vector<16x128xf32>
    %8 = arith.addf %3, %7 : vector<16x128xf32>
    %c0_8 = arith.constant 0 : index
    %c0_9 = arith.constant 0 : index
    %9 = vector.load %arg5[%c0_8, %c0_9] : memref<1x128xf32, #tpu.memory_space<vmem>>, vector<1x128xf32>
    %10 = vector.broadcast %9 : vector<1x128xf32> to vector<16x128xf32>
    %11 = arith.addf %8, %10 : vector<16x128xf32>
    %c0_10 = arith.constant 0 : index
    %c0_11 = arith.constant 0 : index
    %12 = vector.load %arg6[%c0_10, %c0_11] : memref<16x128xf32, #tpu.memory_space<vmem>>, vector<16x128xf32>
    tpu.vector_store %arg6[%c0_10, %c0_11], %11 {strides = array<i32>} : memref<16x128xf32, #tpu.memory_space<vmem>>, vector<16x128xf32>,
    return
  }
  func.func @transform_0(%arg0: i32) -> (i32, i32) {
    %c0_i32 = arith.constant 0 : i32
    %c0_i32_0 = arith.constant 0 : i32
    return %arg0, %c0_i32 : i32, i32
  }
  func.func @transform_1(%arg0: i32) -> (i32, i32) {
    %c0_i32 = arith.constant 0 : i32
    %c0_i32_0 = arith.constant 0 : i32
    return %arg0, %c0_i32 : i32, i32
  }
  func.func @transform_2(%arg0: i32) -> (i32, i32) {
    %c0_i32 = arith.constant 0 : i32
    %c0_i32_0 = arith.constant 0 : i32
    %c0_i32_1 = arith.constant 0 : i32
    return %c0_i32, %c0_i32_0 : i32, i32
  }
  func.func @transform_3(%arg0: i32) -> (i32, i32) {
    %c0_i32 = arith.constant 0 : i32
    %c0_i32_0 = arith.constant 0 : i32
    %c0_i32_1 = arith.constant 0 : i32
    return %c0_i32, %c0_i32_0 : i32, i32
  }
  func.func @transform_4(%arg0: i32) -> (i32, i32) {
    %c0_i32 = arith.constant 0 : i32
    %c0_i32_0 = arith.constant 0 : i32
    %c0_i32_1 = arith.constant 0 : i32
    return %c0_i32, %c0_i32_0 : i32, i32
  }
  func.func @transform_5(%arg0: i32) -> (i32, i32) {
    %c0_i32 = arith.constant 0 : i32
    %c0_i32_0 = arith.constant 0 : i32
    return %arg0, %c0_i32 : i32, i32
  }
}

</mosaic_0001>

<llo_original>
// kernel: lstm_rnn_forward.7
$region0: #{lstm_rnn_forward.7}
  #allocation0 [shape = 'u32[]', space=smem, size = 0x4, offset = 0x4, fixed_abs, tag = 'smem constant byte address 0x4 - core index']
  #allocation1 [shape = 'u32[144,128]{1,0:T(1,128)}', space=vmem, size = 0x12000, scoped, tag = 'internal scratch']
  %s0 = inlined_call_operand.vmem [shape: f32[64,64], index: 0, kind: input, shape index: {}]
  %s1 = inlined_call_operand.vmem [shape: bf16[64,512], index: 1, kind: input, shape index: {}]
  %s2 = inlined_call_operand.vmem [shape: f32[1,512], index: 2, kind: input, shape index: {}]
  %s3 = inlined_call_operand.vmem [shape: f32[64,512], index: 3, kind: output, shape index: {}]
  %s4 = sld [smem:[#allocation0]]
  $region22: #{lstm_rnn_forward.7} parent=0
    _
  %s6 = ssub.s32 1, %s4
  %s7 = scalar_select 0, %s6, %s4
  // Predicated region
  $region2: #{lstm_rnn_forward.7} parent=0 // pred_check
    _
  $region3: #{lstm_rnn_forward.7} parent=0 // pred_check_branch
    %9 = sbr.rel (0) target = $region5
  $region4: #{lstm_rnn_forward.7} parent=0 // pred_region
    _
  $region5: #{lstm_rnn_forward.7} parent=0 // pred_fallthru
    _
  // Predicated region
  $region6: #{lstm_rnn_forward.7} parent=0 // pred_check
    _
  $region7: #{lstm_rnn_forward.7} parent=0 // pred_check_branch
    %11 = sbr.rel (0) target = $region9
  $region8: #{lstm_rnn_forward.7} parent=0 // pred_region
    _
  $region9: #{lstm_rnn_forward.7} parent=0 // pred_fallthru
    _
  // Predicated region
  $region10: #{lstm_rnn_forward.7} parent=0 // pred_check
    _
  $region11: #{lstm_rnn_forward.7} parent=0 // pred_check_branch
    %13 = sbr.rel (0) target = $region13
  $region12: #{lstm_rnn_forward.7} parent=0 // pred_region
    _
  $region13: #{lstm_rnn_forward.7} parent=0 // pred_fallthru
    _
  %v15 = vld [vmem:[%s0] sm:$0xff]
  %v16 = vld [vmem:[%s0 + $0x8] sm:$0xff]
  %v17 = vld [vmem:[%s0 + $0x10] sm:$0xff]
  %v18 = vld [vmem:[%s0 + $0x18] sm:$0xff]
  %v19 = vld [vmem:[%s0 + $0x20] sm:$0xff]
  %v20 = vld [vmem:[%s0 + $0x28] sm:$0xff]
  %v21 = vld [vmem:[%s0 + $0x30] sm:$0xff]
  %v22 = vld [vmem:[%s0 + $0x38] sm:$0xff]
  %v23 = vpack.c.bf16 %v16, %v15
  %v24 = vpack.c.bf16 %v18, %v17
  %v25 = vpack.c.bf16 %v20, %v19
  %v26 = vpack.c.bf16 %v22, %v21
  %v27 = vld [vmem:[%s1] sm:$0xff]
  %v28 = vld [vmem:[%s1 + $0x8] sm:$0xff]
  %v29 = vld [vmem:[%s1 + $0x10] sm:$0xff]
  %v30 = vld [vmem:[%s1 + $0x18] sm:$0xff]
  %v31 = vld [vmem:[%s1 + $0x20] sm:$0xff]
  %v32 = vld [vmem:[%s1 + $0x28] sm:$0xff]
  %v33 = vld [vmem:[%s1 + $0x30] sm:$0xff]
  %v34 = vld [vmem:[%s1 + $0x38] sm:$0xff]
  %v35 = vld [vmem:[%s1 + $0x40] sm:$0xff]
  %v36 = vld [vmem:[%s1 + $0x48] sm:$0xff]
  %v37 = vld [vmem:[%s1 + $0x50] sm:$0xff]
  %v38 = vld [vmem:[%s1 + $0x58] sm:$0xff]
  %v39 = vld [vmem:[%s1 + $0x60] sm:$0xff]
  %v40 = vld [vmem:[%s1 + $0x68] sm:$0xff]
  %v41 = vld [vmem:[%s1 + $0x70] sm:$0xff]
  %v42 = vld [vmem:[%s1 + $0x78] sm:$0xff]
  %v43 = vld [vmem:[%s2] sm:$0xf]
  %v45 = vlaneseq
  %v46 = vshrl.u32 %v45, 7
  %v47 = vsub.s32 0, %v46
  %v48 = vrot.slane %v43, %v47
  %v49 = vlaneseq
  %v50 = vshrl.u32 %v49, 7
  %v51 = vsub.s32 1, %v50
  %v52 = vrot.slane %v43, %v51
  %v53 = vlaneseq
  %v54 = vshrl.u32 %v53, 7
  %v55 = vsub.s32 2, %v54
  %v56 = vrot.slane %v43, %v55
  %v57 = vlaneseq
  %v58 = vshrl.u32 %v57, 7
  %v59 = vsub.s32 3, %v58
  %v60 = vrot.slane %v43, %v59
  %v81 = vunpack.c.l.b16 %v27
  %v82 = vunpack.c.h.b16 %v27
  %v83 = vunpack.c.l.b16 %v28
  %v84 = vunpack.c.h.b16 %v28
  %v85 = vunpack.c.l.b16 %v29
  %v86 = vunpack.c.h.b16 %v29
  %v87 = vunpack.c.l.b16 %v30
  %v88 = vunpack.c.h.b16 %v30
  %v89 = vunpack.c.l.b16 %v31
  %v90 = vunpack.c.h.b16 %v31
  %v91 = vunpack.c.l.b16 %v32
  %v92 = vunpack.c.h.b16 %v32
  %v93 = vunpack.c.l.b16 %v33
  %v94 = vunpack.c.h.b16 %v33
  %v95 = vunpack.c.l.b16 %v34
  %v96 = vunpack.c.h.b16 %v34
  %v97 = vunpack.c.l.b16 %v35
  %v98 = vunpack.c.h.b16 %v35
  %v99 = vunpack.c.l.b16 %v36
  %v100 = vunpack.c.h.b16 %v36
  %v101 = vunpack.c.l.b16 %v37
  %v102 = vunpack.c.h.b16 %v37
  %v103 = vunpack.c.l.b16 %v38
  %v104 = vunpack.c.h.b16 %v38
  %v105 = vunpack.c.l.b16 %v39
  %v106 = vunpack.c.h.b16 %v39
  %v107 = vunpack.c.l.b16 %v40
  %v108 = vunpack.c.h.b16 %v40
  %v109 = vunpack.c.l.b16 %v41
  %v110 = vunpack.c.h.b16 %v41
  %v111 = vunpack.c.l.b16 %v42
  %v112 = vunpack.c.h.b16 %v42
  %v113 = vpack.c.b16 %v85, %v81
  %v114 = vpack.c.b16 %v86, %v82
  %v115 = vpack.c.b16 %v87, %v83
  %v116 = vpack.c.b16 %v88, %v84
  %v117 = vpack.c.b16 %v93, %v89
  %v118 = vpack.c.b16 %v94, %v90
  %v119 = vpack.c.b16 %v95, %v91
  %v120 = vpack.c.b16 %v96, %v92
  %v121 = vpack.c.b16 %v101, %v97
  %v122 = vpack.c.b16 %v102, %v98
  %v123 = vpack.c.b16 %v103, %v99
  %v124 = vpack.c.b16 %v104, %v100
  %v125 = vpack.c.b16 %v109, %v105
  %v126 = vpack.c.b16 %v110, %v106
  %v127 = vpack.c.b16 %v111, %v107
  %v128 = vpack.c.b16 %v112, %v108
  %vm145 = vcmask 523264
  %v147 = vsel %vm145, %v23, 0
  %v150 = vsel %vm145, %v24, 0
  %v153 = vsel %vm145, %v25, 0
  %v156 = vsel %vm145, %v26, 0
  %158 = vmatprep.subr.bf16.mxu0 0
  %159 = vmatpush1.bf16.msra.mxu0 0
  %160 = vmatprep.subr.bf16.mxu0 0
  %161 = vmatpush1.bf16.msra.mxu0 0
  %162 = vmatprep.subr.bf16.mxu0 0
  %163 = vmatpush1.bf16.msra.mxu0 0
  %164 = vmatprep.subr.bf16.mxu0 0
  %165 = vmatpush1.bf16.msra.mxu0 0
  %166 = vmatprep.subr.bf16.mxu0 %v126
  %167 = vmatpush1.bf16.msra.mxu0 %v125
  %168 = vmatprep.subr.bf16.mxu0 %v122
  %169 = vmatpush1.bf16.msra.mxu0 %v121
  %170 = vmatprep.subr.bf16.mxu0 %v118
  %171 = vmatpush1.bf16.msra.mxu0 %v117
  %172 = vmatprep.subr.bf16.mxu0 %v114
  %173 = vmatpush1.bf16.msra.mxu0 %v113
  %174 = vmatprep.subr.bf16.mxu0 0
  %175 = vmatpush2.bf16.msra.mxu0 0
  %176 = vmatprep.subr.bf16.mxu0 0
  %177 = vmatpush2.bf16.msra.mxu0 0
  %178 = vmatprep.subr.bf16.mxu0 0
  %179 = vmatpush2.bf16.msra.mxu0 0
  %180 = vmatprep.subr.bf16.mxu0 0
  %181 = vmatpush2.bf16.msra.mxu0 0
  %182 = vmatprep.subr.bf16.mxu0 0
  %183 = vmatpush2.bf16.msra.mxu0 0
  %184 = vmatprep.subr.bf16.mxu0 0
  %185 = vmatpush2.bf16.msra.mxu0 0
  %186 = vmatprep.subr.bf16.mxu0 0
  %187 = vmatpush2.bf16.msra.mxu0 0
  %188 = vmatprep.subr.bf16.mxu0 0
  %189 = vmatpush2.bf16.msra.mxu0 0
  %190 = vmatprep.mubr.bf16.mxu0 0
  %191 = vmatmul.mubr.bf16.gmra.mxu0 %v147
  %v192 = vpop.f32.mrf.mxu0
  %v193 = vadd.f32 %v48, %v192
  %v194 = vpop.f32.mrf.mxu0
  %v195 = vadd.f32 %v52, %v194
  %v196 = vpop.f32.mrf.mxu0
  %v197 = vadd.f32 %v48, %v196
  %v198 = vpop.f32.mrf.mxu0
  %v199 = vadd.f32 %v52, %v198
  %200 = vmatprep.mubr.bf16.mxu0 0
  %201 = vmatmul.mubr.bf16.gmra.mxu0 %v150
  %v202 = vpop.f32.mrf.mxu0
  %v203 = vadd.f32 %v48, %v202
  %v204 = vpop.f32.mrf.mxu0
  %v205 = vadd.f32 %v52, %v204
  %v206 = vpop.f32.mrf.mxu0
  %v207 = vadd.f32 %v48, %v206
  %v208 = vpop.f32.mrf.mxu0
  %v209 = vadd.f32 %v52, %v208
  %210 = vmatprep.mubr.bf16.mxu0 0
  %211 = vmatmul.mubr.bf16.gmra.mxu0 %v153
  %v212 = vpop.f32.mrf.mxu0
  %v213 = vadd.f32 %v48, %v212
  %v214 = vpop.f32.mrf.mxu0
  %v215 = vadd.f32 %v52, %v214
  %v216 = vpop.f32.mrf.mxu0
  %v217 = vadd.f32 %v48, %v216
  %v218 = vpop.f32.mrf.mxu0
  %v219 = vadd.f32 %v52, %v218
  %220 = vmatprep.mubr.bf16.mxu0 0
  %221 = vmatmul.mubr.bf16.gmra.mxu0 %v156
  %v222 = vpop.f32.mrf.mxu0
  %v223 = vadd.f32 %v48, %v222
  %v224 = vpop.f32.mrf.mxu0
  %v225 = vadd.f32 %v52, %v224
  %v226 = vpop.f32.mrf.mxu0
  %v227 = vadd.f32 %v48, %v226
  %v228 = vpop.f32.mrf.mxu0
  %v229 = vadd.f32 %v52, %v228
  %230 = vdwg.mxu0
  %231 = vmatprep.subr.bf16.mxu0 0
  %232 = vmatpush1.bf16.msra.mxu0 0
  %233 = vmatprep.subr.bf16.mxu0 0
  %234 = vmatpush1.bf16.msra.mxu0 0
  %235 = vmatprep.subr.bf16.mxu0 0
  %236 = vmatpush1.bf16.msra.mxu0 0
  %237 = vmatprep.subr.bf16.mxu0 0
  %238 = vmatpush1.bf16.msra.mxu0 0
  %239 = vmatprep.subr.bf16.mxu0 %v128
  %240 = vmatpush1.bf16.msra.mxu0 %v127
  %241 = vmatprep.subr.bf16.mxu0 %v124
  %242 = vmatpush1.bf16.msra.mxu0 %v123
  %243 = vmatprep.subr.bf16.mxu0 %v120
  %244 = vmatpush1.bf16.msra.mxu0 %v119
  %245 = vmatprep.subr.bf16.mxu0 %v116
  %246 = vmatpush1.bf16.msra.mxu0 %v115
  %247 = vmatprep.subr.bf16.mxu0 0
  %248 = vmatpush2.bf16.msra.mxu0 0
  %249 = vmatprep.subr.bf16.mxu0 0
  %250 = vmatpush2.bf16.msra.mxu0 0
  %251 = vmatprep.subr.bf16.mxu0 0
  %252 = vmatpush2.bf16.msra.mxu0 0
  %253 = vmatprep.subr.bf16.mxu0 0
  %254 = vmatpush2.bf16.msra.mxu0 0
  %255 = vmatprep.subr.bf16.mxu0 0
  %256 = vmatpush2.bf16.msra.mxu0 0
  %257 = vmatprep.subr.bf16.mxu0 0
  %258 = vmatpush2.bf16.msra.mxu0 0
  %259 = vmatprep.subr.bf16.mxu0 0
  %260 = vmatpush2.bf16.msra.mxu0 0
  %261 = vmatprep.subr.bf16.mxu0 0
  %262 = vmatpush2.bf16.msra.mxu0 0
  %263 = vmatprep.mubr.bf16.mxu0 0
  %264 = vmatmul.mubr.bf16.gmra.mxu0 %v147
  %v265 = vpop.f32.mrf.mxu0
  %v266 = vadd.f32 %v56, %v265
  %v267 = vpop.f32.mrf.mxu0
  %v268 = vadd.f32 %v60, %v267
  %v269 = vpop.f32.mrf.mxu0
  %v270 = vadd.f32 %v56, %v269
  %v271 = vpop.f32.mrf.mxu0
  %v272 = vadd.f32 %v60, %v271
  %273 = vmatprep.mubr.bf16.mxu0 0
  %274 = vmatmul.mubr.bf16.gmra.mxu0 %v150
  %v275 = vpop.f32.mrf.mxu0
  %v276 = vadd.f32 %v56, %v275
  %v277 = vpop.f32.mrf.mxu0
  %v278 = vadd.f32 %v60, %v277
  %v279 = vpop.f32.mrf.mxu0
  %v280 = vadd.f32 %v56, %v279
  %v281 = vpop.f32.mrf.mxu0
  %v282 = vadd.f32 %v60, %v281
  %283 = vmatprep.mubr.bf16.mxu0 0
  %284 = vmatmul.mubr.bf16.gmra.mxu0 %v153
  %v285 = vpop.f32.mrf.mxu0
  %v286 = vadd.f32 %v56, %v285
  %v287 = vpop.f32.mrf.mxu0
  %v288 = vadd.f32 %v60, %v287
  %v289 = vpop.f32.mrf.mxu0
  %v290 = vadd.f32 %v56, %v289
  %v291 = vpop.f32.mrf.mxu0
  %v292 = vadd.f32 %v60, %v291
  %293 = vmatprep.mubr.bf16.mxu0 0
  %294 = vmatmul.mubr.bf16.gmra.mxu0 %v156
  %v295 = vpop.f32.mrf.mxu0
  %v296 = vadd.f32 %v56, %v295
  %v297 = vpop.f32.mrf.mxu0
  %v298 = vadd.f32 %v60, %v297
  %v299 = vpop.f32.mrf.mxu0
  %v300 = vadd.f32 %v56, %v299
  %v301 = vpop.f32.mrf.mxu0
  %v302 = vadd.f32 %v60, %v301
  %303 = vdwg.mxu0
  %304 = vst [vmem:[%s3] sm:$0xff] %v193
  %305 = vst [vmem:[%s3 + $0x8] sm:$0xff] %v195
  %306 = vst [vmem:[%s3 + $0x10] sm:$0xff] %v266
  %307 = vst [vmem:[%s3 + $0x18] sm:$0xff] %v268
  %308 = vst [vmem:[%s3 + $0x20] sm:$0xff] %v197
  %309 = vst [vmem:[%s3 + $0x28] sm:$0xff] %v199
  %310 = vst [vmem:[%s3 + $0x30] sm:$0xff] %v270
  %311 = vst [vmem:[%s3 + $0x38] sm:$0xff] %v272
  %312 = vst [vmem:[%s3 + $0x40] sm:$0xff] %v203
  %313 = vst [vmem:[%s3 + $0x48] sm:$0xff] %v205
  %314 = vst [vmem:[%s3 + $0x50] sm:$0xff] %v276
  %315 = vst [vmem:[%s3 + $0x58] sm:$0xff] %v278
  %316 = vst [vmem:[%s3 + $0x60] sm:$0xff] %v207
  %317 = vst [vmem:[%s3 + $0x68] sm:$0xff] %v209
  %318 = vst [vmem:[%s3 + $0x70] sm:$0xff] %v280
  %319 = vst [vmem:[%s3 + $0x78] sm:$0xff] %v282
  %320 = vst [vmem:[%s3 + $0x80] sm:$0xff] %v213
  %321 = vst [vmem:[%s3 + $0x88] sm:$0xff] %v215
  %322 = vst [vmem:[%s3 + $0x90] sm:$0xff] %v286
  %323 = vst [vmem:[%s3 + $0x98] sm:$0xff] %v288
  %324 = vst [vmem:[%s3 + $0xa0] sm:$0xff] %v217
  %325 = vst [vmem:[%s3 + $0xa8] sm:$0xff] %v219
  %326 = vst [vmem:[%s3 + $0xb0] sm:$0xff] %v290
  %327 = vst [vmem:[%s3 + $0xb8] sm:$0xff] %v292
  %328 = vst [vmem:[%s3 + $0xc0] sm:$0xff] %v223
  %329 = vst [vmem:[%s3 + $0xc8] sm:$0xff] %v225
  %330 = vst [vmem:[%s3 + $0xd0] sm:$0xff] %v296
  %331 = vst [vmem:[%s3 + $0xd8] sm:$0xff] %v298
  %332 = vst [vmem:[%s3 + $0xe0] sm:$0xff] %v227
  %333 = vst [vmem:[%s3 + $0xe8] sm:$0xff] %v229
  %334 = vst [vmem:[%s3 + $0xf0] sm:$0xff] %v300
  %335 = vst [vmem:[%s3 + $0xf8] sm:$0xff] %v302
  // Predicated region
  $region14: #{lstm_rnn_forward.7} parent=0 // pred_check
    _
  $region15: #{lstm_rnn_forward.7} parent=0 // pred_check_branch
    %337 = sbr.rel (0) target = $region17
  $region16: #{lstm_rnn_forward.7} parent=0 // pred_region
    _
  $region17: #{lstm_rnn_forward.7} parent=0 // pred_fallthru
    _
  // Predicated region
  $region18: #{lstm_rnn_forward.7} parent=0 // pred_check
    _
  $region19: #{lstm_rnn_forward.7} parent=0 // pred_check_branch
    %339 = sbr.rel (0) target = $region21
  $region20: #{lstm_rnn_forward.7} parent=0 // pred_region
    _
  $region21: #{lstm_rnn_forward.7} parent=0 // pred_fallthru
    _

// kernel: lstm_rnn_forward.11
$region0: #{lstm_rnn_forward.11}
  #allocation0 [shape = 'u32[]', space=smem, size = 0x4, offset = 0x4, fixed_abs, tag = 'smem constant byte address 0x4 - core index']
  #allocation1 [shape = 'u32[144,128]{1,0:T(1,128)}', space=vmem, size = 0x12000, scoped, tag = 'internal scratch']
  %s0 = inlined_call_operand.vmem [shape: f32[16,128], index: 0, kind: input, shape index: {}]
  %s1 = inlined_call_operand.vmem [shape: f32[16,128], index: 1, kind: input, shape index: {}]
  %s2 = inlined_call_operand.vmem [shape: bf16[128,512], index: 2, kind: input, shape index: {}]
  %s3 = inlined_call_operand.vmem [shape: bf16[128,512], index: 3, kind: input, shape index: {}]
  %s4 = inlined_call_operand.vmem [shape: f32[1,512], index: 4, kind: input, shape index: {}]
  %s5 = inlined_call_operand.vmem [shape: f32[16,512], index: 5, kind: output, shape index: {}]
  %s6 = sld [smem:[#allocation0]]
  $region30: #{lstm_rnn_forward.11} parent=0
    _
  %s8 = ssub.s32 1, %s6
  %s9 = scalar_select 0, %s8, %s6
  // Predicated region
  $region2: #{lstm_rnn_forward.11} parent=0 // pred_check
    _
  $region3: #{lstm_rnn_forward.11} parent=0 // pred_check_branch
    %11 = sbr.rel (0) target = $region5
  $region4: #{lstm_rnn_forward.11} parent=0 // pred_region
    _
  $region5: #{lstm_rnn_forward.11} parent=0 // pred_fallthru
    _
  // Predicated region
  $region6: #{lstm_rnn_forward.11} parent=0 // pred_check
    _
  $region7: #{lstm_rnn_forward.11} parent=0 // pred_check_branch
    %13 = sbr.rel (0) target = $region9
  $region8: #{lstm_rnn_forward.11} parent=0 // pred_region
    _
  $region9: #{lstm_rnn_forward.11} parent=0 // pred_fallthru
    _
  // Predicated region
  $region10: #{lstm_rnn_forward.11} parent=0 // pred_check
    _
  $region11: #{lstm_rnn_forward.11} parent=0 // pred_check_branch
    %15 = sbr.rel (0) target = $region13
  $region12: #{lstm_rnn_forward.11} parent=0 // pred_region
    _
  $region13: #{lstm_rnn_forward.11} parent=0 // pred_fallthru
    _
  // Predicated region
  $region14: #{lstm_rnn_forward.11} parent=0 // pred_check
    _
  $region15: #{lstm_rnn_forward.11} parent=0 // pred_check_branch
    %17 = sbr.rel (0) target = $region17
  $region16: #{lstm_rnn_forward.11} parent=0 // pred_region
    _
  $region17: #{lstm_rnn_forward.11} parent=0 // pred_fallthru
    _
  // Predicated region
  $region18: #{lstm_rnn_forward.11} parent=0 // pred_check
    _
  $region19: #{lstm_rnn_forward.11} parent=0 // pred_check_branch
    %19 = sbr.rel (0) target = $region21
  $region20: #{lstm_rnn_forward.11} parent=0 // pred_region
    _
  $region21: #{lstm_rnn_forward.11} parent=0 // pred_fallthru
    _
  %v21 = vld [vmem:[%s0] sm:$0xff]
  %v22 = vld [vmem:[%s0 + $0x8] sm:$0xff]
  %v23 = vpack.c.bf16 %v22, %v21
  %v24 = vld [vmem:[%s2] sm:$0xff]
  %v25 = vld [vmem:[%s2 + $0x8] sm:$0xff]
  %v26 = vld [vmem:[%s2 + $0x10] sm:$0xff]
  %v27 = vld [vmem:[%s2 + $0x18] sm:$0xff]
  %v28 = vld [vmem:[%s2 + $0x20] sm:$0xff]
  %v29 = vld [vmem:[%s2 + $0x28] sm:$0xff]
  %v30 = vld [vmem:[%s2 + $0x30] sm:$0xff]
  %v31 = vld [vmem:[%s2 + $0x38] sm:$0xff]
  %v32 = vld [vmem:[%s2 + $0x40] sm:$0xff]
  %v33 = vld [vmem:[%s2 + $0x48] sm:$0xff]
  %v34 = vld [vmem:[%s2 + $0x50] sm:$0xff]
  %v35 = vld [vmem:[%s2 + $0x58] sm:$0xff]
  %v36 = vld [vmem:[%s2 + $0x60] sm:$0xff]
  %v37 = vld [vmem:[%s2 + $0x68] sm:$0xff]
  %v38 = vld [vmem:[%s2 + $0x70] sm:$0xff]
  %v39 = vld [vmem:[%s2 + $0x78] sm:$0xff]
  %v40 = vld [vmem:[%s2 + $0x80] sm:$0xff]
  %v41 = vld [vmem:[%s2 + $0x88] sm:$0xff]
  %v42 = vld [vmem:[%s2 + $0x90] sm:$0xff]
  %v43 = vld [vmem:[%s2 + $0x98] sm:$0xff]
  %v44 = vld [vmem:[%s2 + $0xa0] sm:$0xff]
  %v45 = vld [vmem:[%s2 + $0xa8] sm:$0xff]
  %v46 = vld [vmem:[%s2 + $0xb0] sm:$0xff]
  %v47 = vld [vmem:[%s2 + $0xb8] sm:$0xff]
  %v48 = vld [vmem:[%s2 + $0xc0] sm:$0xff]
  %v49 = vld [vmem:[%s2 + $0xc8] sm:$0xff]
  %v50 = vld [vmem:[%s2 + $0xd0] sm:$0xff]
  %v51 = vld [vmem:[%s2 + $0xd8] sm:$0xff]
  %v52 = vld [vmem:[%s2 + $0xe0] sm:$0xff]
  %v53 = vld [vmem:[%s2 + $0xe8] sm:$0xff]
  %v54 = vld [vmem:[%s2 + $0xf0] sm:$0xff]
  %v55 = vld [vmem:[%s2 + $0xf8] sm:$0xff]
  %v56 = vld [vmem:[%s1] sm:$0xff]
  %v57 = vld [vmem:[%s1 + $0x8] sm:$0xff]
  %v58 = vpack.c.bf16 %v57, %v56
  %v59 = vld [vmem:[%s3] sm:$0xff]
  %v60 = vld [vmem:[%s3 + $0x8] sm:$0xff]
  %v61 = vld [vmem:[%s3 + $0x10] sm:$0xff]
  %v62 = vld [vmem:[%s3 + $0x18] sm:$0xff]
  %v63 = vld [vmem:[%s3 + $0x20] sm:$0xff]
  %v64 = vld [vmem:[%s3 + $0x28] sm:$0xff]
  %v65 = vld [vmem:[%s3 + $0x30] sm:$0xff]
  %v66 = vld [vmem:[%s3 + $0x38] sm:$0xff]
  %v67 = vld [vmem:[%s3 + $0x40] sm:$0xff]
  %v68 = vld [vmem:[%s3 + $0x48] sm:$0xff]
  %v69 = vld [vmem:[%s3 + $0x50] sm:$0xff]
  %v70 = vld [vmem:[%s3 + $0x58] sm:$0xff]
  %v71 = vld [vmem:[%s3 + $0x60] sm:$0xff]
  %v72 = vld [vmem:[%s3 + $0x68] sm:$0xff]
  %v73 = vld [vmem:[%s3 + $0x70] sm:$0xff]
  %v74 = vld [vmem:[%s3 + $0x78] sm:$0xff]
  %v75 = vld [vmem:[%s3 + $0x80] sm:$0xff]
  %v76 = vld [vmem:[%s3 + $0x88] sm:$0xff]
  %v77 = vld [vmem:[%s3 + $0x90] sm:$0xff]
  %v78 = vld [vmem:[%s3 + $0x98] sm:$0xff]
  %v79 = vld [vmem:[%s3 + $0xa0] sm:$0xff]
  %v80 = vld [vmem:[%s3 + $0xa8] sm:$0xff]
  %v81 = vld [vmem:[%s3 + $0xb0] sm:$0xff]
  %v82 = vld [vmem:[%s3 + $0xb8] sm:$0xff]
  %v83 = vld [vmem:[%s3 + $0xc0] sm:$0xff]
  %v84 = vld [vmem:[%s3 + $0xc8] sm:$0xff]
  %v85 = vld [vmem:[%s3 + $0xd0] sm:$0xff]
  %v86 = vld [vmem:[%s3 + $0xd8] sm:$0xff]
  %v87 = vld [vmem:[%s3 + $0xe0] sm:$0xff]
  %v88 = vld [vmem:[%s3 + $0xe8] sm:$0xff]
  %v89 = vld [vmem:[%s3 + $0xf0] sm:$0xff]
  %v90 = vld [vmem:[%s3 + $0xf8] sm:$0xff]
  %v123 = vunpack.c.l.b16 %v59
  %v124 = vunpack.c.h.b16 %v59
  %v125 = vunpack.c.l.b16 %v60
  %v126 = vunpack.c.h.b16 %v60
  %v127 = vunpack.c.l.b16 %v61
  %v128 = vunpack.c.h.b16 %v61
  %v129 = vunpack.c.l.b16 %v62
  %v130 = vunpack.c.h.b16 %v62
  %v131 = vunpack.c.l.b16 %v63
  %v132 = vunpack.c.h.b16 %v63
  %v133 = vunpack.c.l.b16 %v64
  %v134 = vunpack.c.h.b16 %v64
  %v135 = vunpack.c.l.b16 %v65
  %v136 = vunpack.c.h.b16 %v65
  %v137 = vunpack.c.l.b16 %v66
  %v138 = vunpack.c.h.b16 %v66
  %v139 = vunpack.c.l.b16 %v67
  %v140 = vunpack.c.h.b16 %v67
  %v141 = vunpack.c.l.b16 %v68
  %v142 = vunpack.c.h.b16 %v68
  %v143 = vunpack.c.l.b16 %v69
  %v144 = vunpack.c.h.b16 %v69
  %v145 = vunpack.c.l.b16 %v70
  %v146 = vunpack.c.h.b16 %v70
  %v147 = vunpack.c.l.b16 %v71
  %v148 = vunpack.c.h.b16 %v71
  %v149 = vunpack.c.l.b16 %v72
  %v150 = vunpack.c.h.b16 %v72
  %v151 = vunpack.c.l.b16 %v73
  %v152 = vunpack.c.h.b16 %v73
  %v153 = vunpack.c.l.b16 %v74
  %v154 = vunpack.c.h.b16 %v74
  %v155 = vunpack.c.l.b16 %v75
  %v156 = vunpack.c.h.b16 %v75
  %v157 = vunpack.c.l.b16 %v76
  %v158 = vunpack.c.h.b16 %v76
  %v159 = vunpack.c.l.b16 %v77
  %v160 = vunpack.c.h.b16 %v77
  %v161 = vunpack.c.l.b16 %v78
  %v162 = vunpack.c.h.b16 %v78
  %v163 = vunpack.c.l.b16 %v79
  %v164 = vunpack.c.h.b16 %v79
  %v165 = vunpack.c.l.b16 %v80
  %v166 = vunpack.c.h.b16 %v80
  %v167 = vunpack.c.l.b16 %v81
  %v168 = vunpack.c.h.b16 %v81
  %v169 = vunpack.c.l.b16 %v82
  %v170 = vunpack.c.h.b16 %v82
  %v171 = vunpack.c.l.b16 %v83
  %v172 = vunpack.c.h.b16 %v83
  %v173 = vunpack.c.l.b16 %v84
  %v174 = vunpack.c.h.b16 %v84
  %v175 = vunpack.c.l.b16 %v85
  %v176 = vunpack.c.h.b16 %v85
  %v177 = vunpack.c.l.b16 %v86
  %v178 = vunpack.c.h.b16 %v86
  %v179 = vunpack.c.l.b16 %v87
  %v180 = vunpack.c.h.b16 %v87
  %v181 = vunpack.c.l.b16 %v88
  %v182 = vunpack.c.h.b16 %v88
  %v183 = vunpack.c.l.b16 %v89
  %v184 = vunpack.c.h.b16 %v89
  %v185 = vunpack.c.l.b16 %v90
  %v186 = vunpack.c.h.b16 %v90
  %v187 = vpack.c.b16 %v127, %v123
  %v188 = vpack.c.b16 %v128, %v124
  %v189 = vpack.c.b16 %v129, %v125
  %v190 = vpack.c.b16 %v130, %v126
  %v191 = vpack.c.b16 %v135, %v131
  %v192 = vpack.c.b16 %v136, %v132
  %v193 = vpack.c.b16 %v137, %v133
  %v194 = vpack.c.b16 %v138, %v134
  %v195 = vpack.c.b16 %v143, %v139
  %v196 = vpack.c.b16 %v144, %v140
  %v197 = vpack.c.b16 %v145, %v141
  %v198 = vpack.c.b16 %v146, %v142
  %v199 = vpack.c.b16 %v151, %v147
  %v200 = vpack.c.b16 %v152, %v148
  %v201 = vpack.c.b16 %v153, %v149
  %v202 = vpack.c.b16 %v154, %v150
  %v203 = vpack.c.b16 %v159, %v155
  %v204 = vpack.c.b16 %v160, %v156
  %v205 = vpack.c.b16 %v161, %v157
  %v206 = vpack.c.b16 %v162, %v158
  %v207 = vpack.c.b16 %v167, %v163
  %v208 = vpack.c.b16 %v168, %v164
  %v209 = vpack.c.b16 %v169, %v165
  %v210 = vpack.c.b16 %v170, %v166
  %v211 = vpack.c.b16 %v175, %v171
  %v212 = vpack.c.b16 %v176, %v172
  %v213 = vpack.c.b16 %v177, %v173
  %v214 = vpack.c.b16 %v178, %v174
  %v215 = vpack.c.b16 %v183, %v179
  %v216 = vpack.c.b16 %v184, %v180
  %v217 = vpack.c.b16 %v185, %v181
  %v218 = vpack.c.b16 %v186, %v182
  %251 = vmatprep.subr.bf16.mxu0 %v216
  %252 = vmatpush1.bf16.msra.mxu0 %v215
  %253 = vmatprep.subr.bf16.mxu0 %v212
  %254 = vmatpush1.bf16.msra.mxu0 %v211
  %255 = vmatprep.subr.bf16.mxu0 %v208
  %256 = vmatpush1.bf16.msra.mxu0 %v207
  %257 = vmatprep.subr.bf16.mxu0 %v204
  %258 = vmatpush1.bf16.msra.mxu0 %v203
  %259 = vmatprep.subr.bf16.mxu0 %v200
  %260 = vmatpush1.bf16.msra.mxu0 %v199
  %261 = vmatprep.subr.bf16.mxu0 %v196
  %262 = vmatpush1.bf16.msra.mxu0 %v195
  %263 = vmatprep.subr.bf16.mxu0 %v192
  %264 = vmatpush1.bf16.msra.mxu0 %v191
  %265 = vmatprep.subr.bf16.mxu0 %v188
  %266 = vmatpush1.bf16.msra.mxu0 %v187
  %267 = vmatprep.subr.bf16.mxu0 0
  %268 = vmatpush2.bf16.msra.mxu0 0
  %269 = vmatprep.subr.bf16.mxu0 0
  %270 = vmatpush2.bf16.msra.mxu0 0
  %271 = vmatprep.subr.bf16.mxu0 0
  %272 = vmatpush2.bf16.msra.mxu0 0
  %273 = vmatprep.subr.bf16.mxu0 0
  %274 = vmatpush2.bf16.msra.mxu0 0
  %275 = vmatprep.subr.bf16.mxu0 0
  %276 = vmatpush2.bf16.msra.mxu0 0
  %277 = vmatprep.subr.bf16.mxu0 0
  %278 = vmatpush2.bf16.msra.mxu0 0
  %279 = vmatprep.subr.bf16.mxu0 0
  %280 = vmatpush2.bf16.msra.mxu0 0
  %281 = vmatprep.subr.bf16.mxu0 0
  %282 = vmatpush2.bf16.msra.mxu0 0
  %283 = vmatprep.mubr.bf16.mxu0 0
  %284 = vmatmul.mubr.bf16.gmra.mxu0 %v58
  %v285 = vpop.f32.mrf.mxu0
  %v286 = vadd.f32 0.0, %v285
  %v287 = vpop.f32.mrf.mxu0
  %v288 = vadd.f32 0.0, %v287
  %v289 = vpop.f32.mrf.mxu0
  %v290 = vadd.f32 0.0, %v289
  %v291 = vpop.f32.mrf.mxu0
  %v292 = vadd.f32 0.0, %v291
  %293 = vdwg.mxu0
  %294 = vmatprep.subr.bf16.mxu0 %v218
  %295 = vmatpush1.bf16.msra.mxu0 %v217
  %296 = vmatprep.subr.bf16.mxu0 %v214
  %297 = vmatpush1.bf16.msra.mxu0 %v213
  %298 = vmatprep.subr.bf16.mxu0 %v210
  %299 = vmatpush1.bf16.msra.mxu0 %v209
  %300 = vmatprep.subr.bf16.mxu0 %v206
  %301 = vmatpush1.bf16.msra.mxu0 %v205
  %302 = vmatprep.subr.bf16.mxu0 %v202
  %303 = vmatpush1.bf16.msra.mxu0 %v201
  %304 = vmatprep.subr.bf16.mxu0 %v198
  %305 = vmatpush1.bf16.msra.mxu0 %v197
  %306 = vmatprep.subr.bf16.mxu0 %v194
  %307 = vmatpush1.bf16.msra.mxu0 %v193
  %308 = vmatprep.subr.bf16.mxu0 %v190
  %309 = vmatpush1.bf16.msra.mxu0 %v189
  %310 = vmatprep.subr.bf16.mxu0 0
  %311 = vmatpush2.bf16.msra.mxu0 0
  %312 = vmatprep.subr.bf16.mxu0 0
  %313 = vmatpush2.bf16.msra.mxu0 0
  %314 = vmatprep.subr.bf16.mxu0 0
  %315 = vmatpush2.bf16.msra.mxu0 0
  %316 = vmatprep.subr.bf16.mxu0 0
  %317 = vmatpush2.bf16.msra.mxu0 0
  %318 = vmatprep.subr.bf16.mxu0 0
  %319 = vmatpush2.bf16.msra.mxu0 0
  %320 = vmatprep.subr.bf16.mxu0 0
  %321 = vmatpush2.bf16.msra.mxu0 0
  %322 = vmatprep.subr.bf16.mxu0 0
  %323 = vmatpush2.bf16.msra.mxu0 0
  %324 = vmatprep.subr.bf16.mxu0 0
  %325 = vmatpush2.bf16.msra.mxu0 0
  %326 = vmatprep.mubr.bf16.mxu0 0
  %327 = vmatmul.mubr.bf16.gmra.mxu0 %v58
  %v328 = vpop.f32.mrf.mxu0
  %v329 = vadd.f32 0.0, %v328
  %v330 = vpop.f32.mrf.mxu0
  %v331 = vadd.f32 0.0, %v330
  %v332 = vpop.f32.mrf.mxu0
  %v333 = vadd.f32 0.0, %v332
  %v334 = vpop.f32.mrf.mxu0
  %v335 = vadd.f32 0.0, %v334
  %336 = vdwg.mxu0
  %v369 = vunpack.c.l.b16 %v24
  %v370 = vunpack.c.h.b16 %v24
  %v371 = vunpack.c.l.b16 %v25
  %v372 = vunpack.c.h.b16 %v25
  %v373 = vunpack.c.l.b16 %v26
  %v374 = vunpack.c.h.b16 %v26
  %v375 = vunpack.c.l.b16 %v27
  %v376 = vunpack.c.h.b16 %v27
  %v377 = vunpack.c.l.b16 %v28
  %v378 = vunpack.c.h.b16 %v28
  %v379 = vunpack.c.l.b16 %v29
  %v380 = vunpack.c.h.b16 %v29
  %v381 = vunpack.c.l.b16 %v30
  %v382 = vunpack.c.h.b16 %v30
  %v383 = vunpack.c.l.b16 %v31
  %v384 = vunpack.c.h.b16 %v31
  %v385 = vunpack.c.l.b16 %v32
  %v386 = vunpack.c.h.b16 %v32
  %v387 = vunpack.c.l.b16 %v33
  %v388 = vunpack.c.h.b16 %v33
  %v389 = vunpack.c.l.b16 %v34
  %v390 = vunpack.c.h.b16 %v34
  %v391 = vunpack.c.l.b16 %v35
  %v392 = vunpack.c.h.b16 %v35
  %v393 = vunpack.c.l.b16 %v36
  %v394 = vunpack.c.h.b16 %v36
  %v395 = vunpack.c.l.b16 %v37
  %v396 = vunpack.c.h.b16 %v37
  %v397 = vunpack.c.l.b16 %v38
  %v398 = vunpack.c.h.b16 %v38
  %v399 = vunpack.c.l.b16 %v39
  %v400 = vunpack.c.h.b16 %v39
  %v401 = vunpack.c.l.b16 %v40
  %v402 = vunpack.c.h.b16 %v40
  %v403 = vunpack.c.l.b16 %v41
  %v404 = vunpack.c.h.b16 %v41
  %v405 = vunpack.c.l.b16 %v42
  %v406 = vunpack.c.h.b16 %v42
  %v407 = vunpack.c.l.b16 %v43
  %v408 = vunpack.c.h.b16 %v43
  %v409 = vunpack.c.l.b16 %v44
  %v410 = vunpack.c.h.b16 %v44
  %v411 = vunpack.c.l.b16 %v45
  %v412 = vunpack.c.h.b16 %v45
  %v413 = vunpack.c.l.b16 %v46
  %v414 = vunpack.c.h.b16 %v46
  %v415 = vunpack.c.l.b16 %v47
  %v416 = vunpack.c.h.b16 %v47
  %v417 = vunpack.c.l.b16 %v48
  %v418 = vunpack.c.h.b16 %v48
  %v419 = vunpack.c.l.b16 %v49
  %v420 = vunpack.c.h.b16 %v49
  %v421 = vunpack.c.l.b16 %v50
  %v422 = vunpack.c.h.b16 %v50
  %v423 = vunpack.c.l.b16 %v51
  %v424 = vunpack.c.h.b16 %v51
  %v425 = vunpack.c.l.b16 %v52
  %v426 = vunpack.c.h.b16 %v52
  %v427 = vunpack.c.l.b16 %v53
  %v428 = vunpack.c.h.b16 %v53
  %v429 = vunpack.c.l.b16 %v54
  %v430 = vunpack.c.h.b16 %v54
  %v431 = vunpack.c.l.b16 %v55
  %v432 = vunpack.c.h.b16 %v55
  %v433 = vpack.c.b16 %v373, %v369
  %v434 = vpack.c.b16 %v374, %v370
  %v435 = vpack.c.b16 %v375, %v371
  %v436 = vpack.c.b16 %v376, %v372
  %v437 = vpack.c.b16 %v381, %v377
  %v438 = vpack.c.b16 %v382, %v378
  %v439 = vpack.c.b16 %v383, %v379
  %v440 = vpack.c.b16 %v384, %v380
  %v441 = vpack.c.b16 %v389, %v385
  %v442 = vpack.c.b16 %v390, %v386
  %v443 = vpack.c.b16 %v391, %v387
  %v444 = vpack.c.b16 %v392, %v388
  %v445 = vpack.c.b16 %v397, %v393
  %v446 = vpack.c.b16 %v398, %v394
  %v447 = vpack.c.b16 %v399, %v395
  %v448 = vpack.c.b16 %v400, %v396
  %v449 = vpack.c.b16 %v405, %v401
  %v450 = vpack.c.b16 %v406, %v402
  %v451 = vpack.c.b16 %v407, %v403
  %v452 = vpack.c.b16 %v408, %v404
  %v453 = vpack.c.b16 %v413, %v409
  %v454 = vpack.c.b16 %v414, %v410
  %v455 = vpack.c.b16 %v415, %v411
  %v456 = vpack.c.b16 %v416, %v412
  %v457 = vpack.c.b16 %v421, %v417
  %v458 = vpack.c.b16 %v422, %v418
  %v459 = vpack.c.b16 %v423, %v419
  %v460 = vpack.c.b16 %v424, %v420
  %v461 = vpack.c.b16 %v429, %v425
  %v462 = vpack.c.b16 %v430, %v426
  %v463 = vpack.c.b16 %v431, %v427
  %v464 = vpack.c.b16 %v432, %v428
  %497 = vmatprep.subr.bf16.mxu0 %v462
  %498 = vmatpush1.bf16.msra.mxu0 %v461
  %499 = vmatprep.subr.bf16.mxu0 %v458
  %500 = vmatpush1.bf16.msra.mxu0 %v457
  %501 = vmatprep.subr.bf16.mxu0 %v454
  %502 = vmatpush1.bf16.msra.mxu0 %v453
  %503 = vmatprep.subr.bf16.mxu0 %v450
  %504 = vmatpush1.bf16.msra.mxu0 %v449
  %505 = vmatprep.subr.bf16.mxu0 %v446
  %506 = vmatpush1.bf16.msra.mxu0 %v445
  %507 = vmatprep.subr.bf16.mxu0 %v442
  %508 = vmatpush1.bf16.msra.mxu0 %v441
  %509 = vmatprep.subr.bf16.mxu0 %v438
  %510 = vmatpush1.bf16.msra.mxu0 %v437
  %511 = vmatprep.subr.bf16.mxu0 %v434
  %512 = vmatpush1.bf16.msra.mxu0 %v433
  %513 = vmatprep.subr.bf16.mxu0 0
  %514 = vmatpush2.bf16.msra.mxu0 0
  %515 = vmatprep.subr.bf16.mxu0 0
  %516 = vmatpush2.bf16.msra.mxu0 0
  %517 = vmatprep.subr.bf16.mxu0 0
  %518 = vmatpush2.bf16.msra.mxu0 0
  %519 = vmatprep.subr.bf16.mxu0 0
  %520 = vmatpush2.bf16.msra.mxu0 0
  %521 = vmatprep.subr.bf16.mxu0 0
  %522 = vmatpush2.bf16.msra.mxu0 0
  %523 = vmatprep.subr.bf16.mxu0 0
  %524 = vmatpush2.bf16.msra.mxu0 0
  %525 = vmatprep.subr.bf16.mxu0 0
  %526 = vmatpush2.bf16.msra.mxu0 0
  %527 = vmatprep.subr.bf16.mxu0 0
  %528 = vmatpush2.bf16.msra.mxu0 0
  %529 = vmatprep.mubr.bf16.mxu0 0
  %530 = vmatmul.mubr.bf16.gmra.mxu0 %v23
  %v531 = vpop.f32.mrf.mxu0
  %v532 = vadd.f32 %v286, %v531
  %v533 = vpop.f32.mrf.mxu0
  %v534 = vadd.f32 %v288, %v533
  %v535 = vpop.f32.mrf.mxu0
  %v536 = vadd.f32 %v290, %v535
  %v537 = vpop.f32.mrf.mxu0
  %v538 = vadd.f32 %v292, %v537
  %539 = vdwg.mxu0
  %540 = vmatprep.subr.bf16.mxu0 %v464
  %541 = vmatpush1.bf16.msra.mxu0 %v463
  %542 = vmatprep.subr.bf16.mxu0 %v460
  %543 = vmatpush1.bf16.msra.mxu0 %v459
  %544 = vmatprep.subr.bf16.mxu0 %v456
  %545 = vmatpush1.bf16.msra.mxu0 %v455
  %546 = vmatprep.subr.bf16.mxu0 %v452
  %547 = vmatpush1.bf16.msra.mxu0 %v451
  %548 = vmatprep.subr.bf16.mxu0 %v448
  %549 = vmatpush1.bf16.msra.mxu0 %v447
  %550 = vmatprep.subr.bf16.mxu0 %v444
  %551 = vmatpush1.bf16.msra.mxu0 %v443
  %552 = vmatprep.subr.bf16.mxu0 %v440
  %553 = vmatpush1.bf16.msra.mxu0 %v439
  %554 = vmatprep.subr.bf16.mxu0 %v436
  %555 = vmatpush1.bf16.msra.mxu0 %v435
  %556 = vmatprep.subr.bf16.mxu0 0
  %557 = vmatpush2.bf16.msra.mxu0 0
  %558 = vmatprep.subr.bf16.mxu0 0
  %559 = vmatpush2.bf16.msra.mxu0 0
  %560 = vmatprep.subr.bf16.mxu0 0
  %561 = vmatpush2.bf16.msra.mxu0 0
  %562 = vmatprep.subr.bf16.mxu0 0
  %563 = vmatpush2.bf16.msra.mxu0 0
  %564 = vmatprep.subr.bf16.mxu0 0
  %565 = vmatpush2.bf16.msra.mxu0 0
  %566 = vmatprep.subr.bf16.mxu0 0
  %567 = vmatpush2.bf16.msra.mxu0 0
  %568 = vmatprep.subr.bf16.mxu0 0
  %569 = vmatpush2.bf16.msra.mxu0 0
  %570 = vmatprep.subr.bf16.mxu0 0
  %571 = vmatpush2.bf16.msra.mxu0 0
  %572 = vmatprep.mubr.bf16.mxu0 0
  %573 = vmatmul.mubr.bf16.gmra.mxu0 %v23
  %v574 = vpop.f32.mrf.mxu0
  %v575 = vadd.f32 %v329, %v574
  %v576 = vpop.f32.mrf.mxu0
  %v577 = vadd.f32 %v331, %v576
  %v578 = vpop.f32.mrf.mxu0
  %v579 = vadd.f32 %v333, %v578
  %v580 = vpop.f32.mrf.mxu0
  %v581 = vadd.f32 %v335, %v580
  %582 = vdwg.mxu0
  %v583 = vld [vmem:[%s4] sm:$0xf]
  %v585 = vlaneseq
  %v586 = vshrl.u32 %v585, 7
  %v587 = vsub.s32 0, %v586
  %v588 = vrot.slane %v583, %v587
  %v589 = vlaneseq
  %v590 = vshrl.u32 %v589, 7
  %v591 = vsub.s32 1, %v590
  %v592 = vrot.slane %v583, %v591
  %v593 = vlaneseq
  %v594 = vshrl.u32 %v593, 7
  %v595 = vsub.s32 2, %v594
  %v596 = vrot.slane %v583, %v595
  %v597 = vlaneseq
  %v598 = vshrl.u32 %v597, 7
  %v599 = vsub.s32 3, %v598
  %v600 = vrot.slane %v583, %v599
  %v605 = vadd.f32 %v532, %v588
  %v606 = vadd.f32 %v534, %v592
  %v607 = vadd.f32 %v575, %v596
  %v608 = vadd.f32 %v577, %v600
  %v609 = vadd.f32 %v536, %v588
  %v610 = vadd.f32 %v538, %v592
  %v611 = vadd.f32 %v579, %v596
  %v612 = vadd.f32 %v581, %v600
  %613 = vst [vmem:[%s5] sm:$0xff] %v605
  %614 = vst [vmem:[%s5 + $0x8] sm:$0xff] %v606
  %615 = vst [vmem:[%s5 + $0x10] sm:$0xff] %v607
  %616 = vst [vmem:[%s5 + $0x18] sm:$0xff] %v608
  %617 = vst [vmem:[%s5 + $0x20] sm:$0xff] %v609
  %618 = vst [vmem:[%s5 + $0x28] sm:$0xff] %v610
  %619 = vst [vmem:[%s5 + $0x30] sm:$0xff] %v611
  %620 = vst [vmem:[%s5 + $0x38] sm:$0xff] %v612
  // Predicated region
  $region22: #{lstm_rnn_forward.11} parent=0 // pred_check
    _
  $region23: #{lstm_rnn_forward.11} parent=0 // pred_check_branch
    %622 = sbr.rel (0) target = $region25
  $region24: #{lstm_rnn_forward.11} parent=0 // pred_region
    _
  $region25: #{lstm_rnn_forward.11} parent=0 // pred_fallthru
    _
  // Predicated region
  $region26: #{lstm_rnn_forward.11} parent=0 // pred_check
    _
  $region27: #{lstm_rnn_forward.11} parent=0 // pred_check_branch
    %624 = sbr.rel (0) target = $region29
  $region28: #{lstm_rnn_forward.11} parent=0 // pred_region
    _
  $region29: #{lstm_rnn_forward.11} parent=0 // pred_fallthru
    _

// kernel: lstm_rnn_forward.13
$region0: #{lstm_rnn_forward.13}
  #allocation0 [shape = 'u32[]', space=smem, size = 0x4, offset = 0x4, fixed_abs, tag = 'smem constant byte address 0x4 - core index']
  #allocation1 [shape = 'u32[144,128]{1,0:T(1,128)}', space=vmem, size = 0x12000, scoped, tag = 'internal scratch']
  %s0 = inlined_call_operand.vmem [shape: f32[16,128], index: 0, kind: input, shape index: {}]
  %s1 = inlined_call_operand.vmem [shape: f32[16,128], index: 1, kind: input, shape index: {}]
  %s2 = inlined_call_operand.vmem [shape: bf16[128,128], index: 2, kind: input, shape index: {}]
  %s3 = inlined_call_operand.vmem [shape: bf16[128,128], index: 3, kind: input, shape index: {}]
  %s4 = inlined_call_operand.vmem [shape: f32[1,128], index: 4, kind: input, shape index: {}]
  %s5 = inlined_call_operand.vmem [shape: f32[16,128], index: 5, kind: output, shape index: {}]
  %s6 = sld [smem:[#allocation0]]
  $region30: #{lstm_rnn_forward.13} parent=0
    _
  %s8 = ssub.s32 1, %s6
  %s9 = scalar_select 0, %s8, %s6
  // Predicated region
  $region2: #{lstm_rnn_forward.13} parent=0 // pred_check
    _
  $region3: #{lstm_rnn_forward.13} parent=0 // pred_check_branch
    %11 = sbr.rel (0) target = $region5
  $region4: #{lstm_rnn_forward.13} parent=0 // pred_region
    _
  $region5: #{lstm_rnn_forward.13} parent=0 // pred_fallthru
    _
  // Predicated region
  $region6: #{lstm_rnn_forward.13} parent=0 // pred_check
    _
  $region7: #{lstm_rnn_forward.13} parent=0 // pred_check_branch
    %13 = sbr.rel (0) target = $region9
  $region8: #{lstm_rnn_forward.13} parent=0 // pred_region
    _
  $region9: #{lstm_rnn_forward.13} parent=0 // pred_fallthru
    _
  // Predicated region
  $region10: #{lstm_rnn_forward.13} parent=0 // pred_check
    _
  $region11: #{lstm_rnn_forward.13} parent=0 // pred_check_branch
    %15 = sbr.rel (0) target = $region13
  $region12: #{lstm_rnn_forward.13} parent=0 // pred_region
    _
  $region13: #{lstm_rnn_forward.13} parent=0 // pred_fallthru
    _
  // Predicated region
  $region14: #{lstm_rnn_forward.13} parent=0 // pred_check
    _
  $region15: #{lstm_rnn_forward.13} parent=0 // pred_check_branch
    %17 = sbr.rel (0) target = $region17
  $region16: #{lstm_rnn_forward.13} parent=0 // pred_region
    _
  $region17: #{lstm_rnn_forward.13} parent=0 // pred_fallthru
    _
  // Predicated region
  $region18: #{lstm_rnn_forward.13} parent=0 // pred_check
    _
  $region19: #{lstm_rnn_forward.13} parent=0 // pred_check_branch
    %19 = sbr.rel (0) target = $region21
  $region20: #{lstm_rnn_forward.13} parent=0 // pred_region
    _
  $region21: #{lstm_rnn_forward.13} parent=0 // pred_fallthru
    _
  %v21 = vld [vmem:[%s0] sm:$0xff]
  %v22 = vld [vmem:[%s0 + $0x8] sm:$0xff]
  %v23 = vpack.c.bf16 %v22, %v21
  %v24 = vld [vmem:[%s2] sm:$0xf]
  %v25 = vld [vmem:[%s2 + $0x4] sm:$0xf]
  %v26 = vld [vmem:[%s2 + $0x8] sm:$0xf]
  %v27 = vld [vmem:[%s2 + $0xc] sm:$0xf]
  %v28 = vld [vmem:[%s2 + $0x10] sm:$0xf]
  %v29 = vld [vmem:[%s2 + $0x14] sm:$0xf]
  %v30 = vld [vmem:[%s2 + $0x18] sm:$0xf]
  %v31 = vld [vmem:[%s2 + $0x1c] sm:$0xf]
  %v32 = vld [vmem:[%s2 + $0x20] sm:$0xf]
  %v33 = vld [vmem:[%s2 + $0x24] sm:$0xf]
  %v34 = vld [vmem:[%s2 + $0x28] sm:$0xf]
  %v35 = vld [vmem:[%s2 + $0x2c] sm:$0xf]
  %v36 = vld [vmem:[%s2 + $0x30] sm:$0xf]
  %v37 = vld [vmem:[%s2 + $0x34] sm:$0xf]
  %v38 = vld [vmem:[%s2 + $0x38] sm:$0xf]
  %v39 = vld [vmem:[%s2 + $0x3c] sm:$0xf]
  %v40 = vld [vmem:[%s1] sm:$0xff]
  %v41 = vld [vmem:[%s1 + $0x8] sm:$0xff]
  %v42 = vpack.c.bf16 %v41, %v40
  %v43 = vld [vmem:[%s3] sm:$0xf]
  %v44 = vld [vmem:[%s3 + $0x4] sm:$0xf]
  %v45 = vld [vmem:[%s3 + $0x8] sm:$0xf]
  %v46 = vld [vmem:[%s3 + $0xc] sm:$0xf]
  %v47 = vld [vmem:[%s3 + $0x10] sm:$0xf]
  %v48 = vld [vmem:[%s3 + $0x14] sm:$0xf]
  %v49 = vld [vmem:[%s3 + $0x18] sm:$0xf]
  %v50 = vld [vmem:[%s3 + $0x1c] sm:$0xf]
  %v51 = vld [vmem:[%s3 + $0x20] sm:$0xf]
  %v52 = vld [vmem:[%s3 + $0x24] sm:$0xf]
  %v53 = vld [vmem:[%s3 + $0x28] sm:$0xf]
  %v54 = vld [vmem:[%s3 + $0x2c] sm:$0xf]
  %v55 = vld [vmem:[%s3 + $0x30] sm:$0xf]
  %v56 = vld [vmem:[%s3 + $0x34] sm:$0xf]
  %v57 = vld [vmem:[%s3 + $0x38] sm:$0xf]
  %v58 = vld [vmem:[%s3 + $0x3c] sm:$0xf]
  %v75 = vunpack.c.l.b16 %v43
  %v76 = vunpack.c.l.b16 %v44
  %v77 = vunpack.c.l.b16 %v45
  %v78 = vunpack.c.l.b16 %v46
  %v79 = vunpack.c.l.b16 %v47
  %v80 = vunpack.c.l.b16 %v48
  %v81 = vunpack.c.l.b16 %v49
  %v82 = vunpack.c.l.b16 %v50
  %v83 = vunpack.c.l.b16 %v51
  %v84 = vunpack.c.l.b16 %v52
  %v85 = vunpack.c.l.b16 %v53
  %v86 = vunpack.c.l.b16 %v54
  %v87 = vunpack.c.l.b16 %v55
  %v88 = vunpack.c.l.b16 %v56
  %v89 = vunpack.c.l.b16 %v57
  %v90 = vunpack.c.l.b16 %v58
  %v91 = vpack.c.b16 %v76, %v75
  %v92 = vpack.c.b16 %v78, %v77
  %v93 = vpack.c.b16 %v80, %v79
  %v94 = vpack.c.b16 %v82, %v81
  %v95 = vpack.c.b16 %v84, %v83
  %v96 = vpack.c.b16 %v86, %v85
  %v97 = vpack.c.b16 %v88, %v87
  %v98 = vpack.c.b16 %v90, %v89
  %107 = vmatprep.subr.bf16.mxu0 0
  %108 = vmatpush1.bf16.msra.mxu0 %v98
  %109 = vmatprep.subr.bf16.mxu0 0
  %110 = vmatpush1.bf16.msra.mxu0 %v97
  %111 = vmatprep.subr.bf16.mxu0 0
  %112 = vmatpush1.bf16.msra.mxu0 %v96
  %113 = vmatprep.subr.bf16.mxu0 0
  %114 = vmatpush1.bf16.msra.mxu0 %v95
  %115 = vmatprep.subr.bf16.mxu0 0
  %116 = vmatpush1.bf16.msra.mxu0 %v94
  %117 = vmatprep.subr.bf16.mxu0 0
  %118 = vmatpush1.bf16.msra.mxu0 %v93
  %119 = vmatprep.subr.bf16.mxu0 0
  %120 = vmatpush1.bf16.msra.mxu0 %v92
  %121 = vmatprep.subr.bf16.mxu0 0
  %122 = vmatpush1.bf16.msra.mxu0 %v91
  %123 = vmatprep.subr.bf16.mxu0 0
  %124 = vmatpush2.bf16.msra.mxu0 0
  %125 = vmatprep.subr.bf16.mxu0 0
  %126 = vmatpush2.bf16.msra.mxu0 0
  %127 = vmatprep.subr.bf16.mxu0 0
  %128 = vmatpush2.bf16.msra.mxu0 0
  %129 = vmatprep.subr.bf16.mxu0 0
  %130 = vmatpush2.bf16.msra.mxu0 0
  %131 = vmatprep.subr.bf16.mxu0 0
  %132 = vmatpush2.bf16.msra.mxu0 0
  %133 = vmatprep.subr.bf16.mxu0 0
  %134 = vmatpush2.bf16.msra.mxu0 0
  %135 = vmatprep.subr.bf16.mxu0 0
  %136 = vmatpush2.bf16.msra.mxu0 0
  %137 = vmatprep.subr.bf16.mxu0 0
  %138 = vmatpush2.bf16.msra.mxu0 0
  %139 = vmatprep.mubr.bf16.mxu0 0
  %140 = vmatmul.mubr.bf16.gmra.mxu0 %v42
  %v141 = vpop.f32.mrf.mxu0
  %v142 = vadd.f32 0.0, %v141
  %v143 = vpop.f32.mrf.mxu0
  %v144 = vpop.f32.mrf.mxu0
  %v145 = vadd.f32 0.0, %v144
  %v146 = vpop.f32.mrf.mxu0
  %147 = vdwg.mxu0
  %v164 = vunpack.c.l.b16 %v24
  %v165 = vunpack.c.l.b16 %v25
  %v166 = vunpack.c.l.b16 %v26
  %v167 = vunpack.c.l.b16 %v27
  %v168 = vunpack.c.l.b16 %v28
  %v169 = vunpack.c.l.b16 %v29
  %v170 = vunpack.c.l.b16 %v30
  %v171 = vunpack.c.l.b16 %v31
  %v172 = vunpack.c.l.b16 %v32
  %v173 = vunpack.c.l.b16 %v33
  %v174 = vunpack.c.l.b16 %v34
  %v175 = vunpack.c.l.b16 %v35
  %v176 = vunpack.c.l.b16 %v36
  %v177 = vunpack.c.l.b16 %v37
  %v178 = vunpack.c.l.b16 %v38
  %v179 = vunpack.c.l.b16 %v39
  %v180 = vpack.c.b16 %v165, %v164
  %v181 = vpack.c.b16 %v167, %v166
  %v182 = vpack.c.b16 %v169, %v168
  %v183 = vpack.c.b16 %v171, %v170
  %v184 = vpack.c.b16 %v173, %v172
  %v185 = vpack.c.b16 %v175, %v174
  %v186 = vpack.c.b16 %v177, %v176
  %v187 = vpack.c.b16 %v179, %v178
  %196 = vmatprep.subr.bf16.mxu0 0
  %197 = vmatpush1.bf16.msra.mxu0 %v187
  %198 = vmatprep.subr.bf16.mxu0 0
  %199 = vmatpush1.bf16.msra.mxu0 %v186
  %200 = vmatprep.subr.bf16.mxu0 0
  %201 = vmatpush1.bf16.msra.mxu0 %v185
  %202 = vmatprep.subr.bf16.mxu0 0
  %203 = vmatpush1.bf16.msra.mxu0 %v184
  %204 = vmatprep.subr.bf16.mxu0 0
  %205 = vmatpush1.bf16.msra.mxu0 %v183
  %206 = vmatprep.subr.bf16.mxu0 0
  %207 = vmatpush1.bf16.msra.mxu0 %v182
  %208 = vmatprep.subr.bf16.mxu0 0
  %209 = vmatpush1.bf16.msra.mxu0 %v181
  %210 = vmatprep.subr.bf16.mxu0 0
  %211 = vmatpush1.bf16.msra.mxu0 %v180
  %212 = vmatprep.subr.bf16.mxu0 0
  %213 = vmatpush2.bf16.msra.mxu0 0
  %214 = vmatprep.subr.bf16.mxu0 0
  %215 = vmatpush2.bf16.msra.mxu0 0
  %216 = vmatprep.subr.bf16.mxu0 0
  %217 = vmatpush2.bf16.msra.mxu0 0
  %218 = vmatprep.subr.bf16.mxu0 0
  %219 = vmatpush2.bf16.msra.mxu0 0
  %220 = vmatprep.subr.bf16.mxu0 0
  %221 = vmatpush2.bf16.msra.mxu0 0
  %222 = vmatprep.subr.bf16.mxu0 0
  %223 = vmatpush2.bf16.msra.mxu0 0
  %224 = vmatprep.subr.bf16.mxu0 0
  %225 = vmatpush2.bf16.msra.mxu0 0
  %226 = vmatprep.subr.bf16.mxu0 0
  %227 = vmatpush2.bf16.msra.mxu0 0
  %228 = vmatprep.mubr.bf16.mxu0 0
  %229 = vmatmul.mubr.bf16.gmra.mxu0 %v23
  %v230 = vpop.f32.mrf.mxu0
  %v231 = vadd.f32 %v142, %v230
  %v232 = vpop.f32.mrf.mxu0
  %v233 = vpop.f32.mrf.mxu0
  %v234 = vadd.f32 %v145, %v233
  %v235 = vpop.f32.mrf.mxu0
  %236 = vdwg.mxu0
  %v237 = vld [vmem:[%s4] sm:$0x1]
  %v239 = vlaneseq
  %v240 = vshrl.u32 %v239, 7
  %v241 = vsub.s32 0, %v240
  %v242 = vrot.slane %v237, %v241
  %v244 = vadd.f32 %v231, %v242
  %v245 = vadd.f32 %v234, %v242
  %246 = vst [vmem:[%s5] sm:$0xff] %v244
  %247 = vst [vmem:[%s5 + $0x8] sm:$0xff] %v245
  // Predicated region
  $region22: #{lstm_rnn_forward.13} parent=0 // pred_check
    _
  $region23: #{lstm_rnn_forward.13} parent=0 // pred_check_branch
    %249 = sbr.rel (0) target = $region25
  $region24: #{lstm_rnn_forward.13} parent=0 // pred_region
    _
  $region25: #{lstm_rnn_forward.13} parent=0 // pred_fallthru
    _
  // Predicated region
  $region26: #{lstm_rnn_forward.13} parent=0 // pred_check
    _
  $region27: #{lstm_rnn_forward.13} parent=0 // pred_check_branch
    %251 = sbr.rel (0) target = $region29
  $region28: #{lstm_rnn_forward.13} parent=0 // pred_region
    _
  $region29: #{lstm_rnn_forward.13} parent=0 // pred_fallthru
    _

// kernel: lstm_rnn_forward.9
$region0: #{lstm_rnn_forward.9}
  #allocation0 [shape = 'u32[]', space=smem, size = 0x4, offset = 0x4, fixed_abs, tag = 'smem constant byte address 0x4 - core index']
  #allocation1 [shape = 'u32[144,128]{1,0:T(1,128)}', space=vmem, size = 0x12000, scoped, tag = 'internal scratch']
  #allocation2 [shape = 'f32[2,2,128]{2,1,0:T(2,128)}', space=vmem, size = 0x800, scoped, tag = 'scratch operand']
  #allocation3 [shape = 'f32[2,2,128]{2,1,0:T(2,128)}', space=vmem, size = 0x800, scoped, tag = 'scratch operand']
  %s0 = inlined_call_operand.vmem [shape: f32[8,2,512], index: 0, kind: input, shape index: {}]
  %s1 = inlined_call_operand.vmem [shape: f32[8,2,512], index: 1, kind: input, shape index: {}]
  %s2 = inlined_call_operand.vmem [shape: bf16[2,128,512], index: 2, kind: input, shape index: {}]
  %s3 = inlined_call_operand.vmem [shape: f32[8,2,128], index: 3, kind: output, shape index: {0}]
  %s4 = inlined_call_operand.vmem [shape: f32[8,2,128], index: 4, kind: output, shape index: {1}]
  %s5 = inlined_call_operand.vmem [shape: f32[2,2,128], index: 5, kind: output, shape index: {2}]
  %s6 = inlined_call_operand.vmem [shape: f32[2,2,128], index: 6, kind: output, shape index: {3}]
  %7 = xla_tuple %s3, %s4, %s5, %s6
  %s8 = sld [smem:[#allocation0]]
  $region50: #{lstm_rnn_forward.9} parent=0
    _
  %s10 = ssub.s32 1, %s8
  %s11 = scalar_select 0, %s10, %s8
  // Predicated region
  $region2: #{lstm_rnn_forward.9} parent=0 // pred_check
    _
  $region3: #{lstm_rnn_forward.9} parent=0 // pred_check_branch
    %13 = sbr.rel (0) target = $region5
  $region4: #{lstm_rnn_forward.9} parent=0 // pred_region
    _
  $region5: #{lstm_rnn_forward.9} parent=0 // pred_fallthru
    _
  // Predicated region
  $region6: #{lstm_rnn_forward.9} parent=0 // pred_check
    _
  $region7: #{lstm_rnn_forward.9} parent=0 // pred_check_branch
    %15 = sbr.rel (0) target = $region9
  $region8: #{lstm_rnn_forward.9} parent=0 // pred_region
    %s16 = ssub.s32 0, 0
    %s17 = smul.u32 8, %s16
    %p18 = scmp.lt.s32.totalorder %s17, 7
    %s19 = scalar_select %p18, %s17, 7
    %s20 = smul.addr %s19, 4
    %s21 = smul.addr %s20, 2
    %s22 = scalar_lea.vmem %s1, %s21
    %s23 = ssub.s32 0, 0
    %s24 = smul.u32 8, %s23
  $region9: #{lstm_rnn_forward.9} parent=0 // pred_fallthru
    _
  // Predicated region
  $region10: #{lstm_rnn_forward.9} parent=0 // pred_check
    _
  $region11: #{lstm_rnn_forward.9} parent=0 // pred_check_branch
    %26 = sbr.rel (0) target = $region13
  $region12: #{lstm_rnn_forward.9} parent=0 // pred_region
    _
  $region13: #{lstm_rnn_forward.9} parent=0 // pred_fallthru
    _
  %s27 = ssub.s32 0, 0
  %s28 = smul.u32 8, %s27
  %p29 = scmp.lt.s32.totalorder %s28, 7
  %s30 = scalar_select %p29, %s28, 7
  %s31 = smul.addr %s30, 4
  %s32 = smul.addr %s31, 2
  %s33 = scalar_lea.vmem %s1, %s32
  %s34 = ssub.s32 0, 0
  %s35 = smul.u32 8, %s34
  %p36 = scmp.lt.s32.totalorder %s35, 7
  %s37 = scalar_select %p36, %s35, 7
  %s38 = smul.addr %s37, 2
  %s39 = scalar_lea.vmem %s4, %s38
  %s40 = ssub.s32 0, 0
  %s41 = smul.u32 8, %s40
  %p42 = scmp.lt.s32.totalorder %s41, 7
  %s43 = scalar_select %p42, %s41, 7
  %s44 = smul.addr %s43, 4
  %s45 = smul.addr %s44, 2
  %s46 = scalar_lea.vmem %s1, %s45
  %s47 = ssub.s32 0, 0
  %s48 = smul.u32 8, %s47
  %s49 = ssub.s32 0, 0
  %s50 = smul.u32 8, %s49
  %p51 = scmp.lt.s32.totalorder %s50, 7
  %s52 = scalar_select %p51, %s50, 7
  %s53 = smul.addr %s52, 2
  %s54 = scalar_lea.vmem %s4, %s53
  %s55 = ssub.s32 0, 0
  %s56 = smul.u32 8, %s55
  %p58 = scmp.eq.s32.totalorder 0, 0
  // Predicated region
  $region14: #{lstm_rnn_forward.9} parent=0 // pred_check
    %p59 = pneg %p58
  $region15: #{lstm_rnn_forward.9} parent=0 // pred_check_branch
    %61 = sbr.rel (%p59) target = $region17
  $region16: #{lstm_rnn_forward.9} parent=0 // pred_region
    %62 = vst [vmem:[#allocation2] sm:$0x3] 0.0
    %63 = vst [vmem:[#allocation2 + $0x2] sm:$0x3] 0.0
    %64 = vst [vmem:[#allocation3] sm:$0x3] 0.0
    %65 = vst [vmem:[#allocation3 + $0x2] sm:$0x3] 0.0
  $region17: #{lstm_rnn_forward.9} parent=0 // pred_fallthru
    _
  %v66 = vld [vmem:[#allocation2] sm:$0x3]
  %v67 = vld [vmem:[#allocation2 + $0x2] sm:$0x3]
  %v68 = vpack.c.bf16 %v66, %v66
  %v69 = vpack.c.bf16 %v67, %v67
  %v70 = vld [vmem:[%s2] sm:$0xff]
  %v71 = vld [vmem:[%s2 + $0x8] sm:$0xff]
  %v72 = vld [vmem:[%s2 + $0x10] sm:$0xff]
  %v73 = vld [vmem:[%s2 + $0x18] sm:$0xff]
  %v74 = vld [vmem:[%s2 + $0x20] sm:$0xff]
  %v75 = vld [vmem:[%s2 + $0x28] sm:$0xff]
  %v76 = vld [vmem:[%s2 + $0x30] sm:$0xff]
  %v77 = vld [vmem:[%s2 + $0x38] sm:$0xff]
  %v78 = vld [vmem:[%s2 + $0x40] sm:$0xff]
  %v79 = vld [vmem:[%s2 + $0x48] sm:$0xff]
  %v80 = vld [vmem:[%s2 + $0x50] sm:$0xff]
  %v81 = vld [vmem:[%s2 + $0x58] sm:$0xff]
  %v82 = vld [vmem:[%s2 + $0x60] sm:$0xff]
  %v83 = vld [vmem:[%s2 + $0x68] sm:$0xff]
  %v84 = vld [vmem:[%s2 + $0x70] sm:$0xff]
  %v85 = vld [vmem:[%s2 + $0x78] sm:$0xff]
  %v86 = vld [vmem:[%s2 + $0x80] sm:$0xff]
  %v87 = vld [vmem:[%s2 + $0x88] sm:$0xff]
  %v88 = vld [vmem:[%s2 + $0x90] sm:$0xff]
  %v89 = vld [vmem:[%s2 + $0x98] sm:$0xff]
  %v90 = vld [vmem:[%s2 + $0xa0] sm:$0xff]
  %v91 = vld [vmem:[%s2 + $0xa8] sm:$0xff]
  %v92 = vld [vmem:[%s2 + $0xb0] sm:$0xff]
  %v93 = vld [vmem:[%s2 + $0xb8] sm:$0xff]
  %v94 = vld [vmem:[%s2 + $0xc0] sm:$0xff]
  %v95 = vld [vmem:[%s2 + $0xc8] sm:$0xff]
  %v96 = vld [vmem:[%s2 + $0xd0] sm:$0xff]
  %v97 = vld [vmem:[%s2 + $0xd8] sm:$0xff]
  %v98 = vld [vmem:[%s2 + $0xe0] sm:$0xff]
  %v99 = vld [vmem:[%s2 + $0xe8] sm:$0xff]
  %v100 = vld [vmem:[%s2 + $0xf0] sm:$0xff]
  %v101 = vld [vmem:[%s2 + $0xf8] sm:$0xff]
  %v102 = vld [vmem:[%s2 + $0x100] sm:$0xff]
  %v103 = vld [vmem:[%s2 + $0x108] sm:$0xff]
  %v104 = vld [vmem:[%s2 + $0x110] sm:$0xff]
  %v105 = vld [vmem:[%s2 + $0x118] sm:$0xff]
  %v106 = vld [vmem:[%s2 + $0x120] sm:$0xff]
  %v107 = vld [vmem:[%s2 + $0x128] sm:$0xff]
  %v108 = vld [vmem:[%s2 + $0x130] sm:$0xff]
  %v109 = vld [vmem:[%s2 + $0x138] sm:$0xff]
  %v110 = vld [vmem:[%s2 + $0x140] sm:$0xff]
  %v111 = vld [vmem:[%s2 + $0x148] sm:$0xff]
  %v112 = vld [vmem:[%s2 + $0x150] sm:$0xff]
  %v113 = vld [vmem:[%s2 + $0x158] sm:$0xff]
  %v114 = vld [vmem:[%s2 + $0x160] sm:$0xff]
  %v115 = vld [vmem:[%s2 + $0x168] sm:$0xff]
  %v116 = vld [vmem:[%s2 + $0x170] sm:$0xff]
  %v117 = vld [vmem:[%s2 + $0x178] sm:$0xff]
  %v118 = vld [vmem:[%s2 + $0x180] sm:$0xff]
  %v119 = vld [vmem:[%s2 + $0x188] sm:$0xff]
  %v120 = vld [vmem:[%s2 + $0x190] sm:$0xff]
  %v121 = vld [vmem:[%s2 + $0x198] sm:$0xff]
  %v122 = vld [vmem:[%s2 + $0x1a0] sm:$0xff]
  %v123 = vld [vmem:[%s2 + $0x1a8] sm:$0xff]
  %v124 = vld [vmem:[%s2 + $0x1b0] sm:$0xff]
  %v125 = vld [vmem:[%s2 + $0x1b8] sm:$0xff]
  %v126 = vld [vmem:[%s2 + $0x1c0] sm:$0xff]
  %v127 = vld [vmem:[%s2 + $0x1c8] sm:$0xff]
  %v128 = vld [vmem:[%s2 + $0x1d0] sm:$0xff]
  %v129 = vld [vmem:[%s2 + $0x1d8] sm:$0xff]
  %v130 = vld [vmem:[%s2 + $0x1e0] sm:$0xff]
  %v131 = vld [vmem:[%s2 + $0x1e8] sm:$0xff]
  %v132 = vld [vmem:[%s2 + $0x1f0] sm:$0xff]
  %v133 = vld [vmem:[%s2 + $0x1f8] sm:$0xff]
  %v166 = vunpack.c.l.b16 %v70
  %v167 = vunpack.c.h.b16 %v70
  %v168 = vunpack.c.l.b16 %v71
  %v169 = vunpack.c.h.b16 %v71
  %v170 = vunpack.c.l.b16 %v72
  %v171 = vunpack.c.h.b16 %v72
  %v172 = vunpack.c.l.b16 %v73
  %v173 = vunpack.c.h.b16 %v73
  %v174 = vunpack.c.l.b16 %v74
  %v175 = vunpack.c.h.b16 %v74
  %v176 = vunpack.c.l.b16 %v75
  %v177 = vunpack.c.h.b16 %v75
  %v178 = vunpack.c.l.b16 %v76
  %v179 = vunpack.c.h.b16 %v76
  %v180 = vunpack.c.l.b16 %v77
  %v181 = vunpack.c.h.b16 %v77
  %v182 = vunpack.c.l.b16 %v78
  %v183 = vunpack.c.h.b16 %v78
  %v184 = vunpack.c.l.b16 %v79
  %v185 = vunpack.c.h.b16 %v79
  %v186 = vunpack.c.l.b16 %v80
  %v187 = vunpack.c.h.b16 %v80
  %v188 = vunpack.c.l.b16 %v81
  %v189 = vunpack.c.h.b16 %v81
  %v190 = vunpack.c.l.b16 %v82
  %v191 = vunpack.c.h.b16 %v82
  %v192 = vunpack.c.l.b16 %v83
  %v193 = vunpack.c.h.b16 %v83
  %v194 = vunpack.c.l.b16 %v84
  %v195 = vunpack.c.h.b16 %v84
  %v196 = vunpack.c.l.b16 %v85
  %v197 = vunpack.c.h.b16 %v85
  %v198 = vunpack.c.l.b16 %v86
  %v199 = vunpack.c.h.b16 %v86
  %v200 = vunpack.c.l.b16 %v87
  %v201 = vunpack.c.h.b16 %v87
  %v202 = vunpack.c.l.b16 %v88
  %v203 = vunpack.c.h.b16 %v88
  %v204 = vunpack.c.l.b16 %v89
  %v205 = vunpack.c.h.b16 %v89
  %v206 = vunpack.c.l.b16 %v90
  %v207 = vunpack.c.h.b16 %v90
  %v208 = vunpack.c.l.b16 %v91
  %v209 = vunpack.c.h.b16 %v91
  %v210 = vunpack.c.l.b16 %v92
  %v211 = vunpack.c.h.b16 %v92
  %v212 = vunpack.c.l.b16 %v93
  %v213 = vunpack.c.h.b16 %v93
  %v214 = vunpack.c.l.b16 %v94
  %v215 = vunpack.c.h.b16 %v94
  %v216 = vunpack.c.l.b16 %v95
  %v217 = vunpack.c.h.b16 %v95
  %v218 = vunpack.c.l.b16 %v96
  %v219 = vunpack.c.h.b16 %v96
  %v220 = vunpack.c.l.b16 %v97
  %v221 = vunpack.c.h.b16 %v97
  %v222 = vunpack.c.l.b16 %v98
  %v223 = vunpack.c.h.b16 %v98
  %v224 = vunpack.c.l.b16 %v99
  %v225 = vunpack.c.h.b16 %v99
  %v226 = vunpack.c.l.b16 %v100
  %v227 = vunpack.c.h.b16 %v100
  %v228 = vunpack.c.l.b16 %v101
  %v229 = vunpack.c.h.b16 %v101
  %v230 = vpack.c.b16 %v170, %v166
  %v231 = vpack.c.b16 %v171, %v167
  %v232 = vpack.c.b16 %v172, %v168
  %v233 = vpack.c.b16 %v173, %v169
  %v234 = vpack.c.b16 %v178, %v174
  %v235 = vpack.c.b16 %v179, %v175
  %v236 = vpack.c.b16 %v180, %v176
  %v237 = vpack.c.b16 %v181, %v177
  %v238 = vpack.c.b16 %v186, %v182
  %v239 = vpack.c.b16 %v187, %v183
  %v240 = vpack.c.b16 %v188, %v184
  %v241 = vpack.c.b16 %v189, %v185
  %v242 = vpack.c.b16 %v194, %v190
  %v243 = vpack.c.b16 %v195, %v191
  %v244 = vpack.c.b16 %v196, %v192
  %v245 = vpack.c.b16 %v197, %v193
  %v246 = vpack.c.b16 %v202, %v198
  %v247 = vpack.c.b16 %v203, %v199
  %v248 = vpack.c.b16 %v204, %v200
  %v249 = vpack.c.b16 %v205, %v201
  %v250 = vpack.c.b16 %v210, %v206
  %v251 = vpack.c.b16 %v211, %v207
  %v252 = vpack.c.b16 %v212, %v208
  %v253 = vpack.c.b16 %v213, %v209
  %v254 = vpack.c.b16 %v218, %v214
  %v255 = vpack.c.b16 %v219, %v215
  %v256 = vpack.c.b16 %v220, %v216
  %v257 = vpack.c.b16 %v221, %v217
  %v258 = vpack.c.b16 %v226, %v222
  %v259 = vpack.c.b16 %v227, %v223
  %v260 = vpack.c.b16 %v228, %v224
  %v261 = vpack.c.b16 %v229, %v225
  %294 = vmatprep.subr.bf16.mxu0 %v259
  %295 = vmatpush1.bf16.msra.mxu0 %v258
  %296 = vmatprep.subr.bf16.mxu0 %v255
  %297 = vmatpush1.bf16.msra.mxu0 %v254
  %298 = vmatprep.subr.bf16.mxu0 %v251
  %299 = vmatpush1.bf16.msra.mxu0 %v250
  %300 = vmatprep.subr.bf16.mxu0 %v247
  %301 = vmatpush1.bf16.msra.mxu0 %v246
  %302 = vmatprep.subr.bf16.mxu0 %v243
  %303 = vmatpush1.bf16.msra.mxu0 %v242
  %304 = vmatprep.subr.bf16.mxu0 %v239
  %305 = vmatpush1.bf16.msra.mxu0 %v238
  %306 = vmatprep.subr.bf16.mxu0 %v235
  %307 = vmatpush1.bf16.msra.mxu0 %v234
  %308 = vmatprep.subr.bf16.mxu0 %v231
  %309 = vmatpush1.bf16.msra.mxu0 %v230
  %310 = vmatprep.subr.bf16.mxu0 0
  %311 = vmatpush2.bf16.msra.mxu0 0
  %312 = vmatprep.subr.bf16.mxu0 0
  %313 = vmatpush2.bf16.msra.mxu0 0
  %314 = vmatprep.subr.bf16.mxu0 0
  %315 = vmatpush2.bf16.msra.mxu0 0
  %316 = vmatprep.subr.bf16.mxu0 0
  %317 = vmatpush2.bf16.msra.mxu0 0
  %318 = vmatprep.subr.bf16.mxu0 0
  %319 = vmatpush2.bf16.msra.mxu0 0
  %320 = vmatprep.subr.bf16.mxu0 0
  %321 = vmatpush2.bf16.msra.mxu0 0
  %322 = vmatprep.subr.bf16.mxu0 0
  %323 = vmatpush2.bf16.msra.mxu0 0
  %324 = vmatprep.subr.bf16.mxu0 0
  %325 = vmatpush2.bf16.msra.mxu0 0
  %326 = vmatprep.mubr.bf16.mxu0 0
  %327 = vmatmul.mubr.bf16.gmra.mxu0 %v68
  %v328 = vpop.f32.mrf.mxu0
  %v329 = vadd.f32 0.0, %v328
  %v330 = vpop.f32.mrf.mxu0
  %v331 = vadd.f32 0.0, %v330
  %v332 = vpop.f32.mrf.mxu0
  %v333 = vpop.f32.mrf.mxu0
  %334 = vdwg.mxu0
  %335 = vmatprep.subr.bf16.mxu0 %v261
  %336 = vmatpush1.bf16.msra.mxu0 %v260
  %337 = vmatprep.subr.bf16.mxu0 %v257
  %338 = vmatpush1.bf16.msra.mxu0 %v256
  %339 = vmatprep.subr.bf16.mxu0 %v253
  %340 = vmatpush1.bf16.msra.mxu0 %v252
  %341 = vmatprep.subr.bf16.mxu0 %v249
  %342 = vmatpush1.bf16.msra.mxu0 %v248
  %343 = vmatprep.subr.bf16.mxu0 %v245
  %344 = vmatpush1.bf16.msra.mxu0 %v244
  %345 = vmatprep.subr.bf16.mxu0 %v241
  %346 = vmatpush1.bf16.msra.mxu0 %v240
  %347 = vmatprep.subr.bf16.mxu0 %v237
  %348 = vmatpush1.bf16.msra.mxu0 %v236
  %349 = vmatprep.subr.bf16.mxu0 %v233
  %350 = vmatpush1.bf16.msra.mxu0 %v232
  %351 = vmatprep.subr.bf16.mxu0 0
  %352 = vmatpush2.bf16.msra.mxu0 0
  %353 = vmatprep.subr.bf16.mxu0 0
  %354 = vmatpush2.bf16.msra.mxu0 0
  %355 = vmatprep.subr.bf16.mxu0 0
  %356 = vmatpush2.bf16.msra.mxu0 0
  %357 = vmatprep.subr.bf16.mxu0 0
  %358 = vmatpush2.bf16.msra.mxu0 0
  %359 = vmatprep.subr.bf16.mxu0 0
  %360 = vmatpush2.bf16.msra.mxu0 0
  %361 = vmatprep.subr.bf16.mxu0 0
  %362 = vmatpush2.bf16.msra.mxu0 0
  %363 = vmatprep.subr.bf16.mxu0 0
  %364 = vmatpush2.bf16.msra.mxu0 0
  %365 = vmatprep.subr.bf16.mxu0 0
  %366 = vmatpush2.bf16.msra.mxu0 0
  %367 = vmatprep.mubr.bf16.mxu0 0
  %368 = vmatmul.mubr.bf16.gmra.mxu0 %v68
  %v369 = vpop.f32.mrf.mxu0
  %v370 = vadd.f32 0.0, %v369
  %v371 = vpop.f32.mrf.mxu0
  %v372 = vadd.f32 0.0, %v371
  %v373 = vpop.f32.mrf.mxu0
  %v374 = vpop.f32.mrf.mxu0
  %375 = vdwg.mxu0
  %v408 = vunpack.c.l.b16 %v102
  %v409 = vunpack.c.h.b16 %v102
  %v410 = vunpack.c.l.b16 %v103
  %v411 = vunpack.c.h.b16 %v103
  %v412 = vunpack.c.l.b16 %v104
  %v413 = vunpack.c.h.b16 %v104
  %v414 = vunpack.c.l.b16 %v105
  %v415 = vunpack.c.h.b16 %v105
  %v416 = vunpack.c.l.b16 %v106
  %v417 = vunpack.c.h.b16 %v106
  %v418 = vunpack.c.l.b16 %v107
  %v419 = vunpack.c.h.b16 %v107
  %v420 = vunpack.c.l.b16 %v108
  %v421 = vunpack.c.h.b16 %v108
  %v422 = vunpack.c.l.b16 %v109
  %v423 = vunpack.c.h.b16 %v109
  %v424 = vunpack.c.l.b16 %v110
  %v425 = vunpack.c.h.b16 %v110
  %v426 = vunpack.c.l.b16 %v111
  %v427 = vunpack.c.h.b16 %v111
  %v428 = vunpack.c.l.b16 %v112
  %v429 = vunpack.c.h.b16 %v112
  %v430 = vunpack.c.l.b16 %v113
  %v431 = vunpack.c.h.b16 %v113
  %v432 = vunpack.c.l.b16 %v114
  %v433 = vunpack.c.h.b16 %v114
  %v434 = vunpack.c.l.b16 %v115
  %v435 = vunpack.c.h.b16 %v115
  %v436 = vunpack.c.l.b16 %v116
  %v437 = vunpack.c.h.b16 %v116
  %v438 = vunpack.c.l.b16 %v117
  %v439 = vunpack.c.h.b16 %v117
  %v440 = vunpack.c.l.b16 %v118
  %v441 = vunpack.c.h.b16 %v118
  %v442 = vunpack.c.l.b16 %v119
  %v443 = vunpack.c.h.b16 %v119
  %v444 = vunpack.c.l.b16 %v120
  %v445 = vunpack.c.h.b16 %v120
  %v446 = vunpack.c.l.b16 %v121
  %v447 = vunpack.c.h.b16 %v121
  %v448 = vunpack.c.l.b16 %v122
  %v449 = vunpack.c.h.b16 %v122
  %v450 = vunpack.c.l.b16 %v123
  %v451 = vunpack.c.h.b16 %v123
  %v452 = vunpack.c.l.b16 %v124
  %v453 = vunpack.c.h.b16 %v124
  %v454 = vunpack.c.l.b16 %v125
  %v455 = vunpack.c.h.b16 %v125
  %v456 = vunpack.c.l.b16 %v126
  %v457 = vunpack.c.h.b16 %v126
  %v458 = vunpack.c.l.b16 %v127
  %v459 = vunpack.c.h.b16 %v127
  %v460 = vunpack.c.l.b16 %v128
  %v461 = vunpack.c.h.b16 %v128
  %v462 = vunpack.c.l.b16 %v129
  %v463 = vunpack.c.h.b16 %v129
  %v464 = vunpack.c.l.b16 %v130
  %v465 = vunpack.c.h.b16 %v130
  %v466 = vunpack.c.l.b16 %v131
  %v467 = vunpack.c.h.b16 %v131
  %v468 = vunpack.c.l.b16 %v132
  %v469 = vunpack.c.h.b16 %v132
  %v470 = vunpack.c.l.b16 %v133
  %v471 = vunpack.c.h.b16 %v133
  %v472 = vpack.c.b16 %v412, %v408
  %v473 = vpack.c.b16 %v413, %v409
  %v474 = vpack.c.b16 %v414, %v410
  %v475 = vpack.c.b16 %v415, %v411
  %v476 = vpack.c.b16 %v420, %v416
  %v477 = vpack.c.b16 %v421, %v417
  %v478 = vpack.c.b16 %v422, %v418
  %v479 = vpack.c.b16 %v423, %v419
  %v480 = vpack.c.b16 %v428, %v424
  %v481 = vpack.c.b16 %v429, %v425
  %v482 = vpack.c.b16 %v430, %v426
  %v483 = vpack.c.b16 %v431, %v427
  %v484 = vpack.c.b16 %v436, %v432
  %v485 = vpack.c.b16 %v437, %v433
  %v486 = vpack.c.b16 %v438, %v434
  %v487 = vpack.c.b16 %v439, %v435
  %v488 = vpack.c.b16 %v444, %v440
  %v489 = vpack.c.b16 %v445, %v441
  %v490 = vpack.c.b16 %v446, %v442
  %v491 = vpack.c.b16 %v447, %v443
  %v492 = vpack.c.b16 %v452, %v448
  %v493 = vpack.c.b16 %v453, %v449
  %v494 = vpack.c.b16 %v454, %v450
  %v495 = vpack.c.b16 %v455, %v451
  %v496 = vpack.c.b16 %v460, %v456
  %v497 = vpack.c.b16 %v461, %v457
  %v498 = vpack.c.b16 %v462, %v458
  %v499 = vpack.c.b16 %v463, %v459
  %v500 = vpack.c.b16 %v468, %v464
  %v501 = vpack.c.b16 %v469, %v465
  %v502 = vpack.c.b16 %v470, %v466
  %v503 = vpack.c.b16 %v471, %v467
  %536 = vmatprep.subr.bf16.mxu0 %v501
  %537 = vmatpush1.bf16.msra.mxu0 %v500
  %538 = vmatprep.subr.bf16.mxu0 %v497
  %539 = vmatpush1.bf16.msra.mxu0 %v496
  %540 = vmatprep.subr.bf16.mxu0 %v493
  %541 = vmatpush1.bf16.msra.mxu0 %v492
  %542 = vmatprep.subr.bf16.mxu0 %v489
  %543 = vmatpush1.bf16.msra.mxu0 %v488
  %544 = vmatprep.subr.bf16.mxu0 %v485
  %545 = vmatpush1.bf16.msra.mxu0 %v484
  %546 = vmatprep.subr.bf16.mxu0 %v481
  %547 = vmatpush1.bf16.msra.mxu0 %v480
  %548 = vmatprep.subr.bf16.mxu0 %v477
  %549 = vmatpush1.bf16.msra.mxu0 %v476
  %550 = vmatprep.subr.bf16.mxu0 %v473
  %551 = vmatpush1.bf16.msra.mxu0 %v472
  %552 = vmatprep.subr.bf16.mxu0 0
  %553 = vmatpush2.bf16.msra.mxu0 0
  %554 = vmatprep.subr.bf16.mxu0 0
  %555 = vmatpush2.bf16.msra.mxu0 0
  %556 = vmatprep.subr.bf16.mxu0 0
  %557 = vmatpush2.bf16.msra.mxu0 0
  %558 = vmatprep.subr.bf16.mxu0 0
  %559 = vmatpush2.bf16.msra.mxu0 0
  %560 = vmatprep.subr.bf16.mxu0 0
  %561 = vmatpush2.bf16.msra.mxu0 0
  %562 = vmatprep.subr.bf16.mxu0 0
  %563 = vmatpush2.bf16.msra.mxu0 0
  %564 = vmatprep.subr.bf16.mxu0 0
  %565 = vmatpush2.bf16.msra.mxu0 0
  %566 = vmatprep.subr.bf16.mxu0 0
  %567 = vmatpush2.bf16.msra.mxu0 0
  %568 = vmatprep.mubr.bf16.mxu0 0
  %569 = vmatmul.mubr.bf16.gmra.mxu0 %v69
  %v570 = vpop.f32.mrf.mxu0
  %v571 = vadd.f32 0.0, %v570
  %v572 = vpop.f32.mrf.mxu0
  %v573 = vadd.f32 0.0, %v572
  %v574 = vpop.f32.mrf.mxu0
  %v575 = vpop.f32.mrf.mxu0
  %576 = vdwg.mxu0
  %577 = vmatprep.subr.bf16.mxu0 %v503
  %578 = vmatpush1.bf16.msra.mxu0 %v502
  %579 = vmatprep.subr.bf16.mxu0 %v499
  %580 = vmatpush1.bf16.msra.mxu0 %v498
  %581 = vmatprep.subr.bf16.mxu0 %v495
  %582 = vmatpush1.bf16.msra.mxu0 %v494
  %583 = vmatprep.subr.bf16.mxu0 %v491
  %584 = vmatpush1.bf16.msra.mxu0 %v490
  %585 = vmatprep.subr.bf16.mxu0 %v487
  %586 = vmatpush1.bf16.msra.mxu0 %v486
  %587 = vmatprep.subr.bf16.mxu0 %v483
  %588 = vmatpush1.bf16.msra.mxu0 %v482
  %589 = vmatprep.subr.bf16.mxu0 %v479
  %590 = vmatpush1.bf16.msra.mxu0 %v478
  %591 = vmatprep.subr.bf16.mxu0 %v475
  %592 = vmatpush1.bf16.msra.mxu0 %v474
  %593 = vmatprep.subr.bf16.mxu0 0
  %594 = vmatpush2.bf16.msra.mxu0 0
  %595 = vmatprep.subr.bf16.mxu0 0
  %596 = vmatpush2.bf16.msra.mxu0 0
  %597 = vmatprep.subr.bf16.mxu0 0
  %598 = vmatpush2.bf16.msra.mxu0 0
  %599 = vmatprep.subr.bf16.mxu0 0
  %600 = vmatpush2.bf16.msra.mxu0 0
  %601 = vmatprep.subr.bf16.mxu0 0
  %602 = vmatpush2.bf16.msra.mxu0 0
  %603 = vmatprep.subr.bf16.mxu0 0
  %604 = vmatpush2.bf16.msra.mxu0 0
  %605 = vmatprep.subr.bf16.mxu0 0
  %606 = vmatpush2.bf16.msra.mxu0 0
  %607 = vmatprep.subr.bf16.mxu0 0
  %608 = vmatpush2.bf16.msra.mxu0 0
  %609 = vmatprep.mubr.bf16.mxu0 0
  %610 = vmatmul.mubr.bf16.gmra.mxu0 %v69
  %v611 = vpop.f32.mrf.mxu0
  %v612 = vadd.f32 0.0, %v611
  %v613 = vpop.f32.mrf.mxu0
  %v614 = vadd.f32 0.0, %v613
  %v615 = vpop.f32.mrf.mxu0
  %v616 = vpop.f32.mrf.mxu0
  %617 = vdwg.mxu0
  %v618 = vld [vmem:[%s0] sm:$0xff]
  %s619 = scalar_lea.vmem %s46, 56
  %v620 = vld [vmem:[%s619] sm:$0xff]
  %v629 = vcombine.low %v329, %v331
  %v630 = vcombine.low %v370, %v372
  %v632 = vunpack.c.l.s4 1983009808
  %v633 = vunpack.c.0.s8 %v632
  %v634 = vlaneseq
  %v635 = vshrl.u32 %v634, 7
  %v636 = vsub.s32 %v633, %v635
  %v637 = vrot.slane %v629, %v636
  %v639 = vunpack.c.l.s4 1983009808
  %v640 = vunpack.c.0.s8 %v639
  %v641 = vlaneseq
  %v642 = vshrl.u32 %v641, 7
  %v643 = vsub.s32 %v640, %v642
  %v644 = vrot.slane %v630, %v643
  %v645 = vcombine.low %v637, %v644
  %v646 = vcombine.low %v571, %v573
  %v647 = vcombine.low %v612, %v614
  %v649 = vunpack.c.l.s4 1983009808
  %v650 = vunpack.c.0.s8 %v649
  %v651 = vlaneseq
  %v652 = vshrl.u32 %v651, 7
  %v653 = vsub.s32 %v650, %v652
  %v654 = vrot.slane %v646, %v653
  %v656 = vunpack.c.l.s4 1983009808
  %v657 = vunpack.c.0.s8 %v656
  %v658 = vlaneseq
  %v659 = vshrl.u32 %v658, 7
  %v660 = vsub.s32 %v657, %v659
  %v661 = vrot.slane %v647, %v660
  %v662 = vcombine.low %v654, %v661
  %v665 = vadd.f32 %v618, %v645
  %v666 = vadd.f32 %v620, %v662
  %v667 = vxor.u32 %v665, 2147483648
  %v668 = vxor.u32 %v666, 2147483648
  %v669 = vmul.f32 %v667, 1.442695
  %v670 = vpow.pop %v669
  %v671 = vmul.f32 %v668, 1.442695
  %v672 = vpow.pop %v671
  %v673 = vadd.f32 %v670, 1.0
  %v674 = vadd.f32 %v672, 1.0
  %v675 = vrcp.pop %v673
  %v676 = vmul.f32 1.0, %v675
  %v677 = vrcp.pop %v674
  %v678 = vmul.f32 1.0, %v677
  %v681 = vrot.slane %v665, 2
  %v682 = vrot.slane %v666, 2
  %v685 = vxor.u32 %v681, 2147483648
  %v686 = vxor.u32 %v682, 2147483648
  %v687 = vmul.f32 %v685, 1.442695
  %v688 = vpow.pop %v687
  %v689 = vmul.f32 %v686, 1.442695
  %v690 = vpow.pop %v689
  %v691 = vadd.f32 %v688, 1.0
  %v692 = vadd.f32 %v690, 1.0
  %v693 = vrcp.pop %v691
  %v694 = vmul.f32 1.0, %v693
  %v695 = vrcp.pop %v692
  %v696 = vmul.f32 1.0, %v695
  %v697 = vrot.slane %v665, 4
  %v698 = vrot.slane %v666, 4
  %v701 = vtanh.pop %v697
  %v702 = vtanh.pop %v698
  %v703 = vrot.slane %v665, 6
  %v704 = vrot.slane %v666, 6
  %v707 = vxor.u32 %v703, 2147483648
  %v708 = vxor.u32 %v704, 2147483648
  %v709 = vmul.f32 %v707, 1.442695
  %v710 = vpow.pop %v709
  %v711 = vmul.f32 %v708, 1.442695
  %v712 = vpow.pop %v711
  %v713 = vadd.f32 %v710, 1.0
  %v714 = vadd.f32 %v712, 1.0
  %v715 = vrcp.pop %v713
  %v716 = vmul.f32 1.0, %v715
  %v717 = vrcp.pop %v714
  %v718 = vmul.f32 1.0, %v717
  %v719 = vld [vmem:[#allocation3] sm:$0x3]
  %v720 = vld [vmem:[#allocation3 + $0x2] sm:$0x3]
  %v721 = vmul.f32 %v694, %v719
  %v722 = vmul.f32 %v696, %v720
  %v723 = vmul.f32 %v676, %v701
  %v724 = vmul.f32 %v678, %v702
  %v725 = vadd.f32 %v721, %v723
  %v726 = vadd.f32 %v722, %v724
  %v727 = vtanh.pop %v725
  %v728 = vtanh.pop %v726
  %v729 = vmul.f32 %v716, %v727
  %v730 = vmul.f32 %v718, %v728
  %731 = vst [vmem:[#allocation3] sm:$0x3] %v725
  %732 = vst [vmem:[#allocation3 + $0x2] sm:$0x3] %v726
  %733 = vst [vmem:[#allocation2] sm:$0x3] %v729
  %734 = vst [vmem:[#allocation2 + $0x2] sm:$0x3] %v730
  %735 = vst [vmem:[%s3] sm:$0x3] %v729
  %s736 = scalar_lea.vmem %s54, 14
  %737 = vst [vmem:[%s736] sm:$0x3] %v730
  %v738 = vld [vmem:[#allocation2] sm:$0x3]
  %v739 = vld [vmem:[#allocation2 + $0x2] sm:$0x3]
  %v740 = vpack.c.bf16 %v738, %v738
  %v741 = vpack.c.bf16 %v739, %v739
  %v742 = vld [vmem:[%s2] sm:$0xff]
  %v743 = vld [vmem:[%s2 + $0x8] sm:$0xff]
  %v744 = vld [vmem:[%s2 + $0x10] sm:$0xff]
  %v745 = vld [vmem:[%s2 + $0x18] sm:$0xff]
  %v746 = vld [vmem:[%s2 + $0x20] sm:$0xff]
  %v747 = vld [vmem:[%s2 + $0x28] sm:$0xff]
  %v748 = vld [vmem:[%s2 + $0x30] sm:$0xff]
  %v749 = vld [vmem:[%s2 + $0x38] sm:$0xff]
  %v750 = vld [vmem:[%s2 + $0x40] sm:$0xff]
  %v751 = vld [vmem:[%s2 + $0x48] sm:$0xff]
  %v752 = vld [vmem:[%s2 + $0x50] sm:$0xff]
  %v753 = vld [vmem:[%s2 + $0x58] sm:$0xff]
  %v754 = vld [vmem:[%s2 + $0x60] sm:$0xff]
  %v755 = vld [vmem:[%s2 + $0x68] sm:$0xff]
  %v756 = vld [vmem:[%s2 + $0x70] sm:$0xff]
  %v757 = vld [vmem:[%s2 + $0x78] sm:$0xff]
  %v758 = vld [vmem:[%s2 + $0x80] sm:$0xff]
  %v759 = vld [vmem:[%s2 + $0x88] sm:$0xff]
  %v760 = vld [vmem:[%s2 + $0x90] sm:$0xff]
  %v761 = vld [vmem:[%s2 + $0x98] sm:$0xff]
  %v762 = vld [vmem:[%s2 + $0xa0] sm:$0xff]
  %v763 = vld [vmem:[%s2 + $0xa8] sm:$0xff]
  %v764 = vld [vmem:[%s2 + $0xb0] sm:$0xff]
  %v765 = vld [vmem:[%s2 + $0xb8] sm:$0xff]
  %v766 = vld [vmem:[%s2 + $0xc0] sm:$0xff]
  %v767 = vld [vmem:[%s2 + $0xc8] sm:$0xff]
  %v768 = vld [vmem:[%s2 + $0xd0] sm:$0xff]
  %v769 = vld [vmem:[%s2 + $0xd8] sm:$0xff]
  %v770 = vld [vmem:[%s2 + $0xe0] sm:$0xff]
  %v771 = vld [vmem:[%s2 + $0xe8] sm:$0xff]
  %v772 = vld [vmem:[%s2 + $0xf0] sm:$0xff]
  %v773 = vld [vmem:[%s2 + $0xf8] sm:$0xff]
  %v774 = vld [vmem:[%s2 + $0x100] sm:$0xff]
  %v775 = vld [vmem:[%s2 + $0x108] sm:$0xff]
  %v776 = vld [vmem:[%s2 + $0x110] sm:$0xff]
  %v777 = vld [vmem:[%s2 + $0x118] sm:$0xff]
  %v778 = vld [vmem:[%s2 + $0x120] sm:$0xff]
  %v779 = vld [vmem:[%s2 + $0x128] sm:$0xff]
  %v780 = vld [vmem:[%s2 + $0x130] sm:$0xff]
  %v781 = vld [vmem:[%s2 + $0x138] sm:$0xff]
  %v782 = vld [vmem:[%s2 + $0x140] sm:$0xff]
  %v783 = vld [vmem:[%s2 + $0x148] sm:$0xff]
  %v784 = vld [vmem:[%s2 + $0x150] sm:$0xff]
  %v785 = vld [vmem:[%s2 + $0x158] sm:$0xff]
  %v786 = vld [vmem:[%s2 + $0x160] sm:$0xff]
  %v787 = vld [vmem:[%s2 + $0x168] sm:$0xff]
  %v788 = vld [vmem:[%s2 + $0x170] sm:$0xff]
  %v789 = vld [vmem:[%s2 + $0x178] sm:$0xff]
  %v790 = vld [vmem:[%s2 + $0x180] sm:$0xff]
  %v791 = vld [vmem:[%s2 + $0x188] sm:$0xff]
  %v792 = vld [vmem:[%s2 + $0x190] sm:$0xff]
  %v793 = vld [vmem:[%s2 + $0x198] sm:$0xff]
  %v794 = vld [vmem:[%s2 + $0x1a0] sm:$0xff]
  %v795 = vld [vmem:[%s2 + $0x1a8] sm:$0xff]
  %v796 = vld [vmem:[%s2 + $0x1b0] sm:$0xff]
  %v797 = vld [vmem:[%s2 + $0x1b8] sm:$0xff]
  %v798 = vld [vmem:[%s2 + $0x1c0] sm:$0xff]
  %v799 = vld [vmem:[%s2 + $0x1c8] sm:$0xff]
  %v800 = vld [vmem:[%s2 + $0x1d0] sm:$0xff]
  %v801 = vld [vmem:[%s2 + $0x1d8] sm:$0xff]
  %v802 = vld [vmem:[%s2 + $0x1e0] sm:$0xff]
  %v803 = vld [vmem:[%s2 + $0x1e8] sm:$0xff]
  %v804 = vld [vmem:[%s2 + $0x1f0] sm:$0xff]
  %v805 = vld [vmem:[%s2 + $0x1f8] sm:$0xff]
  %v838 = vunpack.c.l.b16 %v742
  %v839 = vunpack.c.h.b16 %v742
  %v840 = vunpack.c.l.b16 %v743
  %v841 = vunpack.c.h.b16 %v743
  %v842 = vunpack.c.l.b16 %v744
  %v843 = vunpack.c.h.b16 %v744
  %v844 = vunpack.c.l.b16 %v745
  %v845 = vunpack.c.h.b16 %v745
  %v846 = vunpack.c.l.b16 %v746
  %v847 = vunpack.c.h.b16 %v746
  %v848 = vunpack.c.l.b16 %v747
  %v849 = vunpack.c.h.b16 %v747
  %v850 = vunpack.c.l.b16 %v748
  %v851 = vunpack.c.h.b16 %v748
  %v852 = vunpack.c.l.b16 %v749
  %v853 = vunpack.c.h.b16 %v749
  %v854 = vunpack.c.l.b16 %v750
  %v855 = vunpack.c.h.b16 %v750
  %v856 = vunpack.c.l.b16 %v751
  %v857 = vunpack.c.h.b16 %v751
  %v858 = vunpack.c.l.b16 %v752
  %v859 = vunpack.c.h.b16 %v752
  %v860 = vunpack.c.l.b16 %v753
  %v861 = vunpack.c.h.b16 %v753
  %v862 = vunpack.c.l.b16 %v754
  %v863 = vunpack.c.h.b16 %v754
  %v864 = vunpack.c.l.b16 %v755
  %v865 = vunpack.c.h.b16 %v755
  %v866 = vunpack.c.l.b16 %v756
  %v867 = vunpack.c.h.b16 %v756
  %v868 = vunpack.c.l.b16 %v757
  %v869 = vunpack.c.h.b16 %v757
  %v870 = vunpack.c.l.b16 %v758
  %v871 = vunpack.c.h.b16 %v758
  %v872 = vunpack.c.l.b16 %v759
  %v873 = vunpack.c.h.b16 %v759
  %v874 = vunpack.c.l.b16 %v760
  %v875 = vunpack.c.h.b16 %v760
  %v876 = vunpack.c.l.b16 %v761
  %v877 = vunpack.c.h.b16 %v761
  %v878 = vunpack.c.l.b16 %v762
  %v879 = vunpack.c.h.b16 %v762
  %v880 = vunpack.c.l.b16 %v763
  %v881 = vunpack.c.h.b16 %v763
  %v882 = vunpack.c.l.b16 %v764
  %v883 = vunpack.c.h.b16 %v764
  %v884 = vunpack.c.l.b16 %v765
  %v885 = vunpack.c.h.b16 %v765
  %v886 = vunpack.c.l.b16 %v766
  %v887 = vunpack.c.h.b16 %v766
  %v888 = vunpack.c.l.b16 %v767
  %v889 = vunpack.c.h.b16 %v767
  %v890 = vunpack.c.l.b16 %v768
  %v891 = vunpack.c.h.b16 %v768
  %v892 = vunpack.c.l.b16 %v769
  %v893 = vunpack.c.h.b16 %v769
  %v894 = vunpack.c.l.b16 %v770
  %v895 = vunpack.c.h.b16 %v770
  %v896 = vunpack.c.l.b16 %v771
  %v897 = vunpack.c.h.b16 %v771
  %v898 = vunpack.c.l.b16 %v772
  %v899 = vunpack.c.h.b16 %v772
  %v900 = vunpack.c.l.b16 %v773
  %v901 = vunpack.c.h.b16 %v773
  %v902 = vpack.c.b16 %v842, %v838
  %v903 = vpack.c.b16 %v843, %v839
  %v904 = vpack.c.b16 %v844, %v840
  %v905 = vpack.c.b16 %v845, %v841
  %v906 = vpack.c.b16 %v850, %v846
  %v907 = vpack.c.b16 %v851, %v847
  %v908 = vpack.c.b16 %v852, %v848
  %v909 = vpack.c.b16 %v853, %v849
  %v910 = vpack.c.b16 %v858, %v854
  %v911 = vpack.c.b16 %v859, %v855
  %v912 = vpack.c.b16 %v860, %v856
  %v913 = vpack.c.b16 %v861, %v857
  %v914 = vpack.c.b16 %v866, %v862
  %v915 = vpack.c.b16 %v867, %v863
  %v916 = vpack.c.b16 %v868, %v864
  %v917 = vpack.c.b16 %v869, %v865
  %v918 = vpack.c.b16 %v874, %v870
  %v919 = vpack.c.b16 %v875, %v871
  %v920 = vpack.c.b16 %v876, %v872
  %v921 = vpack.c.b16 %v877, %v873
  %v922 = vpack.c.b16 %v882, %v878
  %v923 = vpack.c.b16 %v883, %v879
  %v924 = vpack.c.b16 %v884, %v880
  %v925 = vpack.c.b16 %v885, %v881
  %v926 = vpack.c.b16 %v890, %v886
  %v927 = vpack.c.b16 %v891, %v887
  %v928 = vpack.c.b16 %v892, %v888
  %v929 = vpack.c.b16 %v893, %v889
  %v930 = vpack.c.b16 %v898, %v894
  %v931 = vpack.c.b16 %v899, %v895
  %v932 = vpack.c.b16 %v900, %v896
  %v933 = vpack.c.b16 %v901, %v897
  %966 = vmatprep.subr.bf16.mxu0 %v931
  %967 = vmatpush1.bf16.msra.mxu0 %v930
  %968 = vmatprep.subr.bf16.mxu0 %v927
  %969 = vmatpush1.bf16.msra.mxu0 %v926
  %970 = vmatprep.subr.bf16.mxu0 %v923
  %971 = vmatpush1.bf16.msra.mxu0 %v922
  %972 = vmatprep.subr.bf16.mxu0 %v919
  %973 = vmatpush1.bf16.msra.mxu0 %v918
  %974 = vmatprep.subr.bf16.mxu0 %v915
  %975 = vmatpush1.bf16.msra.mxu0 %v914
  %976 = vmatprep.subr.bf16.mxu0 %v911
  %977 = vmatpush1.bf16.msra.mxu0 %v910
  %978 = vmatprep.subr.bf16.mxu0 %v907
  %979 = vmatpush1.bf16.msra.mxu0 %v906
  %980 = vmatprep.subr.bf16.mxu0 %v903
  %981 = vmatpush1.bf16.msra.mxu0 %v902
  %982 = vmatprep.subr.bf16.mxu0 0
  %983 = vmatpush2.bf16.msra.mxu0 0
  %984 = vmatprep.subr.bf16.mxu0 0
  %985 = vmatpush2.bf16.msra.mxu0 0
  %986 = vmatprep.subr.bf16.mxu0 0
  %987 = vmatpush2.bf16.msra.mxu0 0
  %988 = vmatprep.subr.bf16.mxu0 0
  %989 = vmatpush2.bf16.msra.mxu0 0
  %990 = vmatprep.subr.bf16.mxu0 0
  %991 = vmatpush2.bf16.msra.mxu0 0
  %992 = vmatprep.subr.bf16.mxu0 0
  %993 = vmatpush2.bf16.msra.mxu0 0
  %994 = vmatprep.subr.bf16.mxu0 0
  %995 = vmatpush2.bf16.msra.mxu0 0
  %996 = vmatprep.subr.bf16.mxu0 0
  %997 = vmatpush2.bf16.msra.mxu0 0
  %998 = vmatprep.mubr.bf16.mxu0 0
  %999 = vmatmul.mubr.bf16.gmra.mxu0 %v740
  %v1000 = vpop.f32.mrf.mxu0
  %v1001 = vadd.f32 0.0, %v1000
  %v1002 = vpop.f32.mrf.mxu0
  %v1003 = vadd.f32 0.0, %v1002
  %v1004 = vpop.f32.mrf.mxu0
  %v1005 = vpop.f32.mrf.mxu0
  %1006 = vdwg.mxu0
  %1007 = vmatprep.subr.bf16.mxu0 %v933
  %1008 = vmatpush1.bf16.msra.mxu0 %v932
  %1009 = vmatprep.subr.bf16.mxu0 %v929
  %1010 = vmatpush1.bf16.msra.mxu0 %v928
  %1011 = vmatprep.subr.bf16.mxu0 %v925
  %1012 = vmatpush1.bf16.msra.mxu0 %v924
  %1013 = vmatprep.subr.bf16.mxu0 %v921
  %1014 = vmatpush1.bf16.msra.mxu0 %v920
  %1015 = vmatprep.subr.bf16.mxu0 %v917
  %1016 = vmatpush1.bf16.msra.mxu0 %v916
  %1017 = vmatprep.subr.bf16.mxu0 %v913
  %1018 = vmatpush1.bf16.msra.mxu0 %v912
  %1019 = vmatprep.subr.bf16.mxu0 %v909
  %1020 = vmatpush1.bf16.msra.mxu0 %v908
  %1021 = vmatprep.subr.bf16.mxu0 %v905
  %1022 = vmatpush1.bf16.msra.mxu0 %v904
  %1023 = vmatprep.subr.bf16.mxu0 0
  %1024 = vmatpush2.bf16.msra.mxu0 0
  %1025 = vmatprep.subr.bf16.mxu0 0
  %1026 = vmatpush2.bf16.msra.mxu0 0
  %1027 = vmatprep.subr.bf16.mxu0 0
  %1028 = vmatpush2.bf16.msra.mxu0 0
  %1029 = vmatprep.subr.bf16.mxu0 0
  %1030 = vmatpush2.bf16.msra.mxu0 0
  %1031 = vmatprep.subr.bf16.mxu0 0
  %1032 = vmatpush2.bf16.msra.mxu0 0
  %1033 = vmatprep.subr.bf16.mxu0 0
  %1034 = vmatpush2.bf16.msra.mxu0 0
  %1035 = vmatprep.subr.bf16.mxu0 0
  %1036 = vmatpush2.bf16.msra.mxu0 0
  %1037 = vmatprep.subr.bf16.mxu0 0
  %1038 = vmatpush2.bf16.msra.mxu0 0
  %1039 = vmatprep.mubr.bf16.mxu0 0
  %1040 = vmatmul.mubr.bf16.gmra.mxu0 %v740
  %v1041 = vpop.f32.mrf.mxu0
  %v1042 = vadd.f32 0.0, %v1041
  %v1043 = vpop.f32.mrf.mxu0
  %v1044 = vadd.f32 0.0, %v1043
  %v1045 = vpop.f32.mrf.mxu0
  %v1046 = vpop.f32.mrf.mxu0
  %1047 = vdwg.mxu0
  %v1080 = vunpack.c.l.b16 %v774
  %v1081 = vunpack.c.h.b16 %v774
  %v1082 = vunpack.c.l.b16 %v775
  %v1083 = vunpack.c.h.b16 %v775
  %v1084 = vunpack.c.l.b16 %v776
  %v1085 = vunpack.c.h.b16 %v776
  %v1086 = vunpack.c.l.b16 %v777
  %v1087 = vunpack.c.h.b16 %v777
  %v1088 = vunpack.c.l.b16 %v778
  %v1089 = vunpack.c.h.b16 %v778
  %v1090 = vunpack.c.l.b16 %v779
  %v1091 = vunpack.c.h.b16 %v779
  %v1092 = vunpack.c.l.b16 %v780
  %v1093 = vunpack.c.h.b16 %v780
  %v1094 = vunpack.c.l.b16 %v781
  %v1095 = vunpack.c.h.b16 %v781
  %v1096 = vunpack.c.l.b16 %v782
  %v1097 = vunpack.c.h.b16 %v782
  %v1098 = vunpack.c.l.b16 %v783
  %v1099 = vunpack.c.h.b16 %v783
  %v1100 = vunpack.c.l.b16 %v784
  %v1101 = vunpack.c.h.b16 %v784
  %v1102 = vunpack.c.l.b16 %v785
  %v1103 = vunpack.c.h.b16 %v785
  %v1104 = vunpack.c.l.b16 %v786
  %v1105 = vunpack.c.h.b16 %v786
  %v1106 = vunpack.c.l.b16 %v787
  %v1107 = vunpack.c.h.b16 %v787
  %v1108 = vunpack.c.l.b16 %v788
  %v1109 = vunpack.c.h.b16 %v788
  %v1110 = vunpack.c.l.b16 %v789
  %v1111 = vunpack.c.h.b16 %v789
  %v1112 = vunpack.c.l.b16 %v790
  %v1113 = vunpack.c.h.b16 %v790
  %v1114 = vunpack.c.l.b16 %v791
  %v1115 = vunpack.c.h.b16 %v791
  %v1116 = vunpack.c.l.b16 %v792
  %v1117 = vunpack.c.h.b16 %v792
  %v1118 = vunpack.c.l.b16 %v793
  %v1119 = vunpack.c.h.b16 %v793
  %v1120 = vunpack.c.l.b16 %v794
  %v1121 = vunpack.c.h.b16 %v794
  %v1122 = vunpack.c.l.b16 %v795
  %v1123 = vunpack.c.h.b16 %v795
  %v1124 = vunpack.c.l.b16 %v796
  %v1125 = vunpack.c.h.b16 %v796
  %v1126 = vunpack.c.l.b16 %v797
  %v1127 = vunpack.c.h.b16 %v797
  %v1128 = vunpack.c.l.b16 %v798
  %v1129 = vunpack.c.h.b16 %v798
  %v1130 = vunpack.c.l.b16 %v799
  %v1131 = vunpack.c.h.b16 %v799
  %v1132 = vunpack.c.l.b16 %v800
  %v1133 = vunpack.c.h.b16 %v800
  %v1134 = vunpack.c.l.b16 %v801
  %v1135 = vunpack.c.h.b16 %v801
  %v1136 = vunpack.c.l.b16 %v802
  %v1137 = vunpack.c.h.b16 %v802
  %v1138 = vunpack.c.l.b16 %v803
  %v1139 = vunpack.c.h.b16 %v803
  %v1140 = vunpack.c.l.b16 %v804
  %v1141 = vunpack.c.h.b16 %v804
  %v1142 = vunpack.c.l.b16 %v805
  %v1143 = vunpack.c.h.b16 %v805
  %v1144 = vpack.c.b16 %v1084, %v1080
  %v1145 = vpack.c.b16 %v1085, %v1081
  %v1146 = vpack.c.b16 %v1086, %v1082
  %v1147 = vpack.c.b16 %v1087, %v1083
  %v1148 = vpack.c.b16 %v1092, %v1088
  %v1149 = vpack.c.b16 %v1093, %v1089
  %v1150 = vpack.c.b16 %v1094, %v1090
  %v1151 = vpack.c.b16 %v1095, %v1091
  %v1152 = vpack.c.b16 %v1100, %v1096
  %v1153 = vpack.c.b16 %v1101, %v1097
  %v1154 = vpack.c.b16 %v1102, %v1098
  %v1155 = vpack.c.b16 %v1103, %v1099
  %v1156 = vpack.c.b16 %v1108, %v1104
  %v1157 = vpack.c.b16 %v1109, %v1105
  %v1158 = vpack.c.b16 %v1110, %v1106
  %v1159 = vpack.c.b16 %v1111, %v1107
  %v1160 = vpack.c.b16 %v1116, %v1112
  %v1161 = vpack.c.b16 %v1117, %v1113
  %v1162 = vpack.c.b16 %v1118, %v1114
  %v1163 = vpack.c.b16 %v1119, %v1115
  %v1164 = vpack.c.b16 %v1124, %v1120
  %v1165 = vpack.c.b16 %v1125, %v1121
  %v1166 = vpack.c.b16 %v1126, %v1122
  %v1167 = vpack.c.b16 %v1127, %v1123
  %v1168 = vpack.c.b16 %v1132, %v1128
  %v1169 = vpack.c.b16 %v1133, %v1129
  %v1170 = vpack.c.b16 %v1134, %v1130
  %v1171 = vpack.c.b16 %v1135, %v1131
  %v1172 = vpack.c.b16 %v1140, %v1136
  %v1173 = vpack.c.b16 %v1141, %v1137
  %v1174 = vpack.c.b16 %v1142, %v1138
  %v1175 = vpack.c.b16 %v1143, %v1139
  %1208 = vmatprep.subr.bf16.mxu0 %v1173
  %1209 = vmatpush1.bf16.msra.mxu0 %v1172
  %1210 = vmatprep.subr.bf16.mxu0 %v1169
  %1211 = vmatpush1.bf16.msra.mxu0 %v1168
  %1212 = vmatprep.subr.bf16.mxu0 %v1165
  %1213 = vmatpush1.bf16.msra.mxu0 %v1164
  %1214 = vmatprep.subr.bf16.mxu0 %v1161
  %1215 = vmatpush1.bf16.msra.mxu0 %v1160
  %1216 = vmatprep.subr.bf16.mxu0 %v1157
  %1217 = vmatpush1.bf16.msra.mxu0 %v1156
  %1218 = vmatprep.subr.bf16.mxu0 %v1153
  %1219 = vmatpush1.bf16.msra.mxu0 %v1152
  %1220 = vmatprep.subr.bf16.mxu0 %v1149
  %1221 = vmatpush1.bf16.msra.mxu0 %v1148
  %1222 = vmatprep.subr.bf16.mxu0 %v1145
  %1223 = vmatpush1.bf16.msra.mxu0 %v1144
  %1224 = vmatprep.subr.bf16.mxu0 0
  %1225 = vmatpush2.bf16.msra.mxu0 0
  %1226 = vmatprep.subr.bf16.mxu0 0
  %1227 = vmatpush2.bf16.msra.mxu0 0
  %1228 = vmatprep.subr.bf16.mxu0 0
  %1229 = vmatpush2.bf16.msra.mxu0 0
  %1230 = vmatprep.subr.bf16.mxu0 0
  %1231 = vmatpush2.bf16.msra.mxu0 0
  %1232 = vmatprep.subr.bf16.mxu0 0
  %1233 = vmatpush2.bf16.msra.mxu0 0
  %1234 = vmatprep.subr.bf16.mxu0 0
  %1235 = vmatpush2.bf16.msra.mxu0 0
  %1236 = vmatprep.subr.bf16.mxu0 0
  %1237 = vmatpush2.bf16.msra.mxu0 0
  %1238 = vmatprep.subr.bf16.mxu0 0
  %1239 = vmatpush2.bf16.msra.mxu0 0
  %1240 = vmatprep.mubr.bf16.mxu0 0
  %1241 = vmatmul.mubr.bf16.gmra.mxu0 %v741
  %v1242 = vpop.f32.mrf.mxu0
  %v1243 = vadd.f32 0.0, %v1242
  %v1244 = vpop.f32.mrf.mxu0
  %v1245 = vadd.f32 0.0, %v1244
  %v1246 = vpop.f32.mrf.mxu0
  %v1247 = vpop.f32.mrf.mxu0
  %1248 = vdwg.mxu0
  %1249 = vmatprep.subr.bf16.mxu0 %v1175
  %1250 = vmatpush1.bf16.msra.mxu0 %v1174
  %1251 = vmatprep.subr.bf16.mxu0 %v1171
  %1252 = vmatpush1.bf16.msra.mxu0 %v1170
  %1253 = vmatprep.subr.bf16.mxu0 %v1167
  %1254 = vmatpush1.bf16.msra.mxu0 %v1166
  %1255 = vmatprep.subr.bf16.mxu0 %v1163
  %1256 = vmatpush1.bf16.msra.mxu0 %v1162
  %1257 = vmatprep.subr.bf16.mxu0 %v1159
  %1258 = vmatpush1.bf16.msra.mxu0 %v1158
  %1259 = vmatprep.subr.bf16.mxu0 %v1155
  %1260 = vmatpush1.bf16.msra.mxu0 %v1154
  %1261 = vmatprep.subr.bf16.mxu0 %v1151
  %1262 = vmatpush1.bf16.msra.mxu0 %v1150
  %1263 = vmatprep.subr.bf16.mxu0 %v1147
  %1264 = vmatpush1.bf16.msra.mxu0 %v1146
  %1265 = vmatprep.subr.bf16.mxu0 0
  %1266 = vmatpush2.bf16.msra.mxu0 0
  %1267 = vmatprep.subr.bf16.mxu0 0
  %1268 = vmatpush2.bf16.msra.mxu0 0
  %1269 = vmatprep.subr.bf16.mxu0 0
  %1270 = vmatpush2.bf16.msra.mxu0 0
  %1271 = vmatprep.subr.bf16.mxu0 0
  %1272 = vmatpush2.bf16.msra.mxu0 0
  %1273 = vmatprep.subr.bf16.mxu0 0
  %1274 = vmatpush2.bf16.msra.mxu0 0
  %1275 = vmatprep.subr.bf16.mxu0 0
  %1276 = vmatpush2.bf16.msra.mxu0 0
  %1277 = vmatprep.subr.bf16.mxu0 0
  %1278 = vmatpush2.bf16.msra.mxu0 0
  %1279 = vmatprep.subr.bf16.mxu0 0
  %1280 = vmatpush2.bf16.msra.mxu0 0
  %1281 = vmatprep.mubr.bf16.mxu0 0
  %1282 = vmatmul.mubr.bf16.gmra.mxu0 %v741
  %v1283 = vpop.f32.mrf.mxu0
  %v1284 = vadd.f32 0.0, %v1283
  %v1285 = vpop.f32.mrf.mxu0
  %v1286 = vadd.f32 0.0, %v1285
  %v1287 = vpop.f32.mrf.mxu0
  %v1288 = vpop.f32.mrf.mxu0
  %1289 = vdwg.mxu0
  %s1290 = scalar_lea.vmem %s0, 8
  %v1291 = vld [vmem:[%s1290] sm:$0xff]
  %s1292 = scalar_lea.vmem %s46, 48
  %v1293 = vld [vmem:[%s1292] sm:$0xff]
  %v1302 = vcombine.low %v1001, %v1003
  %v1303 = vcombine.low %v1042, %v1044
  %v1305 = vunpack.c.l.s4 1983009808
  %v1306 = vunpack.c.0.s8 %v1305
  %v1307 = vlaneseq
  %v1308 = vshrl.u32 %v1307, 7
  %v1309 = vsub.s32 %v1306, %v1308
  %v1310 = vrot.slane %v1302, %v1309
  %v1312 = vunpack.c.l.s4 1983009808
  %v1313 = vunpack.c.0.s8 %v1312
  %v1314 = vlaneseq
  %v1315 = vshrl.u32 %v1314, 7
  %v1316 = vsub.s32 %v1313, %v1315
  %v1317 = vrot.slane %v1303, %v1316
  %v1318 = vcombine.low %v1310, %v1317
  %v1319 = vcombine.low %v1243, %v1245
  %v1320 = vcombine.low %v1284, %v1286
  %v1322 = vunpack.c.l.s4 1983009808
  %v1323 = vunpack.c.0.s8 %v1322
  %v1324 = vlaneseq
  %v1325 = vshrl.u32 %v1324, 7
  %v1326 = vsub.s32 %v1323, %v1325
  %v1327 = vrot.slane %v1319, %v1326
  %v1329 = vunpack.c.l.s4 1983009808
  %v1330 = vunpack.c.0.s8 %v1329
  %v1331 = vlaneseq
  %v1332 = vshrl.u32 %v1331, 7
  %v1333 = vsub.s32 %v1330, %v1332
  %v1334 = vrot.slane %v1320, %v1333
  %v1335 = vcombine.low %v1327, %v1334
  %v1338 = vadd.f32 %v1291, %v1318
  %v1339 = vadd.f32 %v1293, %v1335
  %v1340 = vxor.u32 %v1338, 2147483648
  %v1341 = vxor.u32 %v1339, 2147483648
  %v1342 = vmul.f32 %v1340, 1.442695
  %v1343 = vpow.pop %v1342
  %v1344 = vmul.f32 %v1341, 1.442695
  %v1345 = vpow.pop %v1344
  %v1346 = vadd.f32 %v1343, 1.0
  %v1347 = vadd.f32 %v1345, 1.0
  %v1348 = vrcp.pop %v1346
  %v1349 = vmul.f32 1.0, %v1348
  %v1350 = vrcp.pop %v1347
  %v1351 = vmul.f32 1.0, %v1350
  %v1354 = vrot.slane %v1338, 2
  %v1355 = vrot.slane %v1339, 2
  %v1358 = vxor.u32 %v1354, 2147483648
  %v1359 = vxor.u32 %v1355, 2147483648
  %v1360 = vmul.f32 %v1358, 1.442695
  %v1361 = vpow.pop %v1360
  %v1362 = vmul.f32 %v1359, 1.442695
  %v1363 = vpow.pop %v1362
  %v1364 = vadd.f32 %v1361, 1.0
  %v1365 = vadd.f32 %v1363, 1.0
  %v1366 = vrcp.pop %v1364
  %v1367 = vmul.f32 1.0, %v1366
  %v1368 = vrcp.pop %v1365
  %v1369 = vmul.f32 1.0, %v1368
  %v1370 = vrot.slane %v1338, 4
  %v1371 = vrot.slane %v1339, 4
  %v1374 = vtanh.pop %v1370
  %v1375 = vtanh.pop %v1371
  %v1376 = vrot.slane %v1338, 6
  %v1377 = vrot.slane %v1339, 6
  %v1380 = vxor.u32 %v1376, 2147483648
  %v1381 = vxor.u32 %v1377, 2147483648
  %v1382 = vmul.f32 %v1380, 1.442695
  %v1383 = vpow.pop %v1382
  %v1384 = vmul.f32 %v1381, 1.442695
  %v1385 = vpow.pop %v1384
  %v1386 = vadd.f32 %v1383, 1.0
  %v1387 = vadd.f32 %v1385, 1.0
  %v1388 = vrcp.pop %v1386
  %v1389 = vmul.f32 1.0, %v1388
  %v1390 = vrcp.pop %v1387
  %v1391 = vmul.f32 1.0, %v1390
  %v1392 = vld [vmem:[#allocation3] sm:$0x3]
  %v1393 = vld [vmem:[#allocation3 + $0x2] sm:$0x3]
  %v1394 = vmul.f32 %v1367, %v1392
  %v1395 = vmul.f32 %v1369, %v1393
  %v1396 = vmul.f32 %v1349, %v1374
  %v1397 = vmul.f32 %v1351, %v1375
  %v1398 = vadd.f32 %v1394, %v1396
  %v1399 = vadd.f32 %v1395, %v1397
  %v1400 = vtanh.pop %v1398
  %v1401 = vtanh.pop %v1399
  %v1402 = vmul.f32 %v1389, %v1400
  %v1403 = vmul.f32 %v1391, %v1401
  %1404 = vst [vmem:[#allocation3] sm:$0x3] %v1398
  %1405 = vst [vmem:[#allocation3 + $0x2] sm:$0x3] %v1399
  %1406 = vst [vmem:[#allocation2] sm:$0x3] %v1402
  %1407 = vst [vmem:[#allocation2 + $0x2] sm:$0x3] %v1403
  %s1408 = scalar_lea.vmem %s3, 2
  %1409 = vst [vmem:[%s1408] sm:$0x3] %v1402
  %s1410 = scalar_lea.vmem %s54, 12
  %1411 = vst [vmem:[%s1410] sm:$0x3] %v1403
  %v1412 = vld [vmem:[#allocation2] sm:$0x3]
  %v1413 = vld [vmem:[#allocation2 + $0x2] sm:$0x3]
  %v1414 = vpack.c.bf16 %v1412, %v1412
  %v1415 = vpack.c.bf16 %v1413, %v1413
  %v1416 = vld [vmem:[%s2] sm:$0xff]
  %v1417 = vld [vmem:[%s2 + $0x8] sm:$0xff]
  %v1418 = vld [vmem:[%s2 + $0x10] sm:$0xff]
  %v1419 = vld [vmem:[%s2 + $0x18] sm:$0xff]
  %v1420 = vld [vmem:[%s2 + $0x20] sm:$0xff]
  %v1421 = vld [vmem:[%s2 + $0x28] sm:$0xff]
  %v1422 = vld [vmem:[%s2 + $0x30] sm:$0xff]
  %v1423 = vld [vmem:[%s2 + $0x38] sm:$0xff]
  %v1424 = vld [vmem:[%s2 + $0x40] sm:$0xff]
  %v1425 = vld [vmem:[%s2 + $0x48] sm:$0xff]
  %v1426 = vld [vmem:[%s2 + $0x50] sm:$0xff]
  %v1427 = vld [vmem:[%s2 + $0x58] sm:$0xff]
  %v1428 = vld [vmem:[%s2 + $0x60] sm:$0xff]
  %v1429 = vld [vmem:[%s2 + $0x68] sm:$0xff]
  %v1430 = vld [vmem:[%s2 + $0x70] sm:$0xff]
  %v1431 = vld [vmem:[%s2 + $0x78] sm:$0xff]
  %v1432 = vld [vmem:[%s2 + $0x80] sm:$0xff]
  %v1433 = vld [vmem:[%s2 + $0x88] sm:$0xff]
  %v1434 = vld [vmem:[%s2 + $0x90] sm:$0xff]
  %v1435 = vld [vmem:[%s2 + $0x98] sm:$0xff]
  %v1436 = vld [vmem:[%s2 + $0xa0] sm:$0xff]
  %v1437 = vld [vmem:[%s2 + $0xa8] sm:$0xff]
  %v1438 = vld [vmem:[%s2 + $0xb0] sm:$0xff]
  %v1439 = vld [vmem:[%s2 + $0xb8] sm:$0xff]
  %v1440 = vld [vmem:[%s2 + $0xc0] sm:$0xff]
  %v1441 = vld [vmem:[%s2 + $0xc8] sm:$0xff]
  %v1442 = vld [vmem:[%s2 + $0xd0] sm:$0xff]
  %v1443 = vld [vmem:[%s2 + $0xd8] sm:$0xff]
  %v1444 = vld [vmem:[%s2 + $0xe0] sm:$0xff]
  %v1445 = vld [vmem:[%s2 + $0xe8] sm:$0xff]
  %v1446 = vld [vmem:[%s2 + $0xf0] sm:$0xff]
  %v1447 = vld [vmem:[%s2 + $0xf8] sm:$0xff]
  %v1448 = vld [vmem:[%s2 + $0x100] sm:$0xff]
  %v1449 = vld [vmem:[%s2 + $0x108] sm:$0xff]
  %v1450 = vld [vmem:[%s2 + $0x110] sm:$0xff]
  %v1451 = vld [vmem:[%s2 + $0x118] sm:$0xff]
  %v1452 = vld [vmem:[%s2 + $0x120] sm:$0xff]
  %v1453 = vld [vmem:[%s2 + $0x128] sm:$0xff]
  %v1454 = vld [vmem:[%s2 + $0x130] sm:$0xff]
  %v1455 = vld [vmem:[%s2 + $0x138] sm:$0xff]
  %v1456 = vld [vmem:[%s2 + $0x140] sm:$0xff]
  %v1457 = vld [vmem:[%s2 + $0x148] sm:$0xff]
  %v1458 = vld [vmem:[%s2 + $0x150] sm:$0xff]
  %v1459 = vld [vmem:[%s2 + $0x158] sm:$0xff]
  %v1460 = vld [vmem:[%s2 + $0x160] sm:$0xff]
  %v1461 = vld [vmem:[%s2 + $0x168] sm:$0xff]
  %v1462 = vld [vmem:[%s2 + $0x170] sm:$0xff]
  %v1463 = vld [vmem:[%s2 + $0x178] sm:$0xff]
  %v1464 = vld [vmem:[%s2 + $0x180] sm:$0xff]
  %v1465 = vld [vmem:[%s2 + $0x188] sm:$0xff]
  %v1466 = vld [vmem:[%s2 + $0x190] sm:$0xff]
  %v1467 = vld [vmem:[%s2 + $0x198] sm:$0xff]
  %v1468 = vld [vmem:[%s2 + $0x1a0] sm:$0xff]
  %v1469 = vld [vmem:[%s2 + $0x1a8] sm:$0xff]
  %v1470 = vld [vmem:[%s2 + $0x1b0] sm:$0xff]
  %v1471 = vld [vmem:[%s2 + $0x1b8] sm:$0xff]
  %v1472 = vld [vmem:[%s2 + $0x1c0] sm:$0xff]
  %v1473 = vld [vmem:[%s2 + $0x1c8] sm:$0xff]
  %v1474 = vld [vmem:[%s2 + $0x1d0] sm:$0xff]
  %v1475 = vld [vmem:[%s2 + $0x1d8] sm:$0xff]
  %v1476 = vld [vmem:[%s2 + $0x1e0] sm:$0xff]
  %v1477 = vld [vmem:[%s2 + $0x1e8] sm:$0xff]
  %v1478 = vld [vmem:[%s2 + $0x1f0] sm:$0xff]
  %v1479 = vld [vmem:[%s2 + $0x1f8] sm:$0xff]
  %v1512 = vunpack.c.l.b16 %v1416
  %v1513 = vunpack.c.h.b16 %v1416
  %v1514 = vunpack.c.l.b16 %v1417
  %v1515 = vunpack.c.h.b16 %v1417
  %v1516 = vunpack.c.l.b16 %v1418
  %v1517 = vunpack.c.h.b16 %v1418
  %v1518 = vunpack.c.l.b16 %v1419
  %v1519 = vunpack.c.h.b16 %v1419
  %v1520 = vunpack.c.l.b16 %v1420
  %v1521 = vunpack.c.h.b16 %v1420
  %v1522 = vunpack.c.l.b16 %v1421
  %v1523 = vunpack.c.h.b16 %v1421
  %v1524 = vunpack.c.l.b16 %v1422
  %v1525 = vunpack.c.h.b16 %v1422
  %v1526 = vunpack.c.l.b16 %v1423
  %v1527 = vunpack.c.h.b16 %v1423
  %v1528 = vunpack.c.l.b16 %v1424
  %v1529 = vunpack.c.h.b16 %v1424
  %v1530 = vunpack.c.l.b16 %v1425
  %v1531 = vunpack.c.h.b16 %v1425
  %v1532 = vunpack.c.l.b16 %v1426
  %v1533 = vunpack.c.h.b16 %v1426
  %v1534 = vunpack.c.l.b16 %v1427
  %v1535 = vunpack.c.h.b16 %v1427
  %v1536 = vunpack.c.l.b16 %v1428
  %v1537 = vunpack.c.h.b16 %v1428
  %v1538 = vunpack.c.l.b16 %v1429
  %v1539 = vunpack.c.h.b16 %v1429
  %v1540 = vunpack.c.l.b16 %v1430
  %v1541 = vunpack.c.h.b16 %v1430
  %v1542 = vunpack.c.l.b16 %v1431
  %v1543 = vunpack.c.h.b16 %v1431
  %v1544 = vunpack.c.l.b16 %v1432
  %v1545 = vunpack.c.h.b16 %v1432
  %v1546 = vunpack.c.l.b16 %v1433
  %v1547 = vunpack.c.h.b16 %v1433
  %v1548 = vunpack.c.l.b16 %v1434
  %v1549 = vunpack.c.h.b16 %v1434
  %v1550 = vunpack.c.l.b16 %v1435
  %v1551 = vunpack.c.h.b16 %v1435
  %v1552 = vunpack.c.l.b16 %v1436
  %v1553 = vunpack.c.h.b16 %v1436
  %v1554 = vunpack.c.l.b16 %v1437
  %v1555 = vunpack.c.h.b16 %v1437
  %v1556 = vunpack.c.l.b16 %v1438
  %v1557 = vunpack.c.h.b16 %v1438
  %v1558 = vunpack.c.l.b16 %v1439
  %v1559 = vunpack.c.h.b16 %v1439
  %v1560 = vunpack.c.l.b16 %v1440
  %v1561 = vunpack.c.h.b16 %v1440
  %v1562 = vunpack.c.l.b16 %v1441
  %v1563 = vunpack.c.h.b16 %v1441
  %v1564 = vunpack.c.l.b16 %v1442
  %v1565 = vunpack.c.h.b16 %v1442
  %v1566 = vunpack.c.l.b16 %v1443
  %v1567 = vunpack.c.h.b16 %v1443
  %v1568 = vunpack.c.l.b16 %v1444
  %v1569 = vunpack.c.h.b16 %v1444
  %v1570 = vunpack.c.l.b16 %v1445
  %v1571 = vunpack.c.h.b16 %v1445
  %v1572 = vunpack.c.l.b16 %v1446
  %v1573 = vunpack.c.h.b16 %v1446
  %v1574 = vunpack.c.l.b16 %v1447
  %v1575 = vunpack.c.h.b16 %v1447
  %v1576 = vpack.c.b16 %v1516, %v1512
  %v1577 = vpack.c.b16 %v1517, %v1513
  %v1578 = vpack.c.b16 %v1518, %v1514
  %v1579 = vpack.c.b16 %v1519, %v1515
  %v1580 = vpack.c.b16 %v1524, %v1520
  %v1581 = vpack.c.b16 %v1525, %v1521
  %v1582 = vpack.c.b16 %v1526, %v1522
  %v1583 = vpack.c.b16 %v1527, %v1523
  %v1584 = vpack.c.b16 %v1532, %v1528
  %v1585 = vpack.c.b16 %v1533, %v1529
  %v1586 = vpack.c.b16 %v1534, %v1530
  %v1587 = vpack.c.b16 %v1535, %v1531
  %v1588 = vpack.c.b16 %v1540, %v1536
  %v1589 = vpack.c.b16 %v1541, %v1537
  %v1590 = vpack.c.b16 %v1542, %v1538
  %v1591 = vpack.c.b16 %v1543, %v1539
  %v1592 = vpack.c.b16 %v1548, %v1544
  %v1593 = vpack.c.b16 %v1549, %v1545
  %v1594 = vpack.c.b16 %v1550, %v1546
  %v1595 = vpack.c.b16 %v1551, %v1547
  %v1596 = vpack.c.b16 %v1556, %v1552
  %v1597 = vpack.c.b16 %v1557, %v1553
  %v1598 = vpack.c.b16 %v1558, %v1554
  %v1599 = vpack.c.b16 %v1559, %v1555
  %v1600 = vpack.c.b16 %v1564, %v1560
  %v1601 = vpack.c.b16 %v1565, %v1561
  %v1602 = vpack.c.b16 %v1566, %v1562
  %v1603 = vpack.c.b16 %v1567, %v1563
  %v1604 = vpack.c.b16 %v1572, %v1568
  %v1605 = vpack.c.b16 %v1573, %v1569
  %v1606 = vpack.c.b16 %v1574, %v1570
  %v1607 = vpack.c.b16 %v1575, %v1571
  %1640 = vmatprep.subr.bf16.mxu0 %v1605
  %1641 = vmatpush1.bf16.msra.mxu0 %v1604
  %1642 = vmatprep.subr.bf16.mxu0 %v1601
  %1643 = vmatpush1.bf16.msra.mxu0 %v1600
  %1644 = vmatprep.subr.bf16.mxu0 %v1597
  %1645 = vmatpush1.bf16.msra.mxu0 %v1596
  %1646 = vmatprep.subr.bf16.mxu0 %v1593
  %1647 = vmatpush1.bf16.msra.mxu0 %v1592
  %1648 = vmatprep.subr.bf16.mxu0 %v1589
  %1649 = vmatpush1.bf16.msra.mxu0 %v1588
  %1650 = vmatprep.subr.bf16.mxu0 %v1585
  %1651 = vmatpush1.bf16.msra.mxu0 %v1584
  %1652 = vmatprep.subr.bf16.mxu0 %v1581
  %1653 = vmatpush1.bf16.msra.mxu0 %v1580
  %1654 = vmatprep.subr.bf16.mxu0 %v1577
  %1655 = vmatpush1.bf16.msra.mxu0 %v1576
  %1656 = vmatprep.subr.bf16.mxu0 0
  %1657 = vmatpush2.bf16.msra.mxu0 0
  %1658 = vmatprep.subr.bf16.mxu0 0
  %1659 = vmatpush2.bf16.msra.mxu0 0
  %1660 = vmatprep.subr.bf16.mxu0 0
  %1661 = vmatpush2.bf16.msra.mxu0 0
  %1662 = vmatprep.subr.bf16.mxu0 0
  %1663 = vmatpush2.bf16.msra.mxu0 0
  %1664 = vmatprep.subr.bf16.mxu0 0
  %1665 = vmatpush2.bf16.msra.mxu0 0
  %1666 = vmatprep.subr.bf16.mxu0 0
  %1667 = vmatpush2.bf16.msra.mxu0 0
  %1668 = vmatprep.subr.bf16.mxu0 0
  %1669 = vmatpush2.bf16.msra.mxu0 0
  %1670 = vmatprep.subr.bf16.mxu0 0
  %1671 = vmatpush2.bf16.msra.mxu0 0
  %1672 = vmatprep.mubr.bf16.mxu0 0
  %1673 = vmatmul.mubr.bf16.gmra.mxu0 %v1414
  %v1674 = vpop.f32.mrf.mxu0
  %v1675 = vadd.f32 0.0, %v1674
  %v1676 = vpop.f32.mrf.mxu0
  %v1677 = vadd.f32 0.0, %v1676
  %v1678 = vpop.f32.mrf.mxu0
  %v1679 = vpop.f32.mrf.mxu0
  %1680 = vdwg.mxu0
  %1681 = vmatprep.subr.bf16.mxu0 %v1607
  %1682 = vmatpush1.bf16.msra.mxu0 %v1606
  %1683 = vmatprep.subr.bf16.mxu0 %v1603
  %1684 = vmatpush1.bf16.msra.mxu0 %v1602
  %1685 = vmatprep.subr.bf16.mxu0 %v1599
  %1686 = vmatpush1.bf16.msra.mxu0 %v1598
  %1687 = vmatprep.subr.bf16.mxu0 %v1595
  %1688 = vmatpush1.bf16.msra.mxu0 %v1594
  %1689 = vmatprep.subr.bf16.mxu0 %v1591
  %1690 = vmatpush1.bf16.msra.mxu0 %v1590
  %1691 = vmatprep.subr.bf16.mxu0 %v1587
  %1692 = vmatpush1.bf16.msra.mxu0 %v1586
  %1693 = vmatprep.subr.bf16.mxu0 %v1583
  %1694 = vmatpush1.bf16.msra.mxu0 %v1582
  %1695 = vmatprep.subr.bf16.mxu0 %v1579
  %1696 = vmatpush1.bf16.msra.mxu0 %v1578
  %1697 = vmatprep.subr.bf16.mxu0 0
  %1698 = vmatpush2.bf16.msra.mxu0 0
  %1699 = vmatprep.subr.bf16.mxu0 0
  %1700 = vmatpush2.bf16.msra.mxu0 0
  %1701 = vmatprep.subr.bf16.mxu0 0
  %1702 = vmatpush2.bf16.msra.mxu0 0
  %1703 = vmatprep.subr.bf16.mxu0 0
  %1704 = vmatpush2.bf16.msra.mxu0 0
  %1705 = vmatprep.subr.bf16.mxu0 0
  %1706 = vmatpush2.bf16.msra.mxu0 0
  %1707 = vmatprep.subr.bf16.mxu0 0
  %1708 = vmatpush2.bf16.msra.mxu0 0
  %1709 = vmatprep.subr.bf16.mxu0 0
  %1710 = vmatpush2.bf16.msra.mxu0 0
  %1711 = vmatprep.subr.bf16.mxu0 0
  %1712 = vmatpush2.bf16.msra.mxu0 0
  %1713 = vmatprep.mubr.bf16.mxu0 0
  %1714 = vmatmul.mubr.bf16.gmra.mxu0 %v1414
  %v1715 = vpop.f32.mrf.mxu0
  %v1716 = vadd.f32 0.0, %v1715
  %v1717 = vpop.f32.mrf.mxu0
  %v1718 = vadd.f32 0.0, %v1717
  %v1719 = vpop.f32.mrf.mxu0
  %v1720 = vpop.f32.mrf.mxu0
  %1721 = vdwg.mxu0
  %v1754 = vunpack.c.l.b16 %v1448
  %v1755 = vunpack.c.h.b16 %v1448
  %v1756 = vunpack.c.l.b16 %v1449
  %v1757 = vunpack.c.h.b16 %v1449
  %v1758 = vunpack.c.l.b16 %v1450
  %v1759 = vunpack.c.h.b16 %v1450
  %v1760 = vunpack.c.l.b16 %v1451
  %v1761 = vunpack.c.h.b16 %v1451
  %v1762 = vunpack.c.l.b16 %v1452
  %v1763 = vunpack.c.h.b16 %v1452
  %v1764 = vunpack.c.l.b16 %v1453
  %v1765 = vunpack.c.h.b16 %v1453
  %v1766 = vunpack.c.l.b16 %v1454
  %v1767 = vunpack.c.h.b16 %v1454
  %v1768 = vunpack.c.l.b16 %v1455
  %v1769 = vunpack.c.h.b16 %v1455
  %v1770 = vunpack.c.l.b16 %v1456
  %v1771 = vunpack.c.h.b16 %v1456
  %v1772 = vunpack.c.l.b16 %v1457
  %v1773 = vunpack.c.h.b16 %v1457
  %v1774 = vunpack.c.l.b16 %v1458
  %v1775 = vunpack.c.h.b16 %v1458
  %v1776 = vunpack.c.l.b16 %v1459
  %v1777 = vunpack.c.h.b16 %v1459
  %v1778 = vunpack.c.l.b16 %v1460
  %v1779 = vunpack.c.h.b16 %v1460
  %v1780 = vunpack.c.l.b16 %v1461
  %v1781 = vunpack.c.h.b16 %v1461
  %v1782 = vunpack.c.l.b16 %v1462
  %v1783 = vunpack.c.h.b16 %v1462
  %v1784 = vunpack.c.l.b16 %v1463
  %v1785 = vunpack.c.h.b16 %v1463
  %v1786 = vunpack.c.l.b16 %v1464
  %v1787 = vunpack.c.h.b16 %v1464
  %v1788 = vunpack.c.l.b16 %v1465
  %v1789 = vunpack.c.h.b16 %v1465
  %v1790 = vunpack.c.l.b16 %v1466
  %v1791 = vunpack.c.h.b16 %v1466
  %v1792 = vunpack.c.l.b16 %v1467
  %v1793 = vunpack.c.h.b16 %v1467
  %v1794 = vunpack.c.l.b16 %v1468
  %v1795 = vunpack.c.h.b16 %v1468
  %v1796 = vunpack.c.l.b16 %v1469
  %v1797 = vunpack.c.h.b16 %v1469
  %v1798 = vunpack.c.l.b16 %v1470
  %v1799 = vunpack.c.h.b16 %v1470
  %v1800 = vunpack.c.l.b16 %v1471
  %v1801 = vunpack.c.h.b16 %v1471
  %v1802 = vunpack.c.l.b16 %v1472
  %v1803 = vunpack.c.h.b16 %v1472
  %v1804 = vunpack.c.l.b16 %v1473
  %v1805 = vunpack.c.h.b16 %v1473
  %v1806 = vunpack.c.l.b16 %v1474
  %v1807 = vunpack.c.h.b16 %v1474
  %v1808 = vunpack.c.l.b16 %v1475
  %v1809 = vunpack.c.h.b16 %v1475
  %v1810 = vunpack.c.l.b16 %v1476
  %v1811 = vunpack.c.h.b16 %v1476
  %v1812 = vunpack.c.l.b16 %v1477
  %v1813 = vunpack.c.h.b16 %v1477
  %v1814 = vunpack.c.l.b16 %v1478
  %v1815 = vunpack.c.h.b16 %v1478
  %v1816 = vunpack.c.l.b16 %v1479
  %v1817 = vunpack.c.h.b16 %v1479
  %v1818 = vpack.c.b16 %v1758, %v1754
  %v1819 = vpack.c.b16 %v1759, %v1755
  %v1820 = vpack.c.b16 %v1760, %v1756
  %v1821 = vpack.c.b16 %v1761, %v1757
  %v1822 = vpack.c.b16 %v1766, %v1762
  %v1823 = vpack.c.b16 %v1767, %v1763
  %v1824 = vpack.c.b16 %v1768, %v1764
  %v1825 = vpack.c.b16 %v1769, %v1765
  %v1826 = vpack.c.b16 %v1774, %v1770
  %v1827 = vpack.c.b16 %v1775, %v1771
  %v1828 = vpack.c.b16 %v1776, %v1772
  %v1829 = vpack.c.b16 %v1777, %v1773
  %v1830 = vpack.c.b16 %v1782, %v1778
  %v1831 = vpack.c.b16 %v1783, %v1779
  %v1832 = vpack.c.b16 %v1784, %v1780
  %v1833 = vpack.c.b16 %v1785, %v1781
  %v1834 = vpack.c.b16 %v1790, %v1786
  %v1835 = vpack.c.b16 %v1791, %v1787
  %v1836 = vpack.c.b16 %v1792, %v1788
  %v1837 = vpack.c.b16 %v1793, %v1789
  %v1838 = vpack.c.b16 %v1798, %v1794
  %v1839 = vpack.c.b16 %v1799, %v1795
  %v1840 = vpack.c.b16 %v1800, %v1796
  %v1841 = vpack.c.b16 %v1801, %v1797
  %v1842 = vpack.c.b16 %v1806, %v1802
  %v1843 = vpack.c.b16 %v1807, %v1803
  %v1844 = vpack.c.b16 %v1808, %v1804
  %v1845 = vpack.c.b16 %v1809, %v1805
  %v1846 = vpack.c.b16 %v1814, %v1810
  %v1847 = vpack.c.b16 %v1815, %v1811
  %v1848 = vpack.c.b16 %v1816, %v1812
  %v1849 = vpack.c.b16 %v1817, %v1813
  %1882 = vmatprep.subr.bf16.mxu0 %v1847
  %1883 = vmatpush1.bf16.msra.mxu0 %v1846
  %1884 = vmatprep.subr.bf16.mxu0 %v1843
  %1885 = vmatpush1.bf16.msra.mxu0 %v1842
  %1886 = vmatprep.subr.bf16.mxu0 %v1839
  %1887 = vmatpush1.bf16.msra.mxu0 %v1838
  %1888 = vmatprep.subr.bf16.mxu0 %v1835
  %1889 = vmatpush1.bf16.msra.mxu0 %v1834
  %1890 = vmatprep.subr.bf16.mxu0 %v1831
  %1891 = vmatpush1.bf16.msra.mxu0 %v1830
  %1892 = vmatprep.subr.bf16.mxu0 %v1827
  %1893 = vmatpush1.bf16.msra.mxu0 %v1826
  %1894 = vmatprep.subr.bf16.mxu0 %v1823
  %1895 = vmatpush1.bf16.msra.mxu0 %v1822
  %1896 = vmatprep.subr.bf16.mxu0 %v1819
  %1897 = vmatpush1.bf16.msra.mxu0 %v1818
  %1898 = vmatprep.subr.bf16.mxu0 0
  %1899 = vmatpush2.bf16.msra.mxu0 0
  %1900 = vmatprep.subr.bf16.mxu0 0
  %1901 = vmatpush2.bf16.msra.mxu0 0
  %1902 = vmatprep.subr.bf16.mxu0 0
  %1903 = vmatpush2.bf16.msra.mxu0 0
  %1904 = vmatprep.subr.bf16.mxu0 0
  %1905 = vmatpush2.bf16.msra.mxu0 0
  %1906 = vmatprep.subr.bf16.mxu0 0
  %1907 = vmatpush2.bf16.msra.mxu0 0
  %1908 = vmatprep.subr.bf16.mxu0 0
  %1909 = vmatpush2.bf16.msra.mxu0 0
  %1910 = vmatprep.subr.bf16.mxu0 0
  %1911 = vmatpush2.bf16.msra.mxu0 0
  %1912 = vmatprep.subr.bf16.mxu0 0
  %1913 = vmatpush2.bf16.msra.mxu0 0
  %1914 = vmatprep.mubr.bf16.mxu0 0
  %1915 = vmatmul.mubr.bf16.gmra.mxu0 %v1415
  %v1916 = vpop.f32.mrf.mxu0
  %v1917 = vadd.f32 0.0, %v1916
  %v1918 = vpop.f32.mrf.mxu0
  %v1919 = vadd.f32 0.0, %v1918
  %v1920 = vpop.f32.mrf.mxu0
  %v1921 = vpop.f32.mrf.mxu0
  %1922 = vdwg.mxu0
  %1923 = vmatprep.subr.bf16.mxu0 %v1849
  %1924 = vmatpush1.bf16.msra.mxu0 %v1848
  %1925 = vmatprep.subr.bf16.mxu0 %v1845
  %1926 = vmatpush1.bf16.msra.mxu0 %v1844
  %1927 = vmatprep.subr.bf16.mxu0 %v1841
  %1928 = vmatpush1.bf16.msra.mxu0 %v1840
  %1929 = vmatprep.subr.bf16.mxu0 %v1837
  %1930 = vmatpush1.bf16.msra.mxu0 %v1836
  %1931 = vmatprep.subr.bf16.mxu0 %v1833
  %1932 = vmatpush1.bf16.msra.mxu0 %v1832
  %1933 = vmatprep.subr.bf16.mxu0 %v1829
  %1934 = vmatpush1.bf16.msra.mxu0 %v1828
  %1935 = vmatprep.subr.bf16.mxu0 %v1825
  %1936 = vmatpush1.bf16.msra.mxu0 %v1824
  %1937 = vmatprep.subr.bf16.mxu0 %v1821
  %1938 = vmatpush1.bf16.msra.mxu0 %v1820
  %1939 = vmatprep.subr.bf16.mxu0 0
  %1940 = vmatpush2.bf16.msra.mxu0 0
  %1941 = vmatprep.subr.bf16.mxu0 0
  %1942 = vmatpush2.bf16.msra.mxu0 0
  %1943 = vmatprep.subr.bf16.mxu0 0
  %1944 = vmatpush2.bf16.msra.mxu0 0
  %1945 = vmatprep.subr.bf16.mxu0 0
  %1946 = vmatpush2.bf16.msra.mxu0 0
  %1947 = vmatprep.subr.bf16.mxu0 0
  %1948 = vmatpush2.bf16.msra.mxu0 0
  %1949 = vmatprep.subr.bf16.mxu0 0
  %1950 = vmatpush2.bf16.msra.mxu0 0
  %1951 = vmatprep.subr.bf16.mxu0 0
  %1952 = vmatpush2.bf16.msra.mxu0 0
  %1953 = vmatprep.subr.bf16.mxu0 0
  %1954 = vmatpush2.bf16.msra.mxu0 0
  %1955 = vmatprep.mubr.bf16.mxu0 0
  %1956 = vmatmul.mubr.bf16.gmra.mxu0 %v1415
  %v1957 = vpop.f32.mrf.mxu0
  %v1958 = vadd.f32 0.0, %v1957
  %v1959 = vpop.f32.mrf.mxu0
  %v1960 = vadd.f32 0.0, %v1959
  %v1961 = vpop.f32.mrf.mxu0
  %v1962 = vpop.f32.mrf.mxu0
  %1963 = vdwg.mxu0
  %s1964 = scalar_lea.vmem %s0, 16
  %v1965 = vld [vmem:[%s1964] sm:$0xff]
  %s1966 = scalar_lea.vmem %s46, 40
  %v1967 = vld [vmem:[%s1966] sm:$0xff]
  %v1976 = vcombine.low %v1675, %v1677
  %v1977 = vcombine.low %v1716, %v1718
  %v1979 = vunpack.c.l.s4 1983009808
  %v1980 = vunpack.c.0.s8 %v1979
  %v1981 = vlaneseq
  %v1982 = vshrl.u32 %v1981, 7
  %v1983 = vsub.s32 %v1980, %v1982
  %v1984 = vrot.slane %v1976, %v1983
  %v1986 = vunpack.c.l.s4 1983009808
  %v1987 = vunpack.c.0.s8 %v1986
  %v1988 = vlaneseq
  %v1989 = vshrl.u32 %v1988, 7
  %v1990 = vsub.s32 %v1987, %v1989
  %v1991 = vrot.slane %v1977, %v1990
  %v1992 = vcombine.low %v1984, %v1991
  %v1993 = vcombine.low %v1917, %v1919
  %v1994 = vcombine.low %v1958, %v1960
  %v1996 = vunpack.c.l.s4 1983009808
  %v1997 = vunpack.c.0.s8 %v1996
  %v1998 = vlaneseq
  %v1999 = vshrl.u32 %v1998, 7
  %v2000 = vsub.s32 %v1997, %v1999
  %v2001 = vrot.slane %v1993, %v2000
  %v2003 = vunpack.c.l.s4 1983009808
  %v2004 = vunpack.c.0.s8 %v2003
  %v2005 = vlaneseq
  %v2006 = vshrl.u32 %v2005, 7
  %v2007 = vsub.s32 %v2004, %v2006
  %v2008 = vrot.slane %v1994, %v2007
  %v2009 = vcombine.low %v2001, %v2008
  %v2012 = vadd.f32 %v1965, %v1992
  %v2013 = vadd.f32 %v1967, %v2009
  %v2014 = vxor.u32 %v2012, 2147483648
  %v2015 = vxor.u32 %v2013, 2147483648
  %v2016 = vmul.f32 %v2014, 1.442695
  %v2017 = vpow.pop %v2016
  %v2018 = vmul.f32 %v2015, 1.442695
  %v2019 = vpow.pop %v2018
  %v2020 = vadd.f32 %v2017, 1.0
  %v2021 = vadd.f32 %v2019, 1.0
  %v2022 = vrcp.pop %v2020
  %v2023 = vmul.f32 1.0, %v2022
  %v2024 = vrcp.pop %v2021
  %v2025 = vmul.f32 1.0, %v2024
  %v2028 = vrot.slane %v2012, 2
  %v2029 = vrot.slane %v2013, 2
  %v2032 = vxor.u32 %v2028, 2147483648
  %v2033 = vxor.u32 %v2029, 2147483648
  %v2034 = vmul.f32 %v2032, 1.442695
  %v2035 = vpow.pop %v2034
  %v2036 = vmul.f32 %v2033, 1.442695
  %v2037 = vpow.pop %v2036
  %v2038 = vadd.f32 %v2035, 1.0
  %v2039 = vadd.f32 %v2037, 1.0
  %v2040 = vrcp.pop %v2038
  %v2041 = vmul.f32 1.0, %v2040
  %v2042 = vrcp.pop %v2039
  %v2043 = vmul.f32 1.0, %v2042
  %v2044 = vrot.slane %v2012, 4
  %v2045 = vrot.slane %v2013, 4
  %v2048 = vtanh.pop %v2044
  %v2049 = vtanh.pop %v2045
  %v2050 = vrot.slane %v2012, 6
  %v2051 = vrot.slane %v2013, 6
  %v2054 = vxor.u32 %v2050, 2147483648
  %v2055 = vxor.u32 %v2051, 2147483648
  %v2056 = vmul.f32 %v2054, 1.442695
  %v2057 = vpow.pop %v2056
  %v2058 = vmul.f32 %v2055, 1.442695
  %v2059 = vpow.pop %v2058
  %v2060 = vadd.f32 %v2057, 1.0
  %v2061 = vadd.f32 %v2059, 1.0
  %v2062 = vrcp.pop %v2060
  %v2063 = vmul.f32 1.0, %v2062
  %v2064 = vrcp.pop %v2061
  %v2065 = vmul.f32 1.0, %v2064
  %v2066 = vld [vmem:[#allocation3] sm:$0x3]
  %v2067 = vld [vmem:[#allocation3 + $0x2] sm:$0x3]
  %v2068 = vmul.f32 %v2041, %v2066
  %v2069 = vmul.f32 %v2043, %v2067
  %v2070 = vmul.f32 %v2023, %v2048
  %v2071 = vmul.f32 %v2025, %v2049
  %v2072 = vadd.f32 %v2068, %v2070
  %v2073 = vadd.f32 %v2069, %v2071
  %v2074 = vtanh.pop %v2072
  %v2075 = vtanh.pop %v2073
  %v2076 = vmul.f32 %v2063, %v2074
  %v2077 = vmul.f32 %v2065, %v2075
  %2078 = vst [vmem:[#allocation3] sm:$0x3] %v2072
  %2079 = vst [vmem:[#allocation3 + $0x2] sm:$0x3] %v2073
  %2080 = vst [vmem:[#allocation2] sm:$0x3] %v2076
  %2081 = vst [vmem:[#allocation2 + $0x2] sm:$0x3] %v2077
  %s2082 = scalar_lea.vmem %s3, 4
  %2083 = vst [vmem:[%s2082] sm:$0x3] %v2076
  %s2084 = scalar_lea.vmem %s54, 10
  %2085 = vst [vmem:[%s2084] sm:$0x3] %v2077
  %v2086 = vld [vmem:[#allocation2] sm:$0x3]
  %v2087 = vld [vmem:[#allocation2 + $0x2] sm:$0x3]
  %v2088 = vpack.c.bf16 %v2086, %v2086
  %v2089 = vpack.c.bf16 %v2087, %v2087
  %v2090 = vld [vmem:[%s2] sm:$0xff]
  %v2091 = vld [vmem:[%s2 + $0x8] sm:$0xff]
  %v2092 = vld [vmem:[%s2 + $0x10] sm:$0xff]
  %v2093 = vld [vmem:[%s2 + $0x18] sm:$0xff]
  %v2094 = vld [vmem:[%s2 + $0x20] sm:$0xff]
  %v2095 = vld [vmem:[%s2 + $0x28] sm:$0xff]
  %v2096 = vld [vmem:[%s2 + $0x30] sm:$0xff]
  %v2097 = vld [vmem:[%s2 + $0x38] sm:$0xff]
  %v2098 = vld [vmem:[%s2 + $0x40] sm:$0xff]
  %v2099 = vld [vmem:[%s2 + $0x48] sm:$0xff]
  %v2100 = vld [vmem:[%s2 + $0x50] sm:$0xff]
  %v2101 = vld [vmem:[%s2 + $0x58] sm:$0xff]
  %v2102 = vld [vmem:[%s2 + $0x60] sm:$0xff]
  %v2103 = vld [vmem:[%s2 + $0x68] sm:$0xff]
  %v2104 = vld [vmem:[%s2 + $0x70] sm:$0xff]
  %v2105 = vld [vmem:[%s2 + $0x78] sm:$0xff]
  %v2106 = vld [vmem:[%s2 + $0x80] sm:$0xff]
  %v2107 = vld [vmem:[%s2 + $0x88] sm:$0xff]
  %v2108 = vld [vmem:[%s2 + $0x90] sm:$0xff]
  %v2109 = vld [vmem:[%s2 + $0x98] sm:$0xff]
  %v2110 = vld [vmem:[%s2 + $0xa0] sm:$0xff]
  %v2111 = vld [vmem:[%s2 + $0xa8] sm:$0xff]
  %v2112 = vld [vmem:[%s2 + $0xb0] sm:$0xff]
  %v2113 = vld [vmem:[%s2 + $0xb8] sm:$0xff]
  %v2114 = vld [vmem:[%s2 + $0xc0] sm:$0xff]
  %v2115 = vld [vmem:[%s2 + $0xc8] sm:$0xff]
  %v2116 = vld [vmem:[%s2 + $0xd0] sm:$0xff]
  %v2117 = vld [vmem:[%s2 + $0xd8] sm:$0xff]
  %v2118 = vld [vmem:[%s2 + $0xe0] sm:$0xff]
  %v2119 = vld [vmem:[%s2 + $0xe8] sm:$0xff]
  %v2120 = vld [vmem:[%s2 + $0xf0] sm:$0xff]
  %v2121 = vld [vmem:[%s2 + $0xf8] sm:$0xff]
  %v2122 = vld [vmem:[%s2 + $0x100] sm:$0xff]
  %v2123 = vld [vmem:[%s2 + $0x108] sm:$0xff]
  %v2124 = vld [vmem:[%s2 + $0x110] sm:$0xff]
  %v2125 = vld [vmem:[%s2 + $0x118] sm:$0xff]
  %v2126 = vld [vmem:[%s2 + $0x120] sm:$0xff]
  %v2127 = vld [vmem:[%s2 + $0x128] sm:$0xff]
  %v2128 = vld [vmem:[%s2 + $0x130] sm:$0xff]
  %v2129 = vld [vmem:[%s2 + $0x138] sm:$0xff]
  %v2130 = vld [vmem:[%s2 + $0x140] sm:$0xff]
  %v2131 = vld [vmem:[%s2 + $0x148] sm:$0xff]
  %v2132 = vld [vmem:[%s2 + $0x150] sm:$0xff]
  %v2133 = vld [vmem:[%s2 + $0x158] sm:$0xff]
  %v2134 = vld [vmem:[%s2 + $0x160] sm:$0xff]
  %v2135 = vld [vmem:[%s2 + $0x168] sm:$0xff]
  %v2136 = vld [vmem:[%s2 + $0x170] sm:$0xff]
  %v2137 = vld [vmem:[%s2 + $0x178] sm:$0xff]
  %v2138 = vld [vmem:[%s2 + $0x180] sm:$0xff]
  %v2139 = vld [vmem:[%s2 + $0x188] sm:$0xff]
  %v2140 = vld [vmem:[%s2 + $0x190] sm:$0xff]
  %v2141 = vld [vmem:[%s2 + $0x198] sm:$0xff]
  %v2142 = vld [vmem:[%s2 + $0x1a0] sm:$0xff]
  %v2143 = vld [vmem:[%s2 + $0x1a8] sm:$0xff]
  %v2144 = vld [vmem:[%s2 + $0x1b0] sm:$0xff]
  %v2145 = vld [vmem:[%s2 + $0x1b8] sm:$0xff]
  %v2146 = vld [vmem:[%s2 + $0x1c0] sm:$0xff]
  %v2147 = vld [vmem:[%s2 + $0x1c8] sm:$0xff]
  %v2148 = vld [vmem:[%s2 + $0x1d0] sm:$0xff]
  %v2149 = vld [vmem:[%s2 + $0x1d8] sm:$0xff]
  %v2150 = vld [vmem:[%s2 + $0x1e0] sm:$0xff]
  %v2151 = vld [vmem:[%s2 + $0x1e8] sm:$0xff]
  %v2152 = vld [vmem:[%s2 + $0x1f0] sm:$0xff]
  %v2153 = vld [vmem:[%s2 + $0x1f8] sm:$0xff]
  %v2186 = vunpack.c.l.b16 %v2090
  %v2187 = vunpack.c.h.b16 %v2090
  %v2188 = vunpack.c.l.b16 %v2091
  %v2189 = vunpack.c.h.b16 %v2091
  %v2190 = vunpack.c.l.b16 %v2092
  %v2191 = vunpack.c.h.b16 %v2092
  %v2192 = vunpack.c.l.b16 %v2093
  %v2193 = vunpack.c.h.b16 %v2093
  %v2194 = vunpack.c.l.b16 %v2094
  %v2195 = vunpack.c.h.b16 %v2094
  %v2196 = vunpack.c.l.b16 %v2095
  %v2197 = vunpack.c.h.b16 %v2095
  %v2198 = vunpack.c.l.b16 %v2096
  %v2199 = vunpack.c.h.b16 %v2096
  %v2200 = vunpack.c.l.b16 %v2097
  %v2201 = vunpack.c.h.b16 %v2097
  %v2202 = vunpack.c.l.b16 %v2098
  %v2203 = vunpack.c.h.b16 %v2098
  %v2204 = vunpack.c.l.b16 %v2099
  %v2205 = vunpack.c.h.b16 %v2099
  %v2206 = vunpack.c.l.b16 %v2100
  %v2207 = vunpack.c.h.b16 %v2100
  %v2208 = vunpack.c.l.b16 %v2101
  %v2209 = vunpack.c.h.b16 %v2101
  %v2210 = vunpack.c.l.b16 %v2102
  %v2211 = vunpack.c.h.b16 %v2102
  %v2212 = vunpack.c.l.b16 %v2103
  %v2213 = vunpack.c.h.b16 %v2103
  %v2214 = vunpack.c.l.b16 %v2104
  %v2215 = vunpack.c.h.b16 %v2104
  %v2216 = vunpack.c.l.b16 %v2105
  %v2217 = vunpack.c.h.b16 %v2105
  %v2218 = vunpack.c.l.b16 %v2106
  %v2219 = vunpack.c.h.b16 %v2106
  %v2220 = vunpack.c.l.b16 %v2107
  %v2221 = vunpack.c.h.b16 %v2107
  %v2222 = vunpack.c.l.b16 %v2108
  %v2223 = vunpack.c.h.b16 %v2108
  %v2224 = vunpack.c.l.b16 %v2109
  %v2225 = vunpack.c.h.b16 %v2109
  %v2226 = vunpack.c.l.b16 %v2110
  %v2227 = vunpack.c.h.b16 %v2110
  %v2228 = vunpack.c.l.b16 %v2111
  %v2229 = vunpack.c.h.b16 %v2111
  %v2230 = vunpack.c.l.b16 %v2112
  %v2231 = vunpack.c.h.b16 %v2112
  %v2232 = vunpack.c.l.b16 %v2113
  %v2233 = vunpack.c.h.b16 %v2113
  %v2234 = vunpack.c.l.b16 %v2114
  %v2235 = vunpack.c.h.b16 %v2114
  %v2236 = vunpack.c.l.b16 %v2115
  %v2237 = vunpack.c.h.b16 %v2115
  %v2238 = vunpack.c.l.b16 %v2116
  %v2239 = vunpack.c.h.b16 %v2116
  %v2240 = vunpack.c.l.b16 %v2117
  %v2241 = vunpack.c.h.b16 %v2117
  %v2242 = vunpack.c.l.b16 %v2118
  %v2243 = vunpack.c.h.b16 %v2118
  %v2244 = vunpack.c.l.b16 %v2119
  %v2245 = vunpack.c.h.b16 %v2119
  %v2246 = vunpack.c.l.b16 %v2120
  %v2247 = vunpack.c.h.b16 %v2120
  %v2248 = vunpack.c.l.b16 %v2121
  %v2249 = vunpack.c.h.b16 %v2121
  %v2250 = vpack.c.b16 %v2190, %v2186
  %v2251 = vpack.c.b16 %v2191, %v2187
  %v2252 = vpack.c.b16 %v2192, %v2188
  %v2253 = vpack.c.b16 %v2193, %v2189
  %v2254 = vpack.c.b16 %v2198, %v2194
  %v2255 = vpack.c.b16 %v2199, %v2195
  %v2256 = vpack.c.b16 %v2200, %v2196
  %v2257 = vpack.c.b16 %v2201, %v2197
  %v2258 = vpack.c.b16 %v2206, %v2202
  %v2259 = vpack.c.b16 %v2207, %v2203
  %v2260 = vpack.c.b16 %v2208, %v2204
  %v2261 = vpack.c.b16 %v2209, %v2205
  %v2262 = vpack.c.b16 %v2214, %v2210
  %v2263 = vpack.c.b16 %v2215, %v2211
  %v2264 = vpack.c.b16 %v2216, %v2212
  %v2265 = vpack.c.b16 %v2217, %v2213
  %v2266 = vpack.c.b16 %v2222, %v2218
  %v2267 = vpack.c.b16 %v2223, %v2219
  %v2268 = vpack.c.b16 %v2224, %v2220
  %v2269 = vpack.c.b16 %v2225, %v2221
  %v2270 = vpack.c.b16 %v2230, %v2226
  %v2271 = vpack.c.b16 %v2231, %v2227
  %v2272 = vpack.c.b16 %v2232, %v2228
  %v2273 = vpack.c.b16 %v2233, %v2229
  %v2274 = vpack.c.b16 %v2238, %v2234
  %v2275 = vpack.c.b16 %v2239, %v2235
  %v2276 = vpack.c.b16 %v2240, %v2236
  %v2277 = vpack.c.b16 %v2241, %v2237
  %v2278 = vpack.c.b16 %v2246, %v2242
  %v2279 = vpack.c.b16 %v2247, %v2243
  %v2280 = vpack.c.b16 %v2248, %v2244
  %v2281 = vpack.c.b16 %v2249, %v2245
  %2314 = vmatprep.subr.bf16.mxu0 %v2279
  %2315 = vmatpush1.bf16.msra.mxu0 %v2278
  %2316 = vmatprep.subr.bf16.mxu0 %v2275
  %2317 = vmatpush1.bf16.msra.mxu0 %v2274
  %2318 = vmatprep.subr.bf16.mxu0 %v2271
  %2319 = vmatpush1.bf16.msra.mxu0 %v2270
  %2320 = vmatprep.subr.bf16.mxu0 %v2267
  %2321 = vmatpush1.bf16.msra.mxu0 %v2266
  %2322 = vmatprep.subr.bf16.mxu0 %v2263
  %2323 = vmatpush1.bf16.msra.mxu0 %v2262
  %2324 = vmatprep.subr.bf16.mxu0 %v2259
  %2325 = vmatpush1.bf16.msra.mxu0 %v2258
  %2326 = vmatprep.subr.bf16.mxu0 %v2255
  %2327 = vmatpush1.bf16.msra.mxu0 %v2254
  %2328 = vmatprep.subr.bf16.mxu0 %v2251
  %2329 = vmatpush1.bf16.msra.mxu0 %v2250
  %2330 = vmatprep.subr.bf16.mxu0 0
  %2331 = vmatpush2.bf16.msra.mxu0 0
  %2332 = vmatprep.subr.bf16.mxu0 0
  %2333 = vmatpush2.bf16.msra.mxu0 0
  %2334 = vmatprep.subr.bf16.mxu0 0
  %2335 = vmatpush2.bf16.msra.mxu0 0
  %2336 = vmatprep.subr.bf16.mxu0 0
  %2337 = vmatpush2.bf16.msra.mxu0 0
  %2338 = vmatprep.subr.bf16.mxu0 0
  %2339 = vmatpush2.bf16.msra.mxu0 0
  %2340 = vmatprep.subr.bf16.mxu0 0
  %2341 = vmatpush2.bf16.msra.mxu0 0
  %2342 = vmatprep.subr.bf16.mxu0 0
  %2343 = vmatpush2.bf16.msra.mxu0 0
  %2344 = vmatprep.subr.bf16.mxu0 0
  %2345 = vmatpush2.bf16.msra.mxu0 0
  %2346 = vmatprep.mubr.bf16.mxu0 0
  %2347 = vmatmul.mubr.bf16.gmra.mxu0 %v2088
  %v2348 = vpop.f32.mrf.mxu0
  %v2349 = vadd.f32 0.0, %v2348
  %v2350 = vpop.f32.mrf.mxu0
  %v2351 = vadd.f32 0.0, %v2350
  %v2352 = vpop.f32.mrf.mxu0
  %v2353 = vpop.f32.mrf.mxu0
  %2354 = vdwg.mxu0
  %2355 = vmatprep.subr.bf16.mxu0 %v2281
  %2356 = vmatpush1.bf16.msra.mxu0 %v2280
  %2357 = vmatprep.subr.bf16.mxu0 %v2277
  %2358 = vmatpush1.bf16.msra.mxu0 %v2276
  %2359 = vmatprep.subr.bf16.mxu0 %v2273
  %2360 = vmatpush1.bf16.msra.mxu0 %v2272
  %2361 = vmatprep.subr.bf16.mxu0 %v2269
  %2362 = vmatpush1.bf16.msra.mxu0 %v2268
  %2363 = vmatprep.subr.bf16.mxu0 %v2265
  %2364 = vmatpush1.bf16.msra.mxu0 %v2264
  %2365 = vmatprep.subr.bf16.mxu0 %v2261
  %2366 = vmatpush1.bf16.msra.mxu0 %v2260
  %2367 = vmatprep.subr.bf16.mxu0 %v2257
  %2368 = vmatpush1.bf16.msra.mxu0 %v2256
  %2369 = vmatprep.subr.bf16.mxu0 %v2253
  %2370 = vmatpush1.bf16.msra.mxu0 %v2252
  %2371 = vmatprep.subr.bf16.mxu0 0
  %2372 = vmatpush2.bf16.msra.mxu0 0
  %2373 = vmatprep.subr.bf16.mxu0 0
  %2374 = vmatpush2.bf16.msra.mxu0 0
  %2375 = vmatprep.subr.bf16.mxu0 0
  %2376 = vmatpush2.bf16.msra.mxu0 0
  %2377 = vmatprep.subr.bf16.mxu0 0
  %2378 = vmatpush2.bf16.msra.mxu0 0
  %2379 = vmatprep.subr.bf16.mxu0 0
  %2380 = vmatpush2.bf16.msra.mxu0 0
  %2381 = vmatprep.subr.bf16.mxu0 0
  %2382 = vmatpush2.bf16.msra.mxu0 0
  %2383 = vmatprep.subr.bf16.mxu0 0
  %2384 = vmatpush2.bf16.msra.mxu0 0
  %2385 = vmatprep.subr.bf16.mxu0 0
  %2386 = vmatpush2.bf16.msra.mxu0 0
  %2387 = vmatprep.mubr.bf16.mxu0 0
  %2388 = vmatmul.mubr.bf16.gmra.mxu0 %v2088
  %v2389 = vpop.f32.mrf.mxu0
  %v2390 = vadd.f32 0.0, %v2389
  %v2391 = vpop.f32.mrf.mxu0
  %v2392 = vadd.f32 0.0, %v2391
  %v2393 = vpop.f32.mrf.mxu0
  %v2394 = vpop.f32.mrf.mxu0
  %2395 = vdwg.mxu0
  %v2428 = vunpack.c.l.b16 %v2122
  %v2429 = vunpack.c.h.b16 %v2122
  %v2430 = vunpack.c.l.b16 %v2123
  %v2431 = vunpack.c.h.b16 %v2123
  %v2432 = vunpack.c.l.b16 %v2124
  %v2433 = vunpack.c.h.b16 %v2124
  %v2434 = vunpack.c.l.b16 %v2125
  %v2435 = vunpack.c.h.b16 %v2125
  %v2436 = vunpack.c.l.b16 %v2126
  %v2437 = vunpack.c.h.b16 %v2126
  %v2438 = vunpack.c.l.b16 %v2127
  %v2439 = vunpack.c.h.b16 %v2127
  %v2440 = vunpack.c.l.b16 %v2128
  %v2441 = vunpack.c.h.b16 %v2128
  %v2442 = vunpack.c.l.b16 %v2129
  %v2443 = vunpack.c.h.b16 %v2129
  %v2444 = vunpack.c.l.b16 %v2130
  %v2445 = vunpack.c.h.b16 %v2130
  %v2446 = vunpack.c.l.b16 %v2131
  %v2447 = vunpack.c.h.b16 %v2131
  %v2448 = vunpack.c.l.b16 %v2132
  %v2449 = vunpack.c.h.b16 %v2132
  %v2450 = vunpack.c.l.b16 %v2133
  %v2451 = vunpack.c.h.b16 %v2133
  %v2452 = vunpack.c.l.b16 %v2134
  %v2453 = vunpack.c.h.b16 %v2134
  %v2454 = vunpack.c.l.b16 %v2135
  %v2455 = vunpack.c.h.b16 %v2135
  %v2456 = vunpack.c.l.b16 %v2136
  %v2457 = vunpack.c.h.b16 %v2136
  %v2458 = vunpack.c.l.b16 %v2137
  %v2459 = vunpack.c.h.b16 %v2137
  %v2460 = vunpack.c.l.b16 %v2138
  %v2461 = vunpack.c.h.b16 %v2138
  %v2462 = vunpack.c.l.b16 %v2139
  %v2463 = vunpack.c.h.b16 %v2139
  %v2464 = vunpack.c.l.b16 %v2140
  %v2465 = vunpack.c.h.b16 %v2140
  %v2466 = vunpack.c.l.b16 %v2141
  %v2467 = vunpack.c.h.b16 %v2141
  %v2468 = vunpack.c.l.b16 %v2142
  %v2469 = vunpack.c.h.b16 %v2142
  %v2470 = vunpack.c.l.b16 %v2143
  %v2471 = vunpack.c.h.b16 %v2143
  %v2472 = vunpack.c.l.b16 %v2144
  %v2473 = vunpack.c.h.b16 %v2144
  %v2474 = vunpack.c.l.b16 %v2145
  %v2475 = vunpack.c.h.b16 %v2145
  %v2476 = vunpack.c.l.b16 %v2146
  %v2477 = vunpack.c.h.b16 %v2146
  %v2478 = vunpack.c.l.b16 %v2147
  %v2479 = vunpack.c.h.b16 %v2147
  %v2480 = vunpack.c.l.b16 %v2148
  %v2481 = vunpack.c.h.b16 %v2148
  %v2482 = vunpack.c.l.b16 %v2149
  %v2483 = vunpack.c.h.b16 %v2149
  %v2484 = vunpack.c.l.b16 %v2150
  %v2485 = vunpack.c.h.b16 %v2150
  %v2486 = vunpack.c.l.b16 %v2151
  %v2487 = vunpack.c.h.b16 %v2151
  %v2488 = vunpack.c.l.b16 %v2152
  %v2489 = vunpack.c.h.b16 %v2152
  %v2490 = vunpack.c.l.b16 %v2153
  %v2491 = vunpack.c.h.b16 %v2153
  %v2492 = vpack.c.b16 %v2432, %v2428
  %v2493 = vpack.c.b16 %v2433, %v2429
  %v2494 = vpack.c.b16 %v2434, %v2430
  %v2495 = vpack.c.b16 %v2435, %v2431
  %v2496 = vpack.c.b16 %v2440, %v2436
  %v2497 = vpack.c.b16 %v2441, %v2437
  %v2498 = vpack.c.b16 %v2442, %v2438
  %v2499 = vpack.c.b16 %v2443, %v2439
  %v2500 = vpack.c.b16 %v2448, %v2444
  %v2501 = vpack.c.b16 %v2449, %v2445
  %v2502 = vpack.c.b16 %v2450, %v2446
  %v2503 = vpack.c.b16 %v2451, %v2447
  %v2504 = vpack.c.b16 %v2456, %v2452
  %v2505 = vpack.c.b16 %v2457, %v2453
  %v2506 = vpack.c.b16 %v2458, %v2454
  %v2507 = vpack.c.b16 %v2459, %v2455
  %v2508 = vpack.c.b16 %v2464, %v2460
  %v2509 = vpack.c.b16 %v2465, %v2461
  %v2510 = vpack.c.b16 %v2466, %v2462
  %v2511 = vpack.c.b16 %v2467, %v2463
  %v2512 = vpack.c.b16 %v2472, %v2468
  %v2513 = vpack.c.b16 %v2473, %v2469
  %v2514 = vpack.c.b16 %v2474, %v2470
  %v2515 = vpack.c.b16 %v2475, %v2471
  %v2516 = vpack.c.b16 %v2480, %v2476
  %v2517 = vpack.c.b16 %v2481, %v2477
  %v2518 = vpack.c.b16 %v2482, %v2478
  %v2519 = vpack.c.b16 %v2483, %v2479
  %v2520 = vpack.c.b16 %v2488, %v2484
  %v2521 = vpack.c.b16 %v2489, %v2485
  %v2522 = vpack.c.b16 %v2490, %v2486
  %v2523 = vpack.c.b16 %v2491, %v2487
  %2556 = vmatprep.subr.bf16.mxu0 %v2521
  %2557 = vmatpush1.bf16.msra.mxu0 %v2520
  %2558 = vmatprep.subr.bf16.mxu0 %v2517
  %2559 = vmatpush1.bf16.msra.mxu0 %v2516
  %2560 = vmatprep.subr.bf16.mxu0 %v2513
  %2561 = vmatpush1.bf16.msra.mxu0 %v2512
  %2562 = vmatprep.subr.bf16.mxu0 %v2509
  %2563 = vmatpush1.bf16.msra.mxu0 %v2508
  %2564 = vmatprep.subr.bf16.mxu0 %v2505
  %2565 = vmatpush1.bf16.msra.mxu0 %v2504
  %2566 = vmatprep.subr.bf16.mxu0 %v2501
  %2567 = vmatpush1.bf16.msra.mxu0 %v2500
  %2568 = vmatprep.subr.bf16.mxu0 %v2497
  %2569 = vmatpush1.bf16.msra.mxu0 %v2496
  %2570 = vmatprep.subr.bf16.mxu0 %v2493
  %2571 = vmatpush1.bf16.msra.mxu0 %v2492
  %2572 = vmatprep.subr.bf16.mxu0 0
  %2573 = vmatpush2.bf16.msra.mxu0 0
  %2574 = vmatprep.subr.bf16.mxu0 0
  %2575 = vmatpush2.bf16.msra.mxu0 0
  %2576 = vmatprep.subr.bf16.mxu0 0
  %2577 = vmatpush2.bf16.msra.mxu0 0
  %2578 = vmatprep.subr.bf16.mxu0 0
  %2579 = vmatpush2.bf16.msra.mxu0 0
  %2580 = vmatprep.subr.bf16.mxu0 0
  %2581 = vmatpush2.bf16.msra.mxu0 0
  %2582 = vmatprep.subr.bf16.mxu0 0
  %2583 = vmatpush2.bf16.msra.mxu0 0
  %2584 = vmatprep.subr.bf16.mxu0 0
  %2585 = vmatpush2.bf16.msra.mxu0 0
  %2586 = vmatprep.subr.bf16.mxu0 0
  %2587 = vmatpush2.bf16.msra.mxu0 0
  %2588 = vmatprep.mubr.bf16.mxu0 0
  %2589 = vmatmul.mubr.bf16.gmra.mxu0 %v2089
  %v2590 = vpop.f32.mrf.mxu0
  %v2591 = vadd.f32 0.0, %v2590
  %v2592 = vpop.f32.mrf.mxu0
  %v2593 = vadd.f32 0.0, %v2592
  %v2594 = vpop.f32.mrf.mxu0
  %v2595 = vpop.f32.mrf.mxu0
  %2596 = vdwg.mxu0
  %2597 = vmatprep.subr.bf16.mxu0 %v2523
  %2598 = vmatpush1.bf16.msra.mxu0 %v2522
  %2599 = vmatprep.subr.bf16.mxu0 %v2519
  %2600 = vmatpush1.bf16.msra.mxu0 %v2518
  %2601 = vmatprep.subr.bf16.mxu0 %v2515
  %2602 = vmatpush1.bf16.msra.mxu0 %v2514
  %2603 = vmatprep.subr.bf16.mxu0 %v2511
  %2604 = vmatpush1.bf16.msra.mxu0 %v2510
  %2605 = vmatprep.subr.bf16.mxu0 %v2507
  %2606 = vmatpush1.bf16.msra.mxu0 %v2506
  %2607 = vmatprep.subr.bf16.mxu0 %v2503
  %2608 = vmatpush1.bf16.msra.mxu0 %v2502
  %2609 = vmatprep.subr.bf16.mxu0 %v2499
  %2610 = vmatpush1.bf16.msra.mxu0 %v2498
  %2611 = vmatprep.subr.bf16.mxu0 %v2495
  %2612 = vmatpush1.bf16.msra.mxu0 %v2494
  %2613 = vmatprep.subr.bf16.mxu0 0
  %2614 = vmatpush2.bf16.msra.mxu0 0
  %2615 = vmatprep.subr.bf16.mxu0 0
  %2616 = vmatpush2.bf16.msra.mxu0 0
  %2617 = vmatprep.subr.bf16.mxu0 0
  %2618 = vmatpush2.bf16.msra.mxu0 0
  %2619 = vmatprep.subr.bf16.mxu0 0
  %2620 = vmatpush2.bf16.msra.mxu0 0
  %2621 = vmatprep.subr.bf16.mxu0 0
  %2622 = vmatpush2.bf16.msra.mxu0 0
  %2623 = vmatprep.subr.bf16.mxu0 0
  %2624 = vmatpush2.bf16.msra.mxu0 0
  %2625 = vmatprep.subr.bf16.mxu0 0
  %2626 = vmatpush2.bf16.msra.mxu0 0
  %2627 = vmatprep.subr.bf16.mxu0 0
  %2628 = vmatpush2.bf16.msra.mxu0 0
  %2629 = vmatprep.mubr.bf16.mxu0 0
  %2630 = vmatmul.mubr.bf16.gmra.mxu0 %v2089
  %v2631 = vpop.f32.mrf.mxu0
  %v2632 = vadd.f32 0.0, %v2631
  %v2633 = vpop.f32.mrf.mxu0
  %v2634 = vadd.f32 0.0, %v2633
  %v2635 = vpop.f32.mrf.mxu0
  %v2636 = vpop.f32.mrf.mxu0
  %2637 = vdwg.mxu0
  %s2638 = scalar_lea.vmem %s0, 24
  %v2639 = vld [vmem:[%s2638] sm:$0xff]
  %s2640 = scalar_lea.vmem %s46, 32
  %v2641 = vld [vmem:[%s2640] sm:$0xff]
  %v2650 = vcombine.low %v2349, %v2351
  %v2651 = vcombine.low %v2390, %v2392
  %v2653 = vunpack.c.l.s4 1983009808
  %v2654 = vunpack.c.0.s8 %v2653
  %v2655 = vlaneseq
  %v2656 = vshrl.u32 %v2655, 7
  %v2657 = vsub.s32 %v2654, %v2656
  %v2658 = vrot.slane %v2650, %v2657
  %v2660 = vunpack.c.l.s4 1983009808
  %v2661 = vunpack.c.0.s8 %v2660
  %v2662 = vlaneseq
  %v2663 = vshrl.u32 %v2662, 7
  %v2664 = vsub.s32 %v2661, %v2663
  %v2665 = vrot.slane %v2651, %v2664
  %v2666 = vcombine.low %v2658, %v2665
  %v2667 = vcombine.low %v2591, %v2593
  %v2668 = vcombine.low %v2632, %v2634
  %v2670 = vunpack.c.l.s4 1983009808
  %v2671 = vunpack.c.0.s8 %v2670
  %v2672 = vlaneseq
  %v2673 = vshrl.u32 %v2672, 7
  %v2674 = vsub.s32 %v2671, %v2673
  %v2675 = vrot.slane %v2667, %v2674
  %v2677 = vunpack.c.l.s4 1983009808
  %v2678 = vunpack.c.0.s8 %v2677
  %v2679 = vlaneseq
  %v2680 = vshrl.u32 %v2679, 7
  %v2681 = vsub.s32 %v2678, %v2680
  %v2682 = vrot.slane %v2668, %v2681
  %v2683 = vcombine.low %v2675, %v2682
  %v2686 = vadd.f32 %v2639, %v2666
  %v2687 = vadd.f32 %v2641, %v2683
  %v2688 = vxor.u32 %v2686, 2147483648
  %v2689 = vxor.u32 %v2687, 2147483648
  %v2690 = vmul.f32 %v2688, 1.442695
  %v2691 = vpow.pop %v2690
  %v2692 = vmul.f32 %v2689, 1.442695
  %v2693 = vpow.pop %v2692
  %v2694 = vadd.f32 %v2691, 1.0
  %v2695 = vadd.f32 %v2693, 1.0
  %v2696 = vrcp.pop %v2694
  %v2697 = vmul.f32 1.0, %v2696
  %v2698 = vrcp.pop %v2695
  %v2699 = vmul.f32 1.0, %v2698
  %v2702 = vrot.slane %v2686, 2
  %v2703 = vrot.slane %v2687, 2
  %v2706 = vxor.u32 %v2702, 2147483648
  %v2707 = vxor.u32 %v2703, 2147483648
  %v2708 = vmul.f32 %v2706, 1.442695
  %v2709 = vpow.pop %v2708
  %v2710 = vmul.f32 %v2707, 1.442695
  %v2711 = vpow.pop %v2710
  %v2712 = vadd.f32 %v2709, 1.0
  %v2713 = vadd.f32 %v2711, 1.0
  %v2714 = vrcp.pop %v2712
  %v2715 = vmul.f32 1.0, %v2714
  %v2716 = vrcp.pop %v2713
  %v2717 = vmul.f32 1.0, %v2716
  %v2718 = vrot.slane %v2686, 4
  %v2719 = vrot.slane %v2687, 4
  %v2722 = vtanh.pop %v2718
  %v2723 = vtanh.pop %v2719
  %v2724 = vrot.slane %v2686, 6
  %v2725 = vrot.slane %v2687, 6
  %v2728 = vxor.u32 %v2724, 2147483648
  %v2729 = vxor.u32 %v2725, 2147483648
  %v2730 = vmul.f32 %v2728, 1.442695
  %v2731 = vpow.pop %v2730
  %v2732 = vmul.f32 %v2729, 1.442695
  %v2733 = vpow.pop %v2732
  %v2734 = vadd.f32 %v2731, 1.0
  %v2735 = vadd.f32 %v2733, 1.0
  %v2736 = vrcp.pop %v2734
  %v2737 = vmul.f32 1.0, %v2736
  %v2738 = vrcp.pop %v2735
  %v2739 = vmul.f32 1.0, %v2738
  %v2740 = vld [vmem:[#allocation3] sm:$0x3]
  %v2741 = vld [vmem:[#allocation3 + $0x2] sm:$0x3]
  %v2742 = vmul.f32 %v2715, %v2740
  %v2743 = vmul.f32 %v2717, %v2741
  %v2744 = vmul.f32 %v2697, %v2722
  %v2745 = vmul.f32 %v2699, %v2723
  %v2746 = vadd.f32 %v2742, %v2744
  %v2747 = vadd.f32 %v2743, %v2745
  %v2748 = vtanh.pop %v2746
  %v2749 = vtanh.pop %v2747
  %v2750 = vmul.f32 %v2737, %v2748
  %v2751 = vmul.f32 %v2739, %v2749
  %2752 = vst [vmem:[#allocation3] sm:$0x3] %v2746
  %2753 = vst [vmem:[#allocation3 + $0x2] sm:$0x3] %v2747
  %2754 = vst [vmem:[#allocation2] sm:$0x3] %v2750
  %2755 = vst [vmem:[#allocation2 + $0x2] sm:$0x3] %v2751
  %s2756 = scalar_lea.vmem %s3, 6
  %2757 = vst [vmem:[%s2756] sm:$0x3] %v2750
  %s2758 = scalar_lea.vmem %s54, 8
  %2759 = vst [vmem:[%s2758] sm:$0x3] %v2751
  %v2760 = vld [vmem:[#allocation2] sm:$0x3]
  %v2761 = vld [vmem:[#allocation2 + $0x2] sm:$0x3]
  %v2762 = vpack.c.bf16 %v2760, %v2760
  %v2763 = vpack.c.bf16 %v2761, %v2761
  %v2764 = vld [vmem:[%s2] sm:$0xff]
  %v2765 = vld [vmem:[%s2 + $0x8] sm:$0xff]
  %v2766 = vld [vmem:[%s2 + $0x10] sm:$0xff]
  %v2767 = vld [vmem:[%s2 + $0x18] sm:$0xff]
  %v2768 = vld [vmem:[%s2 + $0x20] sm:$0xff]
  %v2769 = vld [vmem:[%s2 + $0x28] sm:$0xff]
  %v2770 = vld [vmem:[%s2 + $0x30] sm:$0xff]
  %v2771 = vld [vmem:[%s2 + $0x38] sm:$0xff]
  %v2772 = vld [vmem:[%s2 + $0x40] sm:$0xff]
  %v2773 = vld [vmem:[%s2 + $0x48] sm:$0xff]
  %v2774 = vld [vmem:[%s2 + $0x50] sm:$0xff]
  %v2775 = vld [vmem:[%s2 + $0x58] sm:$0xff]
  %v2776 = vld [vmem:[%s2 + $0x60] sm:$0xff]
  %v2777 = vld [vmem:[%s2 + $0x68] sm:$0xff]
  %v2778 = vld [vmem:[%s2 + $0x70] sm:$0xff]
  %v2779 = vld [vmem:[%s2 + $0x78] sm:$0xff]
  %v2780 = vld [vmem:[%s2 + $0x80] sm:$0xff]
  %v2781 = vld [vmem:[%s2 + $0x88] sm:$0xff]
  %v2782 = vld [vmem:[%s2 + $0x90] sm:$0xff]
  %v2783 = vld [vmem:[%s2 + $0x98] sm:$0xff]
  %v2784 = vld [vmem:[%s2 + $0xa0] sm:$0xff]
  %v2785 = vld [vmem:[%s2 + $0xa8] sm:$0xff]
  %v2786 = vld [vmem:[%s2 + $0xb0] sm:$0xff]
  %v2787 = vld [vmem:[%s2 + $0xb8] sm:$0xff]
  %v2788 = vld [vmem:[%s2 + $0xc0] sm:$0xff]
  %v2789 = vld [vmem:[%s2 + $0xc8] sm:$0xff]
  %v2790 = vld [vmem:[%s2 + $0xd0] sm:$0xff]
  %v2791 = vld [vmem:[%s2 + $0xd8] sm:$0xff]
  %v2792 = vld [vmem:[%s2 + $0xe0] sm:$0xff]
  %v2793 = vld [vmem:[%s2 + $0xe8] sm:$0xff]
  %v2794 = vld [vmem:[%s2 + $0xf0] sm:$0xff]
  %v2795 = vld [vmem:[%s2 + $0xf8] sm:$0xff]
  %v2796 = vld [vmem:[%s2 + $0x100] sm:$0xff]
  %v2797 = vld [vmem:[%s2 + $0x108] sm:$0xff]
  %v2798 = vld [vmem:[%s2 + $0x110] sm:$0xff]
  %v2799 = vld [vmem:[%s2 + $0x118] sm:$0xff]
  %v2800 = vld [vmem:[%s2 + $0x120] sm:$0xff]
  %v2801 = vld [vmem:[%s2 + $0x128] sm:$0xff]
  %v2802 = vld [vmem:[%s2 + $0x130] sm:$0xff]
  %v2803 = vld [vmem:[%s2 + $0x138] sm:$0xff]
  %v2804 = vld [vmem:[%s2 + $0x140] sm:$0xff]
  %v2805 = vld [vmem:[%s2 + $0x148] sm:$0xff]
  %v2806 = vld [vmem:[%s2 + $0x150] sm:$0xff]
  %v2807 = vld [vmem:[%s2 + $0x158] sm:$0xff]
  %v2808 = vld [vmem:[%s2 + $0x160] sm:$0xff]
  %v2809 = vld [vmem:[%s2 + $0x168] sm:$0xff]
  %v2810 = vld [vmem:[%s2 + $0x170] sm:$0xff]
  %v2811 = vld [vmem:[%s2 + $0x178] sm:$0xff]
  %v2812 = vld [vmem:[%s2 + $0x180] sm:$0xff]
  %v2813 = vld [vmem:[%s2 + $0x188] sm:$0xff]
  %v2814 = vld [vmem:[%s2 + $0x190] sm:$0xff]
  %v2815 = vld [vmem:[%s2 + $0x198] sm:$0xff]
  %v2816 = vld [vmem:[%s2 + $0x1a0] sm:$0xff]
  %v2817 = vld [vmem:[%s2 + $0x1a8] sm:$0xff]
  %v2818 = vld [vmem:[%s2 + $0x1b0] sm:$0xff]
  %v2819 = vld [vmem:[%s2 + $0x1b8] sm:$0xff]
  %v2820 = vld [vmem:[%s2 + $0x1c0] sm:$0xff]
  %v2821 = vld [vmem:[%s2 + $0x1c8] sm:$0xff]
  %v2822 = vld [vmem:[%s2 + $0x1d0] sm:$0xff]
  %v2823 = vld [vmem:[%s2 + $0x1d8] sm:$0xff]
  %v2824 = vld [vmem:[%s2 + $0x1e0] sm:$0xff]
  %v2825 = vld [vmem:[%s2 + $0x1e8] sm:$0xff]
  %v2826 = vld [vmem:[%s2 + $0x1f0] sm:$0xff]
  %v2827 = vld [vmem:[%s2 + $0x1f8] sm:$0xff]
  %v2860 = vunpack.c.l.b16 %v2764
  %v2861 = vunpack.c.h.b16 %v2764
  %v2862 = vunpack.c.l.b16 %v2765
  %v2863 = vunpack.c.h.b16 %v2765
  %v2864 = vunpack.c.l.b16 %v2766
  %v2865 = vunpack.c.h.b16 %v2766
  %v2866 = vunpack.c.l.b16 %v2767
  %v2867 = vunpack.c.h.b16 %v2767
  %v2868 = vunpack.c.l.b16 %v2768
  %v2869 = vunpack.c.h.b16 %v2768
  %v2870 = vunpack.c.l.b16 %v2769
  %v2871 = vunpack.c.h.b16 %v2769
  %v2872 = vunpack.c.l.b16 %v2770
  %v2873 = vunpack.c.h.b16 %v2770
  %v2874 = vunpack.c.l.b16 %v2771
  %v2875 = vunpack.c.h.b16 %v2771
  %v2876 = vunpack.c.l.b16 %v2772
  %v2877 = vunpack.c.h.b16 %v2772
  %v2878 = vunpack.c.l.b16 %v2773
  %v2879 = vunpack.c.h.b16 %v2773
  %v2880 = vunpack.c.l.b16 %v2774
  %v2881 = vunpack.c.h.b16 %v2774
  %v2882 = vunpack.c.l.b16 %v2775
  %v2883 = vunpack.c.h.b16 %v2775
  %v2884 = vunpack.c.l.b16 %v2776
  %v2885 = vunpack.c.h.b16 %v2776
  %v2886 = vunpack.c.l.b16 %v2777
  %v2887 = vunpack.c.h.b16 %v2777
  %v2888 = vunpack.c.l.b16 %v2778
  %v2889 = vunpack.c.h.b16 %v2778
  %v2890 = vunpack.c.l.b16 %v2779
  %v2891 = vunpack.c.h.b16 %v2779
  %v2892 = vunpack.c.l.b16 %v2780
  %v2893 = vunpack.c.h.b16 %v2780
  %v2894 = vunpack.c.l.b16 %v2781
  %v2895 = vunpack.c.h.b16 %v2781
  %v2896 = vunpack.c.l.b16 %v2782
  %v2897 = vunpack.c.h.b16 %v2782
  %v2898 = vunpack.c.l.b16 %v2783
  %v2899 = vunpack.c.h.b16 %v2783
  %v2900 = vunpack.c.l.b16 %v2784
  %v2901 = vunpack.c.h.b16 %v2784
  %v2902 = vunpack.c.l.b16 %v2785
  %v2903 = vunpack.c.h.b16 %v2785
  %v2904 = vunpack.c.l.b16 %v2786
  %v2905 = vunpack.c.h.b16 %v2786
  %v2906 = vunpack.c.l.b16 %v2787
  %v2907 = vunpack.c.h.b16 %v2787
  %v2908 = vunpack.c.l.b16 %v2788
  %v2909 = vunpack.c.h.b16 %v2788
  %v2910 = vunpack.c.l.b16 %v2789
  %v2911 = vunpack.c.h.b16 %v2789
  %v2912 = vunpack.c.l.b16 %v2790
  %v2913 = vunpack.c.h.b16 %v2790
  %v2914 = vunpack.c.l.b16 %v2791
  %v2915 = vunpack.c.h.b16 %v2791
  %v2916 = vunpack.c.l.b16 %v2792
  %v2917 = vunpack.c.h.b16 %v2792
  %v2918 = vunpack.c.l.b16 %v2793
  %v2919 = vunpack.c.h.b16 %v2793
  %v2920 = vunpack.c.l.b16 %v2794
  %v2921 = vunpack.c.h.b16 %v2794
  %v2922 = vunpack.c.l.b16 %v2795
  %v2923 = vunpack.c.h.b16 %v2795
  %v2924 = vpack.c.b16 %v2864, %v2860
  %v2925 = vpack.c.b16 %v2865, %v2861
  %v2926 = vpack.c.b16 %v2866, %v2862
  %v2927 = vpack.c.b16 %v2867, %v2863
  %v2928 = vpack.c.b16 %v2872, %v2868
  %v2929 = vpack.c.b16 %v2873, %v2869
  %v2930 = vpack.c.b16 %v2874, %v2870
  %v2931 = vpack.c.b16 %v2875, %v2871
  %v2932 = vpack.c.b16 %v2880, %v2876
  %v2933 = vpack.c.b16 %v2881, %v2877
  %v2934 = vpack.c.b16 %v2882, %v2878
  %v2935 = vpack.c.b16 %v2883, %v2879
  %v2936 = vpack.c.b16 %v2888, %v2884
  %v2937 = vpack.c.b16 %v2889, %v2885
  %v2938 = vpack.c.b16 %v2890, %v2886
  %v2939 = vpack.c.b16 %v2891, %v2887
  %v2940 = vpack.c.b16 %v2896, %v2892
  %v2941 = vpack.c.b16 %v2897, %v2893
  %v2942 = vpack.c.b16 %v2898, %v2894
  %v2943 = vpack.c.b16 %v2899, %v2895
  %v2944 = vpack.c.b16 %v2904, %v2900
  %v2945 = vpack.c.b16 %v2905, %v2901
  %v2946 = vpack.c.b16 %v2906, %v2902
  %v2947 = vpack.c.b16 %v2907, %v2903
  %v2948 = vpack.c.b16 %v2912, %v2908
  %v2949 = vpack.c.b16 %v2913, %v2909
  %v2950 = vpack.c.b16 %v2914, %v2910
  %v2951 = vpack.c.b16 %v2915, %v2911
  %v2952 = vpack.c.b16 %v2920, %v2916
  %v2953 = vpack.c.b16 %v2921, %v2917
  %v2954 = vpack.c.b16 %v2922, %v2918
  %v2955 = vpack.c.b16 %v2923, %v2919
  %2988 = vmatprep.subr.bf16.mxu0 %v2953
  %2989 = vmatpush1.bf16.msra.mxu0 %v2952
  %2990 = vmatprep.subr.bf16.mxu0 %v2949
  %2991 = vmatpush1.bf16.msra.mxu0 %v2948
  %2992 = vmatprep.subr.bf16.mxu0 %v2945
  %2993 = vmatpush1.bf16.msra.mxu0 %v2944
  %2994 = vmatprep.subr.bf16.mxu0 %v2941
  %2995 = vmatpush1.bf16.msra.mxu0 %v2940
  %2996 = vmatprep.subr.bf16.mxu0 %v2937
  %2997 = vmatpush1.bf16.msra.mxu0 %v2936
  %2998 = vmatprep.subr.bf16.mxu0 %v2933
  %2999 = vmatpush1.bf16.msra.mxu0 %v2932
  %3000 = vmatprep.subr.bf16.mxu0 %v2929
  %3001 = vmatpush1.bf16.msra.mxu0 %v2928
  %3002 = vmatprep.subr.bf16.mxu0 %v2925
  %3003 = vmatpush1.bf16.msra.mxu0 %v2924
  %3004 = vmatprep.subr.bf16.mxu0 0
  %3005 = vmatpush2.bf16.msra.mxu0 0
  %3006 = vmatprep.subr.bf16.mxu0 0
  %3007 = vmatpush2.bf16.msra.mxu0 0
  %3008 = vmatprep.subr.bf16.mxu0 0
  %3009 = vmatpush2.bf16.msra.mxu0 0
  %3010 = vmatprep.subr.bf16.mxu0 0
  %3011 = vmatpush2.bf16.msra.mxu0 0
  %3012 = vmatprep.subr.bf16.mxu0 0
  %3013 = vmatpush2.bf16.msra.mxu0 0
  %3014 = vmatprep.subr.bf16.mxu0 0
  %3015 = vmatpush2.bf16.msra.mxu0 0
  %3016 = vmatprep.subr.bf16.mxu0 0
  %3017 = vmatpush2.bf16.msra.mxu0 0
  %3018 = vmatprep.subr.bf16.mxu0 0
  %3019 = vmatpush2.bf16.msra.mxu0 0
  %3020 = vmatprep.mubr.bf16.mxu0 0
  %3021 = vmatmul.mubr.bf16.gmra.mxu0 %v2762
  %v3022 = vpop.f32.mrf.mxu0
  %v3023 = vadd.f32 0.0, %v3022
  %v3024 = vpop.f32.mrf.mxu0
  %v3025 = vadd.f32 0.0, %v3024
  %v3026 = vpop.f32.mrf.mxu0
  %v3027 = vpop.f32.mrf.mxu0
  %3028 = vdwg.mxu0
  %3029 = vmatprep.subr.bf16.mxu0 %v2955
  %3030 = vmatpush1.bf16.msra.mxu0 %v2954
  %3031 = vmatprep.subr.bf16.mxu0 %v2951
  %3032 = vmatpush1.bf16.msra.mxu0 %v2950
  %3033 = vmatprep.subr.bf16.mxu0 %v2947
  %3034 = vmatpush1.bf16.msra.mxu0 %v2946
  %3035 = vmatprep.subr.bf16.mxu0 %v2943
  %3036 = vmatpush1.bf16.msra.mxu0 %v2942
  %3037 = vmatprep.subr.bf16.mxu0 %v2939
  %3038 = vmatpush1.bf16.msra.mxu0 %v2938
  %3039 = vmatprep.subr.bf16.mxu0 %v2935
  %3040 = vmatpush1.bf16.msra.mxu0 %v2934
  %3041 = vmatprep.subr.bf16.mxu0 %v2931
  %3042 = vmatpush1.bf16.msra.mxu0 %v2930
  %3043 = vmatprep.subr.bf16.mxu0 %v2927
  %3044 = vmatpush1.bf16.msra.mxu0 %v2926
  %3045 = vmatprep.subr.bf16.mxu0 0
  %3046 = vmatpush2.bf16.msra.mxu0 0
  %3047 = vmatprep.subr.bf16.mxu0 0
  %3048 = vmatpush2.bf16.msra.mxu0 0
  %3049 = vmatprep.subr.bf16.mxu0 0
  %3050 = vmatpush2.bf16.msra.mxu0 0
  %3051 = vmatprep.subr.bf16.mxu0 0
  %3052 = vmatpush2.bf16.msra.mxu0 0
  %3053 = vmatprep.subr.bf16.mxu0 0
  %3054 = vmatpush2.bf16.msra.mxu0 0
  %3055 = vmatprep.subr.bf16.mxu0 0
  %3056 = vmatpush2.bf16.msra.mxu0 0
  %3057 = vmatprep.subr.bf16.mxu0 0
  %3058 = vmatpush2.bf16.msra.mxu0 0
  %3059 = vmatprep.subr.bf16.mxu0 0
  %3060 = vmatpush2.bf16.msra.mxu0 0
  %3061 = vmatprep.mubr.bf16.mxu0 0
  %3062 = vmatmul.mubr.bf16.gmra.mxu0 %v2762
  %v3063 = vpop.f32.mrf.mxu0
  %v3064 = vadd.f32 0.0, %v3063
  %v3065 = vpop.f32.mrf.mxu0
  %v3066 = vadd.f32 0.0, %v3065
  %v3067 = vpop.f32.mrf.mxu0
  %v3068 = vpop.f32.mrf.mxu0
  %3069 = vdwg.mxu0
  %v3102 = vunpack.c.l.b16 %v2796
  %v3103 = vunpack.c.h.b16 %v2796
  %v3104 = vunpack.c.l.b16 %v2797
  %v3105 = vunpack.c.h.b16 %v2797
  %v3106 = vunpack.c.l.b16 %v2798
  %v3107 = vunpack.c.h.b16 %v2798
  %v3108 = vunpack.c.l.b16 %v2799
  %v3109 = vunpack.c.h.b16 %v2799
  %v3110 = vunpack.c.l.b16 %v2800
  %v3111 = vunpack.c.h.b16 %v2800
  %v3112 = vunpack.c.l.b16 %v2801
  %v3113 = vunpack.c.h.b16 %v2801
  %v3114 = vunpack.c.l.b16 %v2802
  %v3115 = vunpack.c.h.b16 %v2802
  %v3116 = vunpack.c.l.b16 %v2803
  %v3117 = vunpack.c.h.b16 %v2803
  %v3118 = vunpack.c.l.b16 %v2804
  %v3119 = vunpack.c.h.b16 %v2804
  %v3120 = vunpack.c.l.b16 %v2805
  %v3121 = vunpack.c.h.b16 %v2805
  %v3122 = vunpack.c.l.b16 %v2806
  %v3123 = vunpack.c.h.b16 %v2806
  %v3124 = vunpack.c.l.b16 %v2807
  %v3125 = vunpack.c.h.b16 %v2807
  %v3126 = vunpack.c.l.b16 %v2808
  %v3127 = vunpack.c.h.b16 %v2808
  %v3128 = vunpack.c.l.b16 %v2809
  %v3129 = vunpack.c.h.b16 %v2809
  %v3130 = vunpack.c.l.b16 %v2810
  %v3131 = vunpack.c.h.b16 %v2810
  %v3132 = vunpack.c.l.b16 %v2811
  %v3133 = vunpack.c.h.b16 %v2811
  %v3134 = vunpack.c.l.b16 %v2812
  %v3135 = vunpack.c.h.b16 %v2812
  %v3136 = vunpack.c.l.b16 %v2813
  %v3137 = vunpack.c.h.b16 %v2813
  %v3138 = vunpack.c.l.b16 %v2814
  %v3139 = vunpack.c.h.b16 %v2814
  %v3140 = vunpack.c.l.b16 %v2815
  %v3141 = vunpack.c.h.b16 %v2815
  %v3142 = vunpack.c.l.b16 %v2816
  %v3143 = vunpack.c.h.b16 %v2816
  %v3144 = vunpack.c.l.b16 %v2817
  %v3145 = vunpack.c.h.b16 %v2817
  %v3146 = vunpack.c.l.b16 %v2818
  %v3147 = vunpack.c.h.b16 %v2818
  %v3148 = vunpack.c.l.b16 %v2819
  %v3149 = vunpack.c.h.b16 %v2819
  %v3150 = vunpack.c.l.b16 %v2820
  %v3151 = vunpack.c.h.b16 %v2820
  %v3152 = vunpack.c.l.b16 %v2821
  %v3153 = vunpack.c.h.b16 %v2821
  %v3154 = vunpack.c.l.b16 %v2822
  %v3155 = vunpack.c.h.b16 %v2822
  %v3156 = vunpack.c.l.b16 %v2823
  %v3157 = vunpack.c.h.b16 %v2823
  %v3158 = vunpack.c.l.b16 %v2824
  %v3159 = vunpack.c.h.b16 %v2824
  %v3160 = vunpack.c.l.b16 %v2825
  %v3161 = vunpack.c.h.b16 %v2825
  %v3162 = vunpack.c.l.b16 %v2826
  %v3163 = vunpack.c.h.b16 %v2826
  %v3164 = vunpack.c.l.b16 %v2827
  %v3165 = vunpack.c.h.b16 %v2827
  %v3166 = vpack.c.b16 %v3106, %v3102
  %v3167 = vpack.c.b16 %v3107, %v3103
  %v3168 = vpack.c.b16 %v3108, %v3104
  %v3169 = vpack.c.b16 %v3109, %v3105
  %v3170 = vpack.c.b16 %v3114, %v3110
  %v3171 = vpack.c.b16 %v3115, %v3111
  %v3172 = vpack.c.b16 %v3116, %v3112
  %v3173 = vpack.c.b16 %v3117, %v3113
  %v3174 = vpack.c.b16 %v3122, %v3118
  %v3175 = vpack.c.b16 %v3123, %v3119
  %v3176 = vpack.c.b16 %v3124, %v3120
  %v3177 = vpack.c.b16 %v3125, %v3121
  %v3178 = vpack.c.b16 %v3130, %v3126
  %v3179 = vpack.c.b16 %v3131, %v3127
  %v3180 = vpack.c.b16 %v3132, %v3128
  %v3181 = vpack.c.b16 %v3133, %v3129
  %v3182 = vpack.c.b16 %v3138, %v3134
  %v3183 = vpack.c.b16 %v3139, %v3135
  %v3184 = vpack.c.b16 %v3140, %v3136
  %v3185 = vpack.c.b16 %v3141, %v3137
  %v3186 = vpack.c.b16 %v3146, %v3142
  %v3187 = vpack.c.b16 %v3147, %v3143
  %v3188 = vpack.c.b16 %v3148, %v3144
  %v3189 = vpack.c.b16 %v3149, %v3145
  %v3190 = vpack.c.b16 %v3154, %v3150
  %v3191 = vpack.c.b16 %v3155, %v3151
  %v3192 = vpack.c.b16 %v3156, %v3152
  %v3193 = vpack.c.b16 %v3157, %v3153
  %v3194 = vpack.c.b16 %v3162, %v3158
  %v3195 = vpack.c.b16 %v3163, %v3159
  %v3196 = vpack.c.b16 %v3164, %v3160
  %v3197 = vpack.c.b16 %v3165, %v3161
  %3230 = vmatprep.subr.bf16.mxu0 %v3195
  %3231 = vmatpush1.bf16.msra.mxu0 %v3194
  %3232 = vmatprep.subr.bf16.mxu0 %v3191
  %3233 = vmatpush1.bf16.msra.mxu0 %v3190
  %3234 = vmatprep.subr.bf16.mxu0 %v3187
  %3235 = vmatpush1.bf16.msra.mxu0 %v3186
  %3236 = vmatprep.subr.bf16.mxu0 %v3183
  %3237 = vmatpush1.bf16.msra.mxu0 %v3182
  %3238 = vmatprep.subr.bf16.mxu0 %v3179
  %3239 = vmatpush1.bf16.msra.mxu0 %v3178
  %3240 = vmatprep.subr.bf16.mxu0 %v3175
  %3241 = vmatpush1.bf16.msra.mxu0 %v3174
  %3242 = vmatprep.subr.bf16.mxu0 %v3171
  %3243 = vmatpush1.bf16.msra.mxu0 %v3170
  %3244 = vmatprep.subr.bf16.mxu0 %v3167
  %3245 = vmatpush1.bf16.msra.mxu0 %v3166
  %3246 = vmatprep.subr.bf16.mxu0 0
  %3247 = vmatpush2.bf16.msra.mxu0 0
  %3248 = vmatprep.subr.bf16.mxu0 0
  %3249 = vmatpush2.bf16.msra.mxu0 0
  %3250 = vmatprep.subr.bf16.mxu0 0
  %3251 = vmatpush2.bf16.msra.mxu0 0
  %3252 = vmatprep.subr.bf16.mxu0 0
  %3253 = vmatpush2.bf16.msra.mxu0 0
  %3254 = vmatprep.subr.bf16.mxu0 0
  %3255 = vmatpush2.bf16.msra.mxu0 0
  %3256 = vmatprep.subr.bf16.mxu0 0
  %3257 = vmatpush2.bf16.msra.mxu0 0
  %3258 = vmatprep.subr.bf16.mxu0 0
  %3259 = vmatpush2.bf16.msra.mxu0 0
  %3260 = vmatprep.subr.bf16.mxu0 0
  %3261 = vmatpush2.bf16.msra.mxu0 0
  %3262 = vmatprep.mubr.bf16.mxu0 0
  %3263 = vmatmul.mubr.bf16.gmra.mxu0 %v2763
  %v3264 = vpop.f32.mrf.mxu0
  %v3265 = vadd.f32 0.0, %v3264
  %v3266 = vpop.f32.mrf.mxu0
  %v3267 = vadd.f32 0.0, %v3266
  %v3268 = vpop.f32.mrf.mxu0
  %v3269 = vpop.f32.mrf.mxu0
  %3270 = vdwg.mxu0
  %3271 = vmatprep.subr.bf16.mxu0 %v3197
  %3272 = vmatpush1.bf16.msra.mxu0 %v3196
  %3273 = vmatprep.subr.bf16.mxu0 %v3193
  %3274 = vmatpush1.bf16.msra.mxu0 %v3192
  %3275 = vmatprep.subr.bf16.mxu0 %v3189
  %3276 = vmatpush1.bf16.msra.mxu0 %v3188
  %3277 = vmatprep.subr.bf16.mxu0 %v3185
  %3278 = vmatpush1.bf16.msra.mxu0 %v3184
  %3279 = vmatprep.subr.bf16.mxu0 %v3181
  %3280 = vmatpush1.bf16.msra.mxu0 %v3180
  %3281 = vmatprep.subr.bf16.mxu0 %v3177
  %3282 = vmatpush1.bf16.msra.mxu0 %v3176
  %3283 = vmatprep.subr.bf16.mxu0 %v3173
  %3284 = vmatpush1.bf16.msra.mxu0 %v3172
  %3285 = vmatprep.subr.bf16.mxu0 %v3169
  %3286 = vmatpush1.bf16.msra.mxu0 %v3168
  %3287 = vmatprep.subr.bf16.mxu0 0
  %3288 = vmatpush2.bf16.msra.mxu0 0
  %3289 = vmatprep.subr.bf16.mxu0 0
  %3290 = vmatpush2.bf16.msra.mxu0 0
  %3291 = vmatprep.subr.bf16.mxu0 0
  %3292 = vmatpush2.bf16.msra.mxu0 0
  %3293 = vmatprep.subr.bf16.mxu0 0
  %3294 = vmatpush2.bf16.msra.mxu0 0
  %3295 = vmatprep.subr.bf16.mxu0 0
  %3296 = vmatpush2.bf16.msra.mxu0 0
  %3297 = vmatprep.subr.bf16.mxu0 0
  %3298 = vmatpush2.bf16.msra.mxu0 0
  %3299 = vmatprep.subr.bf16.mxu0 0
  %3300 = vmatpush2.bf16.msra.mxu0 0
  %3301 = vmatprep.subr.bf16.mxu0 0
  %3302 = vmatpush2.bf16.msra.mxu0 0
  %3303 = vmatprep.mubr.bf16.mxu0 0
  %3304 = vmatmul.mubr.bf16.gmra.mxu0 %v2763
  %v3305 = vpop.f32.mrf.mxu0
  %v3306 = vadd.f32 0.0, %v3305
  %v3307 = vpop.f32.mrf.mxu0
  %v3308 = vadd.f32 0.0, %v3307
  %v3309 = vpop.f32.mrf.mxu0
  %v3310 = vpop.f32.mrf.mxu0
  %3311 = vdwg.mxu0
  %s3312 = scalar_lea.vmem %s0, 32
  %v3313 = vld [vmem:[%s3312] sm:$0xff]
  %s3314 = scalar_lea.vmem %s46, 24
  %v3315 = vld [vmem:[%s3314] sm:$0xff]
  %v3324 = vcombine.low %v3023, %v3025
  %v3325 = vcombine.low %v3064, %v3066
  %v3327 = vunpack.c.l.s4 1983009808
  %v3328 = vunpack.c.0.s8 %v3327
  %v3329 = vlaneseq
  %v3330 = vshrl.u32 %v3329, 7
  %v3331 = vsub.s32 %v3328, %v3330
  %v3332 = vrot.slane %v3324, %v3331
  %v3334 = vunpack.c.l.s4 1983009808
  %v3335 = vunpack.c.0.s8 %v3334
  %v3336 = vlaneseq
  %v3337 = vshrl.u32 %v3336, 7
  %v3338 = vsub.s32 %v3335, %v3337
  %v3339 = vrot.slane %v3325, %v3338
  %v3340 = vcombine.low %v3332, %v3339
  %v3341 = vcombine.low %v3265, %v3267
  %v3342 = vcombine.low %v3306, %v3308
  %v3344 = vunpack.c.l.s4 1983009808
  %v3345 = vunpack.c.0.s8 %v3344
  %v3346 = vlaneseq
  %v3347 = vshrl.u32 %v3346, 7
  %v3348 = vsub.s32 %v3345, %v3347
  %v3349 = vrot.slane %v3341, %v3348
  %v3351 = vunpack.c.l.s4 1983009808
  %v3352 = vunpack.c.0.s8 %v3351
  %v3353 = vlaneseq
  %v3354 = vshrl.u32 %v3353, 7
  %v3355 = vsub.s32 %v3352, %v3354
  %v3356 = vrot.slane %v3342, %v3355
  %v3357 = vcombine.low %v3349, %v3356
  %v3360 = vadd.f32 %v3313, %v3340
  %v3361 = vadd.f32 %v3315, %v3357
  %v3362 = vxor.u32 %v3360, 2147483648
  %v3363 = vxor.u32 %v3361, 2147483648
  %v3364 = vmul.f32 %v3362, 1.442695
  %v3365 = vpow.pop %v3364
  %v3366 = vmul.f32 %v3363, 1.442695
  %v3367 = vpow.pop %v3366
  %v3368 = vadd.f32 %v3365, 1.0
  %v3369 = vadd.f32 %v3367, 1.0
  %v3370 = vrcp.pop %v3368
  %v3371 = vmul.f32 1.0, %v3370
  %v3372 = vrcp.pop %v3369
  %v3373 = vmul.f32 1.0, %v3372
  %v3376 = vrot.slane %v3360, 2
  %v3377 = vrot.slane %v3361, 2
  %v3380 = vxor.u32 %v3376, 2147483648
  %v3381 = vxor.u32 %v3377, 2147483648
  %v3382 = vmul.f32 %v3380, 1.442695
  %v3383 = vpow.pop %v3382
  %v3384 = vmul.f32 %v3381, 1.442695
  %v3385 = vpow.pop %v3384
  %v3386 = vadd.f32 %v3383, 1.0
  %v3387 = vadd.f32 %v3385, 1.0
  %v3388 = vrcp.pop %v3386
  %v3389 = vmul.f32 1.0, %v3388
  %v3390 = vrcp.pop %v3387
  %v3391 = vmul.f32 1.0, %v3390
  %v3392 = vrot.slane %v3360, 4
  %v3393 = vrot.slane %v3361, 4
  %v3396 = vtanh.pop %v3392
  %v3397 = vtanh.pop %v3393
  %v3398 = vrot.slane %v3360, 6
  %v3399 = vrot.slane %v3361, 6
  %v3402 = vxor.u32 %v3398, 2147483648
  %v3403 = vxor.u32 %v3399, 2147483648
  %v3404 = vmul.f32 %v3402, 1.442695
  %v3405 = vpow.pop %v3404
  %v3406 = vmul.f32 %v3403, 1.442695
  %v3407 = vpow.pop %v3406
  %v3408 = vadd.f32 %v3405, 1.0
  %v3409 = vadd.f32 %v3407, 1.0
  %v3410 = vrcp.pop %v3408
  %v3411 = vmul.f32 1.0, %v3410
  %v3412 = vrcp.pop %v3409
  %v3413 = vmul.f32 1.0, %v3412
  %v3414 = vld [vmem:[#allocation3] sm:$0x3]
  %v3415 = vld [vmem:[#allocation3 + $0x2] sm:$0x3]
  %v3416 = vmul.f32 %v3389, %v3414
  %v3417 = vmul.f32 %v3391, %v3415
  %v3418 = vmul.f32 %v3371, %v3396
  %v3419 = vmul.f32 %v3373, %v3397
  %v3420 = vadd.f32 %v3416, %v3418
  %v3421 = vadd.f32 %v3417, %v3419
  %v3422 = vtanh.pop %v3420
  %v3423 = vtanh.pop %v3421
  %v3424 = vmul.f32 %v3411, %v3422
  %v3425 = vmul.f32 %v3413, %v3423
  %3426 = vst [vmem:[#allocation3] sm:$0x3] %v3420
  %3427 = vst [vmem:[#allocation3 + $0x2] sm:$0x3] %v3421
  %3428 = vst [vmem:[#allocation2] sm:$0x3] %v3424
  %3429 = vst [vmem:[#allocation2 + $0x2] sm:$0x3] %v3425
  %s3430 = scalar_lea.vmem %s3, 8
  %3431 = vst [vmem:[%s3430] sm:$0x3] %v3424
  %s3432 = scalar_lea.vmem %s54, 6
  %3433 = vst [vmem:[%s3432] sm:$0x3] %v3425
  %v3434 = vld [vmem:[#allocation2] sm:$0x3]
  %v3435 = vld [vmem:[#allocation2 + $0x2] sm:$0x3]
  %v3436 = vpack.c.bf16 %v3434, %v3434
  %v3437 = vpack.c.bf16 %v3435, %v3435
  %v3438 = vld [vmem:[%s2] sm:$0xff]
  %v3439 = vld [vmem:[%s2 + $0x8] sm:$0xff]
  %v3440 = vld [vmem:[%s2 + $0x10] sm:$0xff]
  %v3441 = vld [vmem:[%s2 + $0x18] sm:$0xff]
  %v3442 = vld [vmem:[%s2 + $0x20] sm:$0xff]
  %v3443 = vld [vmem:[%s2 + $0x28] sm:$0xff]
  %v3444 = vld [vmem:[%s2 + $0x30] sm:$0xff]
  %v3445 = vld [vmem:[%s2 + $0x38] sm:$0xff]
  %v3446 = vld [vmem:[%s2 + $0x40] sm:$0xff]
  %v3447 = vld [vmem:[%s2 + $0x48] sm:$0xff]
  %v3448 = vld [vmem:[%s2 + $0x50] sm:$0xff]
  %v3449 = vld [vmem:[%s2 + $0x58] sm:$0xff]
  %v3450 = vld [vmem:[%s2 + $0x60] sm:$0xff]
  %v3451 = vld [vmem:[%s2 + $0x68] sm:$0xff]
  %v3452 = vld [vmem:[%s2 + $0x70] sm:$0xff]
  %v3453 = vld [vmem:[%s2 + $0x78] sm:$0xff]
  %v3454 = vld [vmem:[%s2 + $0x80] sm:$0xff]
  %v3455 = vld [vmem:[%s2 + $0x88] sm:$0xff]
  %v3456 = vld [vmem:[%s2 + $0x90] sm:$0xff]
  %v3457 = vld [vmem:[%s2 + $0x98] sm:$0xff]
  %v3458 = vld [vmem:[%s2 + $0xa0] sm:$0xff]
  %v3459 = vld [vmem:[%s2 + $0xa8] sm:$0xff]
  %v3460 = vld [vmem:[%s2 + $0xb0] sm:$0xff]
  %v3461 = vld [vmem:[%s2 + $0xb8] sm:$0xff]
  %v3462 = vld [vmem:[%s2 + $0xc0] sm:$0xff]
  %v3463 = vld [vmem:[%s2 + $0xc8] sm:$0xff]
  %v3464 = vld [vmem:[%s2 + $0xd0] sm:$0xff]
  %v3465 = vld [vmem:[%s2 + $0xd8] sm:$0xff]
  %v3466 = vld [vmem:[%s2 + $0xe0] sm:$0xff]
  %v3467 = vld [vmem:[%s2 + $0xe8] sm:$0xff]
  %v3468 = vld [vmem:[%s2 + $0xf0] sm:$0xff]
  %v3469 = vld [vmem:[%s2 + $0xf8] sm:$0xff]
  %v3470 = vld [vmem:[%s2 + $0x100] sm:$0xff]
  %v3471 = vld [vmem:[%s2 + $0x108] sm:$0xff]
  %v3472 = vld [vmem:[%s2 + $0x110] sm:$0xff]
  %v3473 = vld [vmem:[%s2 + $0x118] sm:$0xff]
  %v3474 = vld [vmem:[%s2 + $0x120] sm:$0xff]
  %v3475 = vld [vmem:[%s2 + $0x128] sm:$0xff]
  %v3476 = vld [vmem:[%s2 + $0x130] sm:$0xff]
  %v3477 = vld [vmem:[%s2 + $0x138] sm:$0xff]
  %v3478 = vld [vmem:[%s2 + $0x140] sm:$0xff]
  %v3479 = vld [vmem:[%s2 + $0x148] sm:$0xff]
  %v3480 = vld [vmem:[%s2 + $0x150] sm:$0xff]
  %v3481 = vld [vmem:[%s2 + $0x158] sm:$0xff]
  %v3482 = vld [vmem:[%s2 + $0x160] sm:$0xff]
  %v3483 = vld [vmem:[%s2 + $0x168] sm:$0xff]
  %v3484 = vld [vmem:[%s2 + $0x170] sm:$0xff]
  %v3485 = vld [vmem:[%s2 + $0x178] sm:$0xff]
  %v3486 = vld [vmem:[%s2 + $0x180] sm:$0xff]
  %v3487 = vld [vmem:[%s2 + $0x188] sm:$0xff]
  %v3488 = vld [vmem:[%s2 + $0x190] sm:$0xff]
  %v3489 = vld [vmem:[%s2 + $0x198] sm:$0xff]
  %v3490 = vld [vmem:[%s2 + $0x1a0] sm:$0xff]
  %v3491 = vld [vmem:[%s2 + $0x1a8] sm:$0xff]
  %v3492 = vld [vmem:[%s2 + $0x1b0] sm:$0xff]
  %v3493 = vld [vmem:[%s2 + $0x1b8] sm:$0xff]
  %v3494 = vld [vmem:[%s2 + $0x1c0] sm:$0xff]
  %v3495 = vld [vmem:[%s2 + $0x1c8] sm:$0xff]
  %v3496 = vld [vmem:[%s2 + $0x1d0] sm:$0xff]
  %v3497 = vld [vmem:[%s2 + $0x1d8] sm:$0xff]
  %v3498 = vld [vmem:[%s2 + $0x1e0] sm:$0xff]
  %v3499 = vld [vmem:[%s2 + $0x1e8] sm:$0xff]
  %v3500 = vld [vmem:[%s2 + $0x1f0] sm:$0xff]
  %v3501 = vld [vmem:[%s2 + $0x1f8] sm:$0xff]
  %v3534 = vunpack.c.l.b16 %v3438
  %v3535 = vunpack.c.h.b16 %v3438
  %v3536 = vunpack.c.l.b16 %v3439
  %v3537 = vunpack.c.h.b16 %v3439
  %v3538 = vunpack.c.l.b16 %v3440
  %v3539 = vunpack.c.h.b16 %v3440
  %v3540 = vunpack.c.l.b16 %v3441
  %v3541 = vunpack.c.h.b16 %v3441
  %v3542 = vunpack.c.l.b16 %v3442
  %v3543 = vunpack.c.h.b16 %v3442
  %v3544 = vunpack.c.l.b16 %v3443
  %v3545 = vunpack.c.h.b16 %v3443
  %v3546 = vunpack.c.l.b16 %v3444
  %v3547 = vunpack.c.h.b16 %v3444
  %v3548 = vunpack.c.l.b16 %v3445
  %v3549 = vunpack.c.h.b16 %v3445
  %v3550 = vunpack.c.l.b16 %v3446
  %v3551 = vunpack.c.h.b16 %v3446
  %v3552 = vunpack.c.l.b16 %v3447
  %v3553 = vunpack.c.h.b16 %v3447
  %v3554 = vunpack.c.l.b16 %v3448
  %v3555 = vunpack.c.h.b16 %v3448
  %v3556 = vunpack.c.l.b16 %v3449
  %v3557 = vunpack.c.h.b16 %v3449
  %v3558 = vunpack.c.l.b16 %v3450
  %v3559 = vunpack.c.h.b16 %v3450
  %v3560 = vunpack.c.l.b16 %v3451
  %v3561 = vunpack.c.h.b16 %v3451
  %v3562 = vunpack.c.l.b16 %v3452
  %v3563 = vunpack.c.h.b16 %v3452
  %v3564 = vunpack.c.l.b16 %v3453
  %v3565 = vunpack.c.h.b16 %v3453
  %v3566 = vunpack.c.l.b16 %v3454
  %v3567 = vunpack.c.h.b16 %v3454
  %v3568 = vunpack.c.l.b16 %v3455
  %v3569 = vunpack.c.h.b16 %v3455
  %v3570 = vunpack.c.l.b16 %v3456
  %v3571 = vunpack.c.h.b16 %v3456
  %v3572 = vunpack.c.l.b16 %v3457
  %v3573 = vunpack.c.h.b16 %v3457
  %v3574 = vunpack.c.l.b16 %v3458
  %v3575 = vunpack.c.h.b16 %v3458
  %v3576 = vunpack.c.l.b16 %v3459
  %v3577 = vunpack.c.h.b16 %v3459
  %v3578 = vunpack.c.l.b16 %v3460
  %v3579 = vunpack.c.h.b16 %v3460
  %v3580 = vunpack.c.l.b16 %v3461
  %v3581 = vunpack.c.h.b16 %v3461
  %v3582 = vunpack.c.l.b16 %v3462
  %v3583 = vunpack.c.h.b16 %v3462
  %v3584 = vunpack.c.l.b16 %v3463
  %v3585 = vunpack.c.h.b16 %v3463
  %v3586 = vunpack.c.l.b16 %v3464
  %v3587 = vunpack.c.h.b16 %v3464
  %v3588 = vunpack.c.l.b16 %v3465
  %v3589 = vunpack.c.h.b16 %v3465
  %v3590 = vunpack.c.l.b16 %v3466
  %v3591 = vunpack.c.h.b16 %v3466
  %v3592 = vunpack.c.l.b16 %v3467
  %v3593 = vunpack.c.h.b16 %v3467
  %v3594 = vunpack.c.l.b16 %v3468
  %v3595 = vunpack.c.h.b16 %v3468
  %v3596 = vunpack.c.l.b16 %v3469
  %v3597 = vunpack.c.h.b16 %v3469
  %v3598 = vpack.c.b16 %v3538, %v3534
  %v3599 = vpack.c.b16 %v3539, %v3535
  %v3600 = vpack.c.b16 %v3540, %v3536
  %v3601 = vpack.c.b16 %v3541, %v3537
  %v3602 = vpack.c.b16 %v3546, %v3542
  %v3603 = vpack.c.b16 %v3547, %v3543
  %v3604 = vpack.c.b16 %v3548, %v3544
  %v3605 = vpack.c.b16 %v3549, %v3545
  %v3606 = vpack.c.b16 %v3554, %v3550
  %v3607 = vpack.c.b16 %v3555, %v3551
  %v3608 = vpack.c.b16 %v3556, %v3552
  %v3609 = vpack.c.b16 %v3557, %v3553
  %v3610 = vpack.c.b16 %v3562, %v3558
  %v3611 = vpack.c.b16 %v3563, %v3559
  %v3612 = vpack.c.b16 %v3564, %v3560
  %v3613 = vpack.c.b16 %v3565, %v3561
  %v3614 = vpack.c.b16 %v3570, %v3566
  %v3615 = vpack.c.b16 %v3571, %v3567
  %v3616 = vpack.c.b16 %v3572, %v3568
  %v3617 = vpack.c.b16 %v3573, %v3569
  %v3618 = vpack.c.b16 %v3578, %v3574
  %v3619 = vpack.c.b16 %v3579, %v3575
  %v3620 = vpack.c.b16 %v3580, %v3576
  %v3621 = vpack.c.b16 %v3581, %v3577
  %v3622 = vpack.c.b16 %v3586, %v3582
  %v3623 = vpack.c.b16 %v3587, %v3583
  %v3624 = vpack.c.b16 %v3588, %v3584
  %v3625 = vpack.c.b16 %v3589, %v3585
  %v3626 = vpack.c.b16 %v3594, %v3590
  %v3627 = vpack.c.b16 %v3595, %v3591
  %v3628 = vpack.c.b16 %v3596, %v3592
  %v3629 = vpack.c.b16 %v3597, %v3593
  %3662 = vmatprep.subr.bf16.mxu0 %v3627
  %3663 = vmatpush1.bf16.msra.mxu0 %v3626
  %3664 = vmatprep.subr.bf16.mxu0 %v3623
  %3665 = vmatpush1.bf16.msra.mxu0 %v3622
  %3666 = vmatprep.subr.bf16.mxu0 %v3619
  %3667 = vmatpush1.bf16.msra.mxu0 %v3618
  %3668 = vmatprep.subr.bf16.mxu0 %v3615
  %3669 = vmatpush1.bf16.msra.mxu0 %v3614
  %3670 = vmatprep.subr.bf16.mxu0 %v3611
  %3671 = vmatpush1.bf16.msra.mxu0 %v3610
  %3672 = vmatprep.subr.bf16.mxu0 %v3607
  %3673 = vmatpush1.bf16.msra.mxu0 %v3606
  %3674 = vmatprep.subr.bf16.mxu0 %v3603
  %3675 = vmatpush1.bf16.msra.mxu0 %v3602
  %3676 = vmatprep.subr.bf16.mxu0 %v3599
  %3677 = vmatpush1.bf16.msra.mxu0 %v3598
  %3678 = vmatprep.subr.bf16.mxu0 0
  %3679 = vmatpush2.bf16.msra.mxu0 0
  %3680 = vmatprep.subr.bf16.mxu0 0
  %3681 = vmatpush2.bf16.msra.mxu0 0
  %3682 = vmatprep.subr.bf16.mxu0 0
  %3683 = vmatpush2.bf16.msra.mxu0 0
  %3684 = vmatprep.subr.bf16.mxu0 0
  %3685 = vmatpush2.bf16.msra.mxu0 0
  %3686 = vmatprep.subr.bf16.mxu0 0
  %3687 = vmatpush2.bf16.msra.mxu0 0
  %3688 = vmatprep.subr.bf16.mxu0 0
  %3689 = vmatpush2.bf16.msra.mxu0 0
  %3690 = vmatprep.subr.bf16.mxu0 0
  %3691 = vmatpush2.bf16.msra.mxu0 0
  %3692 = vmatprep.subr.bf16.mxu0 0
  %3693 = vmatpush2.bf16.msra.mxu0 0
  %3694 = vmatprep.mubr.bf16.mxu0 0
  %3695 = vmatmul.mubr.bf16.gmra.mxu0 %v3436
  %v3696 = vpop.f32.mrf.mxu0
  %v3697 = vadd.f32 0.0, %v3696
  %v3698 = vpop.f32.mrf.mxu0
  %v3699 = vadd.f32 0.0, %v3698
  %v3700 = vpop.f32.mrf.mxu0
  %v3701 = vpop.f32.mrf.mxu0
  %3702 = vdwg.mxu0
  %3703 = vmatprep.subr.bf16.mxu0 %v3629
  %3704 = vmatpush1.bf16.msra.mxu0 %v3628
  %3705 = vmatprep.subr.bf16.mxu0 %v3625
  %3706 = vmatpush1.bf16.msra.mxu0 %v3624
  %3707 = vmatprep.subr.bf16.mxu0 %v3621
  %3708 = vmatpush1.bf16.msra.mxu0 %v3620
  %3709 = vmatprep.subr.bf16.mxu0 %v3617
  %3710 = vmatpush1.bf16.msra.mxu0 %v3616
  %3711 = vmatprep.subr.bf16.mxu0 %v3613
  %3712 = vmatpush1.bf16.msra.mxu0 %v3612
  %3713 = vmatprep.subr.bf16.mxu0 %v3609
  %3714 = vmatpush1.bf16.msra.mxu0 %v3608
  %3715 = vmatprep.subr.bf16.mxu0 %v3605
  %3716 = vmatpush1.bf16.msra.mxu0 %v3604
  %3717 = vmatprep.subr.bf16.mxu0 %v3601
  %3718 = vmatpush1.bf16.msra.mxu0 %v3600
  %3719 = vmatprep.subr.bf16.mxu0 0
  %3720 = vmatpush2.bf16.msra.mxu0 0
  %3721 = vmatprep.subr.bf16.mxu0 0
  %3722 = vmatpush2.bf16.msra.mxu0 0
  %3723 = vmatprep.subr.bf16.mxu0 0
  %3724 = vmatpush2.bf16.msra.mxu0 0
  %3725 = vmatprep.subr.bf16.mxu0 0
  %3726 = vmatpush2.bf16.msra.mxu0 0
  %3727 = vmatprep.subr.bf16.mxu0 0
  %3728 = vmatpush2.bf16.msra.mxu0 0
  %3729 = vmatprep.subr.bf16.mxu0 0
  %3730 = vmatpush2.bf16.msra.mxu0 0
  %3731 = vmatprep.subr.bf16.mxu0 0
  %3732 = vmatpush2.bf16.msra.mxu0 0
  %3733 = vmatprep.subr.bf16.mxu0 0
  %3734 = vmatpush2.bf16.msra.mxu0 0
  %3735 = vmatprep.mubr.bf16.mxu0 0
  %3736 = vmatmul.mubr.bf16.gmra.mxu0 %v3436
  %v3737 = vpop.f32.mrf.mxu0
  %v3738 = vadd.f32 0.0, %v3737
  %v3739 = vpop.f32.mrf.mxu0
  %v3740 = vadd.f32 0.0, %v3739
  %v3741 = vpop.f32.mrf.mxu0
  %v3742 = vpop.f32.mrf.mxu0
  %3743 = vdwg.mxu0
  %v3776 = vunpack.c.l.b16 %v3470
  %v3777 = vunpack.c.h.b16 %v3470
  %v3778 = vunpack.c.l.b16 %v3471
  %v3779 = vunpack.c.h.b16 %v3471
  %v3780 = vunpack.c.l.b16 %v3472
  %v3781 = vunpack.c.h.b16 %v3472
  %v3782 = vunpack.c.l.b16 %v3473
  %v3783 = vunpack.c.h.b16 %v3473
  %v3784 = vunpack.c.l.b16 %v3474
  %v3785 = vunpack.c.h.b16 %v3474
  %v3786 = vunpack.c.l.b16 %v3475
  %v3787 = vunpack.c.h.b16 %v3475
  %v3788 = vunpack.c.l.b16 %v3476
  %v3789 = vunpack.c.h.b16 %v3476
  %v3790 = vunpack.c.l.b16 %v3477
  %v3791 = vunpack.c.h.b16 %v3477
  %v3792 = vunpack.c.l.b16 %v3478
  %v3793 = vunpack.c.h.b16 %v3478
  %v3794 = vunpack.c.l.b16 %v3479
  %v3795 = vunpack.c.h.b16 %v3479
  %v3796 = vunpack.c.l.b16 %v3480
  %v3797 = vunpack.c.h.b16 %v3480
  %v3798 = vunpack.c.l.b16 %v3481
  %v3799 = vunpack.c.h.b16 %v3481
  %v3800 = vunpack.c.l.b16 %v3482
  %v3801 = vunpack.c.h.b16 %v3482
  %v3802 = vunpack.c.l.b16 %v3483
  %v3803 = vunpack.c.h.b16 %v3483
  %v3804 = vunpack.c.l.b16 %v3484
  %v3805 = vunpack.c.h.b16 %v3484
  %v3806 = vunpack.c.l.b16 %v3485
  %v3807 = vunpack.c.h.b16 %v3485
  %v3808 = vunpack.c.l.b16 %v3486
  %v3809 = vunpack.c.h.b16 %v3486
  %v3810 = vunpack.c.l.b16 %v3487
  %v3811 = vunpack.c.h.b16 %v3487
  %v3812 = vunpack.c.l.b16 %v3488
  %v3813 = vunpack.c.h.b16 %v3488
  %v3814 = vunpack.c.l.b16 %v3489
  %v3815 = vunpack.c.h.b16 %v3489
  %v3816 = vunpack.c.l.b16 %v3490
  %v3817 = vunpack.c.h.b16 %v3490
  %v3818 = vunpack.c.l.b16 %v3491
  %v3819 = vunpack.c.h.b16 %v3491
  %v3820 = vunpack.c.l.b16 %v3492
  %v3821 = vunpack.c.h.b16 %v3492
  %v3822 = vunpack.c.l.b16 %v3493
  %v3823 = vunpack.c.h.b16 %v3493
  %v3824 = vunpack.c.l.b16 %v3494
  %v3825 = vunpack.c.h.b16 %v3494
  %v3826 = vunpack.c.l.b16 %v3495
  %v3827 = vunpack.c.h.b16 %v3495
  %v3828 = vunpack.c.l.b16 %v3496
  %v3829 = vunpack.c.h.b16 %v3496
  %v3830 = vunpack.c.l.b16 %v3497
  %v3831 = vunpack.c.h.b16 %v3497
  %v3832 = vunpack.c.l.b16 %v3498
  %v3833 = vunpack.c.h.b16 %v3498
  %v3834 = vunpack.c.l.b16 %v3499
  %v3835 = vunpack.c.h.b16 %v3499
  %v3836 = vunpack.c.l.b16 %v3500
  %v3837 = vunpack.c.h.b16 %v3500
  %v3838 = vunpack.c.l.b16 %v3501
  %v3839 = vunpack.c.h.b16 %v3501
  %v3840 = vpack.c.b16 %v3780, %v3776
  %v3841 = vpack.c.b16 %v3781, %v3777
  %v3842 = vpack.c.b16 %v3782, %v3778
  %v3843 = vpack.c.b16 %v3783, %v3779
  %v3844 = vpack.c.b16 %v3788, %v3784
  %v3845 = vpack.c.b16 %v3789, %v3785
  %v3846 = vpack.c.b16 %v3790, %v3786
  %v3847 = vpack.c.b16 %v3791, %v3787
  %v3848 = vpack.c.b16 %v3796, %v3792
  %v3849 = vpack.c.b16 %v3797, %v3793
  %v3850 = vpack.c.b16 %v3798, %v3794
  %v3851 = vpack.c.b16 %v3799, %v3795
  %v3852 = vpack.c.b16 %v3804, %v3800
  %v3853 = vpack.c.b16 %v3805, %v3801
  %v3854 = vpack.c.b16 %v3806, %v3802
  %v3855 = vpack.c.b16 %v3807, %v3803
  %v3856 = vpack.c.b16 %v3812, %v3808
  %v3857 = vpack.c.b16 %v3813, %v3809
  %v3858 = vpack.c.b16 %v3814, %v3810
  %v3859 = vpack.c.b16 %v3815, %v3811
  %v3860 = vpack.c.b16 %v3820, %v3816
  %v3861 = vpack.c.b16 %v3821, %v3817
  %v3862 = vpack.c.b16 %v3822, %v3818
  %v3863 = vpack.c.b16 %v3823, %v3819
  %v3864 = vpack.c.b16 %v3828, %v3824
  %v3865 = vpack.c.b16 %v3829, %v3825
  %v3866 = vpack.c.b16 %v3830, %v3826
  %v3867 = vpack.c.b16 %v3831, %v3827
  %v3868 = vpack.c.b16 %v3836, %v3832
  %v3869 = vpack.c.b16 %v3837, %v3833
  %v3870 = vpack.c.b16 %v3838, %v3834
  %v3871 = vpack.c.b16 %v3839, %v3835
  %3904 = vmatprep.subr.bf16.mxu0 %v3869
  %3905 = vmatpush1.bf16.msra.mxu0 %v3868
  %3906 = vmatprep.subr.bf16.mxu0 %v3865
  %3907 = vmatpush1.bf16.msra.mxu0 %v3864
  %3908 = vmatprep.subr.bf16.mxu0 %v3861
  %3909 = vmatpush1.bf16.msra.mxu0 %v3860
  %3910 = vmatprep.subr.bf16.mxu0 %v3857
  %3911 = vmatpush1.bf16.msra.mxu0 %v3856
  %3912 = vmatprep.subr.bf16.mxu0 %v3853
  %3913 = vmatpush1.bf16.msra.mxu0 %v3852
  %3914 = vmatprep.subr.bf16.mxu0 %v3849
  %3915 = vmatpush1.bf16.msra.mxu0 %v3848
  %3916 = vmatprep.subr.bf16.mxu0 %v3845
  %3917 = vmatpush1.bf16.msra.mxu0 %v3844
  %3918 = vmatprep.subr.bf16.mxu0 %v3841
  %3919 = vmatpush1.bf16.msra.mxu0 %v3840
  %3920 = vmatprep.subr.bf16.mxu0 0
  %3921 = vmatpush2.bf16.msra.mxu0 0
  %3922 = vmatprep.subr.bf16.mxu0 0
  %3923 = vmatpush2.bf16.msra.mxu0 0
  %3924 = vmatprep.subr.bf16.mxu0 0
  %3925 = vmatpush2.bf16.msra.mxu0 0
  %3926 = vmatprep.subr.bf16.mxu0 0
  %3927 = vmatpush2.bf16.msra.mxu0 0
  %3928 = vmatprep.subr.bf16.mxu0 0
  %3929 = vmatpush2.bf16.msra.mxu0 0
  %3930 = vmatprep.subr.bf16.mxu0 0
  %3931 = vmatpush2.bf16.msra.mxu0 0
  %3932 = vmatprep.subr.bf16.mxu0 0
  %3933 = vmatpush2.bf16.msra.mxu0 0
  %3934 = vmatprep.subr.bf16.mxu0 0
  %3935 = vmatpush2.bf16.msra.mxu0 0
  %3936 = vmatprep.mubr.bf16.mxu0 0
  %3937 = vmatmul.mubr.bf16.gmra.mxu0 %v3437
  %v3938 = vpop.f32.mrf.mxu0
  %v3939 = vadd.f32 0.0, %v3938
  %v3940 = vpop.f32.mrf.mxu0
  %v3941 = vadd.f32 0.0, %v3940
  %v3942 = vpop.f32.mrf.mxu0
  %v3943 = vpop.f32.mrf.mxu0
  %3944 = vdwg.mxu0
  %3945 = vmatprep.subr.bf16.mxu0 %v3871
  %3946 = vmatpush1.bf16.msra.mxu0 %v3870
  %3947 = vmatprep.subr.bf16.mxu0 %v3867
  %3948 = vmatpush1.bf16.msra.mxu0 %v3866
  %3949 = vmatprep.subr.bf16.mxu0 %v3863
  %3950 = vmatpush1.bf16.msra.mxu0 %v3862
  %3951 = vmatprep.subr.bf16.mxu0 %v3859
  %3952 = vmatpush1.bf16.msra.mxu0 %v3858
  %3953 = vmatprep.subr.bf16.mxu0 %v3855
  %3954 = vmatpush1.bf16.msra.mxu0 %v3854
  %3955 = vmatprep.subr.bf16.mxu0 %v3851
  %3956 = vmatpush1.bf16.msra.mxu0 %v3850
  %3957 = vmatprep.subr.bf16.mxu0 %v3847
  %3958 = vmatpush1.bf16.msra.mxu0 %v3846
  %3959 = vmatprep.subr.bf16.mxu0 %v3843
  %3960 = vmatpush1.bf16.msra.mxu0 %v3842
  %3961 = vmatprep.subr.bf16.mxu0 0
  %3962 = vmatpush2.bf16.msra.mxu0 0
  %3963 = vmatprep.subr.bf16.mxu0 0
  %3964 = vmatpush2.bf16.msra.mxu0 0
  %3965 = vmatprep.subr.bf16.mxu0 0
  %3966 = vmatpush2.bf16.msra.mxu0 0
  %3967 = vmatprep.subr.bf16.mxu0 0
  %3968 = vmatpush2.bf16.msra.mxu0 0
  %3969 = vmatprep.subr.bf16.mxu0 0
  %3970 = vmatpush2.bf16.msra.mxu0 0
  %3971 = vmatprep.subr.bf16.mxu0 0
  %3972 = vmatpush2.bf16.msra.mxu0 0
  %3973 = vmatprep.subr.bf16.mxu0 0
  %3974 = vmatpush2.bf16.msra.mxu0 0
  %3975 = vmatprep.subr.bf16.mxu0 0
  %3976 = vmatpush2.bf16.msra.mxu0 0
  %3977 = vmatprep.mubr.bf16.mxu0 0
  %3978 = vmatmul.mubr.bf16.gmra.mxu0 %v3437
  %v3979 = vpop.f32.mrf.mxu0
  %v3980 = vadd.f32 0.0, %v3979
  %v3981 = vpop.f32.mrf.mxu0
  %v3982 = vadd.f32 0.0, %v3981
  %v3983 = vpop.f32.mrf.mxu0
  %v3984 = vpop.f32.mrf.mxu0
  %3985 = vdwg.mxu0
  %s3986 = scalar_lea.vmem %s0, 40
  %v3987 = vld [vmem:[%s3986] sm:$0xff]
  %s3988 = scalar_lea.vmem %s46, 16
  %v3989 = vld [vmem:[%s3988] sm:$0xff]
  %v3998 = vcombine.low %v3697, %v3699
  %v3999 = vcombine.low %v3738, %v3740
  %v4001 = vunpack.c.l.s4 1983009808
  %v4002 = vunpack.c.0.s8 %v4001
  %v4003 = vlaneseq
  %v4004 = vshrl.u32 %v4003, 7
  %v4005 = vsub.s32 %v4002, %v4004
  %v4006 = vrot.slane %v3998, %v4005
  %v4008 = vunpack.c.l.s4 1983009808
  %v4009 = vunpack.c.0.s8 %v4008
  %v4010 = vlaneseq
  %v4011 = vshrl.u32 %v4010, 7
  %v4012 = vsub.s32 %v4009, %v4011
  %v4013 = vrot.slane %v3999, %v4012
  %v4014 = vcombine.low %v4006, %v4013
  %v4015 = vcombine.low %v3939, %v3941
  %v4016 = vcombine.low %v3980, %v3982
  %v4018 = vunpack.c.l.s4 1983009808
  %v4019 = vunpack.c.0.s8 %v4018
  %v4020 = vlaneseq
  %v4021 = vshrl.u32 %v4020, 7
  %v4022 = vsub.s32 %v4019, %v4021
  %v4023 = vrot.slane %v4015, %v4022
  %v4025 = vunpack.c.l.s4 1983009808
  %v4026 = vunpack.c.0.s8 %v4025
  %v4027 = vlaneseq
  %v4028 = vshrl.u32 %v4027, 7
  %v4029 = vsub.s32 %v4026, %v4028
  %v4030 = vrot.slane %v4016, %v4029
  %v4031 = vcombine.low %v4023, %v4030
  %v4034 = vadd.f32 %v3987, %v4014
  %v4035 = vadd.f32 %v3989, %v4031
  %v4036 = vxor.u32 %v4034, 2147483648
  %v4037 = vxor.u32 %v4035, 2147483648
  %v4038 = vmul.f32 %v4036, 1.442695
  %v4039 = vpow.pop %v4038
  %v4040 = vmul.f32 %v4037, 1.442695
  %v4041 = vpow.pop %v4040
  %v4042 = vadd.f32 %v4039, 1.0
  %v4043 = vadd.f32 %v4041, 1.0
  %v4044 = vrcp.pop %v4042
  %v4045 = vmul.f32 1.0, %v4044
  %v4046 = vrcp.pop %v4043
  %v4047 = vmul.f32 1.0, %v4046
  %v4050 = vrot.slane %v4034, 2
  %v4051 = vrot.slane %v4035, 2
  %v4054 = vxor.u32 %v4050, 2147483648
  %v4055 = vxor.u32 %v4051, 2147483648
  %v4056 = vmul.f32 %v4054, 1.442695
  %v4057 = vpow.pop %v4056
  %v4058 = vmul.f32 %v4055, 1.442695
  %v4059 = vpow.pop %v4058
  %v4060 = vadd.f32 %v4057, 1.0
  %v4061 = vadd.f32 %v4059, 1.0
  %v4062 = vrcp.pop %v4060
  %v4063 = vmul.f32 1.0, %v4062
  %v4064 = vrcp.pop %v4061
  %v4065 = vmul.f32 1.0, %v4064
  %v4066 = vrot.slane %v4034, 4
  %v4067 = vrot.slane %v4035, 4
  %v4070 = vtanh.pop %v4066
  %v4071 = vtanh.pop %v4067
  %v4072 = vrot.slane %v4034, 6
  %v4073 = vrot.slane %v4035, 6
  %v4076 = vxor.u32 %v4072, 2147483648
  %v4077 = vxor.u32 %v4073, 2147483648
  %v4078 = vmul.f32 %v4076, 1.442695
  %v4079 = vpow.pop %v4078
  %v4080 = vmul.f32 %v4077, 1.442695
  %v4081 = vpow.pop %v4080
  %v4082 = vadd.f32 %v4079, 1.0
  %v4083 = vadd.f32 %v4081, 1.0
  %v4084 = vrcp.pop %v4082
  %v4085 = vmul.f32 1.0, %v4084
  %v4086 = vrcp.pop %v4083
  %v4087 = vmul.f32 1.0, %v4086
  %v4088 = vld [vmem:[#allocation3] sm:$0x3]
  %v4089 = vld [vmem:[#allocation3 + $0x2] sm:$0x3]
  %v4090 = vmul.f32 %v4063, %v4088
  %v4091 = vmul.f32 %v4065, %v4089
  %v4092 = vmul.f32 %v4045, %v4070
  %v4093 = vmul.f32 %v4047, %v4071
  %v4094 = vadd.f32 %v4090, %v4092
  %v4095 = vadd.f32 %v4091, %v4093
  %v4096 = vtanh.pop %v4094
  %v4097 = vtanh.pop %v4095
  %v4098 = vmul.f32 %v4085, %v4096
  %v4099 = vmul.f32 %v4087, %v4097
  %4100 = vst [vmem:[#allocation3] sm:$0x3] %v4094
  %4101 = vst [vmem:[#allocation3 + $0x2] sm:$0x3] %v4095
  %4102 = vst [vmem:[#allocation2] sm:$0x3] %v4098
  %4103 = vst [vmem:[#allocation2 + $0x2] sm:$0x3] %v4099
  %s4104 = scalar_lea.vmem %s3, 10
  %4105 = vst [vmem:[%s4104] sm:$0x3] %v4098
  %s4106 = scalar_lea.vmem %s54, 4
  %4107 = vst [vmem:[%s4106] sm:$0x3] %v4099
  %v4108 = vld [vmem:[#allocation2] sm:$0x3]
  %v4109 = vld [vmem:[#allocation2 + $0x2] sm:$0x3]
  %v4110 = vpack.c.bf16 %v4108, %v4108
  %v4111 = vpack.c.bf16 %v4109, %v4109
  %v4112 = vld [vmem:[%s2] sm:$0xff]
  %v4113 = vld [vmem:[%s2 + $0x8] sm:$0xff]
  %v4114 = vld [vmem:[%s2 + $0x10] sm:$0xff]
  %v4115 = vld [vmem:[%s2 + $0x18] sm:$0xff]
  %v4116 = vld [vmem:[%s2 + $0x20] sm:$0xff]
  %v4117 = vld [vmem:[%s2 + $0x28] sm:$0xff]
  %v4118 = vld [vmem:[%s2 + $0x30] sm:$0xff]
  %v4119 = vld [vmem:[%s2 + $0x38] sm:$0xff]
  %v4120 = vld [vmem:[%s2 + $0x40] sm:$0xff]
  %v4121 = vld [vmem:[%s2 + $0x48] sm:$0xff]
  %v4122 = vld [vmem:[%s2 + $0x50] sm:$0xff]
  %v4123 = vld [vmem:[%s2 + $0x58] sm:$0xff]
  %v4124 = vld [vmem:[%s2 + $0x60] sm:$0xff]
  %v4125 = vld [vmem:[%s2 + $0x68] sm:$0xff]
  %v4126 = vld [vmem:[%s2 + $0x70] sm:$0xff]
  %v4127 = vld [vmem:[%s2 + $0x78] sm:$0xff]
  %v4128 = vld [vmem:[%s2 + $0x80] sm:$0xff]
  %v4129 = vld [vmem:[%s2 + $0x88] sm:$0xff]
  %v4130 = vld [vmem:[%s2 + $0x90] sm:$0xff]
  %v4131 = vld [vmem:[%s2 + $0x98] sm:$0xff]
  %v4132 = vld [vmem:[%s2 + $0xa0] sm:$0xff]
  %v4133 = vld [vmem:[%s2 + $0xa8] sm:$0xff]
  %v4134 = vld [vmem:[%s2 + $0xb0] sm:$0xff]
  %v4135 = vld [vmem:[%s2 + $0xb8] sm:$0xff]
  %v4136 = vld [vmem:[%s2 + $0xc0] sm:$0xff]
  %v4137 = vld [vmem:[%s2 + $0xc8] sm:$0xff]
  %v4138 = vld [vmem:[%s2 + $0xd0] sm:$0xff]
  %v4139 = vld [vmem:[%s2 + $0xd8] sm:$0xff]
  %v4140 = vld [vmem:[%s2 + $0xe0] sm:$0xff]
  %v4141 = vld [vmem:[%s2 + $0xe8] sm:$0xff]
  %v4142 = vld [vmem:[%s2 + $0xf0] sm:$0xff]
  %v4143 = vld [vmem:[%s2 + $0xf8] sm:$0xff]
  %v4144 = vld [vmem:[%s2 + $0x100] sm:$0xff]
  %v4145 = vld [vmem:[%s2 + $0x108] sm:$0xff]
  %v4146 = vld [vmem:[%s2 + $0x110] sm:$0xff]
  %v4147 = vld [vmem:[%s2 + $0x118] sm:$0xff]
  %v4148 = vld [vmem:[%s2 + $0x120] sm:$0xff]
  %v4149 = vld [vmem:[%s2 + $0x128] sm:$0xff]
  %v4150 = vld [vmem:[%s2 + $0x130] sm:$0xff]
  %v4151 = vld [vmem:[%s2 + $0x138] sm:$0xff]
  %v4152 = vld [vmem:[%s2 + $0x140] sm:$0xff]
  %v4153 = vld [vmem:[%s2 + $0x148] sm:$0xff]
  %v4154 = vld [vmem:[%s2 + $0x150] sm:$0xff]
  %v4155 = vld [vmem:[%s2 + $0x158] sm:$0xff]
  %v4156 = vld [vmem:[%s2 + $0x160] sm:$0xff]
  %v4157 = vld [vmem:[%s2 + $0x168] sm:$0xff]
  %v4158 = vld [vmem:[%s2 + $0x170] sm:$0xff]
  %v4159 = vld [vmem:[%s2 + $0x178] sm:$0xff]
  %v4160 = vld [vmem:[%s2 + $0x180] sm:$0xff]
  %v4161 = vld [vmem:[%s2 + $0x188] sm:$0xff]
  %v4162 = vld [vmem:[%s2 + $0x190] sm:$0xff]
  %v4163 = vld [vmem:[%s2 + $0x198] sm:$0xff]
  %v4164 = vld [vmem:[%s2 + $0x1a0] sm:$0xff]
  %v4165 = vld [vmem:[%s2 + $0x1a8] sm:$0xff]
  %v4166 = vld [vmem:[%s2 + $0x1b0] sm:$0xff]
  %v4167 = vld [vmem:[%s2 + $0x1b8] sm:$0xff]
  %v4168 = vld [vmem:[%s2 + $0x1c0] sm:$0xff]
  %v4169 = vld [vmem:[%s2 + $0x1c8] sm:$0xff]
  %v4170 = vld [vmem:[%s2 + $0x1d0] sm:$0xff]
  %v4171 = vld [vmem:[%s2 + $0x1d8] sm:$0xff]
  %v4172 = vld [vmem:[%s2 + $0x1e0] sm:$0xff]
  %v4173 = vld [vmem:[%s2 + $0x1e8] sm:$0xff]
  %v4174 = vld [vmem:[%s2 + $0x1f0] sm:$0xff]
  %v4175 = vld [vmem:[%s2 + $0x1f8] sm:$0xff]
  %v4208 = vunpack.c.l.b16 %v4112
  %v4209 = vunpack.c.h.b16 %v4112
  %v4210 = vunpack.c.l.b16 %v4113
  %v4211 = vunpack.c.h.b16 %v4113
  %v4212 = vunpack.c.l.b16 %v4114
  %v4213 = vunpack.c.h.b16 %v4114
  %v4214 = vunpack.c.l.b16 %v4115
  %v4215 = vunpack.c.h.b16 %v4115
  %v4216 = vunpack.c.l.b16 %v4116
  %v4217 = vunpack.c.h.b16 %v4116
  %v4218 = vunpack.c.l.b16 %v4117
  %v4219 = vunpack.c.h.b16 %v4117
  %v4220 = vunpack.c.l.b16 %v4118
  %v4221 = vunpack.c.h.b16 %v4118
  %v4222 = vunpack.c.l.b16 %v4119
  %v4223 = vunpack.c.h.b16 %v4119
  %v4224 = vunpack.c.l.b16 %v4120
  %v4225 = vunpack.c.h.b16 %v4120
  %v4226 = vunpack.c.l.b16 %v4121
  %v4227 = vunpack.c.h.b16 %v4121
  %v4228 = vunpack.c.l.b16 %v4122
  %v4229 = vunpack.c.h.b16 %v4122
  %v4230 = vunpack.c.l.b16 %v4123
  %v4231 = vunpack.c.h.b16 %v4123
  %v4232 = vunpack.c.l.b16 %v4124
  %v4233 = vunpack.c.h.b16 %v4124
  %v4234 = vunpack.c.l.b16 %v4125
  %v4235 = vunpack.c.h.b16 %v4125
  %v4236 = vunpack.c.l.b16 %v4126
  %v4237 = vunpack.c.h.b16 %v4126
  %v4238 = vunpack.c.l.b16 %v4127
  %v4239 = vunpack.c.h.b16 %v4127
  %v4240 = vunpack.c.l.b16 %v4128
  %v4241 = vunpack.c.h.b16 %v4128
  %v4242 = vunpack.c.l.b16 %v4129
  %v4243 = vunpack.c.h.b16 %v4129
  %v4244 = vunpack.c.l.b16 %v4130
  %v4245 = vunpack.c.h.b16 %v4130
  %v4246 = vunpack.c.l.b16 %v4131
  %v4247 = vunpack.c.h.b16 %v4131
  %v4248 = vunpack.c.l.b16 %v4132
  %v4249 = vunpack.c.h.b16 %v4132
  %v4250 = vunpack.c.l.b16 %v4133
  %v4251 = vunpack.c.h.b16 %v4133
  %v4252 = vunpack.c.l.b16 %v4134
  %v4253 = vunpack.c.h.b16 %v4134
  %v4254 = vunpack.c.l.b16 %v4135
  %v4255 = vunpack.c.h.b16 %v4135
  %v4256 = vunpack.c.l.b16 %v4136
  %v4257 = vunpack.c.h.b16 %v4136
  %v4258 = vunpack.c.l.b16 %v4137
  %v4259 = vunpack.c.h.b16 %v4137
  %v4260 = vunpack.c.l.b16 %v4138
  %v4261 = vunpack.c.h.b16 %v4138
  %v4262 = vunpack.c.l.b16 %v4139
  %v4263 = vunpack.c.h.b16 %v4139
  %v4264 = vunpack.c.l.b16 %v4140
  %v4265 = vunpack.c.h.b16 %v4140
  %v4266 = vunpack.c.l.b16 %v4141
  %v4267 = vunpack.c.h.b16 %v4141
  %v4268 = vunpack.c.l.b16 %v4142
  %v4269 = vunpack.c.h.b16 %v4142
  %v4270 = vunpack.c.l.b16 %v4143
  %v4271 = vunpack.c.h.b16 %v4143
  %v4272 = vpack.c.b16 %v4212, %v4208
  %v4273 = vpack.c.b16 %v4213, %v4209
  %v4274 = vpack.c.b16 %v4214, %v4210
  %v4275 = vpack.c.b16 %v4215, %v4211
  %v4276 = vpack.c.b16 %v4220, %v4216
  %v4277 = vpack.c.b16 %v4221, %v4217
  %v4278 = vpack.c.b16 %v4222, %v4218
  %v4279 = vpack.c.b16 %v4223, %v4219
  %v4280 = vpack.c.b16 %v4228, %v4224
  %v4281 = vpack.c.b16 %v4229, %v4225
  %v4282 = vpack.c.b16 %v4230, %v4226
  %v4283 = vpack.c.b16 %v4231, %v4227
  %v4284 = vpack.c.b16 %v4236, %v4232
  %v4285 = vpack.c.b16 %v4237, %v4233
  %v4286 = vpack.c.b16 %v4238, %v4234
  %v4287 = vpack.c.b16 %v4239, %v4235
  %v4288 = vpack.c.b16 %v4244, %v4240
  %v4289 = vpack.c.b16 %v4245, %v4241
  %v4290 = vpack.c.b16 %v4246, %v4242
  %v4291 = vpack.c.b16 %v4247, %v4243
  %v4292 = vpack.c.b16 %v4252, %v4248
  %v4293 = vpack.c.b16 %v4253, %v4249
  %v4294 = vpack.c.b16 %v4254, %v4250
  %v4295 = vpack.c.b16 %v4255, %v4251
  %v4296 = vpack.c.b16 %v4260, %v4256
  %v4297 = vpack.c.b16 %v4261, %v4257
  %v4298 = vpack.c.b16 %v4262, %v4258
  %v4299 = vpack.c.b16 %v4263, %v4259
  %v4300 = vpack.c.b16 %v4268, %v4264
  %v4301 = vpack.c.b16 %v4269, %v4265
  %v4302 = vpack.c.b16 %v4270, %v4266
  %v4303 = vpack.c.b16 %v4271, %v4267
  %4336 = vmatprep.subr.bf16.mxu0 %v4301
  %4337 = vmatpush1.bf16.msra.mxu0 %v4300
  %4338 = vmatprep.subr.bf16.mxu0 %v4297
  %4339 = vmatpush1.bf16.msra.mxu0 %v4296
  %4340 = vmatprep.subr.bf16.mxu0 %v4293
  %4341 = vmatpush1.bf16.msra.mxu0 %v4292
  %4342 = vmatprep.subr.bf16.mxu0 %v4289
  %4343 = vmatpush1.bf16.msra.mxu0 %v4288
  %4344 = vmatprep.subr.bf16.mxu0 %v4285
  %4345 = vmatpush1.bf16.msra.mxu0 %v4284
  %4346 = vmatprep.subr.bf16.mxu0 %v4281
  %4347 = vmatpush1.bf16.msra.mxu0 %v4280
  %4348 = vmatprep.subr.bf16.mxu0 %v4277
  %4349 = vmatpush1.bf16.msra.mxu0 %v4276
  %4350 = vmatprep.subr.bf16.mxu0 %v4273
  %4351 = vmatpush1.bf16.msra.mxu0 %v4272
  %4352 = vmatprep.subr.bf16.mxu0 0
  %4353 = vmatpush2.bf16.msra.mxu0 0
  %4354 = vmatprep.subr.bf16.mxu0 0
  %4355 = vmatpush2.bf16.msra.mxu0 0
  %4356 = vmatprep.subr.bf16.mxu0 0
  %4357 = vmatpush2.bf16.msra.mxu0 0
  %4358 = vmatprep.subr.bf16.mxu0 0
  %4359 = vmatpush2.bf16.msra.mxu0 0
  %4360 = vmatprep.subr.bf16.mxu0 0
  %4361 = vmatpush2.bf16.msra.mxu0 0
  %4362 = vmatprep.subr.bf16.mxu0 0
  %4363 = vmatpush2.bf16.msra.mxu0 0
  %4364 = vmatprep.subr.bf16.mxu0 0
  %4365 = vmatpush2.bf16.msra.mxu0 0
  %4366 = vmatprep.subr.bf16.mxu0 0
  %4367 = vmatpush2.bf16.msra.mxu0 0
  %4368 = vmatprep.mubr.bf16.mxu0 0
  %4369 = vmatmul.mubr.bf16.gmra.mxu0 %v4110
  %v4370 = vpop.f32.mrf.mxu0
  %v4371 = vadd.f32 0.0, %v4370
  %v4372 = vpop.f32.mrf.mxu0
  %v4373 = vadd.f32 0.0, %v4372
  %v4374 = vpop.f32.mrf.mxu0
  %v4375 = vpop.f32.mrf.mxu0
  %4376 = vdwg.mxu0
  %4377 = vmatprep.subr.bf16.mxu0 %v4303
  %4378 = vmatpush1.bf16.msra.mxu0 %v4302
  %4379 = vmatprep.subr.bf16.mxu0 %v4299
  %4380 = vmatpush1.bf16.msra.mxu0 %v4298
  %4381 = vmatprep.subr.bf16.mxu0 %v4295
  %4382 = vmatpush1.bf16.msra.mxu0 %v4294
  %4383 = vmatprep.subr.bf16.mxu0 %v4291
  %4384 = vmatpush1.bf16.msra.mxu0 %v4290
  %4385 = vmatprep.subr.bf16.mxu0 %v4287
  %4386 = vmatpush1.bf16.msra.mxu0 %v4286
  %4387 = vmatprep.subr.bf16.mxu0 %v4283
  %4388 = vmatpush1.bf16.msra.mxu0 %v4282
  %4389 = vmatprep.subr.bf16.mxu0 %v4279
  %4390 = vmatpush1.bf16.msra.mxu0 %v4278
  %4391 = vmatprep.subr.bf16.mxu0 %v4275
  %4392 = vmatpush1.bf16.msra.mxu0 %v4274
  %4393 = vmatprep.subr.bf16.mxu0 0
  %4394 = vmatpush2.bf16.msra.mxu0 0
  %4395 = vmatprep.subr.bf16.mxu0 0
  %4396 = vmatpush2.bf16.msra.mxu0 0
  %4397 = vmatprep.subr.bf16.mxu0 0
  %4398 = vmatpush2.bf16.msra.mxu0 0
  %4399 = vmatprep.subr.bf16.mxu0 0
  %4400 = vmatpush2.bf16.msra.mxu0 0
  %4401 = vmatprep.subr.bf16.mxu0 0
  %4402 = vmatpush2.bf16.msra.mxu0 0
  %4403 = vmatprep.subr.bf16.mxu0 0
  %4404 = vmatpush2.bf16.msra.mxu0 0
  %4405 = vmatprep.subr.bf16.mxu0 0
  %4406 = vmatpush2.bf16.msra.mxu0 0
  %4407 = vmatprep.subr.bf16.mxu0 0
  %4408 = vmatpush2.bf16.msra.mxu0 0
  %4409 = vmatprep.mubr.bf16.mxu0 0
  %4410 = vmatmul.mubr.bf16.gmra.mxu0 %v4110
  %v4411 = vpop.f32.mrf.mxu0
  %v4412 = vadd.f32 0.0, %v4411
  %v4413 = vpop.f32.mrf.mxu0
  %v4414 = vadd.f32 0.0, %v4413
  %v4415 = vpop.f32.mrf.mxu0
  %v4416 = vpop.f32.mrf.mxu0
  %4417 = vdwg.mxu0
  %v4450 = vunpack.c.l.b16 %v4144
  %v4451 = vunpack.c.h.b16 %v4144
  %v4452 = vunpack.c.l.b16 %v4145
  %v4453 = vunpack.c.h.b16 %v4145
  %v4454 = vunpack.c.l.b16 %v4146
  %v4455 = vunpack.c.h.b16 %v4146
  %v4456 = vunpack.c.l.b16 %v4147
  %v4457 = vunpack.c.h.b16 %v4147
  %v4458 = vunpack.c.l.b16 %v4148
  %v4459 = vunpack.c.h.b16 %v4148
  %v4460 = vunpack.c.l.b16 %v4149
  %v4461 = vunpack.c.h.b16 %v4149
  %v4462 = vunpack.c.l.b16 %v4150
  %v4463 = vunpack.c.h.b16 %v4150
  %v4464 = vunpack.c.l.b16 %v4151
  %v4465 = vunpack.c.h.b16 %v4151
  %v4466 = vunpack.c.l.b16 %v4152
  %v4467 = vunpack.c.h.b16 %v4152
  %v4468 = vunpack.c.l.b16 %v4153
  %v4469 = vunpack.c.h.b16 %v4153
  %v4470 = vunpack.c.l.b16 %v4154
  %v4471 = vunpack.c.h.b16 %v4154
  %v4472 = vunpack.c.l.b16 %v4155
  %v4473 = vunpack.c.h.b16 %v4155
  %v4474 = vunpack.c.l.b16 %v4156
  %v4475 = vunpack.c.h.b16 %v4156
  %v4476 = vunpack.c.l.b16 %v4157
  %v4477 = vunpack.c.h.b16 %v4157
  %v4478 = vunpack.c.l.b16 %v4158
  %v4479 = vunpack.c.h.b16 %v4158
  %v4480 = vunpack.c.l.b16 %v4159
  %v4481 = vunpack.c.h.b16 %v4159
  %v4482 = vunpack.c.l.b16 %v4160
  %v4483 = vunpack.c.h.b16 %v4160
  %v4484 = vunpack.c.l.b16 %v4161
  %v4485 = vunpack.c.h.b16 %v4161
  %v4486 = vunpack.c.l.b16 %v4162
  %v4487 = vunpack.c.h.b16 %v4162
  %v4488 = vunpack.c.l.b16 %v4163
  %v4489 = vunpack.c.h.b16 %v4163
  %v4490 = vunpack.c.l.b16 %v4164
  %v4491 = vunpack.c.h.b16 %v4164
  %v4492 = vunpack.c.l.b16 %v4165
  %v4493 = vunpack.c.h.b16 %v4165
  %v4494 = vunpack.c.l.b16 %v4166
  %v4495 = vunpack.c.h.b16 %v4166
  %v4496 = vunpack.c.l.b16 %v4167
  %v4497 = vunpack.c.h.b16 %v4167
  %v4498 = vunpack.c.l.b16 %v4168
  %v4499 = vunpack.c.h.b16 %v4168
  %v4500 = vunpack.c.l.b16 %v4169
  %v4501 = vunpack.c.h.b16 %v4169
  %v4502 = vunpack.c.l.b16 %v4170
  %v4503 = vunpack.c.h.b16 %v4170
  %v4504 = vunpack.c.l.b16 %v4171
  %v4505 = vunpack.c.h.b16 %v4171
  %v4506 = vunpack.c.l.b16 %v4172
  %v4507 = vunpack.c.h.b16 %v4172
  %v4508 = vunpack.c.l.b16 %v4173
  %v4509 = vunpack.c.h.b16 %v4173
  %v4510 = vunpack.c.l.b16 %v4174
  %v4511 = vunpack.c.h.b16 %v4174
  %v4512 = vunpack.c.l.b16 %v4175
  %v4513 = vunpack.c.h.b16 %v4175
  %v4514 = vpack.c.b16 %v4454, %v4450
  %v4515 = vpack.c.b16 %v4455, %v4451
  %v4516 = vpack.c.b16 %v4456, %v4452
  %v4517 = vpack.c.b16 %v4457, %v4453
  %v4518 = vpack.c.b16 %v4462, %v4458
  %v4519 = vpack.c.b16 %v4463, %v4459
  %v4520 = vpack.c.b16 %v4464, %v4460
  %v4521 = vpack.c.b16 %v4465, %v4461
  %v4522 = vpack.c.b16 %v4470, %v4466
  %v4523 = vpack.c.b16 %v4471, %v4467
  %v4524 = vpack.c.b16 %v4472, %v4468
  %v4525 = vpack.c.b16 %v4473, %v4469
  %v4526 = vpack.c.b16 %v4478, %v4474
  %v4527 = vpack.c.b16 %v4479, %v4475
  %v4528 = vpack.c.b16 %v4480, %v4476
  %v4529 = vpack.c.b16 %v4481, %v4477
  %v4530 = vpack.c.b16 %v4486, %v4482
  %v4531 = vpack.c.b16 %v4487, %v4483
  %v4532 = vpack.c.b16 %v4488, %v4484
  %v4533 = vpack.c.b16 %v4489, %v4485
  %v4534 = vpack.c.b16 %v4494, %v4490
  %v4535 = vpack.c.b16 %v4495, %v4491
  %v4536 = vpack.c.b16 %v4496, %v4492
  %v4537 = vpack.c.b16 %v4497, %v4493
  %v4538 = vpack.c.b16 %v4502, %v4498
  %v4539 = vpack.c.b16 %v4503, %v4499
  %v4540 = vpack.c.b16 %v4504, %v4500
  %v4541 = vpack.c.b16 %v4505, %v4501
  %v4542 = vpack.c.b16 %v4510, %v4506
  %v4543 = vpack.c.b16 %v4511, %v4507
  %v4544 = vpack.c.b16 %v4512, %v4508
  %v4545 = vpack.c.b16 %v4513, %v4509
  %4578 = vmatprep.subr.bf16.mxu0 %v4543
  %4579 = vmatpush1.bf16.msra.mxu0 %v4542
  %4580 = vmatprep.subr.bf16.mxu0 %v4539
  %4581 = vmatpush1.bf16.msra.mxu0 %v4538
  %4582 = vmatprep.subr.bf16.mxu0 %v4535
  %4583 = vmatpush1.bf16.msra.mxu0 %v4534
  %4584 = vmatprep.subr.bf16.mxu0 %v4531
  %4585 = vmatpush1.bf16.msra.mxu0 %v4530
  %4586 = vmatprep.subr.bf16.mxu0 %v4527
  %4587 = vmatpush1.bf16.msra.mxu0 %v4526
  %4588 = vmatprep.subr.bf16.mxu0 %v4523
  %4589 = vmatpush1.bf16.msra.mxu0 %v4522
  %4590 = vmatprep.subr.bf16.mxu0 %v4519
  %4591 = vmatpush1.bf16.msra.mxu0 %v4518
  %4592 = vmatprep.subr.bf16.mxu0 %v4515
  %4593 = vmatpush1.bf16.msra.mxu0 %v4514
  %4594 = vmatprep.subr.bf16.mxu0 0
  %4595 = vmatpush2.bf16.msra.mxu0 0
  %4596 = vmatprep.subr.bf16.mxu0 0
  %4597 = vmatpush2.bf16.msra.mxu0 0
  %4598 = vmatprep.subr.bf16.mxu0 0
  %4599 = vmatpush2.bf16.msra.mxu0 0
  %4600 = vmatprep.subr.bf16.mxu0 0
  %4601 = vmatpush2.bf16.msra.mxu0 0
  %4602 = vmatprep.subr.bf16.mxu0 0
  %4603 = vmatpush2.bf16.msra.mxu0 0
  %4604 = vmatprep.subr.bf16.mxu0 0
  %4605 = vmatpush2.bf16.msra.mxu0 0
  %4606 = vmatprep.subr.bf16.mxu0 0
  %4607 = vmatpush2.bf16.msra.mxu0 0
  %4608 = vmatprep.subr.bf16.mxu0 0
  %4609 = vmatpush2.bf16.msra.mxu0 0
  %4610 = vmatprep.mubr.bf16.mxu0 0
  %4611 = vmatmul.mubr.bf16.gmra.mxu0 %v4111
  %v4612 = vpop.f32.mrf.mxu0
  %v4613 = vadd.f32 0.0, %v4612
  %v4614 = vpop.f32.mrf.mxu0
  %v4615 = vadd.f32 0.0, %v4614
  %v4616 = vpop.f32.mrf.mxu0
  %v4617 = vpop.f32.mrf.mxu0
  %4618 = vdwg.mxu0
  %4619 = vmatprep.subr.bf16.mxu0 %v4545
  %4620 = vmatpush1.bf16.msra.mxu0 %v4544
  %4621 = vmatprep.subr.bf16.mxu0 %v4541
  %4622 = vmatpush1.bf16.msra.mxu0 %v4540
  %4623 = vmatprep.subr.bf16.mxu0 %v4537
  %4624 = vmatpush1.bf16.msra.mxu0 %v4536
  %4625 = vmatprep.subr.bf16.mxu0 %v4533
  %4626 = vmatpush1.bf16.msra.mxu0 %v4532
  %4627 = vmatprep.subr.bf16.mxu0 %v4529
  %4628 = vmatpush1.bf16.msra.mxu0 %v4528
  %4629 = vmatprep.subr.bf16.mxu0 %v4525
  %4630 = vmatpush1.bf16.msra.mxu0 %v4524
  %4631 = vmatprep.subr.bf16.mxu0 %v4521
  %4632 = vmatpush1.bf16.msra.mxu0 %v4520
  %4633 = vmatprep.subr.bf16.mxu0 %v4517
  %4634 = vmatpush1.bf16.msra.mxu0 %v4516
  %4635 = vmatprep.subr.bf16.mxu0 0
  %4636 = vmatpush2.bf16.msra.mxu0 0
  %4637 = vmatprep.subr.bf16.mxu0 0
  %4638 = vmatpush2.bf16.msra.mxu0 0
  %4639 = vmatprep.subr.bf16.mxu0 0
  %4640 = vmatpush2.bf16.msra.mxu0 0
  %4641 = vmatprep.subr.bf16.mxu0 0
  %4642 = vmatpush2.bf16.msra.mxu0 0
  %4643 = vmatprep.subr.bf16.mxu0 0
  %4644 = vmatpush2.bf16.msra.mxu0 0
  %4645 = vmatprep.subr.bf16.mxu0 0
  %4646 = vmatpush2.bf16.msra.mxu0 0
  %4647 = vmatprep.subr.bf16.mxu0 0
  %4648 = vmatpush2.bf16.msra.mxu0 0
  %4649 = vmatprep.subr.bf16.mxu0 0
  %4650 = vmatpush2.bf16.msra.mxu0 0
  %4651 = vmatprep.mubr.bf16.mxu0 0
  %4652 = vmatmul.mubr.bf16.gmra.mxu0 %v4111
  %v4653 = vpop.f32.mrf.mxu0
  %v4654 = vadd.f32 0.0, %v4653
  %v4655 = vpop.f32.mrf.mxu0
  %v4656 = vadd.f32 0.0, %v4655
  %v4657 = vpop.f32.mrf.mxu0
  %v4658 = vpop.f32.mrf.mxu0
  %4659 = vdwg.mxu0
  %s4660 = scalar_lea.vmem %s0, 48
  %v4661 = vld [vmem:[%s4660] sm:$0xff]
  %s4662 = scalar_lea.vmem %s46, 8
  %v4663 = vld [vmem:[%s4662] sm:$0xff]
  %v4672 = vcombine.low %v4371, %v4373
  %v4673 = vcombine.low %v4412, %v4414
  %v4675 = vunpack.c.l.s4 1983009808
  %v4676 = vunpack.c.0.s8 %v4675
  %v4677 = vlaneseq
  %v4678 = vshrl.u32 %v4677, 7
  %v4679 = vsub.s32 %v4676, %v4678
  %v4680 = vrot.slane %v4672, %v4679
  %v4682 = vunpack.c.l.s4 1983009808
  %v4683 = vunpack.c.0.s8 %v4682
  %v4684 = vlaneseq
  %v4685 = vshrl.u32 %v4684, 7
  %v4686 = vsub.s32 %v4683, %v4685
  %v4687 = vrot.slane %v4673, %v4686
  %v4688 = vcombine.low %v4680, %v4687
  %v4689 = vcombine.low %v4613, %v4615
  %v4690 = vcombine.low %v4654, %v4656
  %v4692 = vunpack.c.l.s4 1983009808
  %v4693 = vunpack.c.0.s8 %v4692
  %v4694 = vlaneseq
  %v4695 = vshrl.u32 %v4694, 7
  %v4696 = vsub.s32 %v4693, %v4695
  %v4697 = vrot.slane %v4689, %v4696
  %v4699 = vunpack.c.l.s4 1983009808
  %v4700 = vunpack.c.0.s8 %v4699
  %v4701 = vlaneseq
  %v4702 = vshrl.u32 %v4701, 7
  %v4703 = vsub.s32 %v4700, %v4702
  %v4704 = vrot.slane %v4690, %v4703
  %v4705 = vcombine.low %v4697, %v4704
  %v4708 = vadd.f32 %v4661, %v4688
  %v4709 = vadd.f32 %v4663, %v4705
  %v4710 = vxor.u32 %v4708, 2147483648
  %v4711 = vxor.u32 %v4709, 2147483648
  %v4712 = vmul.f32 %v4710, 1.442695
  %v4713 = vpow.pop %v4712
  %v4714 = vmul.f32 %v4711, 1.442695
  %v4715 = vpow.pop %v4714
  %v4716 = vadd.f32 %v4713, 1.0
  %v4717 = vadd.f32 %v4715, 1.0
  %v4718 = vrcp.pop %v4716
  %v4719 = vmul.f32 1.0, %v4718
  %v4720 = vrcp.pop %v4717
  %v4721 = vmul.f32 1.0, %v4720
  %v4724 = vrot.slane %v4708, 2
  %v4725 = vrot.slane %v4709, 2
  %v4728 = vxor.u32 %v4724, 2147483648
  %v4729 = vxor.u32 %v4725, 2147483648
  %v4730 = vmul.f32 %v4728, 1.442695
  %v4731 = vpow.pop %v4730
  %v4732 = vmul.f32 %v4729, 1.442695
  %v4733 = vpow.pop %v4732
  %v4734 = vadd.f32 %v4731, 1.0
  %v4735 = vadd.f32 %v4733, 1.0
  %v4736 = vrcp.pop %v4734
  %v4737 = vmul.f32 1.0, %v4736
  %v4738 = vrcp.pop %v4735
  %v4739 = vmul.f32 1.0, %v4738
  %v4740 = vrot.slane %v4708, 4
  %v4741 = vrot.slane %v4709, 4
  %v4744 = vtanh.pop %v4740
  %v4745 = vtanh.pop %v4741
  %v4746 = vrot.slane %v4708, 6
  %v4747 = vrot.slane %v4709, 6
  %v4750 = vxor.u32 %v4746, 2147483648
  %v4751 = vxor.u32 %v4747, 2147483648
  %v4752 = vmul.f32 %v4750, 1.442695
  %v4753 = vpow.pop %v4752
  %v4754 = vmul.f32 %v4751, 1.442695
  %v4755 = vpow.pop %v4754
  %v4756 = vadd.f32 %v4753, 1.0
  %v4757 = vadd.f32 %v4755, 1.0
  %v4758 = vrcp.pop %v4756
  %v4759 = vmul.f32 1.0, %v4758
  %v4760 = vrcp.pop %v4757
  %v4761 = vmul.f32 1.0, %v4760
  %v4762 = vld [vmem:[#allocation3] sm:$0x3]
  %v4763 = vld [vmem:[#allocation3 + $0x2] sm:$0x3]
  %v4764 = vmul.f32 %v4737, %v4762
  %v4765 = vmul.f32 %v4739, %v4763
  %v4766 = vmul.f32 %v4719, %v4744
  %v4767 = vmul.f32 %v4721, %v4745
  %v4768 = vadd.f32 %v4764, %v4766
  %v4769 = vadd.f32 %v4765, %v4767
  %v4770 = vtanh.pop %v4768
  %v4771 = vtanh.pop %v4769
  %v4772 = vmul.f32 %v4759, %v4770
  %v4773 = vmul.f32 %v4761, %v4771
  %4774 = vst [vmem:[#allocation3] sm:$0x3] %v4768
  %4775 = vst [vmem:[#allocation3 + $0x2] sm:$0x3] %v4769
  %4776 = vst [vmem:[#allocation2] sm:$0x3] %v4772
  %4777 = vst [vmem:[#allocation2 + $0x2] sm:$0x3] %v4773
  %s4778 = scalar_lea.vmem %s3, 12
  %4779 = vst [vmem:[%s4778] sm:$0x3] %v4772
  %s4780 = scalar_lea.vmem %s54, 2
  %4781 = vst [vmem:[%s4780] sm:$0x3] %v4773
  %v4782 = vld [vmem:[#allocation2] sm:$0x3]
  %v4783 = vld [vmem:[#allocation2 + $0x2] sm:$0x3]
  %v4784 = vpack.c.bf16 %v4782, %v4782
  %v4785 = vpack.c.bf16 %v4783, %v4783
  %v4786 = vld [vmem:[%s2] sm:$0xff]
  %v4787 = vld [vmem:[%s2 + $0x8] sm:$0xff]
  %v4788 = vld [vmem:[%s2 + $0x10] sm:$0xff]
  %v4789 = vld [vmem:[%s2 + $0x18] sm:$0xff]
  %v4790 = vld [vmem:[%s2 + $0x20] sm:$0xff]
  %v4791 = vld [vmem:[%s2 + $0x28] sm:$0xff]
  %v4792 = vld [vmem:[%s2 + $0x30] sm:$0xff]
  %v4793 = vld [vmem:[%s2 + $0x38] sm:$0xff]
  %v4794 = vld [vmem:[%s2 + $0x40] sm:$0xff]
  %v4795 = vld [vmem:[%s2 + $0x48] sm:$0xff]
  %v4796 = vld [vmem:[%s2 + $0x50] sm:$0xff]
  %v4797 = vld [vmem:[%s2 + $0x58] sm:$0xff]
  %v4798 = vld [vmem:[%s2 + $0x60] sm:$0xff]
  %v4799 = vld [vmem:[%s2 + $0x68] sm:$0xff]
  %v4800 = vld [vmem:[%s2 + $0x70] sm:$0xff]
  %v4801 = vld [vmem:[%s2 + $0x78] sm:$0xff]
  %v4802 = vld [vmem:[%s2 + $0x80] sm:$0xff]
  %v4803 = vld [vmem:[%s2 + $0x88] sm:$0xff]
  %v4804 = vld [vmem:[%s2 + $0x90] sm:$0xff]
  %v4805 = vld [vmem:[%s2 + $0x98] sm:$0xff]
  %v4806 = vld [vmem:[%s2 + $0xa0] sm:$0xff]
  %v4807 = vld [vmem:[%s2 + $0xa8] sm:$0xff]
  %v4808 = vld [vmem:[%s2 + $0xb0] sm:$0xff]
  %v4809 = vld [vmem:[%s2 + $0xb8] sm:$0xff]
  %v4810 = vld [vmem:[%s2 + $0xc0] sm:$0xff]
  %v4811 = vld [vmem:[%s2 + $0xc8] sm:$0xff]
  %v4812 = vld [vmem:[%s2 + $0xd0] sm:$0xff]
  %v4813 = vld [vmem:[%s2 + $0xd8] sm:$0xff]
  %v4814 = vld [vmem:[%s2 + $0xe0] sm:$0xff]
  %v4815 = vld [vmem:[%s2 + $0xe8] sm:$0xff]
  %v4816 = vld [vmem:[%s2 + $0xf0] sm:$0xff]
  %v4817 = vld [vmem:[%s2 + $0xf8] sm:$0xff]
  %v4818 = vld [vmem:[%s2 + $0x100] sm:$0xff]
  %v4819 = vld [vmem:[%s2 + $0x108] sm:$0xff]
  %v4820 = vld [vmem:[%s2 + $0x110] sm:$0xff]
  %v4821 = vld [vmem:[%s2 + $0x118] sm:$0xff]
  %v4822 = vld [vmem:[%s2 + $0x120] sm:$0xff]
  %v4823 = vld [vmem:[%s2 + $0x128] sm:$0xff]
  %v4824 = vld [vmem:[%s2 + $0x130] sm:$0xff]
  %v4825 = vld [vmem:[%s2 + $0x138] sm:$0xff]
  %v4826 = vld [vmem:[%s2 + $0x140] sm:$0xff]
  %v4827 = vld [vmem:[%s2 + $0x148] sm:$0xff]
  %v4828 = vld [vmem:[%s2 + $0x150] sm:$0xff]
  %v4829 = vld [vmem:[%s2 + $0x158] sm:$0xff]
  %v4830 = vld [vmem:[%s2 + $0x160] sm:$0xff]
  %v4831 = vld [vmem:[%s2 + $0x168] sm:$0xff]
  %v4832 = vld [vmem:[%s2 + $0x170] sm:$0xff]
  %v4833 = vld [vmem:[%s2 + $0x178] sm:$0xff]
  %v4834 = vld [vmem:[%s2 + $0x180] sm:$0xff]
  %v4835 = vld [vmem:[%s2 + $0x188] sm:$0xff]
  %v4836 = vld [vmem:[%s2 + $0x190] sm:$0xff]
  %v4837 = vld [vmem:[%s2 + $0x198] sm:$0xff]
  %v4838 = vld [vmem:[%s2 + $0x1a0] sm:$0xff]
  %v4839 = vld [vmem:[%s2 + $0x1a8] sm:$0xff]
  %v4840 = vld [vmem:[%s2 + $0x1b0] sm:$0xff]
  %v4841 = vld [vmem:[%s2 + $0x1b8] sm:$0xff]
  %v4842 = vld [vmem:[%s2 + $0x1c0] sm:$0xff]
  %v4843 = vld [vmem:[%s2 + $0x1c8] sm:$0xff]
  %v4844 = vld [vmem:[%s2 + $0x1d0] sm:$0xff]
  %v4845 = vld [vmem:[%s2 + $0x1d8] sm:$0xff]
  %v4846 = vld [vmem:[%s2 + $0x1e0] sm:$0xff]
  %v4847 = vld [vmem:[%s2 + $0x1e8] sm:$0xff]
  %v4848 = vld [vmem:[%s2 + $0x1f0] sm:$0xff]
  %v4849 = vld [vmem:[%s2 + $0x1f8] sm:$0xff]
  %v4882 = vunpack.c.l.b16 %v4786
  %v4883 = vunpack.c.h.b16 %v4786
  %v4884 = vunpack.c.l.b16 %v4787
  %v4885 = vunpack.c.h.b16 %v4787
  %v4886 = vunpack.c.l.b16 %v4788
  %v4887 = vunpack.c.h.b16 %v4788
  %v4888 = vunpack.c.l.b16 %v4789
  %v4889 = vunpack.c.h.b16 %v4789
  %v4890 = vunpack.c.l.b16 %v4790
  %v4891 = vunpack.c.h.b16 %v4790
  %v4892 = vunpack.c.l.b16 %v4791
  %v4893 = vunpack.c.h.b16 %v4791
  %v4894 = vunpack.c.l.b16 %v4792
  %v4895 = vunpack.c.h.b16 %v4792
  %v4896 = vunpack.c.l.b16 %v4793
  %v4897 = vunpack.c.h.b16 %v4793
  %v4898 = vunpack.c.l.b16 %v4794
  %v4899 = vunpack.c.h.b16 %v4794
  %v4900 = vunpack.c.l.b16 %v4795
  %v4901 = vunpack.c.h.b16 %v4795
  %v4902 = vunpack.c.l.b16 %v4796
  %v4903 = vunpack.c.h.b16 %v4796
  %v4904 = vunpack.c.l.b16 %v4797
  %v4905 = vunpack.c.h.b16 %v4797
  %v4906 = vunpack.c.l.b16 %v4798
  %v4907 = vunpack.c.h.b16 %v4798
  %v4908 = vunpack.c.l.b16 %v4799
  %v4909 = vunpack.c.h.b16 %v4799
  %v4910 = vunpack.c.l.b16 %v4800
  %v4911 = vunpack.c.h.b16 %v4800
  %v4912 = vunpack.c.l.b16 %v4801
  %v4913 = vunpack.c.h.b16 %v4801
  %v4914 = vunpack.c.l.b16 %v4802
  %v4915 = vunpack.c.h.b16 %v4802
  %v4916 = vunpack.c.l.b16 %v4803
  %v4917 = vunpack.c.h.b16 %v4803
  %v4918 = vunpack.c.l.b16 %v4804
  %v4919 = vunpack.c.h.b16 %v4804
  %v4920 = vunpack.c.l.b16 %v4805
  %v4921 = vunpack.c.h.b16 %v4805
  %v4922 = vunpack.c.l.b16 %v4806
  %v4923 = vunpack.c.h.b16 %v4806
  %v4924 = vunpack.c.l.b16 %v4807
  %v4925 = vunpack.c.h.b16 %v4807
  %v4926 = vunpack.c.l.b16 %v4808
  %v4927 = vunpack.c.h.b16 %v4808
  %v4928 = vunpack.c.l.b16 %v4809
  %v4929 = vunpack.c.h.b16 %v4809
  %v4930 = vunpack.c.l.b16 %v4810
  %v4931 = vunpack.c.h.b16 %v4810
  %v4932 = vunpack.c.l.b16 %v4811
  %v4933 = vunpack.c.h.b16 %v4811
  %v4934 = vunpack.c.l.b16 %v4812
  %v4935 = vunpack.c.h.b16 %v4812
  %v4936 = vunpack.c.l.b16 %v4813
  %v4937 = vunpack.c.h.b16 %v4813
  %v4938 = vunpack.c.l.b16 %v4814
  %v4939 = vunpack.c.h.b16 %v4814
  %v4940 = vunpack.c.l.b16 %v4815
  %v4941 = vunpack.c.h.b16 %v4815
  %v4942 = vunpack.c.l.b16 %v4816
  %v4943 = vunpack.c.h.b16 %v4816
  %v4944 = vunpack.c.l.b16 %v4817
  %v4945 = vunpack.c.h.b16 %v4817
  %v4946 = vpack.c.b16 %v4886, %v4882
  %v4947 = vpack.c.b16 %v4887, %v4883
  %v4948 = vpack.c.b16 %v4888, %v4884
  %v4949 = vpack.c.b16 %v4889, %v4885
  %v4950 = vpack.c.b16 %v4894, %v4890
  %v4951 = vpack.c.b16 %v4895, %v4891
  %v4952 = vpack.c.b16 %v4896, %v4892
  %v4953 = vpack.c.b16 %v4897, %v4893
  %v4954 = vpack.c.b16 %v4902, %v4898
  %v4955 = vpack.c.b16 %v4903, %v4899
  %v4956 = vpack.c.b16 %v4904, %v4900
  %v4957 = vpack.c.b16 %v4905, %v4901
  %v4958 = vpack.c.b16 %v4910, %v4906
  %v4959 = vpack.c.b16 %v4911, %v4907
  %v4960 = vpack.c.b16 %v4912, %v4908
  %v4961 = vpack.c.b16 %v4913, %v4909
  %v4962 = vpack.c.b16 %v4918, %v4914
  %v4963 = vpack.c.b16 %v4919, %v4915
  %v4964 = vpack.c.b16 %v4920, %v4916
  %v4965 = vpack.c.b16 %v4921, %v4917
  %v4966 = vpack.c.b16 %v4926, %v4922
  %v4967 = vpack.c.b16 %v4927, %v4923
  %v4968 = vpack.c.b16 %v4928, %v4924
  %v4969 = vpack.c.b16 %v4929, %v4925
  %v4970 = vpack.c.b16 %v4934, %v4930
  %v4971 = vpack.c.b16 %v4935, %v4931
  %v4972 = vpack.c.b16 %v4936, %v4932
  %v4973 = vpack.c.b16 %v4937, %v4933
  %v4974 = vpack.c.b16 %v4942, %v4938
  %v4975 = vpack.c.b16 %v4943, %v4939
  %v4976 = vpack.c.b16 %v4944, %v4940
  %v4977 = vpack.c.b16 %v4945, %v4941
  %5010 = vmatprep.subr.bf16.mxu0 %v4975
  %5011 = vmatpush1.bf16.msra.mxu0 %v4974
  %5012 = vmatprep.subr.bf16.mxu0 %v4971
  %5013 = vmatpush1.bf16.msra.mxu0 %v4970
  %5014 = vmatprep.subr.bf16.mxu0 %v4967
  %5015 = vmatpush1.bf16.msra.mxu0 %v4966
  %5016 = vmatprep.subr.bf16.mxu0 %v4963
  %5017 = vmatpush1.bf16.msra.mxu0 %v4962
  %5018 = vmatprep.subr.bf16.mxu0 %v4959
  %5019 = vmatpush1.bf16.msra.mxu0 %v4958
  %5020 = vmatprep.subr.bf16.mxu0 %v4955
  %5021 = vmatpush1.bf16.msra.mxu0 %v4954
  %5022 = vmatprep.subr.bf16.mxu0 %v4951
  %5023 = vmatpush1.bf16.msra.mxu0 %v4950
  %5024 = vmatprep.subr.bf16.mxu0 %v4947
  %5025 = vmatpush1.bf16.msra.mxu0 %v4946
  %5026 = vmatprep.subr.bf16.mxu0 0
  %5027 = vmatpush2.bf16.msra.mxu0 0
  %5028 = vmatprep.subr.bf16.mxu0 0
  %5029 = vmatpush2.bf16.msra.mxu0 0
  %5030 = vmatprep.subr.bf16.mxu0 0
  %5031 = vmatpush2.bf16.msra.mxu0 0
  %5032 = vmatprep.subr.bf16.mxu0 0
  %5033 = vmatpush2.bf16.msra.mxu0 0
  %5034 = vmatprep.subr.bf16.mxu0 0
  %5035 = vmatpush2.bf16.msra.mxu0 0
  %5036 = vmatprep.subr.bf16.mxu0 0
  %5037 = vmatpush2.bf16.msra.mxu0 0
  %5038 = vmatprep.subr.bf16.mxu0 0
  %5039 = vmatpush2.bf16.msra.mxu0 0
  %5040 = vmatprep.subr.bf16.mxu0 0
  %5041 = vmatpush2.bf16.msra.mxu0 0
  %5042 = vmatprep.mubr.bf16.mxu0 0
  %5043 = vmatmul.mubr.bf16.gmra.mxu0 %v4784
  %v5044 = vpop.f32.mrf.mxu0
  %v5045 = vadd.f32 0.0, %v5044
  %v5046 = vpop.f32.mrf.mxu0
  %v5047 = vadd.f32 0.0, %v5046
  %v5048 = vpop.f32.mrf.mxu0
  %v5049 = vpop.f32.mrf.mxu0
  %5050 = vdwg.mxu0
  %5051 = vmatprep.subr.bf16.mxu0 %v4977
  %5052 = vmatpush1.bf16.msra.mxu0 %v4976
  %5053 = vmatprep.subr.bf16.mxu0 %v4973
  %5054 = vmatpush1.bf16.msra.mxu0 %v4972
  %5055 = vmatprep.subr.bf16.mxu0 %v4969
  %5056 = vmatpush1.bf16.msra.mxu0 %v4968
  %5057 = vmatprep.subr.bf16.mxu0 %v4965
  %5058 = vmatpush1.bf16.msra.mxu0 %v4964
  %5059 = vmatprep.subr.bf16.mxu0 %v4961
  %5060 = vmatpush1.bf16.msra.mxu0 %v4960
  %5061 = vmatprep.subr.bf16.mxu0 %v4957
  %5062 = vmatpush1.bf16.msra.mxu0 %v4956
  %5063 = vmatprep.subr.bf16.mxu0 %v4953
  %5064 = vmatpush1.bf16.msra.mxu0 %v4952
  %5065 = vmatprep.subr.bf16.mxu0 %v4949
  %5066 = vmatpush1.bf16.msra.mxu0 %v4948
  %5067 = vmatprep.subr.bf16.mxu0 0
  %5068 = vmatpush2.bf16.msra.mxu0 0
  %5069 = vmatprep.subr.bf16.mxu0 0
  %5070 = vmatpush2.bf16.msra.mxu0 0
  %5071 = vmatprep.subr.bf16.mxu0 0
  %5072 = vmatpush2.bf16.msra.mxu0 0
  %5073 = vmatprep.subr.bf16.mxu0 0
  %5074 = vmatpush2.bf16.msra.mxu0 0
  %5075 = vmatprep.subr.bf16.mxu0 0
  %5076 = vmatpush2.bf16.msra.mxu0 0
  %5077 = vmatprep.subr.bf16.mxu0 0
  %5078 = vmatpush2.bf16.msra.mxu0 0
  %5079 = vmatprep.subr.bf16.mxu0 0
  %5080 = vmatpush2.bf16.msra.mxu0 0
  %5081 = vmatprep.subr.bf16.mxu0 0
  %5082 = vmatpush2.bf16.msra.mxu0 0
  %5083 = vmatprep.mubr.bf16.mxu0 0
  %5084 = vmatmul.mubr.bf16.gmra.mxu0 %v4784
  %v5085 = vpop.f32.mrf.mxu0
  %v5086 = vadd.f32 0.0, %v5085
  %v5087 = vpop.f32.mrf.mxu0
  %v5088 = vadd.f32 0.0, %v5087
  %v5089 = vpop.f32.mrf.mxu0
  %v5090 = vpop.f32.mrf.mxu0
  %5091 = vdwg.mxu0
  %v5124 = vunpack.c.l.b16 %v4818
  %v5125 = vunpack.c.h.b16 %v4818
  %v5126 = vunpack.c.l.b16 %v4819
  %v5127 = vunpack.c.h.b16 %v4819
  %v5128 = vunpack.c.l.b16 %v4820
  %v5129 = vunpack.c.h.b16 %v4820
  %v5130 = vunpack.c.l.b16 %v4821
  %v5131 = vunpack.c.h.b16 %v4821
  %v5132 = vunpack.c.l.b16 %v4822
  %v5133 = vunpack.c.h.b16 %v4822
  %v5134 = vunpack.c.l.b16 %v4823
  %v5135 = vunpack.c.h.b16 %v4823
  %v5136 = vunpack.c.l.b16 %v4824
  %v5137 = vunpack.c.h.b16 %v4824
  %v5138 = vunpack.c.l.b16 %v4825
  %v5139 = vunpack.c.h.b16 %v4825
  %v5140 = vunpack.c.l.b16 %v4826
  %v5141 = vunpack.c.h.b16 %v4826
  %v5142 = vunpack.c.l.b16 %v4827
  %v5143 = vunpack.c.h.b16 %v4827
  %v5144 = vunpack.c.l.b16 %v4828
  %v5145 = vunpack.c.h.b16 %v4828
  %v5146 = vunpack.c.l.b16 %v4829
  %v5147 = vunpack.c.h.b16 %v4829
  %v5148 = vunpack.c.l.b16 %v4830
  %v5149 = vunpack.c.h.b16 %v4830
  %v5150 = vunpack.c.l.b16 %v4831
  %v5151 = vunpack.c.h.b16 %v4831
  %v5152 = vunpack.c.l.b16 %v4832
  %v5153 = vunpack.c.h.b16 %v4832
  %v5154 = vunpack.c.l.b16 %v4833
  %v5155 = vunpack.c.h.b16 %v4833
  %v5156 = vunpack.c.l.b16 %v4834
  %v5157 = vunpack.c.h.b16 %v4834
  %v5158 = vunpack.c.l.b16 %v4835
  %v5159 = vunpack.c.h.b16 %v4835
  %v5160 = vunpack.c.l.b16 %v4836
  %v5161 = vunpack.c.h.b16 %v4836
  %v5162 = vunpack.c.l.b16 %v4837
  %v5163 = vunpack.c.h.b16 %v4837
  %v5164 = vunpack.c.l.b16 %v4838
  %v5165 = vunpack.c.h.b16 %v4838
  %v5166 = vunpack.c.l.b16 %v4839
  %v5167 = vunpack.c.h.b16 %v4839
  %v5168 = vunpack.c.l.b16 %v4840
  %v5169 = vunpack.c.h.b16 %v4840
  %v5170 = vunpack.c.l.b16 %v4841
  %v5171 = vunpack.c.h.b16 %v4841
  %v5172 = vunpack.c.l.b16 %v4842
  %v5173 = vunpack.c.h.b16 %v4842
  %v5174 = vunpack.c.l.b16 %v4843
  %v5175 = vunpack.c.h.b16 %v4843
  %v5176 = vunpack.c.l.b16 %v4844
  %v5177 = vunpack.c.h.b16 %v4844
  %v5178 = vunpack.c.l.b16 %v4845
  %v5179 = vunpack.c.h.b16 %v4845
  %v5180 = vunpack.c.l.b16 %v4846
  %v5181 = vunpack.c.h.b16 %v4846
  %v5182 = vunpack.c.l.b16 %v4847
  %v5183 = vunpack.c.h.b16 %v4847
  %v5184 = vunpack.c.l.b16 %v4848
  %v5185 = vunpack.c.h.b16 %v4848
  %v5186 = vunpack.c.l.b16 %v4849
  %v5187 = vunpack.c.h.b16 %v4849
  %v5188 = vpack.c.b16 %v5128, %v5124
  %v5189 = vpack.c.b16 %v5129, %v5125
  %v5190 = vpack.c.b16 %v5130, %v5126
  %v5191 = vpack.c.b16 %v5131, %v5127
  %v5192 = vpack.c.b16 %v5136, %v5132
  %v5193 = vpack.c.b16 %v5137, %v5133
  %v5194 = vpack.c.b16 %v5138, %v5134
  %v5195 = vpack.c.b16 %v5139, %v5135
  %v5196 = vpack.c.b16 %v5144, %v5140
  %v5197 = vpack.c.b16 %v5145, %v5141
  %v5198 = vpack.c.b16 %v5146, %v5142
  %v5199 = vpack.c.b16 %v5147, %v5143
  %v5200 = vpack.c.b16 %v5152, %v5148
  %v5201 = vpack.c.b16 %v5153, %v5149
  %v5202 = vpack.c.b16 %v5154, %v5150
  %v5203 = vpack.c.b16 %v5155, %v5151
  %v5204 = vpack.c.b16 %v5160, %v5156
  %v5205 = vpack.c.b16 %v5161, %v5157
  %v5206 = vpack.c.b16 %v5162, %v5158
  %v5207 = vpack.c.b16 %v5163, %v5159
  %v5208 = vpack.c.b16 %v5168, %v5164
  %v5209 = vpack.c.b16 %v5169, %v5165
  %v5210 = vpack.c.b16 %v5170, %v5166
  %v5211 = vpack.c.b16 %v5171, %v5167
  %v5212 = vpack.c.b16 %v5176, %v5172
  %v5213 = vpack.c.b16 %v5177, %v5173
  %v5214 = vpack.c.b16 %v5178, %v5174
  %v5215 = vpack.c.b16 %v5179, %v5175
  %v5216 = vpack.c.b16 %v5184, %v5180
  %v5217 = vpack.c.b16 %v5185, %v5181
  %v5218 = vpack.c.b16 %v5186, %v5182
  %v5219 = vpack.c.b16 %v5187, %v5183
  %5252 = vmatprep.subr.bf16.mxu0 %v5217
  %5253 = vmatpush1.bf16.msra.mxu0 %v5216
  %5254 = vmatprep.subr.bf16.mxu0 %v5213
  %5255 = vmatpush1.bf16.msra.mxu0 %v5212
  %5256 = vmatprep.subr.bf16.mxu0 %v5209
  %5257 = vmatpush1.bf16.msra.mxu0 %v5208
  %5258 = vmatprep.subr.bf16.mxu0 %v5205
  %5259 = vmatpush1.bf16.msra.mxu0 %v5204
  %5260 = vmatprep.subr.bf16.mxu0 %v5201
  %5261 = vmatpush1.bf16.msra.mxu0 %v5200
  %5262 = vmatprep.subr.bf16.mxu0 %v5197
  %5263 = vmatpush1.bf16.msra.mxu0 %v5196
  %5264 = vmatprep.subr.bf16.mxu0 %v5193
  %5265 = vmatpush1.bf16.msra.mxu0 %v5192
  %5266 = vmatprep.subr.bf16.mxu0 %v5189
  %5267 = vmatpush1.bf16.msra.mxu0 %v5188
  %5268 = vmatprep.subr.bf16.mxu0 0
  %5269 = vmatpush2.bf16.msra.mxu0 0
  %5270 = vmatprep.subr.bf16.mxu0 0
  %5271 = vmatpush2.bf16.msra.mxu0 0
  %5272 = vmatprep.subr.bf16.mxu0 0
  %5273 = vmatpush2.bf16.msra.mxu0 0
  %5274 = vmatprep.subr.bf16.mxu0 0
  %5275 = vmatpush2.bf16.msra.mxu0 0
  %5276 = vmatprep.subr.bf16.mxu0 0
  %5277 = vmatpush2.bf16.msra.mxu0 0
  %5278 = vmatprep.subr.bf16.mxu0 0
  %5279 = vmatpush2.bf16.msra.mxu0 0
  %5280 = vmatprep.subr.bf16.mxu0 0
  %5281 = vmatpush2.bf16.msra.mxu0 0
  %5282 = vmatprep.subr.bf16.mxu0 0
  %5283 = vmatpush2.bf16.msra.mxu0 0
  %5284 = vmatprep.mubr.bf16.mxu0 0
  %5285 = vmatmul.mubr.bf16.gmra.mxu0 %v4785
  %v5286 = vpop.f32.mrf.mxu0
  %v5287 = vadd.f32 0.0, %v5286
  %v5288 = vpop.f32.mrf.mxu0
  %v5289 = vadd.f32 0.0, %v5288
  %v5290 = vpop.f32.mrf.mxu0
  %v5291 = vpop.f32.mrf.mxu0
  %5292 = vdwg.mxu0
  %5293 = vmatprep.subr.bf16.mxu0 %v5219
  %5294 = vmatpush1.bf16.msra.mxu0 %v5218
  %5295 = vmatprep.subr.bf16.mxu0 %v5215
  %5296 = vmatpush1.bf16.msra.mxu0 %v5214
  %5297 = vmatprep.subr.bf16.mxu0 %v5211
  %5298 = vmatpush1.bf16.msra.mxu0 %v5210
  %5299 = vmatprep.subr.bf16.mxu0 %v5207
  %5300 = vmatpush1.bf16.msra.mxu0 %v5206
  %5301 = vmatprep.subr.bf16.mxu0 %v5203
  %5302 = vmatpush1.bf16.msra.mxu0 %v5202
  %5303 = vmatprep.subr.bf16.mxu0 %v5199
  %5304 = vmatpush1.bf16.msra.mxu0 %v5198
  %5305 = vmatprep.subr.bf16.mxu0 %v5195
  %5306 = vmatpush1.bf16.msra.mxu0 %v5194
  %5307 = vmatprep.subr.bf16.mxu0 %v5191
  %5308 = vmatpush1.bf16.msra.mxu0 %v5190
  %5309 = vmatprep.subr.bf16.mxu0 0
  %5310 = vmatpush2.bf16.msra.mxu0 0
  %5311 = vmatprep.subr.bf16.mxu0 0
  %5312 = vmatpush2.bf16.msra.mxu0 0
  %5313 = vmatprep.subr.bf16.mxu0 0
  %5314 = vmatpush2.bf16.msra.mxu0 0
  %5315 = vmatprep.subr.bf16.mxu0 0
  %5316 = vmatpush2.bf16.msra.mxu0 0
  %5317 = vmatprep.subr.bf16.mxu0 0
  %5318 = vmatpush2.bf16.msra.mxu0 0
  %5319 = vmatprep.subr.bf16.mxu0 0
  %5320 = vmatpush2.bf16.msra.mxu0 0
  %5321 = vmatprep.subr.bf16.mxu0 0
  %5322 = vmatpush2.bf16.msra.mxu0 0
  %5323 = vmatprep.subr.bf16.mxu0 0
  %5324 = vmatpush2.bf16.msra.mxu0 0
  %5325 = vmatprep.mubr.bf16.mxu0 0
  %5326 = vmatmul.mubr.bf16.gmra.mxu0 %v4785
  %v5327 = vpop.f32.mrf.mxu0
  %v5328 = vadd.f32 0.0, %v5327
  %v5329 = vpop.f32.mrf.mxu0
  %v5330 = vadd.f32 0.0, %v5329
  %v5331 = vpop.f32.mrf.mxu0
  %v5332 = vpop.f32.mrf.mxu0
  %5333 = vdwg.mxu0
  %s5334 = scalar_lea.vmem %s0, 56
  %v5335 = vld [vmem:[%s5334] sm:$0xff]
  %v5336 = vld [vmem:[%s46] sm:$0xff]
  %v5345 = vcombine.low %v5045, %v5047
  %v5346 = vcombine.low %v5086, %v5088
  %v5348 = vunpack.c.l.s4 1983009808
  %v5349 = vunpack.c.0.s8 %v5348
  %v5350 = vlaneseq
  %v5351 = vshrl.u32 %v5350, 7
  %v5352 = vsub.s32 %v5349, %v5351
  %v5353 = vrot.slane %v5345, %v5352
  %v5355 = vunpack.c.l.s4 1983009808
  %v5356 = vunpack.c.0.s8 %v5355
  %v5357 = vlaneseq
  %v5358 = vshrl.u32 %v5357, 7
  %v5359 = vsub.s32 %v5356, %v5358
  %v5360 = vrot.slane %v5346, %v5359
  %v5361 = vcombine.low %v5353, %v5360
  %v5362 = vcombine.low %v5287, %v5289
  %v5363 = vcombine.low %v5328, %v5330
  %v5365 = vunpack.c.l.s4 1983009808
  %v5366 = vunpack.c.0.s8 %v5365
  %v5367 = vlaneseq
  %v5368 = vshrl.u32 %v5367, 7
  %v5369 = vsub.s32 %v5366, %v5368
  %v5370 = vrot.slane %v5362, %v5369
  %v5372 = vunpack.c.l.s4 1983009808
  %v5373 = vunpack.c.0.s8 %v5372
  %v5374 = vlaneseq
  %v5375 = vshrl.u32 %v5374, 7
  %v5376 = vsub.s32 %v5373, %v5375
  %v5377 = vrot.slane %v5363, %v5376
  %v5378 = vcombine.low %v5370, %v5377
  %v5381 = vadd.f32 %v5335, %v5361
  %v5382 = vadd.f32 %v5336, %v5378
  %v5383 = vxor.u32 %v5381, 2147483648
  %v5384 = vxor.u32 %v5382, 2147483648
  %v5385 = vmul.f32 %v5383, 1.442695
  %v5386 = vpow.pop %v5385
  %v5387 = vmul.f32 %v5384, 1.442695
  %v5388 = vpow.pop %v5387
  %v5389 = vadd.f32 %v5386, 1.0
  %v5390 = vadd.f32 %v5388, 1.0
  %v5391 = vrcp.pop %v5389
  %v5392 = vmul.f32 1.0, %v5391
  %v5393 = vrcp.pop %v5390
  %v5394 = vmul.f32 1.0, %v5393
  %v5397 = vrot.slane %v5381, 2
  %v5398 = vrot.slane %v5382, 2
  %v5401 = vxor.u32 %v5397, 2147483648
  %v5402 = vxor.u32 %v5398, 2147483648
  %v5403 = vmul.f32 %v5401, 1.442695
  %v5404 = vpow.pop %v5403
  %v5405 = vmul.f32 %v5402, 1.442695
  %v5406 = vpow.pop %v5405
  %v5407 = vadd.f32 %v5404, 1.0
  %v5408 = vadd.f32 %v5406, 1.0
  %v5409 = vrcp.pop %v5407
  %v5410 = vmul.f32 1.0, %v5409
  %v5411 = vrcp.pop %v5408
  %v5412 = vmul.f32 1.0, %v5411
  %v5413 = vrot.slane %v5381, 4
  %v5414 = vrot.slane %v5382, 4
  %v5417 = vtanh.pop %v5413
  %v5418 = vtanh.pop %v5414
  %v5419 = vrot.slane %v5381, 6
  %v5420 = vrot.slane %v5382, 6
  %v5423 = vxor.u32 %v5419, 2147483648
  %v5424 = vxor.u32 %v5420, 2147483648
  %v5425 = vmul.f32 %v5423, 1.442695
  %v5426 = vpow.pop %v5425
  %v5427 = vmul.f32 %v5424, 1.442695
  %v5428 = vpow.pop %v5427
  %v5429 = vadd.f32 %v5426, 1.0
  %v5430 = vadd.f32 %v5428, 1.0
  %v5431 = vrcp.pop %v5429
  %v5432 = vmul.f32 1.0, %v5431
  %v5433 = vrcp.pop %v5430
  %v5434 = vmul.f32 1.0, %v5433
  %v5435 = vld [vmem:[#allocation3] sm:$0x3]
  %v5436 = vld [vmem:[#allocation3 + $0x2] sm:$0x3]
  %v5437 = vmul.f32 %v5410, %v5435
  %v5438 = vmul.f32 %v5412, %v5436
  %v5439 = vmul.f32 %v5392, %v5417
  %v5440 = vmul.f32 %v5394, %v5418
  %v5441 = vadd.f32 %v5437, %v5439
  %v5442 = vadd.f32 %v5438, %v5440
  %v5443 = vtanh.pop %v5441
  %v5444 = vtanh.pop %v5442
  %v5445 = vmul.f32 %v5432, %v5443
  %v5446 = vmul.f32 %v5434, %v5444
  %5447 = vst [vmem:[#allocation3] sm:$0x3] %v5441
  %5448 = vst [vmem:[#allocation3 + $0x2] sm:$0x3] %v5442
  %5449 = vst [vmem:[#allocation2] sm:$0x3] %v5445
  %5450 = vst [vmem:[#allocation2 + $0x2] sm:$0x3] %v5446
  %s5451 = scalar_lea.vmem %s3, 14
  %5452 = vst [vmem:[%s5451] sm:$0x3] %v5445
  %5453 = vst [vmem:[%s54] sm:$0x3] %v5446
  %v5454 = vld [vmem:[#allocation2] sm:$0x3]
  %v5455 = vld [vmem:[#allocation2 + $0x2] sm:$0x3]
  %5456 = vst [vmem:[%s5] sm:$0x3] %v5454
  %5457 = vst [vmem:[%s5 + $0x2] sm:$0x3] %v5455
  %v5458 = vld [vmem:[#allocation3] sm:$0x3]
  %v5459 = vld [vmem:[#allocation3 + $0x2] sm:$0x3]
  %5460 = vst [vmem:[%s6] sm:$0x3] %v5458
  %5461 = vst [vmem:[%s6 + $0x2] sm:$0x3] %v5459
  %s5462 = ssub.s32 0, 0
  %s5463 = smul.u32 8, %s5462
  %p5464 = scmp.lt.s32.totalorder %s5463, 7
  %s5465 = scalar_select %p5464, %s5463, 7
  %s5466 = smul.addr %s5465, 2
  %s5467 = scalar_lea.vmem %s4, %s5466
  // Predicated region
  $region18: #{lstm_rnn_forward.9} parent=0 // pred_check
    _
  $region19: #{lstm_rnn_forward.9} parent=0 // pred_check_branch
    %5469 = sbr.rel (0) target = $region21
  $region20: #{lstm_rnn_forward.9} parent=0 // pred_region
    _
  $region21: #{lstm_rnn_forward.9} parent=0 // pred_fallthru
    _
  // Predicated region
  $region22: #{lstm_rnn_forward.9} parent=0 // pred_check
    _
  $region23: #{lstm_rnn_forward.9} parent=0 // pred_check_branch
    %5471 = sbr.rel (0) target = $region25
  $region24: #{lstm_rnn_forward.9} parent=0 // pred_region
    %s5472 = ssub.s32 0, 0
    %s5473 = smul.u32 8, %s5472
  $region25: #{lstm_rnn_forward.9} parent=0 // pred_fallthru
    _
  // Predicated region
  $region26: #{lstm_rnn_forward.9} parent=0 // pred_check
    _
  $region27: #{lstm_rnn_forward.9} parent=0 // pred_check_branch
    %5475 = sbr.rel (0) target = $region29
  $region28: #{lstm_rnn_forward.9} parent=0 // pred_region
    _
  $region29: #{lstm_rnn_forward.9} parent=0 // pred_fallthru
    _
  // Predicated region
  $region30: #{lstm_rnn_forward.9} parent=0 // pred_check
    _
  $region31: #{lstm_rnn_forward.9} parent=0 // pred_check_branch
    %5477 = sbr.rel (0) target = $region33
  $region32: #{lstm_rnn_forward.9} parent=0 // pred_region
    _
  $region33: #{lstm_rnn_forward.9} parent=0 // pred_fallthru
    _
  // Predicated region
  $region34: #{lstm_rnn_forward.9} parent=0 // pred_check
    _
  $region35: #{lstm_rnn_forward.9} parent=0 // pred_check_branch
    %5479 = sbr.rel (0) target = $region37
  $region36: #{lstm_rnn_forward.9} parent=0 // pred_region
    _
  $region37: #{lstm_rnn_forward.9} parent=0 // pred_fallthru
    _
  // Predicated region
  $region38: #{lstm_rnn_forward.9} parent=0 // pred_check
    _
  $region39: #{lstm_rnn_forward.9} parent=0 // pred_check_branch
    %5481 = sbr.rel (0) target = $region41
  $region40: #{lstm_rnn_forward.9} parent=0 // pred_region
    %s5482 = ssub.s32 0, 0
    %s5483 = smul.u32 8, %s5482
    %p5484 = scmp.lt.s32.totalorder %s5483, 7
    %s5485 = scalar_select %p5484, %s5483, 7
    %s5486 = smul.addr %s5485, 2
    %s5487 = scalar_lea.vmem %s4, %s5486
  $region41: #{lstm_rnn_forward.9} parent=0 // pred_fallthru
    _
  // Predicated region
  $region42: #{lstm_rnn_forward.9} parent=0 // pred_check
    _
  $region43: #{lstm_rnn_forward.9} parent=0 // pred_check_branch
    %5489 = sbr.rel (0) target = $region45
  $region44: #{lstm_rnn_forward.9} parent=0 // pred_region
    _
  $region45: #{lstm_rnn_forward.9} parent=0 // pred_fallthru
    _
  // Predicated region
  $region46: #{lstm_rnn_forward.9} parent=0 // pred_check
    _
  $region47: #{lstm_rnn_forward.9} parent=0 // pred_check_branch
    %5491 = sbr.rel (0) target = $region49
  $region48: #{lstm_rnn_forward.9} parent=0 // pred_region
    _
  $region49: #{lstm_rnn_forward.9} parent=0 // pred_fallthru
    _

</llo_original>
